<compile_context>
chip_gen: v6e
topology: v6e:2x2x1
jax: 0.10.0
libtpu: 0.0.40
codegen_flags: <defaults>
</compile_context>

<pallas_src>
import functools

import jax
import jax.numpy as jnp
import numpy as np
from jax.experimental import pallas as pl
from jax.experimental.pallas import tpu as pltpu

d_c = 6
d_e = 100
d_f = 50
d_o = 50
k_d = 3
k_d3 = k_d ** 3

S = 5                     # spatial grid (5,5,5): 'valid' 3x3x3 conv -> 3x3x3
S_OUT = S - k_d + 1       # 3
VOX = S * S * S           # 125 voxels per batch element
A_PAD = 128               # lane-padded action dim (sliced back in wrapper)


def _pad8(n):
    return -(-n // 8) * 8


def _elu(y):
    # ELU(alpha=1).  exp(min(y,0)) - 1 instead of expm1: numerically identical
    # at these magnitudes and guaranteed to lower in Mosaic.  Inputs are f32.
    return jnp.where(y > 0.0, y, jnp.exp(jnp.minimum(y, 0.0)) - 1.0)


# --------------------------- fused Pallas kernel --------------------------- #
def _dqn_kernel(x_ref, w1_ref, b1_ref, w2_ref, b2_ref, wc_ref, bc_ref,
                w3_ref, b3_ref, w4_ref, b4_ref, wo_ref, bo_ref,
                out_ref, h_scr, acc_scr, *, bb):
    f32 = jnp.float32
    bf16 = jnp.bfloat16
    n_acc = acc_scr.shape[0]          # padded conv-output rows (= pad8(63*bb))

    # ---- fc1 block: per-voxel MLP.  rows = vox*bb + b (batch-minor),
    #      lanes = channels.  bf16 operands, f32 accumulate, f32 bias/ELU.
    h = x_ref[...]                                                   # (R, 6) bf16
    h = _elu(jnp.dot(h, w1_ref[...], preferred_element_type=f32) + b1_ref[...])
    h = _elu(jnp.dot(h.astype(bf16), w2_ref[...],
                     preferred_element_type=f32) + b2_ref[...])
    h_scr[...] = h.astype(bf16)                                      # (R, 100)

    # ---- Conv3d(d_e -> d_f, 3x3x3, valid) as 27 shifted matmuls.
    # conv output for (b, od, oh, ow) lands at row  l = (25*od+5*oh+ow)*bb + b
    # and tap (kd,kh,kw) needs h rows  l + (25*kd+5*kh+kw)*bb, i.e. the
    # contiguous window [off*bb, off*bb + n_acc) of h_scr.
    # Accumulate in vregs (f32); VMEM is written exactly once.
    # TODO(synk): 20/27 window offsets are not sublane-8 aligned; could hoist
    # them into 3 pre-rolled copies of h_scr if relayout loads ever dominate.
    acc = jnp.zeros((n_acc, d_f), f32)
    for kd in range(k_d):
        for kh in range(k_d):
            for kw in range(k_d):
                k = (kd * k_d + kh) * k_d + kw
                off = ((kd * S + kh) * S + kw) * bb
                lhs = h_scr[pl.ds(off, n_acc), :]                    # (n_acc, d_e) bf16
                acc = acc + jnp.dot(lhs, wc_ref[k],                  # (d_e, d_f) bf16
                                    preferred_element_type=f32)
    acc_scr[...] = _elu(acc + bc_ref[...]).astype(bf16)              # bias + ELU

    # ---- fc2 block (Linear(1350,50)) as 27 batched (bb,50)x(50,50) matmuls:
    # for spatial position sp, the bb batch rows are CONTIGUOUS in acc_scr.
    z = jnp.zeros((bb, d_o), f32)
    for od in range(S_OUT):
        for oh in range(S_OUT):
            for ow in range(S_OUT):
                sp = (od * S_OUT + oh) * S_OUT + ow
                l = ((od * S + oh) * S + ow) * bb
                rows = acc_scr[pl.ds(l, bb), :]                      # (bb, d_f) bf16
                z = z + jnp.dot(rows, w3_ref[sp],                    # (d_f, d_o) bf16
                                preferred_element_type=f32)

    # ---- remaining head, fully batched: 2 matmuls + one lane-dense store.
    z = _elu(z + b3_ref[...])
    z = _elu(jnp.dot(z.astype(bf16), w4_ref[...],
                     preferred_element_type=f32) + b4_ref[...])
    out = jnp.dot(z.astype(bf16), wo_ref[...],
                  preferred_element_type=f32) + bo_ref[...]          # (bb, 128)
    out_ref[...] = out.astype(out_ref.dtype)


# --------------------------------- wrapper --------------------------------- #
@functools.partial(jax.jit, static_argnames=("n_actions", "block_b"))
def dqn_forward(x, params, n_actions, block_b=2):
    """x: (B, d_c, 5, 5, 5) NCDHW float32; params: kernel-layout dict."""
    B = x.shape[0]
    assert x.shape[1:] == (d_c, S, S, S), x.shape
    bb = block_b
    assert bb % 2 == 0, "batch block must be even (bf16 sublane-pair alignment)"

    n_blk = -(-B // bb)
    B_pad = n_blk * bb
    n_acc = _pad8(63 * bb)            # conv-output rows per block (128 @ bb=2)
    R = _pad8(62 * bb + n_acc)        # h rows per block, covers all tap windows

    # batch-minor voxel rows per block: row = ((d*5+h)*5+w)*bb + b_local
    xt = jnp.transpose(x, (0, 2, 3, 4, 1)).reshape(B, VOX, d_c)
    xt = jnp.pad(xt, ((0, B_pad - B), (0, 0), (0, 0)))
    xt = xt.reshape(n_blk, bb, VOX, d_c).transpose(0, 2, 1, 3)
    xt = xt.reshape(n_blk, VOX * bb, d_c)
    xt = jnp.pad(xt, ((0, 0), (0, R - VOX * bb), (0, 0))).astype(jnp.bfloat16)

    kernel = functools.partial(_dqn_kernel, bb=bb)
    out = pl.pallas_call(
        kernel,
        out_shape=jax.ShapeDtypeStruct((n_blk, bb, A_PAD), jnp.float32),
        grid_spec=pltpu.PrefetchScalarGridSpec(
            num_scalar_prefetch=0,
            grid=(n_blk,),
            in_specs=[
                pl.BlockSpec((None, R, d_c), lambda i: (i, 0, 0)),        # x block
                pl.BlockSpec((d_c, d_e), lambda i: (0, 0)),               # w1
                pl.BlockSpec((1, d_e), lambda i: (0, 0)),                 # b1
                pl.BlockSpec((d_e, d_e), lambda i: (0, 0)),               # w2
                pl.BlockSpec((1, d_e), lambda i: (0, 0)),                 # b2
                pl.BlockSpec((k_d3, d_e, d_f), lambda i: (0, 0, 0)),      # wc
                pl.BlockSpec((1, d_f), lambda i: (0, 0)),                 # bc
                pl.BlockSpec((k_d3, d_f, d_o), lambda i: (0, 0, 0)),      # w3
                pl.BlockSpec((1, d_o), lambda i: (0, 0)),                 # b3
                pl.BlockSpec((d_o, d_o), lambda i: (0, 0)),               # w4
                pl.BlockSpec((1, d_o), lambda i: (0, 0)),                 # b4
                pl.BlockSpec((d_o, A_PAD), lambda i: (0, 0)),             # wo
                pl.BlockSpec((1, A_PAD), lambda i: (0, 0)),               # bo
            ],
            out_specs=pl.BlockSpec((None, bb, A_PAD), lambda i: (i, 0, 0)),
            scratch_shapes=[
                pltpu.VMEM((R, d_e), jnp.bfloat16),      # fc output / conv input
                pltpu.VMEM((n_acc, d_f), jnp.bfloat16),  # conv output (post-ELU)
            ],
        ),
        compiler_params=pltpu.CompilerParams(
            dimension_semantics=("parallel",)),
    )(xt, params["w1"], params["b1"], params["w2"], params["b2"],
      params["wc"], params["bc"], params["w3"], params["b3"],
      params["w4"], params["b4"], params["wo"], params["bo"])

    return out.reshape(B_pad, A_PAD)[:B, :n_actions]


# ----------------------- parameters (torch <-> kernel) --------------------- #
def init_torch_params(key, n_actions):
    """Synthetic params in the PyTorch layouts, U(-1/sqrt(fan_in), +)."""
    ks = jax.random.split(key, 12)

    def u(k, shape, fan_in):
        b = 1.0 / (fan_in ** 0.5)
        return jax.random.uniform(k, shape, jnp.float32, -b, b)

    return {
        "fc1.0.weight": u(ks[0], (d_e, d_c), d_c),  "fc1.0.bias": u(ks[1], (d_e,), d_c),
        "fc1.2.weight": u(ks[2], (d_e, d_e), d_e),  "fc1.2.bias": u(ks[3], (d_e,), d_e),
        "cnn.0.weight": u(ks[4], (d_f, d_e, k_d, k_d, k_d), d_e * k_d3),
        "cnn.0.bias":   u(ks[5], (d_f,), d_e * k_d3),
        "fc2.0.weight": u(ks[6], (d_o, k_d3 * d_f), k_d3 * d_f),
        "fc2.0.bias":   u(ks[7], (d_o,), k_d3 * d_f),
        "fc2.2.weight": u(ks[8], (d_o, d_o), d_o),  "fc2.2.bias": u(ks[9], (d_o,), d_o),
        "output.weight": u(ks[10], (n_actions, d_o), d_o),
        "output.bias":   u(ks[11], (n_actions,), d_o),
    }


def prepare_params(tp, n_actions):
    """Bake all layout permutations + dtype casts into the weights (off hot path)."""
    bf16, f32 = jnp.bfloat16, jnp.float32
    # Conv3d weight (f, c, kd, kh, kw) -> (kd*9+kh*3+kw, c, f)
    wc = jnp.transpose(tp["cnn.0.weight"], (2, 3, 4, 1, 0)).reshape(k_d3, d_e, d_f)
    # fc2[0] weight (o, f*27 + od*9+oh*3+ow) -> (od*9+oh*3+ow, f, o)
    w3 = tp["fc2.0.weight"].reshape(d_o, d_f, k_d, k_d, k_d)
    w3 = jnp.transpose(w3, (2, 3, 4, 1, 0)).reshape(k_d3, d_f, d_o)
    # output head: pad action lanes to 128 with zeros (sliced off in wrapper)
    wo = jnp.zeros((d_o, A_PAD), f32).at[:, :n_actions].set(tp["output.weight"].T)
    bo = jnp.zeros((1, A_PAD), f32).at[:, :n_actions].set(tp["output.bias"])
    return {
        "w1": tp["fc1.0.weight"].T.astype(bf16),
        "b1": tp["fc1.0.bias"].reshape(1, d_e).astype(f32),
        "w2": tp["fc1.2.weight"].T.astype(bf16),
        "b2": tp["fc1.2.bias"].reshape(1, d_e).astype(f32),
        "wc": wc.astype(bf16),
        "bc": tp["cnn.0.bias"].reshape(1, d_f).astype(f32),
        "w3": w3.astype(bf16),
        "b3": tp["fc2.0.bias"].reshape(1, d_o).astype(f32),
        "w4": tp["fc2.2.weight"].T.astype(bf16),
        "b4": tp["fc2.2.bias"].reshape(1, d_o).astype(f32),
        "wo": wo.astype(bf16),
        "bo": bo,
    }


# ------------------------- pure-JAX reference (oracle) --------------------- #
def dqn_reference(x, tp):
    B = x.shape[0]
    h = jnp.transpose(x, (0, 2, 3, 4, 1))                             # (B,5,5,5,6)
    h = _elu(h @ tp["fc1.0.weight"].T + tp["fc1.0.bias"])
    h = _elu(h @ tp["fc1.2.weight"].T + tp["fc1.2.bias"])             # (B,5,5,5,100)
    h = jnp.transpose(h, (0, 4, 1, 2, 3))                             # (B,100,5,5,5)
    w = tp["cnn.0.weight"]
    conv = jnp.zeros((B, d_f, S_OUT, S_OUT, S_OUT), jnp.float32)
    for kd in range(k_d):
        for kh in range(k_d):
            for kw in range(k_d):
                patch = h[:, :, kd:kd + S_OUT, kh:kh + S_OUT, kw:kw + S_OUT]
                conv = conv + jnp.einsum("bcdhw,fc->bfdhw", patch, w[:, :, kd, kh, kw])
    conv = _elu(conv + tp["cnn.0.bias"][None, :, None, None, None])
    z = conv.reshape(B, k_d3 * d_f)                                   # torch order
    z = _elu(z @ tp["fc2.0.weight"].T + tp["fc2.0.bias"])
    z = _elu(z @ tp["fc2.2.weight"].T + tp["fc2.2.bias"])
    return z @ tp["output.weight"].T + tp["output.bias"]


if __name__ == "__main__":
    key = jax.random.PRNGKey(0)
    k_x, k_p = jax.random.split(key)
    B, n_actions = 2, 4
    x = jax.random.normal(k_x, (B, d_c, S, S, S), dtype=jnp.float32)

    torch_params = init_torch_params(k_p, n_actions)
    params = prepare_params(torch_params, n_actions)

    out = jax.block_until_ready(dqn_forward(x, params, n_actions=n_actions, block_b=2))
    assert out.shape == (B, n_actions), out.shape

    # correctness check against a pure-JAX replica of the PyTorch forward
    with jax.default_matmul_precision("highest"):
        ref = jax.block_until_ready(dqn_reference(x, torch_params))
    ref = np.asarray(ref)
    tol = 5e-2 * float(np.abs(ref).max()) + 1e-6
    np.testing.assert_allclose(np.asarray(out), ref, rtol=5e-2, atol=tol)

    print("KERNEL_OK")
</pallas_src>

<mosaic_0001>
module attributes {stable_mosaic.version = 11 : i64} {
  func.func @_dqn_kernel(%arg0: i32, %arg1: memref<1x256x6xbf16, #tpu.memory_space<vmem>>, %arg2: memref<6x100xbf16, #tpu.memory_space<vmem>>, %arg3: memref<1x100xf32, #tpu.memory_space<vmem>>, %arg4: memref<100x100xbf16, #tpu.memory_space<vmem>>, %arg5: memref<1x100xf32, #tpu.memory_space<vmem>>, %arg6: memref<27x100x50xbf16, #tpu.memory_space<vmem>>, %arg7: memref<1x50xf32, #tpu.memory_space<vmem>>, %arg8: memref<27x50x50xbf16, #tpu.memory_space<vmem>>, %arg9: memref<1x50xf32, #tpu.memory_space<vmem>>, %arg10: memref<50x50xbf16, #tpu.memory_space<vmem>>, %arg11: memref<1x50xf32, #tpu.memory_space<vmem>>, %arg12: memref<50x128xbf16, #tpu.memory_space<vmem>>, %arg13: memref<1x128xf32, #tpu.memory_space<vmem>>, %arg14: memref<1x2x128xf32, #tpu.memory_space<vmem>>, %arg15: memref<256x100xbf16, #tpu.memory_space<vmem>>, %arg16: memref<128x50xbf16, #tpu.memory_space<vmem>>) attributes {dimension_semantics = [#tpu.dimension_semantics<parallel>], iteration_bounds = array<i64: 1>, scalar_prefetch = 0 : i64, scratch_operands = 2 : i64, tpu.core_type = #tpu.core_type<tc>, window_params = [{transform_indices = @transform_0, window_bounds = array<i64: 1, 256, 6>}, {pipeline_mode = #tpu.pipeline_mode<synchronous>, transform_indices = @transform_1, window_bounds = array<i64: 6, 100>}, {pipeline_mode = #tpu.pipeline_mode<synchronous>, transform_indices = @transform_2, window_bounds = array<i64: 1, 100>}, {pipeline_mode = #tpu.pipeline_mode<synchronous>, transform_indices = @transform_3, window_bounds = array<i64: 100, 100>}, {pipeline_mode = #tpu.pipeline_mode<synchronous>, transform_indices = @transform_4, window_bounds = array<i64: 1, 100>}, {pipeline_mode = #tpu.pipeline_mode<synchronous>, transform_indices = @transform_5, window_bounds = array<i64: 27, 100, 50>}, {pipeline_mode = #tpu.pipeline_mode<synchronous>, transform_indices = @transform_6, window_bounds = array<i64: 1, 50>}, {pipeline_mode = #tpu.pipeline_mode<synchronous>, transform_indices = @transform_7, window_bounds = array<i64: 27, 50, 50>}, {pipeline_mode = #tpu.pipeline_mode<synchronous>, transform_indices = @transform_8, window_bounds = array<i64: 1, 50>}, {pipeline_mode = #tpu.pipeline_mode<synchronous>, transform_indices = @transform_9, window_bounds = array<i64: 50, 50>}, {pipeline_mode = #tpu.pipeline_mode<synchronous>, transform_indices = @transform_10, window_bounds = array<i64: 1, 50>}, {pipeline_mode = #tpu.pipeline_mode<synchronous>, transform_indices = @transform_11, window_bounds = array<i64: 50, 128>}, {pipeline_mode = #tpu.pipeline_mode<synchronous>, transform_indices = @transform_12, window_bounds = array<i64: 1, 128>}, {transform_indices = @transform_13, window_bounds = array<i64: 1, 2, 128>}]} {
    %c0 = arith.constant 0 : index
    %c0_0 = arith.constant 0 : index
    %c0_1 = arith.constant 0 : index
    %0 = vector.load %arg1[%c0, %c0_0, %c0_1] : memref<1x256x6xbf16, #tpu.memory_space<vmem>>, vector<1x256x6xbf16>
    %1 = vector.shape_cast %0 : vector<1x256x6xbf16> to vector<256x6xbf16>
    %c0_2 = arith.constant 0 : index
    %c0_3 = arith.constant 0 : index
    %2 = vector.load %arg2[%c0_2, %c0_3] : memref<6x100xbf16, #tpu.memory_space<vmem>>, vector<6x100xbf16>
    %cst = arith.constant dense<0.000000e+00> : vector<256x100xf32>
    %3 = tpu.matmul %1, %2, %cst {dimension_numbers = #tpu.dot_dimension_numbers<[1], [0], [0], [1], [0, 0, 1, 1], [], []>} : vector<256x6xbf16>, vector<6x100xbf16>, vector<256x100xf32> -> vector<256x100xf32>
    %c0_4 = arith.constant 0 : index
    %c0_5 = arith.constant 0 : index
    %4 = vector.load %arg3[%c0_4, %c0_5] : memref<1x100xf32, #tpu.memory_space<vmem>>, vector<1x100xf32>
    %5 = vector.broadcast %4 : vector<1x100xf32> to vector<256x100xf32>
    %6 = arith.addf %3, %5 : vector<256x100xf32>
    %cst_6 = arith.constant 0.000000e+00 : f32
    %7 = vector.broadcast %cst_6 : f32 to vector<256x100xf32>
    %8 = arith.cmpf ogt, %6, %7 : vector<256x100xf32>
    %cst_7 = arith.constant 0.000000e+00 : f32
    %9 = vector.broadcast %cst_7 : f32 to vector<256x100xf32>
    %10 = arith.minimumf %6, %9 : vector<256x100xf32>
    %11 = math.exp %10 : vector<256x100xf32>
    %cst_8 = arith.constant 1.000000e+00 : f32
    %12 = vector.broadcast %cst_8 : f32 to vector<256x100xf32>
    %13 = arith.subf %11, %12 : vector<256x100xf32>
    %14 = arith.select %8, %6, %13 : vector<256x100xi1>, vector<256x100xf32>
    %15 = arith.truncf %14 : vector<256x100xf32> to vector<256x100xbf16>
    %c0_9 = arith.constant 0 : index
    %c0_10 = arith.constant 0 : index
    %16 = vector.load %arg4[%c0_9, %c0_10] : memref<100x100xbf16, #tpu.memory_space<vmem>>, vector<100x100xbf16>
    %cst_11 = arith.constant dense<0.000000e+00> : vector<256x100xf32>
    %17 = tpu.matmul %15, %16, %cst_11 {dimension_numbers = #tpu.dot_dimension_numbers<[1], [0], [0], [1], [0, 0, 1, 1], [], []>} : vector<256x100xbf16>, vector<100x100xbf16>, vector<256x100xf32> -> vector<256x100xf32>
    %c0_12 = arith.constant 0 : index
    %c0_13 = arith.constant 0 : index
    %18 = vector.load %arg5[%c0_12, %c0_13] : memref<1x100xf32, #tpu.memory_space<vmem>>, vector<1x100xf32>
    %19 = vector.broadcast %18 : vector<1x100xf32> to vector<256x100xf32>
    %20 = arith.addf %17, %19 : vector<256x100xf32>
    %cst_14 = arith.constant 0.000000e+00 : f32
    %21 = vector.broadcast %cst_14 : f32 to vector<256x100xf32>
    %22 = arith.cmpf ogt, %20, %21 : vector<256x100xf32>
    %cst_15 = arith.constant 0.000000e+00 : f32
    %23 = vector.broadcast %cst_15 : f32 to vector<256x100xf32>
    %24 = arith.minimumf %20, %23 : vector<256x100xf32>
    %25 = math.exp %24 : vector<256x100xf32>
    %cst_16 = arith.constant 1.000000e+00 : f32
    %26 = vector.broadcast %cst_16 : f32 to vector<256x100xf32>
    %27 = arith.subf %25, %26 : vector<256x100xf32>
    %28 = arith.select %22, %20, %27 : vector<256x100xi1>, vector<256x100xf32>
    %29 = arith.truncf %28 : vector<256x100xf32> to vector<256x100xbf16>
    %c0_17 = arith.constant 0 : index
    %c0_18 = arith.constant 0 : index
    %30 = vector.load %arg15[%c0_17, %c0_18] : memref<256x100xbf16, #tpu.memory_space<vmem>>, vector<256x100xbf16>
    tpu.vector_store %arg15[%c0_17, %c0_18], %29 {strides = array<i32>} : memref<256x100xbf16, #tpu.memory_space<vmem>>, vector<256x100xbf16>,
    %cst_19 = arith.constant 0.000000e+00 : f32
    %31 = vector.broadcast %cst_19 : f32 to vector<128x50xf32>
    %c0_20 = arith.constant 0 : index
    %c0_21 = arith.constant 0 : index
    %32 = vector.load %arg15[%c0_20, %c0_21] : memref<256x100xbf16, #tpu.memory_space<vmem>>, vector<128x100xbf16>
    %c0_22 = arith.constant 0 : index
    %c0_23 = arith.constant 0 : index
    %c0_24 = arith.constant 0 : index
    %33 = vector.load %arg6[%c0_22, %c0_23, %c0_24] : memref<27x100x50xbf16, #tpu.memory_space<vmem>>, vector<1x100x50xbf16>
    %34 = vector.shape_cast %33 : vector<1x100x50xbf16> to vector<100x50xbf16>
    %cst_25 = arith.constant dense<0.000000e+00> : vector<128x50xf32>
    %35 = tpu.matmul %32, %34, %cst_25 {dimension_numbers = #tpu.dot_dimension_numbers<[1], [0], [0], [1], [0, 0, 1, 1], [], []>} : vector<128x100xbf16>, vector<100x50xbf16>, vector<128x50xf32> -> vector<128x50xf32>
    %36 = arith.addf %31, %35 : vector<128x50xf32>
    %c2 = arith.constant 2 : index
    %c0_26 = arith.constant 0 : index
    %37 = vector.load %arg15[%c2, %c0_26] : memref<256x100xbf16, #tpu.memory_space<vmem>>, vector<128x100xbf16>
    %c1 = arith.constant 1 : index
    %c0_27 = arith.constant 0 : index
    %c0_28 = arith.constant 0 : index
    %38 = vector.load %arg6[%c1, %c0_27, %c0_28] : memref<27x100x50xbf16, #tpu.memory_space<vmem>>, vector<1x100x50xbf16>
    %39 = vector.shape_cast %38 : vector<1x100x50xbf16> to vector<100x50xbf16>
    %cst_29 = arith.constant dense<0.000000e+00> : vector<128x50xf32>
    %40 = tpu.matmul %37, %39, %cst_29 {dimension_numbers = #tpu.dot_dimension_numbers<[1], [0], [0], [1], [0, 0, 1, 1], [], []>} : vector<128x100xbf16>, vector<100x50xbf16>, vector<128x50xf32> -> vector<128x50xf32>
    %41 = arith.addf %36, %40 : vector<128x50xf32>
    %c4 = arith.constant 4 : index
    %c0_30 = arith.constant 0 : index
    %42 = vector.load %arg15[%c4, %c0_30] : memref<256x100xbf16, #tpu.memory_space<vmem>>, vector<128x100xbf16>
    %c2_31 = arith.constant 2 : index
    %c0_32 = arith.constant 0 : index
    %c0_33 = arith.constant 0 : index
    %43 = vector.load %arg6[%c2_31, %c0_32, %c0_33] : memref<27x100x50xbf16, #tpu.memory_space<vmem>>, vector<1x100x50xbf16>
    %44 = vector.shape_cast %43 : vector<1x100x50xbf16> to vector<100x50xbf16>
    %cst_34 = arith.constant dense<0.000000e+00> : vector<128x50xf32>
    %45 = tpu.matmul %42, %44, %cst_34 {dimension_numbers = #tpu.dot_dimension_numbers<[1], [0], [0], [1], [0, 0, 1, 1], [], []>} : vector<128x100xbf16>, vector<100x50xbf16>, vector<128x50xf32> -> vector<128x50xf32>
    %46 = arith.addf %41, %45 : vector<128x50xf32>
    %c10 = arith.constant 10 : index
    %c0_35 = arith.constant 0 : index
    %47 = vector.load %arg15[%c10, %c0_35] : memref<256x100xbf16, #tpu.memory_space<vmem>>, vector<128x100xbf16>
    %c3 = arith.constant 3 : index
    %c0_36 = arith.constant 0 : index
    %c0_37 = arith.constant 0 : index
    %48 = vector.load %arg6[%c3, %c0_36, %c0_37] : memref<27x100x50xbf16, #tpu.memory_space<vmem>>, vector<1x100x50xbf16>
    %49 = vector.shape_cast %48 : vector<1x100x50xbf16> to vector<100x50xbf16>
    %cst_38 = arith.constant dense<0.000000e+00> : vector<128x50xf32>
    %50 = tpu.matmul %47, %49, %cst_38 {dimension_numbers = #tpu.dot_dimension_numbers<[1], [0], [0], [1], [0, 0, 1, 1], [], []>} : vector<128x100xbf16>, vector<100x50xbf16>, vector<128x50xf32> -> vector<128x50xf32>
    %51 = arith.addf %46, %50 : vector<128x50xf32>
    %c12 = arith.constant 12 : index
    %c0_39 = arith.constant 0 : index
    %52 = vector.load %arg15[%c12, %c0_39] : memref<256x100xbf16, #tpu.memory_space<vmem>>, vector<128x100xbf16>
    %c4_40 = arith.constant 4 : index
    %c0_41 = arith.constant 0 : index
    %c0_42 = arith.constant 0 : index
    %53 = vector.load %arg6[%c4_40, %c0_41, %c0_42] : memref<27x100x50xbf16, #tpu.memory_space<vmem>>, vector<1x100x50xbf16>
    %54 = vector.shape_cast %53 : vector<1x100x50xbf16> to vector<100x50xbf16>
    %cst_43 = arith.constant dense<0.000000e+00> : vector<128x50xf32>
    %55 = tpu.matmul %52, %54, %cst_43 {dimension_numbers = #tpu.dot_dimension_numbers<[1], [0], [0], [1], [0, 0, 1, 1], [], []>} : vector<128x100xbf16>, vector<100x50xbf16>, vector<128x50xf32> -> vector<128x50xf32>
    %56 = arith.addf %51, %55 : vector<128x50xf32>
    %c14 = arith.constant 14 : index
    %c0_44 = arith.constant 0 : index
    %57 = vector.load %arg15[%c14, %c0_44] : memref<256x100xbf16, #tpu.memory_space<vmem>>, vector<128x100xbf16>
    %c5 = arith.constant 5 : index
    %c0_45 = arith.constant 0 : index
    %c0_46 = arith.constant 0 : index
    %58 = vector.load %arg6[%c5, %c0_45, %c0_46] : memref<27x100x50xbf16, #tpu.memory_space<vmem>>, vector<1x100x50xbf16>
    %59 = vector.shape_cast %58 : vector<1x100x50xbf16> to vector<100x50xbf16>
    %cst_47 = arith.constant dense<0.000000e+00> : vector<128x50xf32>
    %60 = tpu.matmul %57, %59, %cst_47 {dimension_numbers = #tpu.dot_dimension_numbers<[1], [0], [0], [1], [0, 0, 1, 1], [], []>} : vector<128x100xbf16>, vector<100x50xbf16>, vector<128x50xf32> -> vector<128x50xf32>
    %61 = arith.addf %56, %60 : vector<128x50xf32>
    %c20 = arith.constant 20 : index
    %c0_48 = arith.constant 0 : index
    %62 = vector.load %arg15[%c20, %c0_48] : memref<256x100xbf16, #tpu.memory_space<vmem>>, vector<128x100xbf16>
    %c6 = arith.constant 6 : index
    %c0_49 = arith.constant 0 : index
    %c0_50 = arith.constant 0 : index
    %63 = vector.load %arg6[%c6, %c0_49, %c0_50] : memref<27x100x50xbf16, #tpu.memory_space<vmem>>, vector<1x100x50xbf16>
    %64 = vector.shape_cast %63 : vector<1x100x50xbf16> to vector<100x50xbf16>
    %cst_51 = arith.constant dense<0.000000e+00> : vector<128x50xf32>
    %65 = tpu.matmul %62, %64, %cst_51 {dimension_numbers = #tpu.dot_dimension_numbers<[1], [0], [0], [1], [0, 0, 1, 1], [], []>} : vector<128x100xbf16>, vector<100x50xbf16>, vector<128x50xf32> -> vector<128x50xf32>
    %66 = arith.addf %61, %65 : vector<128x50xf32>
    %c22 = arith.constant 22 : index
    %c0_52 = arith.constant 0 : index
    %67 = vector.load %arg15[%c22, %c0_52] : memref<256x100xbf16, #tpu.memory_space<vmem>>, vector<128x100xbf16>
    %c7 = arith.constant 7 : index
    %c0_53 = arith.constant 0 : index
    %c0_54 = arith.constant 0 : index
    %68 = vector.load %arg6[%c7, %c0_53, %c0_54] : memref<27x100x50xbf16, #tpu.memory_space<vmem>>, vector<1x100x50xbf16>
    %69 = vector.shape_cast %68 : vector<1x100x50xbf16> to vector<100x50xbf16>
    %cst_55 = arith.constant dense<0.000000e+00> : vector<128x50xf32>
    %70 = tpu.matmul %67, %69, %cst_55 {dimension_numbers = #tpu.dot_dimension_numbers<[1], [0], [0], [1], [0, 0, 1, 1], [], []>} : vector<128x100xbf16>, vector<100x50xbf16>, vector<128x50xf32> -> vector<128x50xf32>
    %71 = arith.addf %66, %70 : vector<128x50xf32>
    %c24 = arith.constant 24 : index
    %c0_56 = arith.constant 0 : index
    %72 = vector.load %arg15[%c24, %c0_56] : memref<256x100xbf16, #tpu.memory_space<vmem>>, vector<128x100xbf16>
    %c8 = arith.constant 8 : index
    %c0_57 = arith.constant 0 : index
    %c0_58 = arith.constant 0 : index
    %73 = vector.load %arg6[%c8, %c0_57, %c0_58] : memref<27x100x50xbf16, #tpu.memory_space<vmem>>, vector<1x100x50xbf16>
    %74 = vector.shape_cast %73 : vector<1x100x50xbf16> to vector<100x50xbf16>
    %cst_59 = arith.constant dense<0.000000e+00> : vector<128x50xf32>
    %75 = tpu.matmul %72, %74, %cst_59 {dimension_numbers = #tpu.dot_dimension_numbers<[1], [0], [0], [1], [0, 0, 1, 1], [], []>} : vector<128x100xbf16>, vector<100x50xbf16>, vector<128x50xf32> -> vector<128x50xf32>
    %76 = arith.addf %71, %75 : vector<128x50xf32>
    %c50 = arith.constant 50 : index
    %c0_60 = arith.constant 0 : index
    %77 = vector.load %arg15[%c50, %c0_60] : memref<256x100xbf16, #tpu.memory_space<vmem>>, vector<128x100xbf16>
    %c9 = arith.constant 9 : index
    %c0_61 = arith.constant 0 : index
    %c0_62 = arith.constant 0 : index
    %78 = vector.load %arg6[%c9, %c0_61, %c0_62] : memref<27x100x50xbf16, #tpu.memory_space<vmem>>, vector<1x100x50xbf16>
    %79 = vector.shape_cast %78 : vector<1x100x50xbf16> to vector<100x50xbf16>
    %cst_63 = arith.constant dense<0.000000e+00> : vector<128x50xf32>
    %80 = tpu.matmul %77, %79, %cst_63 {dimension_numbers = #tpu.dot_dimension_numbers<[1], [0], [0], [1], [0, 0, 1, 1], [], []>} : vector<128x100xbf16>, vector<100x50xbf16>, vector<128x50xf32> -> vector<128x50xf32>
    %81 = arith.addf %76, %80 : vector<128x50xf32>
    %c52 = arith.constant 52 : index
    %c0_64 = arith.constant 0 : index
    %82 = vector.load %arg15[%c52, %c0_64] : memref<256x100xbf16, #tpu.memory_space<vmem>>, vector<128x100xbf16>
    %c10_65 = arith.constant 10 : index
    %c0_66 = arith.constant 0 : index
    %c0_67 = arith.constant 0 : index
    %83 = vector.load %arg6[%c10_65, %c0_66, %c0_67] : memref<27x100x50xbf16, #tpu.memory_space<vmem>>, vector<1x100x50xbf16>
    %84 = vector.shape_cast %83 : vector<1x100x50xbf16> to vector<100x50xbf16>
    %cst_68 = arith.constant dense<0.000000e+00> : vector<128x50xf32>
    %85 = tpu.matmul %82, %84, %cst_68 {dimension_numbers = #tpu.dot_dimension_numbers<[1], [0], [0], [1], [0, 0, 1, 1], [], []>} : vector<128x100xbf16>, vector<100x50xbf16>, vector<128x50xf32> -> vector<128x50xf32>
    %86 = arith.addf %81, %85 : vector<128x50xf32>
    %c54 = arith.constant 54 : index
    %c0_69 = arith.constant 0 : index
    %87 = vector.load %arg15[%c54, %c0_69] : memref<256x100xbf16, #tpu.memory_space<vmem>>, vector<128x100xbf16>
    %c11 = arith.constant 11 : index
    %c0_70 = arith.constant 0 : index
    %c0_71 = arith.constant 0 : index
    %88 = vector.load %arg6[%c11, %c0_70, %c0_71] : memref<27x100x50xbf16, #tpu.memory_space<vmem>>, vector<1x100x50xbf16>
    %89 = vector.shape_cast %88 : vector<1x100x50xbf16> to vector<100x50xbf16>
    %cst_72 = arith.constant dense<0.000000e+00> : vector<128x50xf32>
    %90 = tpu.matmul %87, %89, %cst_72 {dimension_numbers = #tpu.dot_dimension_numbers<[1], [0], [0], [1], [0, 0, 1, 1], [], []>} : vector<128x100xbf16>, vector<100x50xbf16>, vector<128x50xf32> -> vector<128x50xf32>
    %91 = arith.addf %86, %90 : vector<128x50xf32>
    %c60 = arith.constant 60 : index
    %c0_73 = arith.constant 0 : index
    %92 = vector.load %arg15[%c60, %c0_73] : memref<256x100xbf16, #tpu.memory_space<vmem>>, vector<128x100xbf16>
    %c12_74 = arith.constant 12 : index
    %c0_75 = arith.constant 0 : index
    %c0_76 = arith.constant 0 : index
    %93 = vector.load %arg6[%c12_74, %c0_75, %c0_76] : memref<27x100x50xbf16, #tpu.memory_space<vmem>>, vector<1x100x50xbf16>
    %94 = vector.shape_cast %93 : vector<1x100x50xbf16> to vector<100x50xbf16>
    %cst_77 = arith.constant dense<0.000000e+00> : vector<128x50xf32>
    %95 = tpu.matmul %92, %94, %cst_77 {dimension_numbers = #tpu.dot_dimension_numbers<[1], [0], [0], [1], [0, 0, 1, 1], [], []>} : vector<128x100xbf16>, vector<100x50xbf16>, vector<128x50xf32> -> vector<128x50xf32>
    %96 = arith.addf %91, %95 : vector<128x50xf32>
    %c62 = arith.constant 62 : index
    %c0_78 = arith.constant 0 : index
    %97 = vector.load %arg15[%c62, %c0_78] : memref<256x100xbf16, #tpu.memory_space<vmem>>, vector<128x100xbf16>
    %c13 = arith.constant 13 : index
    %c0_79 = arith.constant 0 : index
    %c0_80 = arith.constant 0 : index
    %98 = vector.load %arg6[%c13, %c0_79, %c0_80] : memref<27x100x50xbf16, #tpu.memory_space<vmem>>, vector<1x100x50xbf16>
    %99 = vector.shape_cast %98 : vector<1x100x50xbf16> to vector<100x50xbf16>
    %cst_81 = arith.constant dense<0.000000e+00> : vector<128x50xf32>
    %100 = tpu.matmul %97, %99, %cst_81 {dimension_numbers = #tpu.dot_dimension_numbers<[1], [0], [0], [1], [0, 0, 1, 1], [], []>} : vector<128x100xbf16>, vector<100x50xbf16>, vector<128x50xf32> -> vector<128x50xf32>
    %101 = arith.addf %96, %100 : vector<128x50xf32>
    %c64 = arith.constant 64 : index
    %c0_82 = arith.constant 0 : index
    %102 = vector.load %arg15[%c64, %c0_82] : memref<256x100xbf16, #tpu.memory_space<vmem>>, vector<128x100xbf16>
    %c14_83 = arith.constant 14 : index
    %c0_84 = arith.constant 0 : index
    %c0_85 = arith.constant 0 : index
    %103 = vector.load %arg6[%c14_83, %c0_84, %c0_85] : memref<27x100x50xbf16, #tpu.memory_space<vmem>>, vector<1x100x50xbf16>
    %104 = vector.shape_cast %103 : vector<1x100x50xbf16> to vector<100x50xbf16>
    %cst_86 = arith.constant dense<0.000000e+00> : vector<128x50xf32>
    %105 = tpu.matmul %102, %104, %cst_86 {dimension_numbers = #tpu.dot_dimension_numbers<[1], [0], [0], [1], [0, 0, 1, 1], [], []>} : vector<128x100xbf16>, vector<100x50xbf16>, vector<128x50xf32> -> vector<128x50xf32>
    %106 = arith.addf %101, %105 : vector<128x50xf32>
    %c70 = arith.constant 70 : index
    %c0_87 = arith.constant 0 : index
    %107 = vector.load %arg15[%c70, %c0_87] : memref<256x100xbf16, #tpu.memory_space<vmem>>, vector<128x100xbf16>
    %c15 = arith.constant 15 : index
    %c0_88 = arith.constant 0 : index
    %c0_89 = arith.constant 0 : index
    %108 = vector.load %arg6[%c15, %c0_88, %c0_89] : memref<27x100x50xbf16, #tpu.memory_space<vmem>>, vector<1x100x50xbf16>
    %109 = vector.shape_cast %108 : vector<1x100x50xbf16> to vector<100x50xbf16>
    %cst_90 = arith.constant dense<0.000000e+00> : vector<128x50xf32>
    %110 = tpu.matmul %107, %109, %cst_90 {dimension_numbers = #tpu.dot_dimension_numbers<[1], [0], [0], [1], [0, 0, 1, 1], [], []>} : vector<128x100xbf16>, vector<100x50xbf16>, vector<128x50xf32> -> vector<128x50xf32>
    %111 = arith.addf %106, %110 : vector<128x50xf32>
    %c72 = arith.constant 72 : index
    %c0_91 = arith.constant 0 : index
    %112 = vector.load %arg15[%c72, %c0_91] : memref<256x100xbf16, #tpu.memory_space<vmem>>, vector<128x100xbf16>
    %c16 = arith.constant 16 : index
    %c0_92 = arith.constant 0 : index
    %c0_93 = arith.constant 0 : index
    %113 = vector.load %arg6[%c16, %c0_92, %c0_93] : memref<27x100x50xbf16, #tpu.memory_space<vmem>>, vector<1x100x50xbf16>
    %114 = vector.shape_cast %113 : vector<1x100x50xbf16> to vector<100x50xbf16>
    %cst_94 = arith.constant dense<0.000000e+00> : vector<128x50xf32>
    %115 = tpu.matmul %112, %114, %cst_94 {dimension_numbers = #tpu.dot_dimension_numbers<[1], [0], [0], [1], [0, 0, 1, 1], [], []>} : vector<128x100xbf16>, vector<100x50xbf16>, vector<128x50xf32> -> vector<128x50xf32>
    %116 = arith.addf %111, %115 : vector<128x50xf32>
    %c74 = arith.constant 74 : index
    %c0_95 = arith.constant 0 : index
    %117 = vector.load %arg15[%c74, %c0_95] : memref<256x100xbf16, #tpu.memory_space<vmem>>, vector<128x100xbf16>
    %c17 = arith.constant 17 : index
    %c0_96 = arith.constant 0 : index
    %c0_97 = arith.constant 0 : index
    %118 = vector.load %arg6[%c17, %c0_96, %c0_97] : memref<27x100x50xbf16, #tpu.memory_space<vmem>>, vector<1x100x50xbf16>
    %119 = vector.shape_cast %118 : vector<1x100x50xbf16> to vector<100x50xbf16>
    %cst_98 = arith.constant dense<0.000000e+00> : vector<128x50xf32>
    %120 = tpu.matmul %117, %119, %cst_98 {dimension_numbers = #tpu.dot_dimension_numbers<[1], [0], [0], [1], [0, 0, 1, 1], [], []>} : vector<128x100xbf16>, vector<100x50xbf16>, vector<128x50xf32> -> vector<128x50xf32>
    %121 = arith.addf %116, %120 : vector<128x50xf32>
    %c100 = arith.constant 100 : index
    %c0_99 = arith.constant 0 : index
    %122 = vector.load %arg15[%c100, %c0_99] : memref<256x100xbf16, #tpu.memory_space<vmem>>, vector<128x100xbf16>
    %c18 = arith.constant 18 : index
    %c0_100 = arith.constant 0 : index
    %c0_101 = arith.constant 0 : index
    %123 = vector.load %arg6[%c18, %c0_100, %c0_101] : memref<27x100x50xbf16, #tpu.memory_space<vmem>>, vector<1x100x50xbf16>
    %124 = vector.shape_cast %123 : vector<1x100x50xbf16> to vector<100x50xbf16>
    %cst_102 = arith.constant dense<0.000000e+00> : vector<128x50xf32>
    %125 = tpu.matmul %122, %124, %cst_102 {dimension_numbers = #tpu.dot_dimension_numbers<[1], [0], [0], [1], [0, 0, 1, 1], [], []>} : vector<128x100xbf16>, vector<100x50xbf16>, vector<128x50xf32> -> vector<128x50xf32>
    %126 = arith.addf %121, %125 : vector<128x50xf32>
    %c102 = arith.constant 102 : index
    %c0_103 = arith.constant 0 : index
    %127 = vector.load %arg15[%c102, %c0_103] : memref<256x100xbf16, #tpu.memory_space<vmem>>, vector<128x100xbf16>
    %c19 = arith.constant 19 : index
    %c0_104 = arith.constant 0 : index
    %c0_105 = arith.constant 0 : index
    %128 = vector.load %arg6[%c19, %c0_104, %c0_105] : memref<27x100x50xbf16, #tpu.memory_space<vmem>>, vector<1x100x50xbf16>
    %129 = vector.shape_cast %128 : vector<1x100x50xbf16> to vector<100x50xbf16>
    %cst_106 = arith.constant dense<0.000000e+00> : vector<128x50xf32>
    %130 = tpu.matmul %127, %129, %cst_106 {dimension_numbers = #tpu.dot_dimension_numbers<[1], [0], [0], [1], [0, 0, 1, 1], [], []>} : vector<128x100xbf16>, vector<100x50xbf16>, vector<128x50xf32> -> vector<128x50xf32>
    %131 = arith.addf %126, %130 : vector<128x50xf32>
    %c104 = arith.constant 104 : index
    %c0_107 = arith.constant 0 : index
    %132 = vector.load %arg15[%c104, %c0_107] : memref<256x100xbf16, #tpu.memory_space<vmem>>, vector<128x100xbf16>
    %c20_108 = arith.constant 20 : index
    %c0_109 = arith.constant 0 : index
    %c0_110 = arith.constant 0 : index
    %133 = vector.load %arg6[%c20_108, %c0_109, %c0_110] : memref<27x100x50xbf16, #tpu.memory_space<vmem>>, vector<1x100x50xbf16>
    %134 = vector.shape_cast %133 : vector<1x100x50xbf16> to vector<100x50xbf16>
    %cst_111 = arith.constant dense<0.000000e+00> : vector<128x50xf32>
    %135 = tpu.matmul %132, %134, %cst_111 {dimension_numbers = #tpu.dot_dimension_numbers<[1], [0], [0], [1], [0, 0, 1, 1], [], []>} : vector<128x100xbf16>, vector<100x50xbf16>, vector<128x50xf32> -> vector<128x50xf32>
    %136 = arith.addf %131, %135 : vector<128x50xf32>
    %c110 = arith.constant 110 : index
    %c0_112 = arith.constant 0 : index
    %137 = vector.load %arg15[%c110, %c0_112] : memref<256x100xbf16, #tpu.memory_space<vmem>>, vector<128x100xbf16>
    %c21 = arith.constant 21 : index
    %c0_113 = arith.constant 0 : index
    %c0_114 = arith.constant 0 : index
    %138 = vector.load %arg6[%c21, %c0_113, %c0_114] : memref<27x100x50xbf16, #tpu.memory_space<vmem>>, vector<1x100x50xbf16>
    %139 = vector.shape_cast %138 : vector<1x100x50xbf16> to vector<100x50xbf16>
    %cst_115 = arith.constant dense<0.000000e+00> : vector<128x50xf32>
    %140 = tpu.matmul %137, %139, %cst_115 {dimension_numbers = #tpu.dot_dimension_numbers<[1], [0], [0], [1], [0, 0, 1, 1], [], []>} : vector<128x100xbf16>, vector<100x50xbf16>, vector<128x50xf32> -> vector<128x50xf32>
    %141 = arith.addf %136, %140 : vector<128x50xf32>
    %c112 = arith.constant 112 : index
    %c0_116 = arith.constant 0 : index
    %142 = vector.load %arg15[%c112, %c0_116] : memref<256x100xbf16, #tpu.memory_space<vmem>>, vector<128x100xbf16>
    %c22_117 = arith.constant 22 : index
    %c0_118 = arith.constant 0 : index
    %c0_119 = arith.constant 0 : index
    %143 = vector.load %arg6[%c22_117, %c0_118, %c0_119] : memref<27x100x50xbf16, #tpu.memory_space<vmem>>, vector<1x100x50xbf16>
    %144 = vector.shape_cast %143 : vector<1x100x50xbf16> to vector<100x50xbf16>
    %cst_120 = arith.constant dense<0.000000e+00> : vector<128x50xf32>
    %145 = tpu.matmul %142, %144, %cst_120 {dimension_numbers = #tpu.dot_dimension_numbers<[1], [0], [0], [1], [0, 0, 1, 1], [], []>} : vector<128x100xbf16>, vector<100x50xbf16>, vector<128x50xf32> -> vector<128x50xf32>
    %146 = arith.addf %141, %145 : vector<128x50xf32>
    %c114 = arith.constant 114 : index
    %c0_121 = arith.constant 0 : index
    %147 = vector.load %arg15[%c114, %c0_121] : memref<256x100xbf16, #tpu.memory_space<vmem>>, vector<128x100xbf16>
    %c23 = arith.constant 23 : index
    %c0_122 = arith.constant 0 : index
    %c0_123 = arith.constant 0 : index
    %148 = vector.load %arg6[%c23, %c0_122, %c0_123] : memref<27x100x50xbf16, #tpu.memory_space<vmem>>, vector<1x100x50xbf16>
    %149 = vector.shape_cast %148 : vector<1x100x50xbf16> to vector<100x50xbf16>
    %cst_124 = arith.constant dense<0.000000e+00> : vector<128x50xf32>
    %150 = tpu.matmul %147, %149, %cst_124 {dimension_numbers = #tpu.dot_dimension_numbers<[1], [0], [0], [1], [0, 0, 1, 1], [], []>} : vector<128x100xbf16>, vector<100x50xbf16>, vector<128x50xf32> -> vector<128x50xf32>
    %151 = arith.addf %146, %150 : vector<128x50xf32>
    %c120 = arith.constant 120 : index
    %c0_125 = arith.constant 0 : index
    %152 = vector.load %arg15[%c120, %c0_125] : memref<256x100xbf16, #tpu.memory_space<vmem>>, vector<128x100xbf16>
    %c24_126 = arith.constant 24 : index
    %c0_127 = arith.constant 0 : index
    %c0_128 = arith.constant 0 : index
    %153 = vector.load %arg6[%c24_126, %c0_127, %c0_128] : memref<27x100x50xbf16, #tpu.memory_space<vmem>>, vector<1x100x50xbf16>
    %154 = vector.shape_cast %153 : vector<1x100x50xbf16> to vector<100x50xbf16>
    %cst_129 = arith.constant dense<0.000000e+00> : vector<128x50xf32>
    %155 = tpu.matmul %152, %154, %cst_129 {dimension_numbers = #tpu.dot_dimension_numbers<[1], [0], [0], [1], [0, 0, 1, 1], [], []>} : vector<128x100xbf16>, vector<100x50xbf16>, vector<128x50xf32> -> vector<128x50xf32>
    %156 = arith.addf %151, %155 : vector<128x50xf32>
    %c122 = arith.constant 122 : index
    %c0_130 = arith.constant 0 : index
    %157 = vector.load %arg15[%c122, %c0_130] : memref<256x100xbf16, #tpu.memory_space<vmem>>, vector<128x100xbf16>
    %c25 = arith.constant 25 : index
    %c0_131 = arith.constant 0 : index
    %c0_132 = arith.constant 0 : index
    %158 = vector.load %arg6[%c25, %c0_131, %c0_132] : memref<27x100x50xbf16, #tpu.memory_space<vmem>>, vector<1x100x50xbf16>
    %159 = vector.shape_cast %158 : vector<1x100x50xbf16> to vector<100x50xbf16>
    %cst_133 = arith.constant dense<0.000000e+00> : vector<128x50xf32>
    %160 = tpu.matmul %157, %159, %cst_133 {dimension_numbers = #tpu.dot_dimension_numbers<[1], [0], [0], [1], [0, 0, 1, 1], [], []>} : vector<128x100xbf16>, vector<100x50xbf16>, vector<128x50xf32> -> vector<128x50xf32>
    %161 = arith.addf %156, %160 : vector<128x50xf32>
    %c124 = arith.constant 124 : index
    %c0_134 = arith.constant 0 : index
    %162 = vector.load %arg15[%c124, %c0_134] : memref<256x100xbf16, #tpu.memory_space<vmem>>, vector<128x100xbf16>
    %c26 = arith.constant 26 : index
    %c0_135 = arith.constant 0 : index
    %c0_136 = arith.constant 0 : index
    %163 = vector.load %arg6[%c26, %c0_135, %c0_136] : memref<27x100x50xbf16, #tpu.memory_space<vmem>>, vector<1x100x50xbf16>
    %164 = vector.shape_cast %163 : vector<1x100x50xbf16> to vector<100x50xbf16>
    %cst_137 = arith.constant dense<0.000000e+00> : vector<128x50xf32>
    %165 = tpu.matmul %162, %164, %cst_137 {dimension_numbers = #tpu.dot_dimension_numbers<[1], [0], [0], [1], [0, 0, 1, 1], [], []>} : vector<128x100xbf16>, vector<100x50xbf16>, vector<128x50xf32> -> vector<128x50xf32>
    %166 = arith.addf %161, %165 : vector<128x50xf32>
    %c0_138 = arith.constant 0 : index
    %c0_139 = arith.constant 0 : index
    %167 = vector.load %arg7[%c0_138, %c0_139] : memref<1x50xf32, #tpu.memory_space<vmem>>, vector<1x50xf32>
    %168 = vector.broadcast %167 : vector<1x50xf32> to vector<128x50xf32>
    %169 = arith.addf %166, %168 : vector<128x50xf32>
    %cst_140 = arith.constant 0.000000e+00 : f32
    %170 = vector.broadcast %cst_140 : f32 to vector<128x50xf32>
    %171 = arith.cmpf ogt, %169, %170 : vector<128x50xf32>
    %cst_141 = arith.constant 0.000000e+00 : f32
    %172 = vector.broadcast %cst_141 : f32 to vector<128x50xf32>
    %173 = arith.minimumf %169, %172 : vector<128x50xf32>
    %174 = math.exp %173 : vector<128x50xf32>
    %cst_142 = arith.constant 1.000000e+00 : f32
    %175 = vector.broadcast %cst_142 : f32 to vector<128x50xf32>
    %176 = arith.subf %174, %175 : vector<128x50xf32>
    %177 = arith.select %171, %169, %176 : vector<128x50xi1>, vector<128x50xf32>
    %178 = arith.truncf %177 : vector<128x50xf32> to vector<128x50xbf16>
    %c0_143 = arith.constant 0 : index
    %c0_144 = arith.constant 0 : index
    %179 = vector.load %arg16[%c0_143, %c0_144] : memref<128x50xbf16, #tpu.memory_space<vmem>>, vector<128x50xbf16>
    tpu.vector_store %arg16[%c0_143, %c0_144], %178 {strides = array<i32>} : memref<128x50xbf16, #tpu.memory_space<vmem>>, vector<128x50xbf16>,
    %cst_145 = arith.constant 0.000000e+00 : f32
    %180 = vector.broadcast %cst_145 : f32 to vector<2x50xf32>
    %c0_146 = arith.constant 0 : index
    %c0_147 = arith.constant 0 : index
    %181 = vector.load %arg16[%c0_146, %c0_147] : memref<128x50xbf16, #tpu.memory_space<vmem>>, vector<2x50xbf16>
    %c0_148 = arith.constant 0 : index
    %c0_149 = arith.constant 0 : index
    %c0_150 = arith.constant 0 : index
    %182 = vector.load %arg8[%c0_148, %c0_149, %c0_150] : memref<27x50x50xbf16, #tpu.memory_space<vmem>>, vector<1x50x50xbf16>
    %183 = vector.shape_cast %182 : vector<1x50x50xbf16> to vector<50x50xbf16>
    %cst_151 = arith.constant dense<0.000000e+00> : vector<2x50xf32>
    %184 = tpu.matmul %181, %183, %cst_151 {dimension_numbers = #tpu.dot_dimension_numbers<[1], [0], [0], [1], [0, 0, 1, 1], [], []>} : vector<2x50xbf16>, vector<50x50xbf16>, vector<2x50xf32> -> vector<2x50xf32>
    %185 = arith.addf %180, %184 : vector<2x50xf32>
    %c2_152 = arith.constant 2 : index
    %c0_153 = arith.constant 0 : index
    %186 = vector.load %arg16[%c2_152, %c0_153] : memref<128x50xbf16, #tpu.memory_space<vmem>>, vector<2x50xbf16>
    %c1_154 = arith.constant 1 : index
    %c0_155 = arith.constant 0 : index
    %c0_156 = arith.constant 0 : index
    %187 = vector.load %arg8[%c1_154, %c0_155, %c0_156] : memref<27x50x50xbf16, #tpu.memory_space<vmem>>, vector<1x50x50xbf16>
    %188 = vector.shape_cast %187 : vector<1x50x50xbf16> to vector<50x50xbf16>
    %cst_157 = arith.constant dense<0.000000e+00> : vector<2x50xf32>
    %189 = tpu.matmul %186, %188, %cst_157 {dimension_numbers = #tpu.dot_dimension_numbers<[1], [0], [0], [1], [0, 0, 1, 1], [], []>} : vector<2x50xbf16>, vector<50x50xbf16>, vector<2x50xf32> -> vector<2x50xf32>
    %190 = arith.addf %185, %189 : vector<2x50xf32>
    %c4_158 = arith.constant 4 : index
    %c0_159 = arith.constant 0 : index
    %191 = vector.load %arg16[%c4_158, %c0_159] : memref<128x50xbf16, #tpu.memory_space<vmem>>, vector<2x50xbf16>
    %c2_160 = arith.constant 2 : index
    %c0_161 = arith.constant 0 : index
    %c0_162 = arith.constant 0 : index
    %192 = vector.load %arg8[%c2_160, %c0_161, %c0_162] : memref<27x50x50xbf16, #tpu.memory_space<vmem>>, vector<1x50x50xbf16>
    %193 = vector.shape_cast %192 : vector<1x50x50xbf16> to vector<50x50xbf16>
    %cst_163 = arith.constant dense<0.000000e+00> : vector<2x50xf32>
    %194 = tpu.matmul %191, %193, %cst_163 {dimension_numbers = #tpu.dot_dimension_numbers<[1], [0], [0], [1], [0, 0, 1, 1], [], []>} : vector<2x50xbf16>, vector<50x50xbf16>, vector<2x50xf32> -> vector<2x50xf32>
    %195 = arith.addf %190, %194 : vector<2x50xf32>
    %c10_164 = arith.constant 10 : index
    %c0_165 = arith.constant 0 : index
    %196 = vector.load %arg16[%c10_164, %c0_165] : memref<128x50xbf16, #tpu.memory_space<vmem>>, vector<2x50xbf16>
    %c3_166 = arith.constant 3 : index
    %c0_167 = arith.constant 0 : index
    %c0_168 = arith.constant 0 : index
    %197 = vector.load %arg8[%c3_166, %c0_167, %c0_168] : memref<27x50x50xbf16, #tpu.memory_space<vmem>>, vector<1x50x50xbf16>
    %198 = vector.shape_cast %197 : vector<1x50x50xbf16> to vector<50x50xbf16>
    %cst_169 = arith.constant dense<0.000000e+00> : vector<2x50xf32>
    %199 = tpu.matmul %196, %198, %cst_169 {dimension_numbers = #tpu.dot_dimension_numbers<[1], [0], [0], [1], [0, 0, 1, 1], [], []>} : vector<2x50xbf16>, vector<50x50xbf16>, vector<2x50xf32> -> vector<2x50xf32>
    %200 = arith.addf %195, %199 : vector<2x50xf32>
    %c12_170 = arith.constant 12 : index
    %c0_171 = arith.constant 0 : index
    %201 = vector.load %arg16[%c12_170, %c0_171] : memref<128x50xbf16, #tpu.memory_space<vmem>>, vector<2x50xbf16>
    %c4_172 = arith.constant 4 : index
    %c0_173 = arith.constant 0 : index
    %c0_174 = arith.constant 0 : index
    %202 = vector.load %arg8[%c4_172, %c0_173, %c0_174] : memref<27x50x50xbf16, #tpu.memory_space<vmem>>, vector<1x50x50xbf16>
    %203 = vector.shape_cast %202 : vector<1x50x50xbf16> to vector<50x50xbf16>
    %cst_175 = arith.constant dense<0.000000e+00> : vector<2x50xf32>
    %204 = tpu.matmul %201, %203, %cst_175 {dimension_numbers = #tpu.dot_dimension_numbers<[1], [0], [0], [1], [0, 0, 1, 1], [], []>} : vector<2x50xbf16>, vector<50x50xbf16>, vector<2x50xf32> -> vector<2x50xf32>
    %205 = arith.addf %200, %204 : vector<2x50xf32>
    %c14_176 = arith.constant 14 : index
    %c0_177 = arith.constant 0 : index
    %206 = vector.load %arg16[%c14_176, %c0_177] : memref<128x50xbf16, #tpu.memory_space<vmem>>, vector<2x50xbf16>
    %c5_178 = arith.constant 5 : index
    %c0_179 = arith.constant 0 : index
    %c0_180 = arith.constant 0 : index
    %207 = vector.load %arg8[%c5_178, %c0_179, %c0_180] : memref<27x50x50xbf16, #tpu.memory_space<vmem>>, vector<1x50x50xbf16>
    %208 = vector.shape_cast %207 : vector<1x50x50xbf16> to vector<50x50xbf16>
    %cst_181 = arith.constant dense<0.000000e+00> : vector<2x50xf32>
    %209 = tpu.matmul %206, %208, %cst_181 {dimension_numbers = #tpu.dot_dimension_numbers<[1], [0], [0], [1], [0, 0, 1, 1], [], []>} : vector<2x50xbf16>, vector<50x50xbf16>, vector<2x50xf32> -> vector<2x50xf32>
    %210 = arith.addf %205, %209 : vector<2x50xf32>
    %c20_182 = arith.constant 20 : index
    %c0_183 = arith.constant 0 : index
    %211 = vector.load %arg16[%c20_182, %c0_183] : memref<128x50xbf16, #tpu.memory_space<vmem>>, vector<2x50xbf16>
    %c6_184 = arith.constant 6 : index
    %c0_185 = arith.constant 0 : index
    %c0_186 = arith.constant 0 : index
    %212 = vector.load %arg8[%c6_184, %c0_185, %c0_186] : memref<27x50x50xbf16, #tpu.memory_space<vmem>>, vector<1x50x50xbf16>
    %213 = vector.shape_cast %212 : vector<1x50x50xbf16> to vector<50x50xbf16>
    %cst_187 = arith.constant dense<0.000000e+00> : vector<2x50xf32>
    %214 = tpu.matmul %211, %213, %cst_187 {dimension_numbers = #tpu.dot_dimension_numbers<[1], [0], [0], [1], [0, 0, 1, 1], [], []>} : vector<2x50xbf16>, vector<50x50xbf16>, vector<2x50xf32> -> vector<2x50xf32>
    %215 = arith.addf %210, %214 : vector<2x50xf32>
    %c22_188 = arith.constant 22 : index
    %c0_189 = arith.constant 0 : index
    %216 = vector.load %arg16[%c22_188, %c0_189] : memref<128x50xbf16, #tpu.memory_space<vmem>>, vector<2x50xbf16>
    %c7_190 = arith.constant 7 : index
    %c0_191 = arith.constant 0 : index
    %c0_192 = arith.constant 0 : index
    %217 = vector.load %arg8[%c7_190, %c0_191, %c0_192] : memref<27x50x50xbf16, #tpu.memory_space<vmem>>, vector<1x50x50xbf16>
    %218 = vector.shape_cast %217 : vector<1x50x50xbf16> to vector<50x50xbf16>
    %cst_193 = arith.constant dense<0.000000e+00> : vector<2x50xf32>
    %219 = tpu.matmul %216, %218, %cst_193 {dimension_numbers = #tpu.dot_dimension_numbers<[1], [0], [0], [1], [0, 0, 1, 1], [], []>} : vector<2x50xbf16>, vector<50x50xbf16>, vector<2x50xf32> -> vector<2x50xf32>
    %220 = arith.addf %215, %219 : vector<2x50xf32>
    %c24_194 = arith.constant 24 : index
    %c0_195 = arith.constant 0 : index
    %221 = vector.load %arg16[%c24_194, %c0_195] : memref<128x50xbf16, #tpu.memory_space<vmem>>, vector<2x50xbf16>
    %c8_196 = arith.constant 8 : index
    %c0_197 = arith.constant 0 : index
    %c0_198 = arith.constant 0 : index
    %222 = vector.load %arg8[%c8_196, %c0_197, %c0_198] : memref<27x50x50xbf16, #tpu.memory_space<vmem>>, vector<1x50x50xbf16>
    %223 = vector.shape_cast %222 : vector<1x50x50xbf16> to vector<50x50xbf16>
    %cst_199 = arith.constant dense<0.000000e+00> : vector<2x50xf32>
    %224 = tpu.matmul %221, %223, %cst_199 {dimension_numbers = #tpu.dot_dimension_numbers<[1], [0], [0], [1], [0, 0, 1, 1], [], []>} : vector<2x50xbf16>, vector<50x50xbf16>, vector<2x50xf32> -> vector<2x50xf32>
    %225 = arith.addf %220, %224 : vector<2x50xf32>
    %c50_200 = arith.constant 50 : index
    %c0_201 = arith.constant 0 : index
    %226 = vector.load %arg16[%c50_200, %c0_201] : memref<128x50xbf16, #tpu.memory_space<vmem>>, vector<2x50xbf16>
    %c9_202 = arith.constant 9 : index
    %c0_203 = arith.constant 0 : index
    %c0_204 = arith.constant 0 : index
    %227 = vector.load %arg8[%c9_202, %c0_203, %c0_204] : memref<27x50x50xbf16, #tpu.memory_space<vmem>>, vector<1x50x50xbf16>
    %228 = vector.shape_cast %227 : vector<1x50x50xbf16> to vector<50x50xbf16>
    %cst_205 = arith.constant dense<0.000000e+00> : vector<2x50xf32>
    %229 = tpu.matmul %226, %228, %cst_205 {dimension_numbers = #tpu.dot_dimension_numbers<[1], [0], [0], [1], [0, 0, 1, 1], [], []>} : vector<2x50xbf16>, vector<50x50xbf16>, vector<2x50xf32> -> vector<2x50xf32>
    %230 = arith.addf %225, %229 : vector<2x50xf32>
    %c52_206 = arith.constant 52 : index
    %c0_207 = arith.constant 0 : index
    %231 = vector.load %arg16[%c52_206, %c0_207] : memref<128x50xbf16, #tpu.memory_space<vmem>>, vector<2x50xbf16>
    %c10_208 = arith.constant 10 : index
    %c0_209 = arith.constant 0 : index
    %c0_210 = arith.constant 0 : index
    %232 = vector.load %arg8[%c10_208, %c0_209, %c0_210] : memref<27x50x50xbf16, #tpu.memory_space<vmem>>, vector<1x50x50xbf16>
    %233 = vector.shape_cast %232 : vector<1x50x50xbf16> to vector<50x50xbf16>
    %cst_211 = arith.constant dense<0.000000e+00> : vector<2x50xf32>
    %234 = tpu.matmul %231, %233, %cst_211 {dimension_numbers = #tpu.dot_dimension_numbers<[1], [0], [0], [1], [0, 0, 1, 1], [], []>} : vector<2x50xbf16>, vector<50x50xbf16>, vector<2x50xf32> -> vector<2x50xf32>
    %235 = arith.addf %230, %234 : vector<2x50xf32>
    %c54_212 = arith.constant 54 : index
    %c0_213 = arith.constant 0 : index
    %236 = vector.load %arg16[%c54_212, %c0_213] : memref<128x50xbf16, #tpu.memory_space<vmem>>, vector<2x50xbf16>
    %c11_214 = arith.constant 11 : index
    %c0_215 = arith.constant 0 : index
    %c0_216 = arith.constant 0 : index
    %237 = vector.load %arg8[%c11_214, %c0_215, %c0_216] : memref<27x50x50xbf16, #tpu.memory_space<vmem>>, vector<1x50x50xbf16>
    %238 = vector.shape_cast %237 : vector<1x50x50xbf16> to vector<50x50xbf16>
    %cst_217 = arith.constant dense<0.000000e+00> : vector<2x50xf32>
    %239 = tpu.matmul %236, %238, %cst_217 {dimension_numbers = #tpu.dot_dimension_numbers<[1], [0], [0], [1], [0, 0, 1, 1], [], []>} : vector<2x50xbf16>, vector<50x50xbf16>, vector<2x50xf32> -> vector<2x50xf32>
    %240 = arith.addf %235, %239 : vector<2x50xf32>
    %c60_218 = arith.constant 60 : index
    %c0_219 = arith.constant 0 : index
    %241 = vector.load %arg16[%c60_218, %c0_219] : memref<128x50xbf16, #tpu.memory_space<vmem>>, vector<2x50xbf16>
    %c12_220 = arith.constant 12 : index
    %c0_221 = arith.constant 0 : index
    %c0_222 = arith.constant 0 : index
    %242 = vector.load %arg8[%c12_220, %c0_221, %c0_222] : memref<27x50x50xbf16, #tpu.memory_space<vmem>>, vector<1x50x50xbf16>
    %243 = vector.shape_cast %242 : vector<1x50x50xbf16> to vector<50x50xbf16>
    %cst_223 = arith.constant dense<0.000000e+00> : vector<2x50xf32>
    %244 = tpu.matmul %241, %243, %cst_223 {dimension_numbers = #tpu.dot_dimension_numbers<[1], [0], [0], [1], [0, 0, 1, 1], [], []>} : vector<2x50xbf16>, vector<50x50xbf16>, vector<2x50xf32> -> vector<2x50xf32>
    %245 = arith.addf %240, %244 : vector<2x50xf32>
    %c62_224 = arith.constant 62 : index
    %c0_225 = arith.constant 0 : index
    %246 = vector.load %arg16[%c62_224, %c0_225] : memref<128x50xbf16, #tpu.memory_space<vmem>>, vector<2x50xbf16>
    %c13_226 = arith.constant 13 : index
    %c0_227 = arith.constant 0 : index
    %c0_228 = arith.constant 0 : index
    %247 = vector.load %arg8[%c13_226, %c0_227, %c0_228] : memref<27x50x50xbf16, #tpu.memory_space<vmem>>, vector<1x50x50xbf16>
    %248 = vector.shape_cast %247 : vector<1x50x50xbf16> to vector<50x50xbf16>
    %cst_229 = arith.constant dense<0.000000e+00> : vector<2x50xf32>
    %249 = tpu.matmul %246, %248, %cst_229 {dimension_numbers = #tpu.dot_dimension_numbers<[1], [0], [0], [1], [0, 0, 1, 1], [], []>} : vector<2x50xbf16>, vector<50x50xbf16>, vector<2x50xf32> -> vector<2x50xf32>
    %250 = arith.addf %245, %249 : vector<2x50xf32>
    %c64_230 = arith.constant 64 : index
    %c0_231 = arith.constant 0 : index
    %251 = vector.load %arg16[%c64_230, %c0_231] : memref<128x50xbf16, #tpu.memory_space<vmem>>, vector<2x50xbf16>
    %c14_232 = arith.constant 14 : index
    %c0_233 = arith.constant 0 : index
    %c0_234 = arith.constant 0 : index
    %252 = vector.load %arg8[%c14_232, %c0_233, %c0_234] : memref<27x50x50xbf16, #tpu.memory_space<vmem>>, vector<1x50x50xbf16>
    %253 = vector.shape_cast %252 : vector<1x50x50xbf16> to vector<50x50xbf16>
    %cst_235 = arith.constant dense<0.000000e+00> : vector<2x50xf32>
    %254 = tpu.matmul %251, %253, %cst_235 {dimension_numbers = #tpu.dot_dimension_numbers<[1], [0], [0], [1], [0, 0, 1, 1], [], []>} : vector<2x50xbf16>, vector<50x50xbf16>, vector<2x50xf32> -> vector<2x50xf32>
    %255 = arith.addf %250, %254 : vector<2x50xf32>
    %c70_236 = arith.constant 70 : index
    %c0_237 = arith.constant 0 : index
    %256 = vector.load %arg16[%c70_236, %c0_237] : memref<128x50xbf16, #tpu.memory_space<vmem>>, vector<2x50xbf16>
    %c15_238 = arith.constant 15 : index
    %c0_239 = arith.constant 0 : index
    %c0_240 = arith.constant 0 : index
    %257 = vector.load %arg8[%c15_238, %c0_239, %c0_240] : memref<27x50x50xbf16, #tpu.memory_space<vmem>>, vector<1x50x50xbf16>
    %258 = vector.shape_cast %257 : vector<1x50x50xbf16> to vector<50x50xbf16>
    %cst_241 = arith.constant dense<0.000000e+00> : vector<2x50xf32>
    %259 = tpu.matmul %256, %258, %cst_241 {dimension_numbers = #tpu.dot_dimension_numbers<[1], [0], [0], [1], [0, 0, 1, 1], [], []>} : vector<2x50xbf16>, vector<50x50xbf16>, vector<2x50xf32> -> vector<2x50xf32>
    %260 = arith.addf %255, %259 : vector<2x50xf32>
    %c72_242 = arith.constant 72 : index
    %c0_243 = arith.constant 0 : index
    %261 = vector.load %arg16[%c72_242, %c0_243] : memref<128x50xbf16, #tpu.memory_space<vmem>>, vector<2x50xbf16>
    %c16_244 = arith.constant 16 : index
    %c0_245 = arith.constant 0 : index
    %c0_246 = arith.constant 0 : index
    %262 = vector.load %arg8[%c16_244, %c0_245, %c0_246] : memref<27x50x50xbf16, #tpu.memory_space<vmem>>, vector<1x50x50xbf16>
    %263 = vector.shape_cast %262 : vector<1x50x50xbf16> to vector<50x50xbf16>
    %cst_247 = arith.constant dense<0.000000e+00> : vector<2x50xf32>
    %264 = tpu.matmul %261, %263, %cst_247 {dimension_numbers = #tpu.dot_dimension_numbers<[1], [0], [0], [1], [0, 0, 1, 1], [], []>} : vector<2x50xbf16>, vector<50x50xbf16>, vector<2x50xf32> -> vector<2x50xf32>
    %265 = arith.addf %260, %264 : vector<2x50xf32>
    %c74_248 = arith.constant 74 : index
    %c0_249 = arith.constant 0 : index
    %266 = vector.load %arg16[%c74_248, %c0_249] : memref<128x50xbf16, #tpu.memory_space<vmem>>, vector<2x50xbf16>
    %c17_250 = arith.constant 17 : index
    %c0_251 = arith.constant 0 : index
    %c0_252 = arith.constant 0 : index
    %267 = vector.load %arg8[%c17_250, %c0_251, %c0_252] : memref<27x50x50xbf16, #tpu.memory_space<vmem>>, vector<1x50x50xbf16>
    %268 = vector.shape_cast %267 : vector<1x50x50xbf16> to vector<50x50xbf16>
    %cst_253 = arith.constant dense<0.000000e+00> : vector<2x50xf32>
    %269 = tpu.matmul %266, %268, %cst_253 {dimension_numbers = #tpu.dot_dimension_numbers<[1], [0], [0], [1], [0, 0, 1, 1], [], []>} : vector<2x50xbf16>, vector<50x50xbf16>, vector<2x50xf32> -> vector<2x50xf32>
    %270 = arith.addf %265, %269 : vector<2x50xf32>
    %c100_254 = arith.constant 100 : index
    %c0_255 = arith.constant 0 : index
    %271 = vector.load %arg16[%c100_254, %c0_255] : memref<128x50xbf16, #tpu.memory_space<vmem>>, vector<2x50xbf16>
    %c18_256 = arith.constant 18 : index
    %c0_257 = arith.constant 0 : index
    %c0_258 = arith.constant 0 : index
    %272 = vector.load %arg8[%c18_256, %c0_257, %c0_258] : memref<27x50x50xbf16, #tpu.memory_space<vmem>>, vector<1x50x50xbf16>
    %273 = vector.shape_cast %272 : vector<1x50x50xbf16> to vector<50x50xbf16>
    %cst_259 = arith.constant dense<0.000000e+00> : vector<2x50xf32>
    %274 = tpu.matmul %271, %273, %cst_259 {dimension_numbers = #tpu.dot_dimension_numbers<[1], [0], [0], [1], [0, 0, 1, 1], [], []>} : vector<2x50xbf16>, vector<50x50xbf16>, vector<2x50xf32> -> vector<2x50xf32>
    %275 = arith.addf %270, %274 : vector<2x50xf32>
    %c102_260 = arith.constant 102 : index
    %c0_261 = arith.constant 0 : index
    %276 = vector.load %arg16[%c102_260, %c0_261] : memref<128x50xbf16, #tpu.memory_space<vmem>>, vector<2x50xbf16>
    %c19_262 = arith.constant 19 : index
    %c0_263 = arith.constant 0 : index
    %c0_264 = arith.constant 0 : index
    %277 = vector.load %arg8[%c19_262, %c0_263, %c0_264] : memref<27x50x50xbf16, #tpu.memory_space<vmem>>, vector<1x50x50xbf16>
    %278 = vector.shape_cast %277 : vector<1x50x50xbf16> to vector<50x50xbf16>
    %cst_265 = arith.constant dense<0.000000e+00> : vector<2x50xf32>
    %279 = tpu.matmul %276, %278, %cst_265 {dimension_numbers = #tpu.dot_dimension_numbers<[1], [0], [0], [1], [0, 0, 1, 1], [], []>} : vector<2x50xbf16>, vector<50x50xbf16>, vector<2x50xf32> -> vector<2x50xf32>
    %280 = arith.addf %275, %279 : vector<2x50xf32>
    %c104_266 = arith.constant 104 : index
    %c0_267 = arith.constant 0 : index
    %281 = vector.load %arg16[%c104_266, %c0_267] : memref<128x50xbf16, #tpu.memory_space<vmem>>, vector<2x50xbf16>
    %c20_268 = arith.constant 20 : index
    %c0_269 = arith.constant 0 : index
    %c0_270 = arith.constant 0 : index
    %282 = vector.load %arg8[%c20_268, %c0_269, %c0_270] : memref<27x50x50xbf16, #tpu.memory_space<vmem>>, vector<1x50x50xbf16>
    %283 = vector.shape_cast %282 : vector<1x50x50xbf16> to vector<50x50xbf16>
    %cst_271 = arith.constant dense<0.000000e+00> : vector<2x50xf32>
    %284 = tpu.matmul %281, %283, %cst_271 {dimension_numbers = #tpu.dot_dimension_numbers<[1], [0], [0], [1], [0, 0, 1, 1], [], []>} : vector<2x50xbf16>, vector<50x50xbf16>, vector<2x50xf32> -> vector<2x50xf32>
    %285 = arith.addf %280, %284 : vector<2x50xf32>
    %c110_272 = arith.constant 110 : index
    %c0_273 = arith.constant 0 : index
    %286 = vector.load %arg16[%c110_272, %c0_273] : memref<128x50xbf16, #tpu.memory_space<vmem>>, vector<2x50xbf16>
    %c21_274 = arith.constant 21 : index
    %c0_275 = arith.constant 0 : index
    %c0_276 = arith.constant 0 : index
    %287 = vector.load %arg8[%c21_274, %c0_275, %c0_276] : memref<27x50x50xbf16, #tpu.memory_space<vmem>>, vector<1x50x50xbf16>
    %288 = vector.shape_cast %287 : vector<1x50x50xbf16> to vector<50x50xbf16>
    %cst_277 = arith.constant dense<0.000000e+00> : vector<2x50xf32>
    %289 = tpu.matmul %286, %288, %cst_277 {dimension_numbers = #tpu.dot_dimension_numbers<[1], [0], [0], [1], [0, 0, 1, 1], [], []>} : vector<2x50xbf16>, vector<50x50xbf16>, vector<2x50xf32> -> vector<2x50xf32>
    %290 = arith.addf %285, %289 : vector<2x50xf32>
    %c112_278 = arith.constant 112 : index
    %c0_279 = arith.constant 0 : index
    %291 = vector.load %arg16[%c112_278, %c0_279] : memref<128x50xbf16, #tpu.memory_space<vmem>>, vector<2x50xbf16>
    %c22_280 = arith.constant 22 : index
    %c0_281 = arith.constant 0 : index
    %c0_282 = arith.constant 0 : index
    %292 = vector.load %arg8[%c22_280, %c0_281, %c0_282] : memref<27x50x50xbf16, #tpu.memory_space<vmem>>, vector<1x50x50xbf16>
    %293 = vector.shape_cast %292 : vector<1x50x50xbf16> to vector<50x50xbf16>
    %cst_283 = arith.constant dense<0.000000e+00> : vector<2x50xf32>
    %294 = tpu.matmul %291, %293, %cst_283 {dimension_numbers = #tpu.dot_dimension_numbers<[1], [0], [0], [1], [0, 0, 1, 1], [], []>} : vector<2x50xbf16>, vector<50x50xbf16>, vector<2x50xf32> -> vector<2x50xf32>
    %295 = arith.addf %290, %294 : vector<2x50xf32>
    %c114_284 = arith.constant 114 : index
    %c0_285 = arith.constant 0 : index
    %296 = vector.load %arg16[%c114_284, %c0_285] : memref<128x50xbf16, #tpu.memory_space<vmem>>, vector<2x50xbf16>
    %c23_286 = arith.constant 23 : index
    %c0_287 = arith.constant 0 : index
    %c0_288 = arith.constant 0 : index
    %297 = vector.load %arg8[%c23_286, %c0_287, %c0_288] : memref<27x50x50xbf16, #tpu.memory_space<vmem>>, vector<1x50x50xbf16>
    %298 = vector.shape_cast %297 : vector<1x50x50xbf16> to vector<50x50xbf16>
    %cst_289 = arith.constant dense<0.000000e+00> : vector<2x50xf32>
    %299 = tpu.matmul %296, %298, %cst_289 {dimension_numbers = #tpu.dot_dimension_numbers<[1], [0], [0], [1], [0, 0, 1, 1], [], []>} : vector<2x50xbf16>, vector<50x50xbf16>, vector<2x50xf32> -> vector<2x50xf32>
    %300 = arith.addf %295, %299 : vector<2x50xf32>
    %c120_290 = arith.constant 120 : index
    %c0_291 = arith.constant 0 : index
    %301 = vector.load %arg16[%c120_290, %c0_291] : memref<128x50xbf16, #tpu.memory_space<vmem>>, vector<2x50xbf16>
    %c24_292 = arith.constant 24 : index
    %c0_293 = arith.constant 0 : index
    %c0_294 = arith.constant 0 : index
    %302 = vector.load %arg8[%c24_292, %c0_293, %c0_294] : memref<27x50x50xbf16, #tpu.memory_space<vmem>>, vector<1x50x50xbf16>
    %303 = vector.shape_cast %302 : vector<1x50x50xbf16> to vector<50x50xbf16>
    %cst_295 = arith.constant dense<0.000000e+00> : vector<2x50xf32>
    %304 = tpu.matmul %301, %303, %cst_295 {dimension_numbers = #tpu.dot_dimension_numbers<[1], [0], [0], [1], [0, 0, 1, 1], [], []>} : vector<2x50xbf16>, vector<50x50xbf16>, vector<2x50xf32> -> vector<2x50xf32>
    %305 = arith.addf %300, %304 : vector<2x50xf32>
    %c122_296 = arith.constant 122 : index
    %c0_297 = arith.constant 0 : index
    %306 = vector.load %arg16[%c122_296, %c0_297] : memref<128x50xbf16, #tpu.memory_space<vmem>>, vector<2x50xbf16>
    %c25_298 = arith.constant 25 : index
    %c0_299 = arith.constant 0 : index
    %c0_300 = arith.constant 0 : index
    %307 = vector.load %arg8[%c25_298, %c0_299, %c0_300] : memref<27x50x50xbf16, #tpu.memory_space<vmem>>, vector<1x50x50xbf16>
    %308 = vector.shape_cast %307 : vector<1x50x50xbf16> to vector<50x50xbf16>
    %cst_301 = arith.constant dense<0.000000e+00> : vector<2x50xf32>
    %309 = tpu.matmul %306, %308, %cst_301 {dimension_numbers = #tpu.dot_dimension_numbers<[1], [0], [0], [1], [0, 0, 1, 1], [], []>} : vector<2x50xbf16>, vector<50x50xbf16>, vector<2x50xf32> -> vector<2x50xf32>
    %310 = arith.addf %305, %309 : vector<2x50xf32>
    %c124_302 = arith.constant 124 : index
    %c0_303 = arith.constant 0 : index
    %311 = vector.load %arg16[%c124_302, %c0_303] : memref<128x50xbf16, #tpu.memory_space<vmem>>, vector<2x50xbf16>
    %c26_304 = arith.constant 26 : index
    %c0_305 = arith.constant 0 : index
    %c0_306 = arith.constant 0 : index
    %312 = vector.load %arg8[%c26_304, %c0_305, %c0_306] : memref<27x50x50xbf16, #tpu.memory_space<vmem>>, vector<1x50x50xbf16>
    %313 = vector.shape_cast %312 : vector<1x50x50xbf16> to vector<50x50xbf16>
    %cst_307 = arith.constant dense<0.000000e+00> : vector<2x50xf32>
    %314 = tpu.matmul %311, %313, %cst_307 {dimension_numbers = #tpu.dot_dimension_numbers<[1], [0], [0], [1], [0, 0, 1, 1], [], []>} : vector<2x50xbf16>, vector<50x50xbf16>, vector<2x50xf32> -> vector<2x50xf32>
    %315 = arith.addf %310, %314 : vector<2x50xf32>
    %c0_308 = arith.constant 0 : index
    %c0_309 = arith.constant 0 : index
    %316 = vector.load %arg9[%c0_308, %c0_309] : memref<1x50xf32, #tpu.memory_space<vmem>>, vector<1x50xf32>
    %317 = vector.broadcast %316 : vector<1x50xf32> to vector<2x50xf32>
    %318 = arith.addf %315, %317 : vector<2x50xf32>
    %cst_310 = arith.constant 0.000000e+00 : f32
    %319 = vector.broadcast %cst_310 : f32 to vector<2x50xf32>
    %320 = arith.cmpf ogt, %318, %319 : vector<2x50xf32>
    %cst_311 = arith.constant 0.000000e+00 : f32
    %321 = vector.broadcast %cst_311 : f32 to vector<2x50xf32>
    %322 = arith.minimumf %318, %321 : vector<2x50xf32>
    %323 = math.exp %322 : vector<2x50xf32>
    %cst_312 = arith.constant 1.000000e+00 : f32
    %324 = vector.broadcast %cst_312 : f32 to vector<2x50xf32>
    %325 = arith.subf %323, %324 : vector<2x50xf32>
    %326 = arith.select %320, %318, %325 : vector<2x50xi1>, vector<2x50xf32>
    %327 = arith.truncf %326 : vector<2x50xf32> to vector<2x50xbf16>
    %c0_313 = arith.constant 0 : index
    %c0_314 = arith.constant 0 : index
    %328 = vector.load %arg10[%c0_313, %c0_314] : memref<50x50xbf16, #tpu.memory_space<vmem>>, vector<50x50xbf16>
    %cst_315 = arith.constant dense<0.000000e+00> : vector<2x50xf32>
    %329 = tpu.matmul %327, %328, %cst_315 {dimension_numbers = #tpu.dot_dimension_numbers<[1], [0], [0], [1], [0, 0, 1, 1], [], []>} : vector<2x50xbf16>, vector<50x50xbf16>, vector<2x50xf32> -> vector<2x50xf32>
    %c0_316 = arith.constant 0 : index
    %c0_317 = arith.constant 0 : index
    %330 = vector.load %arg11[%c0_316, %c0_317] : memref<1x50xf32, #tpu.memory_space<vmem>>, vector<1x50xf32>
    %331 = vector.broadcast %330 : vector<1x50xf32> to vector<2x50xf32>
    %332 = arith.addf %329, %331 : vector<2x50xf32>
    %cst_318 = arith.constant 0.000000e+00 : f32
    %333 = vector.broadcast %cst_318 : f32 to vector<2x50xf32>
    %334 = arith.cmpf ogt, %332, %333 : vector<2x50xf32>
    %cst_319 = arith.constant 0.000000e+00 : f32
    %335 = vector.broadcast %cst_319 : f32 to vector<2x50xf32>
    %336 = arith.minimumf %332, %335 : vector<2x50xf32>
    %337 = math.exp %336 : vector<2x50xf32>
    %cst_320 = arith.constant 1.000000e+00 : f32
    %338 = vector.broadcast %cst_320 : f32 to vector<2x50xf32>
    %339 = arith.subf %337, %338 : vector<2x50xf32>
    %340 = arith.select %334, %332, %339 : vector<2x50xi1>, vector<2x50xf32>
    %341 = arith.truncf %340 : vector<2x50xf32> to vector<2x50xbf16>
    %c0_321 = arith.constant 0 : index
    %c0_322 = arith.constant 0 : index
    %342 = vector.load %arg12[%c0_321, %c0_322] : memref<50x128xbf16, #tpu.memory_space<vmem>>, vector<50x128xbf16>
    %cst_323 = arith.constant dense<0.000000e+00> : vector<2x128xf32>
    %343 = tpu.matmul %341, %342, %cst_323 {dimension_numbers = #tpu.dot_dimension_numbers<[1], [0], [0], [1], [0, 0, 1, 1], [], []>} : vector<2x50xbf16>, vector<50x128xbf16>, vector<2x128xf32> -> vector<2x128xf32>
    %c0_324 = arith.constant 0 : index
    %c0_325 = arith.constant 0 : index
    %344 = vector.load %arg13[%c0_324, %c0_325] : memref<1x128xf32, #tpu.memory_space<vmem>>, vector<1x128xf32>
    %345 = vector.broadcast %344 : vector<1x128xf32> to vector<2x128xf32>
    %346 = arith.addf %343, %345 : vector<2x128xf32>
    %c0_326 = arith.constant 0 : index
    %c0_327 = arith.constant 0 : index
    %c0_328 = arith.constant 0 : index
    %347 = vector.load %arg14[%c0_326, %c0_327, %c0_328] : memref<1x2x128xf32, #tpu.memory_space<vmem>>, vector<1x2x128xf32>
    %348 = vector.shape_cast %347 : vector<1x2x128xf32> to vector<2x128xf32>
    %349 = vector.shape_cast %346 : vector<2x128xf32> to vector<1x2x128xf32>
    tpu.vector_store %arg14[%c0_326, %c0_327, %c0_328], %349 {strides = array<i32>} : memref<1x2x128xf32, #tpu.memory_space<vmem>>, vector<1x2x128xf32>,
    return
  }
  func.func @transform_0(%arg0: i32) -> (i32, i32, i32) {
    %c0_i32 = arith.constant 0 : i32
    %c0_i32_0 = arith.constant 0 : i32
    %c0_i32_1 = arith.constant 0 : i32
    return %arg0, %c0_i32, %c0_i32_0 : i32, i32, i32
  }
  func.func @transform_1(%arg0: i32) -> (i32, i32) {
    %c0_i32 = arith.constant 0 : i32
    %c0_i32_0 = arith.constant 0 : i32
    %c0_i32_1 = arith.constant 0 : i32
    return %c0_i32, %c0_i32_0 : i32, i32
  }
  func.func @transform_2(%arg0: i32) -> (i32, i32) {
    %c0_i32 = arith.constant 0 : i32
    %c0_i32_0 = arith.constant 0 : i32
    %c0_i32_1 = arith.constant 0 : i32
    return %c0_i32, %c0_i32_0 : i32, i32
  }
  func.func @transform_3(%arg0: i32) -> (i32, i32) {
    %c0_i32 = arith.constant 0 : i32
    %c0_i32_0 = arith.constant 0 : i32
    %c0_i32_1 = arith.constant 0 : i32
    return %c0_i32, %c0_i32_0 : i32, i32
  }
  func.func @transform_4(%arg0: i32) -> (i32, i32) {
    %c0_i32 = arith.constant 0 : i32
    %c0_i32_0 = arith.constant 0 : i32
    %c0_i32_1 = arith.constant 0 : i32
    return %c0_i32, %c0_i32_0 : i32, i32
  }
  func.func @transform_5(%arg0: i32) -> (i32, i32, i32) {
    %c0_i32 = arith.constant 0 : i32
    %c0_i32_0 = arith.constant 0 : i32
    %c0_i32_1 = arith.constant 0 : i32
    %c0_i32_2 = arith.constant 0 : i32
    return %c0_i32, %c0_i32_0, %c0_i32_1 : i32, i32, i32
  }
  func.func @transform_6(%arg0: i32) -> (i32, i32) {
    %c0_i32 = arith.constant 0 : i32
    %c0_i32_0 = arith.constant 0 : i32
    %c0_i32_1 = arith.constant 0 : i32
    return %c0_i32, %c0_i32_0 : i32, i32
  }
  func.func @transform_7(%arg0: i32) -> (i32, i32, i32) {
    %c0_i32 = arith.constant 0 : i32
    %c0_i32_0 = arith.constant 0 : i32
    %c0_i32_1 = arith.constant 0 : i32
    %c0_i32_2 = arith.constant 0 : i32
    return %c0_i32, %c0_i32_0, %c0_i32_1 : i32, i32, i32
  }
  func.func @transform_8(%arg0: i32) -> (i32, i32) {
    %c0_i32 = arith.constant 0 : i32
    %c0_i32_0 = arith.constant 0 : i32
    %c0_i32_1 = arith.constant 0 : i32
    return %c0_i32, %c0_i32_0 : i32, i32
  }
  func.func @transform_9(%arg0: i32) -> (i32, i32) {
    %c0_i32 = arith.constant 0 : i32
    %c0_i32_0 = arith.constant 0 : i32
    %c0_i32_1 = arith.constant 0 : i32
    return %c0_i32, %c0_i32_0 : i32, i32
  }
  func.func @transform_10(%arg0: i32) -> (i32, i32) {
    %c0_i32 = arith.constant 0 : i32
    %c0_i32_0 = arith.constant 0 : i32
    %c0_i32_1 = arith.constant 0 : i32
    return %c0_i32, %c0_i32_0 : i32, i32
  }
  func.func @transform_11(%arg0: i32) -> (i32, i32) {
    %c0_i32 = arith.constant 0 : i32
    %c0_i32_0 = arith.constant 0 : i32
    %c0_i32_1 = arith.constant 0 : i32
    return %c0_i32, %c0_i32_0 : i32, i32
  }
  func.func @transform_12(%arg0: i32) -> (i32, i32) {
    %c0_i32 = arith.constant 0 : i32
    %c0_i32_0 = arith.constant 0 : i32
    %c0_i32_1 = arith.constant 0 : i32
    return %c0_i32, %c0_i32_0 : i32, i32
  }
  func.func @transform_13(%arg0: i32) -> (i32, i32, i32) {
    %c0_i32 = arith.constant 0 : i32
    %c0_i32_0 = arith.constant 0 : i32
    %c0_i32_1 = arith.constant 0 : i32
    return %arg0, %c0_i32, %c0_i32_0 : i32, i32, i32
  }
}

</mosaic_0001>

<llo_original>
// kernel: dqn_forward.1
$region0: #{dqn_forward.1}
  #allocation0 [shape = 'u32[]', space=smem, size = 0x4, offset = 0x4, fixed_abs, tag = 'smem constant byte address 0x4 - core index']
  #allocation1 [shape = 'u32[144,128]{1,0:T(1,128)}', space=vmem, size = 0x12000, scoped, tag = 'internal scratch']
  #allocation2 [shape = 'bf16[256,100]{1,0:T(8,128)(2,1)}', space=vmem, size = 0x10000, scoped, tag = 'scratch operand']
  #allocation3 [shape = 'bf16[128,50]{1,0:T(8,128)(2,1)}', space=vmem, size = 0x8000, scoped, tag = 'scratch operand']
  %s0 = inlined_call_operand.vmem [shape: bf16[1,256,6], index: 0, kind: input, shape index: {}]
  %s1 = inlined_call_operand.vmem [shape: bf16[6,100], index: 1, kind: input, shape index: {}]
  %s2 = inlined_call_operand.vmem [shape: f32[1,100], index: 2, kind: input, shape index: {}]
  %s3 = inlined_call_operand.vmem [shape: bf16[100,100], index: 3, kind: input, shape index: {}]
  %s4 = inlined_call_operand.vmem [shape: f32[1,100], index: 4, kind: input, shape index: {}]
  %s5 = inlined_call_operand.vmem [shape: bf16[27,100,50], index: 5, kind: input, shape index: {}]
  %s6 = inlined_call_operand.vmem [shape: f32[1,50], index: 6, kind: input, shape index: {}]
  %s7 = inlined_call_operand.vmem [shape: bf16[27,50,50], index: 7, kind: input, shape index: {}]
  %s8 = inlined_call_operand.vmem [shape: f32[1,50], index: 8, kind: input, shape index: {}]
  %s9 = inlined_call_operand.vmem [shape: bf16[50,50], index: 9, kind: input, shape index: {}]
  %s10 = inlined_call_operand.vmem [shape: f32[1,50], index: 10, kind: input, shape index: {}]
  %s11 = inlined_call_operand.vmem [shape: bf16[50,128], index: 11, kind: input, shape index: {}]
  %s12 = inlined_call_operand.vmem [shape: f32[1,128], index: 12, kind: input, shape index: {}]
  %s13 = inlined_call_operand.hbm [shape: f32[1,2,128], index: 13, kind: output, shape index: {}]
  %s14 = sld [smem:[#allocation0]]
  $region62: #{dqn_forward.1} parent=0
    _
  %s16 = ssub.s32 1, %s14
  %s17 = scalar_select 0, %s16, %s14
  $region1: #{dqn_forward.1} parent=0
    #allocation4 [shape = 'u8[1024]{0}', space=vmem, size = 0x400, scoped, tag = 'output window, operand 0, single buffered']
    #allocation5 [shape = 's32[1]{0}', space=sflag, size = 0x4, scoped, tag = 'scoped memory for dqn_forward.1']
    %18 = vsyncpa [#allocation5], 0
    // Predicated region
    $region2: #{dqn_forward.1} parent=1 // pred_check
      _
    $region3: #{dqn_forward.1} parent=1 // pred_check_branch
      %20 = sbr.rel (0) target = $region5
    $region4: #{dqn_forward.1} parent=1 // pred_region
      _
    $region5: #{dqn_forward.1} parent=1 // pred_fallthru
      _
    // Predicated region
    $region6: #{dqn_forward.1} parent=1 // pred_check
      _
    $region7: #{dqn_forward.1} parent=1 // pred_check_branch
      %22 = sbr.rel (0) target = $region9
    $region8: #{dqn_forward.1} parent=1 // pred_region
      _
    $region9: #{dqn_forward.1} parent=1 // pred_fallthru
      _
    // Predicated region
    $region10: #{dqn_forward.1} parent=1 // pred_check
      _
    $region11: #{dqn_forward.1} parent=1 // pred_check_branch
      %24 = sbr.rel (0) target = $region13
    $region12: #{dqn_forward.1} parent=1 // pred_region
      _
    $region13: #{dqn_forward.1} parent=1 // pred_fallthru
      _
    // Predicated region
    $region14: #{dqn_forward.1} parent=1 // pred_check
      _
    $region15: #{dqn_forward.1} parent=1 // pred_check_branch
      %26 = sbr.rel (0) target = $region17
    $region16: #{dqn_forward.1} parent=1 // pred_region
      _
    $region17: #{dqn_forward.1} parent=1 // pred_fallthru
      _
    // Predicated region
    $region18: #{dqn_forward.1} parent=1 // pred_check
      _
    $region19: #{dqn_forward.1} parent=1 // pred_check_branch
      %28 = sbr.rel (0) target = $region21
    $region20: #{dqn_forward.1} parent=1 // pred_region
      _
    $region21: #{dqn_forward.1} parent=1 // pred_fallthru
      _
    // Predicated region
    $region22: #{dqn_forward.1} parent=1 // pred_check
      _
    $region23: #{dqn_forward.1} parent=1 // pred_check_branch
      %30 = sbr.rel (0) target = $region25
    $region24: #{dqn_forward.1} parent=1 // pred_region
      _
    $region25: #{dqn_forward.1} parent=1 // pred_fallthru
      _
    // Predicated region
    $region26: #{dqn_forward.1} parent=1 // pred_check
      _
    $region27: #{dqn_forward.1} parent=1 // pred_check_branch
      %32 = sbr.rel (0) target = $region29
    $region28: #{dqn_forward.1} parent=1 // pred_region
      _
    $region29: #{dqn_forward.1} parent=1 // pred_fallthru
      _
    // Predicated region
    $region30: #{dqn_forward.1} parent=1 // pred_check
      _
    $region31: #{dqn_forward.1} parent=1 // pred_check_branch
      %34 = sbr.rel (0) target = $region33
    $region32: #{dqn_forward.1} parent=1 // pred_region
      _
    $region33: #{dqn_forward.1} parent=1 // pred_fallthru
      _
    // Predicated region
    $region34: #{dqn_forward.1} parent=1 // pred_check
      _
    $region35: #{dqn_forward.1} parent=1 // pred_check_branch
      %36 = sbr.rel (0) target = $region37
    $region36: #{dqn_forward.1} parent=1 // pred_region
      _
    $region37: #{dqn_forward.1} parent=1 // pred_fallthru
      _
    // Predicated region
    $region38: #{dqn_forward.1} parent=1 // pred_check
      _
    $region39: #{dqn_forward.1} parent=1 // pred_check_branch
      %38 = sbr.rel (0) target = $region41
    $region40: #{dqn_forward.1} parent=1 // pred_region
      _
    $region41: #{dqn_forward.1} parent=1 // pred_fallthru
      _
    // Predicated region
    $region42: #{dqn_forward.1} parent=1 // pred_check
      _
    $region43: #{dqn_forward.1} parent=1 // pred_check_branch
      %40 = sbr.rel (0) target = $region45
    $region44: #{dqn_forward.1} parent=1 // pred_region
      _
    $region45: #{dqn_forward.1} parent=1 // pred_fallthru
      _
    // Predicated region
    $region46: #{dqn_forward.1} parent=1 // pred_check
      _
    $region47: #{dqn_forward.1} parent=1 // pred_check_branch
      %42 = sbr.rel (0) target = $region49
    $region48: #{dqn_forward.1} parent=1 // pred_region
      _
    $region49: #{dqn_forward.1} parent=1 // pred_fallthru
      _
    // Predicated region
    $region50: #{dqn_forward.1} parent=1 // pred_check
      _
    $region51: #{dqn_forward.1} parent=1 // pred_check_branch
      %44 = sbr.rel (0) target = $region53
    $region52: #{dqn_forward.1} parent=1 // pred_region
      _
    $region53: #{dqn_forward.1} parent=1 // pred_fallthru
      _
    %v46 = vld [vmem:[%s0] sm:$0xf]
    %v47 = vld [vmem:[%s0 + $0x4] sm:$0xf]
    %v48 = vld [vmem:[%s0 + $0x8] sm:$0xf]
    %v49 = vld [vmem:[%s0 + $0xc] sm:$0xf]
    %v50 = vld [vmem:[%s0 + $0x10] sm:$0xf]
    %v51 = vld [vmem:[%s0 + $0x14] sm:$0xf]
    %v52 = vld [vmem:[%s0 + $0x18] sm:$0xf]
    %v53 = vld [vmem:[%s0 + $0x1c] sm:$0xf]
    %v54 = vld [vmem:[%s0 + $0x20] sm:$0xf]
    %v55 = vld [vmem:[%s0 + $0x24] sm:$0xf]
    %v56 = vld [vmem:[%s0 + $0x28] sm:$0xf]
    %v57 = vld [vmem:[%s0 + $0x2c] sm:$0xf]
    %v58 = vld [vmem:[%s0 + $0x30] sm:$0xf]
    %v59 = vld [vmem:[%s0 + $0x34] sm:$0xf]
    %v60 = vld [vmem:[%s0 + $0x38] sm:$0xf]
    %v61 = vld [vmem:[%s0 + $0x3c] sm:$0xf]
    %v62 = vld [vmem:[%s0 + $0x40] sm:$0xf]
    %v63 = vld [vmem:[%s0 + $0x44] sm:$0xf]
    %v64 = vld [vmem:[%s0 + $0x48] sm:$0xf]
    %v65 = vld [vmem:[%s0 + $0x4c] sm:$0xf]
    %v66 = vld [vmem:[%s0 + $0x50] sm:$0xf]
    %v67 = vld [vmem:[%s0 + $0x54] sm:$0xf]
    %v68 = vld [vmem:[%s0 + $0x58] sm:$0xf]
    %v69 = vld [vmem:[%s0 + $0x5c] sm:$0xf]
    %v70 = vld [vmem:[%s0 + $0x60] sm:$0xf]
    %v71 = vld [vmem:[%s0 + $0x64] sm:$0xf]
    %v72 = vld [vmem:[%s0 + $0x68] sm:$0xf]
    %v73 = vld [vmem:[%s0 + $0x6c] sm:$0xf]
    %v74 = vld [vmem:[%s0 + $0x70] sm:$0xf]
    %v75 = vld [vmem:[%s0 + $0x74] sm:$0xf]
    %v76 = vld [vmem:[%s0 + $0x78] sm:$0xf]
    %v77 = vld [vmem:[%s0 + $0x7c] sm:$0xf]
    %v78 = vld [vmem:[%s1] sm:$0x7]
    %v79 = vld [vmem:[%s2] sm:$0x1]
    %v81 = vlaneseq
    %v82 = vshrl.u32 %v81, 7
    %v83 = vsub.s32 0, %v82
    %v84 = vrot.slane %v79, %v83
    %v118 = vunpack.c.l.b16 %v46
    %v119 = vunpack.c.l.b16 %v47
    %v120 = vunpack.c.l.b16 %v48
    %v121 = vunpack.c.l.b16 %v49
    %v122 = vunpack.c.l.b16 %v50
    %v123 = vunpack.c.l.b16 %v51
    %v124 = vunpack.c.l.b16 %v52
    %v125 = vunpack.c.l.b16 %v53
    %v126 = vunpack.c.l.b16 %v54
    %v127 = vunpack.c.l.b16 %v55
    %v128 = vunpack.c.l.b16 %v56
    %v129 = vunpack.c.l.b16 %v57
    %v130 = vunpack.c.l.b16 %v58
    %v131 = vunpack.c.l.b16 %v59
    %v132 = vunpack.c.l.b16 %v60
    %v133 = vunpack.c.l.b16 %v61
    %v134 = vunpack.c.l.b16 %v62
    %v135 = vunpack.c.l.b16 %v63
    %v136 = vunpack.c.l.b16 %v64
    %v137 = vunpack.c.l.b16 %v65
    %v138 = vunpack.c.l.b16 %v66
    %v139 = vunpack.c.l.b16 %v67
    %v140 = vunpack.c.l.b16 %v68
    %v141 = vunpack.c.l.b16 %v69
    %v142 = vunpack.c.l.b16 %v70
    %v143 = vunpack.c.l.b16 %v71
    %v144 = vunpack.c.l.b16 %v72
    %v145 = vunpack.c.l.b16 %v73
    %v146 = vunpack.c.l.b16 %v74
    %v147 = vunpack.c.l.b16 %v75
    %v148 = vunpack.c.l.b16 %v76
    %v149 = vunpack.c.l.b16 %v77
    %v150 = vpack.c.b16 %v119, %v118
    %v151 = vpack.c.b16 %v121, %v120
    %v152 = vpack.c.b16 %v123, %v122
    %v153 = vpack.c.b16 %v125, %v124
    %v154 = vpack.c.b16 %v127, %v126
    %v155 = vpack.c.b16 %v129, %v128
    %v156 = vpack.c.b16 %v131, %v130
    %v157 = vpack.c.b16 %v133, %v132
    %v158 = vpack.c.b16 %v135, %v134
    %v159 = vpack.c.b16 %v137, %v136
    %v160 = vpack.c.b16 %v139, %v138
    %v161 = vpack.c.b16 %v141, %v140
    %v162 = vpack.c.b16 %v143, %v142
    %v163 = vpack.c.b16 %v145, %v144
    %v164 = vpack.c.b16 %v147, %v146
    %v165 = vpack.c.b16 %v149, %v148
    %vm166 = vcmask 48128
    %v168 = vsel %vm166, %v150, 0
    %v171 = vsel %vm166, %v151, 0
    %v174 = vsel %vm166, %v152, 0
    %v177 = vsel %vm166, %v153, 0
    %v180 = vsel %vm166, %v154, 0
    %v183 = vsel %vm166, %v155, 0
    %v186 = vsel %vm166, %v156, 0
    %v189 = vsel %vm166, %v157, 0
    %v192 = vsel %vm166, %v158, 0
    %v195 = vsel %vm166, %v159, 0
    %v198 = vsel %vm166, %v160, 0
    %v201 = vsel %vm166, %v161, 0
    %v204 = vsel %vm166, %v162, 0
    %v207 = vsel %vm166, %v163, 0
    %v210 = vsel %vm166, %v164, 0
    %v213 = vsel %vm166, %v165, 0
    %vm215 = vcmask 1042432
    %v217 = vsel %vm215, %v78, 0
    %219 = vmatprep.subr.bf16.mxu0 0
    %220 = vmatpush1.bf16.msra.mxu0 0
    %221 = vmatprep.subr.bf16.mxu0 0
    %222 = vmatpush1.bf16.msra.mxu0 0
    %223 = vmatprep.subr.bf16.mxu0 0
    %224 = vmatpush1.bf16.msra.mxu0 0
    %225 = vmatprep.subr.bf16.mxu0 0
    %226 = vmatpush1.bf16.msra.mxu0 0
    %227 = vmatprep.subr.bf16.mxu0 0
    %228 = vmatpush1.bf16.msra.mxu0 0
    %229 = vmatprep.subr.bf16.mxu0 0
    %230 = vmatpush1.bf16.msra.mxu0 0
    %231 = vmatprep.subr.bf16.mxu0 0
    %232 = vmatpush1.bf16.msra.mxu0 0
    %233 = vmatprep.subr.bf16.mxu0 0
    %234 = vmatpush1.bf16.msra.mxu0 %v217
    %235 = vmatprep.subr.bf16.mxu0 0
    %236 = vmatpush2.bf16.msra.mxu0 0
    %237 = vmatprep.subr.bf16.mxu0 0
    %238 = vmatpush2.bf16.msra.mxu0 0
    %239 = vmatprep.subr.bf16.mxu0 0
    %240 = vmatpush2.bf16.msra.mxu0 0
    %241 = vmatprep.subr.bf16.mxu0 0
    %242 = vmatpush2.bf16.msra.mxu0 0
    %243 = vmatprep.subr.bf16.mxu0 0
    %244 = vmatpush2.bf16.msra.mxu0 0
    %245 = vmatprep.subr.bf16.mxu0 0
    %246 = vmatpush2.bf16.msra.mxu0 0
    %247 = vmatprep.subr.bf16.mxu0 0
    %248 = vmatpush2.bf16.msra.mxu0 0
    %249 = vmatprep.subr.bf16.mxu0 0
    %250 = vmatpush2.bf16.msra.mxu0 0
    %251 = vmatprep.mubr.bf16.mxu0 0
    %252 = vmatmul.mubr.bf16.gmra.mxu0 %v168
    %v253 = vpop.f32.mrf.mxu0
    %v254 = vadd.f32 %v84, %v253
    %v255 = vpop.f32.mrf.mxu0
    %v256 = vpop.f32.mrf.mxu0
    %v257 = vadd.f32 %v84, %v256
    %v258 = vpop.f32.mrf.mxu0
    %259 = vmatprep.mubr.bf16.mxu0 0
    %260 = vmatmul.mubr.bf16.gmra.mxu0 %v171
    %v261 = vpop.f32.mrf.mxu0
    %v262 = vadd.f32 %v84, %v261
    %v263 = vpop.f32.mrf.mxu0
    %v264 = vpop.f32.mrf.mxu0
    %v265 = vadd.f32 %v84, %v264
    %v266 = vpop.f32.mrf.mxu0
    %267 = vmatprep.mubr.bf16.mxu0 0
    %268 = vmatmul.mubr.bf16.gmra.mxu0 %v174
    %v269 = vpop.f32.mrf.mxu0
    %v270 = vadd.f32 %v84, %v269
    %v271 = vpop.f32.mrf.mxu0
    %v272 = vpop.f32.mrf.mxu0
    %v273 = vadd.f32 %v84, %v272
    %v274 = vpop.f32.mrf.mxu0
    %275 = vmatprep.mubr.bf16.mxu0 0
    %276 = vmatmul.mubr.bf16.gmra.mxu0 %v177
    %v277 = vpop.f32.mrf.mxu0
    %v278 = vadd.f32 %v84, %v277
    %v279 = vpop.f32.mrf.mxu0
    %v280 = vpop.f32.mrf.mxu0
    %v281 = vadd.f32 %v84, %v280
    %v282 = vpop.f32.mrf.mxu0
    %283 = vmatprep.mubr.bf16.mxu0 0
    %284 = vmatmul.mubr.bf16.gmra.mxu0 %v180
    %v285 = vpop.f32.mrf.mxu0
    %v286 = vadd.f32 %v84, %v285
    %v287 = vpop.f32.mrf.mxu0
    %v288 = vpop.f32.mrf.mxu0
    %v289 = vadd.f32 %v84, %v288
    %v290 = vpop.f32.mrf.mxu0
    %291 = vmatprep.mubr.bf16.mxu0 0
    %292 = vmatmul.mubr.bf16.gmra.mxu0 %v183
    %v293 = vpop.f32.mrf.mxu0
    %v294 = vadd.f32 %v84, %v293
    %v295 = vpop.f32.mrf.mxu0
    %v296 = vpop.f32.mrf.mxu0
    %v297 = vadd.f32 %v84, %v296
    %v298 = vpop.f32.mrf.mxu0
    %299 = vmatprep.mubr.bf16.mxu0 0
    %300 = vmatmul.mubr.bf16.gmra.mxu0 %v186
    %v301 = vpop.f32.mrf.mxu0
    %v302 = vadd.f32 %v84, %v301
    %v303 = vpop.f32.mrf.mxu0
    %v304 = vpop.f32.mrf.mxu0
    %v305 = vadd.f32 %v84, %v304
    %v306 = vpop.f32.mrf.mxu0
    %307 = vmatprep.mubr.bf16.mxu0 0
    %308 = vmatmul.mubr.bf16.gmra.mxu0 %v189
    %v309 = vpop.f32.mrf.mxu0
    %v310 = vadd.f32 %v84, %v309
    %v311 = vpop.f32.mrf.mxu0
    %v312 = vpop.f32.mrf.mxu0
    %v313 = vadd.f32 %v84, %v312
    %v314 = vpop.f32.mrf.mxu0
    %315 = vmatprep.mubr.bf16.mxu0 0
    %316 = vmatmul.mubr.bf16.gmra.mxu0 %v192
    %v317 = vpop.f32.mrf.mxu0
    %v318 = vadd.f32 %v84, %v317
    %v319 = vpop.f32.mrf.mxu0
    %v320 = vpop.f32.mrf.mxu0
    %v321 = vadd.f32 %v84, %v320
    %v322 = vpop.f32.mrf.mxu0
    %323 = vmatprep.mubr.bf16.mxu0 0
    %324 = vmatmul.mubr.bf16.gmra.mxu0 %v195
    %v325 = vpop.f32.mrf.mxu0
    %v326 = vadd.f32 %v84, %v325
    %v327 = vpop.f32.mrf.mxu0
    %v328 = vpop.f32.mrf.mxu0
    %v329 = vadd.f32 %v84, %v328
    %v330 = vpop.f32.mrf.mxu0
    %331 = vmatprep.mubr.bf16.mxu0 0
    %332 = vmatmul.mubr.bf16.gmra.mxu0 %v198
    %v333 = vpop.f32.mrf.mxu0
    %v334 = vadd.f32 %v84, %v333
    %v335 = vpop.f32.mrf.mxu0
    %v336 = vpop.f32.mrf.mxu0
    %v337 = vadd.f32 %v84, %v336
    %v338 = vpop.f32.mrf.mxu0
    %339 = vmatprep.mubr.bf16.mxu0 0
    %340 = vmatmul.mubr.bf16.gmra.mxu0 %v201
    %v341 = vpop.f32.mrf.mxu0
    %v342 = vadd.f32 %v84, %v341
    %v343 = vpop.f32.mrf.mxu0
    %v344 = vpop.f32.mrf.mxu0
    %v345 = vadd.f32 %v84, %v344
    %v346 = vpop.f32.mrf.mxu0
    %347 = vmatprep.mubr.bf16.mxu0 0
    %348 = vmatmul.mubr.bf16.gmra.mxu0 %v204
    %v349 = vpop.f32.mrf.mxu0
    %v350 = vadd.f32 %v84, %v349
    %v351 = vpop.f32.mrf.mxu0
    %v352 = vpop.f32.mrf.mxu0
    %v353 = vadd.f32 %v84, %v352
    %v354 = vpop.f32.mrf.mxu0
    %355 = vmatprep.mubr.bf16.mxu0 0
    %356 = vmatmul.mubr.bf16.gmra.mxu0 %v207
    %v357 = vpop.f32.mrf.mxu0
    %v358 = vadd.f32 %v84, %v357
    %v359 = vpop.f32.mrf.mxu0
    %v360 = vpop.f32.mrf.mxu0
    %v361 = vadd.f32 %v84, %v360
    %v362 = vpop.f32.mrf.mxu0
    %363 = vmatprep.mubr.bf16.mxu0 0
    %364 = vmatmul.mubr.bf16.gmra.mxu0 %v210
    %v365 = vpop.f32.mrf.mxu0
    %v366 = vadd.f32 %v84, %v365
    %v367 = vpop.f32.mrf.mxu0
    %v368 = vpop.f32.mrf.mxu0
    %v369 = vadd.f32 %v84, %v368
    %v370 = vpop.f32.mrf.mxu0
    %371 = vmatprep.mubr.bf16.mxu0 0
    %372 = vmatmul.mubr.bf16.gmra.mxu0 %v213
    %v373 = vpop.f32.mrf.mxu0
    %v374 = vadd.f32 %v84, %v373
    %v375 = vpop.f32.mrf.mxu0
    %v376 = vpop.f32.mrf.mxu0
    %v377 = vadd.f32 %v84, %v376
    %v378 = vpop.f32.mrf.mxu0
    %379 = vdwg.mxu0
    %vm380 = vcmp.gt.f32.partialorder %v254, 0.0
    %vm381 = vcmp.gt.f32.partialorder %v257, 0.0
    %vm382 = vcmp.gt.f32.partialorder %v262, 0.0
    %vm383 = vcmp.gt.f32.partialorder %v265, 0.0
    %vm384 = vcmp.gt.f32.partialorder %v270, 0.0
    %vm385 = vcmp.gt.f32.partialorder %v273, 0.0
    %vm386 = vcmp.gt.f32.partialorder %v278, 0.0
    %vm387 = vcmp.gt.f32.partialorder %v281, 0.0
    %vm388 = vcmp.gt.f32.partialorder %v286, 0.0
    %vm389 = vcmp.gt.f32.partialorder %v289, 0.0
    %vm390 = vcmp.gt.f32.partialorder %v294, 0.0
    %vm391 = vcmp.gt.f32.partialorder %v297, 0.0
    %vm392 = vcmp.gt.f32.partialorder %v302, 0.0
    %vm393 = vcmp.gt.f32.partialorder %v305, 0.0
    %vm394 = vcmp.gt.f32.partialorder %v310, 0.0
    %vm395 = vcmp.gt.f32.partialorder %v313, 0.0
    %vm396 = vcmp.gt.f32.partialorder %v318, 0.0
    %vm397 = vcmp.gt.f32.partialorder %v321, 0.0
    %vm398 = vcmp.gt.f32.partialorder %v326, 0.0
    %vm399 = vcmp.gt.f32.partialorder %v329, 0.0
    %vm400 = vcmp.gt.f32.partialorder %v334, 0.0
    %vm401 = vcmp.gt.f32.partialorder %v337, 0.0
    %vm402 = vcmp.gt.f32.partialorder %v342, 0.0
    %vm403 = vcmp.gt.f32.partialorder %v345, 0.0
    %vm404 = vcmp.gt.f32.partialorder %v350, 0.0
    %vm405 = vcmp.gt.f32.partialorder %v353, 0.0
    %vm406 = vcmp.gt.f32.partialorder %v358, 0.0
    %vm407 = vcmp.gt.f32.partialorder %v361, 0.0
    %vm408 = vcmp.gt.f32.partialorder %v366, 0.0
    %vm409 = vcmp.gt.f32.partialorder %v369, 0.0
    %vm410 = vcmp.gt.f32.partialorder %v374, 0.0
    %vm411 = vcmp.gt.f32.partialorder %v377, 0.0
    %v412 = vmin.f32 %v254, 0.0
    %v413 = vmin.f32 %v257, 0.0
    %v414 = vmin.f32 %v262, 0.0
    %v415 = vmin.f32 %v265, 0.0
    %v416 = vmin.f32 %v270, 0.0
    %v417 = vmin.f32 %v273, 0.0
    %v418 = vmin.f32 %v278, 0.0
    %v419 = vmin.f32 %v281, 0.0
    %v420 = vmin.f32 %v286, 0.0
    %v421 = vmin.f32 %v289, 0.0
    %v422 = vmin.f32 %v294, 0.0
    %v423 = vmin.f32 %v297, 0.0
    %v424 = vmin.f32 %v302, 0.0
    %v425 = vmin.f32 %v305, 0.0
    %v426 = vmin.f32 %v310, 0.0
    %v427 = vmin.f32 %v313, 0.0
    %v428 = vmin.f32 %v318, 0.0
    %v429 = vmin.f32 %v321, 0.0
    %v430 = vmin.f32 %v326, 0.0
    %v431 = vmin.f32 %v329, 0.0
    %v432 = vmin.f32 %v334, 0.0
    %v433 = vmin.f32 %v337, 0.0
    %v434 = vmin.f32 %v342, 0.0
    %v435 = vmin.f32 %v345, 0.0
    %v436 = vmin.f32 %v350, 0.0
    %v437 = vmin.f32 %v353, 0.0
    %v438 = vmin.f32 %v358, 0.0
    %v439 = vmin.f32 %v361, 0.0
    %v440 = vmin.f32 %v366, 0.0
    %v441 = vmin.f32 %v369, 0.0
    %v442 = vmin.f32 %v374, 0.0
    %v443 = vmin.f32 %v377, 0.0
    %v444 = vmul.f32 %v412, 1.442695
    %v445 = vpow.pop %v444
    %v446 = vmul.f32 %v413, 1.442695
    %v447 = vpow.pop %v446
    %v448 = vmul.f32 %v414, 1.442695
    %v449 = vpow.pop %v448
    %v450 = vmul.f32 %v415, 1.442695
    %v451 = vpow.pop %v450
    %v452 = vmul.f32 %v416, 1.442695
    %v453 = vpow.pop %v452
    %v454 = vmul.f32 %v417, 1.442695
    %v455 = vpow.pop %v454
    %v456 = vmul.f32 %v418, 1.442695
    %v457 = vpow.pop %v456
    %v458 = vmul.f32 %v419, 1.442695
    %v459 = vpow.pop %v458
    %v460 = vmul.f32 %v420, 1.442695
    %v461 = vpow.pop %v460
    %v462 = vmul.f32 %v421, 1.442695
    %v463 = vpow.pop %v462
    %v464 = vmul.f32 %v422, 1.442695
    %v465 = vpow.pop %v464
    %v466 = vmul.f32 %v423, 1.442695
    %v467 = vpow.pop %v466
    %v468 = vmul.f32 %v424, 1.442695
    %v469 = vpow.pop %v468
    %v470 = vmul.f32 %v425, 1.442695
    %v471 = vpow.pop %v470
    %v472 = vmul.f32 %v426, 1.442695
    %v473 = vpow.pop %v472
    %v474 = vmul.f32 %v427, 1.442695
    %v475 = vpow.pop %v474
    %v476 = vmul.f32 %v428, 1.442695
    %v477 = vpow.pop %v476
    %v478 = vmul.f32 %v429, 1.442695
    %v479 = vpow.pop %v478
    %v480 = vmul.f32 %v430, 1.442695
    %v481 = vpow.pop %v480
    %v482 = vmul.f32 %v431, 1.442695
    %v483 = vpow.pop %v482
    %v484 = vmul.f32 %v432, 1.442695
    %v485 = vpow.pop %v484
    %v486 = vmul.f32 %v433, 1.442695
    %v487 = vpow.pop %v486
    %v488 = vmul.f32 %v434, 1.442695
    %v489 = vpow.pop %v488
    %v490 = vmul.f32 %v435, 1.442695
    %v491 = vpow.pop %v490
    %v492 = vmul.f32 %v436, 1.442695
    %v493 = vpow.pop %v492
    %v494 = vmul.f32 %v437, 1.442695
    %v495 = vpow.pop %v494
    %v496 = vmul.f32 %v438, 1.442695
    %v497 = vpow.pop %v496
    %v498 = vmul.f32 %v439, 1.442695
    %v499 = vpow.pop %v498
    %v500 = vmul.f32 %v440, 1.442695
    %v501 = vpow.pop %v500
    %v502 = vmul.f32 %v441, 1.442695
    %v503 = vpow.pop %v502
    %v504 = vmul.f32 %v442, 1.442695
    %v505 = vpow.pop %v504
    %v506 = vmul.f32 %v443, 1.442695
    %v507 = vpow.pop %v506
    %v508 = vsub.f32 %v445, 1.0
    %v509 = vsub.f32 %v447, 1.0
    %v510 = vsub.f32 %v449, 1.0
    %v511 = vsub.f32 %v451, 1.0
    %v512 = vsub.f32 %v453, 1.0
    %v513 = vsub.f32 %v455, 1.0
    %v514 = vsub.f32 %v457, 1.0
    %v515 = vsub.f32 %v459, 1.0
    %v516 = vsub.f32 %v461, 1.0
    %v517 = vsub.f32 %v463, 1.0
    %v518 = vsub.f32 %v465, 1.0
    %v519 = vsub.f32 %v467, 1.0
    %v520 = vsub.f32 %v469, 1.0
    %v521 = vsub.f32 %v471, 1.0
    %v522 = vsub.f32 %v473, 1.0
    %v523 = vsub.f32 %v475, 1.0
    %v524 = vsub.f32 %v477, 1.0
    %v525 = vsub.f32 %v479, 1.0
    %v526 = vsub.f32 %v481, 1.0
    %v527 = vsub.f32 %v483, 1.0
    %v528 = vsub.f32 %v485, 1.0
    %v529 = vsub.f32 %v487, 1.0
    %v530 = vsub.f32 %v489, 1.0
    %v531 = vsub.f32 %v491, 1.0
    %v532 = vsub.f32 %v493, 1.0
    %v533 = vsub.f32 %v495, 1.0
    %v534 = vsub.f32 %v497, 1.0
    %v535 = vsub.f32 %v499, 1.0
    %v536 = vsub.f32 %v501, 1.0
    %v537 = vsub.f32 %v503, 1.0
    %v538 = vsub.f32 %v505, 1.0
    %v539 = vsub.f32 %v507, 1.0
    %v540 = vsel %vm380, %v254, %v508
    %v541 = vsel %vm381, %v257, %v509
    %v542 = vsel %vm382, %v262, %v510
    %v543 = vsel %vm383, %v265, %v511
    %v544 = vsel %vm384, %v270, %v512
    %v545 = vsel %vm385, %v273, %v513
    %v546 = vsel %vm386, %v278, %v514
    %v547 = vsel %vm387, %v281, %v515
    %v548 = vsel %vm388, %v286, %v516
    %v549 = vsel %vm389, %v289, %v517
    %v550 = vsel %vm390, %v294, %v518
    %v551 = vsel %vm391, %v297, %v519
    %v552 = vsel %vm392, %v302, %v520
    %v553 = vsel %vm393, %v305, %v521
    %v554 = vsel %vm394, %v310, %v522
    %v555 = vsel %vm395, %v313, %v523
    %v556 = vsel %vm396, %v318, %v524
    %v557 = vsel %vm397, %v321, %v525
    %v558 = vsel %vm398, %v326, %v526
    %v559 = vsel %vm399, %v329, %v527
    %v560 = vsel %vm400, %v334, %v528
    %v561 = vsel %vm401, %v337, %v529
    %v562 = vsel %vm402, %v342, %v530
    %v563 = vsel %vm403, %v345, %v531
    %v564 = vsel %vm404, %v350, %v532
    %v565 = vsel %vm405, %v353, %v533
    %v566 = vsel %vm406, %v358, %v534
    %v567 = vsel %vm407, %v361, %v535
    %v568 = vsel %vm408, %v366, %v536
    %v569 = vsel %vm409, %v369, %v537
    %v570 = vsel %vm410, %v374, %v538
    %v571 = vsel %vm411, %v377, %v539
    %v572 = vpack.c.bf16 %v541, %v540
    %v573 = vpack.c.bf16 %v543, %v542
    %v574 = vpack.c.bf16 %v545, %v544
    %v575 = vpack.c.bf16 %v547, %v546
    %v576 = vpack.c.bf16 %v549, %v548
    %v577 = vpack.c.bf16 %v551, %v550
    %v578 = vpack.c.bf16 %v553, %v552
    %v579 = vpack.c.bf16 %v555, %v554
    %v580 = vpack.c.bf16 %v557, %v556
    %v581 = vpack.c.bf16 %v559, %v558
    %v582 = vpack.c.bf16 %v561, %v560
    %v583 = vpack.c.bf16 %v563, %v562
    %v584 = vpack.c.bf16 %v565, %v564
    %v585 = vpack.c.bf16 %v567, %v566
    %v586 = vpack.c.bf16 %v569, %v568
    %v587 = vpack.c.bf16 %v571, %v570
    %v588 = vld [vmem:[%s3] sm:$0xf]
    %v589 = vld [vmem:[%s3 + $0x4] sm:$0xf]
    %v590 = vld [vmem:[%s3 + $0x8] sm:$0xf]
    %v591 = vld [vmem:[%s3 + $0xc] sm:$0xf]
    %v592 = vld [vmem:[%s3 + $0x10] sm:$0xf]
    %v593 = vld [vmem:[%s3 + $0x14] sm:$0xf]
    %v594 = vld [vmem:[%s3 + $0x18] sm:$0xf]
    %v595 = vld [vmem:[%s3 + $0x1c] sm:$0xf]
    %v596 = vld [vmem:[%s3 + $0x20] sm:$0xf]
    %v597 = vld [vmem:[%s3 + $0x24] sm:$0xf]
    %v598 = vld [vmem:[%s3 + $0x28] sm:$0xf]
    %v599 = vld [vmem:[%s3 + $0x2c] sm:$0xf]
    %v600 = vld [vmem:[%s3 + $0x30] sm:$0x3]
    %v601 = vld [vmem:[%s4] sm:$0x1]
    %v603 = vlaneseq
    %v604 = vshrl.u32 %v603, 7
    %v605 = vsub.s32 0, %v604
    %v606 = vrot.slane %v601, %v605
    %v621 = vunpack.c.l.b16 %v588
    %v622 = vunpack.c.l.b16 %v589
    %v623 = vunpack.c.l.b16 %v590
    %v624 = vunpack.c.l.b16 %v591
    %v625 = vunpack.c.l.b16 %v592
    %v626 = vunpack.c.l.b16 %v593
    %v627 = vunpack.c.l.b16 %v594
    %v628 = vunpack.c.l.b16 %v595
    %v629 = vunpack.c.l.b16 %v596
    %v630 = vunpack.c.l.b16 %v597
    %v631 = vunpack.c.l.b16 %v598
    %v632 = vunpack.c.l.b16 %v599
    %v633 = vunpack.c.l.b16 %v600
    %v634 = vpack.c.b16 %v622, %v621
    %v635 = vpack.c.b16 %v624, %v623
    %v636 = vpack.c.b16 %v626, %v625
    %v637 = vpack.c.b16 %v628, %v627
    %v638 = vpack.c.b16 %v630, %v629
    %v639 = vpack.c.b16 %v632, %v631
    %v640 = vpack.c.b16 %v633, %v633
    %vm647 = vcmask 818176
    %v649 = vsel %vm647, %v572, 0
    %v652 = vsel %vm647, %v573, 0
    %v655 = vsel %vm647, %v574, 0
    %v658 = vsel %vm647, %v575, 0
    %v661 = vsel %vm647, %v576, 0
    %v664 = vsel %vm647, %v577, 0
    %v667 = vsel %vm647, %v578, 0
    %v670 = vsel %vm647, %v579, 0
    %v673 = vsel %vm647, %v580, 0
    %v676 = vsel %vm647, %v581, 0
    %v679 = vsel %vm647, %v582, 0
    %v682 = vsel %vm647, %v583, 0
    %v685 = vsel %vm647, %v584, 0
    %v688 = vsel %vm647, %v585, 0
    %v691 = vsel %vm647, %v586, 0
    %v694 = vsel %vm647, %v587, 0
    %vm696 = vcmask 1041408
    %v698 = vsel %vm696, %v640, 0
    %700 = vmatprep.subr.bf16.mxu0 0
    %701 = vmatpush1.bf16.msra.mxu0 0
    %702 = vmatprep.subr.bf16.mxu0 0
    %703 = vmatpush1.bf16.msra.mxu0 %v698
    %704 = vmatprep.subr.bf16.mxu0 0
    %705 = vmatpush1.bf16.msra.mxu0 %v639
    %706 = vmatprep.subr.bf16.mxu0 0
    %707 = vmatpush1.bf16.msra.mxu0 %v638
    %708 = vmatprep.subr.bf16.mxu0 0
    %709 = vmatpush1.bf16.msra.mxu0 %v637
    %710 = vmatprep.subr.bf16.mxu0 0
    %711 = vmatpush1.bf16.msra.mxu0 %v636
    %712 = vmatprep.subr.bf16.mxu0 0
    %713 = vmatpush1.bf16.msra.mxu0 %v635
    %714 = vmatprep.subr.bf16.mxu0 0
    %715 = vmatpush1.bf16.msra.mxu0 %v634
    %716 = vmatprep.subr.bf16.mxu0 0
    %717 = vmatpush2.bf16.msra.mxu0 0
    %718 = vmatprep.subr.bf16.mxu0 0
    %719 = vmatpush2.bf16.msra.mxu0 0
    %720 = vmatprep.subr.bf16.mxu0 0
    %721 = vmatpush2.bf16.msra.mxu0 0
    %722 = vmatprep.subr.bf16.mxu0 0
    %723 = vmatpush2.bf16.msra.mxu0 0
    %724 = vmatprep.subr.bf16.mxu0 0
    %725 = vmatpush2.bf16.msra.mxu0 0
    %726 = vmatprep.subr.bf16.mxu0 0
    %727 = vmatpush2.bf16.msra.mxu0 0
    %728 = vmatprep.subr.bf16.mxu0 0
    %729 = vmatpush2.bf16.msra.mxu0 0
    %730 = vmatprep.subr.bf16.mxu0 0
    %731 = vmatpush2.bf16.msra.mxu0 0
    %732 = vmatprep.mubr.bf16.mxu0 0
    %733 = vmatmul.mubr.bf16.gmra.mxu0 %v649
    %v734 = vpop.f32.mrf.mxu0
    %v735 = vadd.f32 %v606, %v734
    %v736 = vpop.f32.mrf.mxu0
    %v737 = vpop.f32.mrf.mxu0
    %v738 = vadd.f32 %v606, %v737
    %v739 = vpop.f32.mrf.mxu0
    %740 = vmatprep.mubr.bf16.mxu0 0
    %741 = vmatmul.mubr.bf16.gmra.mxu0 %v652
    %v742 = vpop.f32.mrf.mxu0
    %v743 = vadd.f32 %v606, %v742
    %v744 = vpop.f32.mrf.mxu0
    %v745 = vpop.f32.mrf.mxu0
    %v746 = vadd.f32 %v606, %v745
    %v747 = vpop.f32.mrf.mxu0
    %748 = vmatprep.mubr.bf16.mxu0 0
    %749 = vmatmul.mubr.bf16.gmra.mxu0 %v655
    %v750 = vpop.f32.mrf.mxu0
    %v751 = vadd.f32 %v606, %v750
    %v752 = vpop.f32.mrf.mxu0
    %v753 = vpop.f32.mrf.mxu0
    %v754 = vadd.f32 %v606, %v753
    %v755 = vpop.f32.mrf.mxu0
    %756 = vmatprep.mubr.bf16.mxu0 0
    %757 = vmatmul.mubr.bf16.gmra.mxu0 %v658
    %v758 = vpop.f32.mrf.mxu0
    %v759 = vadd.f32 %v606, %v758
    %v760 = vpop.f32.mrf.mxu0
    %v761 = vpop.f32.mrf.mxu0
    %v762 = vadd.f32 %v606, %v761
    %v763 = vpop.f32.mrf.mxu0
    %764 = vmatprep.mubr.bf16.mxu0 0
    %765 = vmatmul.mubr.bf16.gmra.mxu0 %v661
    %v766 = vpop.f32.mrf.mxu0
    %v767 = vadd.f32 %v606, %v766
    %v768 = vpop.f32.mrf.mxu0
    %v769 = vpop.f32.mrf.mxu0
    %v770 = vadd.f32 %v606, %v769
    %v771 = vpop.f32.mrf.mxu0
    %772 = vmatprep.mubr.bf16.mxu0 0
    %773 = vmatmul.mubr.bf16.gmra.mxu0 %v664
    %v774 = vpop.f32.mrf.mxu0
    %v775 = vadd.f32 %v606, %v774
    %v776 = vpop.f32.mrf.mxu0
    %v777 = vpop.f32.mrf.mxu0
    %v778 = vadd.f32 %v606, %v777
    %v779 = vpop.f32.mrf.mxu0
    %780 = vmatprep.mubr.bf16.mxu0 0
    %781 = vmatmul.mubr.bf16.gmra.mxu0 %v667
    %v782 = vpop.f32.mrf.mxu0
    %v783 = vadd.f32 %v606, %v782
    %v784 = vpop.f32.mrf.mxu0
    %v785 = vpop.f32.mrf.mxu0
    %v786 = vadd.f32 %v606, %v785
    %v787 = vpop.f32.mrf.mxu0
    %788 = vmatprep.mubr.bf16.mxu0 0
    %789 = vmatmul.mubr.bf16.gmra.mxu0 %v670
    %v790 = vpop.f32.mrf.mxu0
    %v791 = vadd.f32 %v606, %v790
    %v792 = vpop.f32.mrf.mxu0
    %v793 = vpop.f32.mrf.mxu0
    %v794 = vadd.f32 %v606, %v793
    %v795 = vpop.f32.mrf.mxu0
    %796 = vmatprep.mubr.bf16.mxu0 0
    %797 = vmatmul.mubr.bf16.gmra.mxu0 %v673
    %v798 = vpop.f32.mrf.mxu0
    %v799 = vadd.f32 %v606, %v798
    %v800 = vpop.f32.mrf.mxu0
    %v801 = vpop.f32.mrf.mxu0
    %v802 = vadd.f32 %v606, %v801
    %v803 = vpop.f32.mrf.mxu0
    %804 = vmatprep.mubr.bf16.mxu0 0
    %805 = vmatmul.mubr.bf16.gmra.mxu0 %v676
    %v806 = vpop.f32.mrf.mxu0
    %v807 = vadd.f32 %v606, %v806
    %v808 = vpop.f32.mrf.mxu0
    %v809 = vpop.f32.mrf.mxu0
    %v810 = vadd.f32 %v606, %v809
    %v811 = vpop.f32.mrf.mxu0
    %812 = vmatprep.mubr.bf16.mxu0 0
    %813 = vmatmul.mubr.bf16.gmra.mxu0 %v679
    %v814 = vpop.f32.mrf.mxu0
    %v815 = vadd.f32 %v606, %v814
    %v816 = vpop.f32.mrf.mxu0
    %v817 = vpop.f32.mrf.mxu0
    %v818 = vadd.f32 %v606, %v817
    %v819 = vpop.f32.mrf.mxu0
    %820 = vmatprep.mubr.bf16.mxu0 0
    %821 = vmatmul.mubr.bf16.gmra.mxu0 %v682
    %v822 = vpop.f32.mrf.mxu0
    %v823 = vadd.f32 %v606, %v822
    %v824 = vpop.f32.mrf.mxu0
    %v825 = vpop.f32.mrf.mxu0
    %v826 = vadd.f32 %v606, %v825
    %v827 = vpop.f32.mrf.mxu0
    %828 = vmatprep.mubr.bf16.mxu0 0
    %829 = vmatmul.mubr.bf16.gmra.mxu0 %v685
    %v830 = vpop.f32.mrf.mxu0
    %v831 = vadd.f32 %v606, %v830
    %v832 = vpop.f32.mrf.mxu0
    %v833 = vpop.f32.mrf.mxu0
    %v834 = vadd.f32 %v606, %v833
    %v835 = vpop.f32.mrf.mxu0
    %836 = vmatprep.mubr.bf16.mxu0 0
    %837 = vmatmul.mubr.bf16.gmra.mxu0 %v688
    %v838 = vpop.f32.mrf.mxu0
    %v839 = vadd.f32 %v606, %v838
    %v840 = vpop.f32.mrf.mxu0
    %v841 = vpop.f32.mrf.mxu0
    %v842 = vadd.f32 %v606, %v841
    %v843 = vpop.f32.mrf.mxu0
    %844 = vmatprep.mubr.bf16.mxu0 0
    %845 = vmatmul.mubr.bf16.gmra.mxu0 %v691
    %v846 = vpop.f32.mrf.mxu0
    %v847 = vadd.f32 %v606, %v846
    %v848 = vpop.f32.mrf.mxu0
    %v849 = vpop.f32.mrf.mxu0
    %v850 = vadd.f32 %v606, %v849
    %v851 = vpop.f32.mrf.mxu0
    %852 = vmatprep.mubr.bf16.mxu0 0
    %853 = vmatmul.mubr.bf16.gmra.mxu0 %v694
    %v854 = vpop.f32.mrf.mxu0
    %v855 = vadd.f32 %v606, %v854
    %v856 = vpop.f32.mrf.mxu0
    %v857 = vpop.f32.mrf.mxu0
    %v858 = vadd.f32 %v606, %v857
    %v859 = vpop.f32.mrf.mxu0
    %860 = vdwg.mxu0
    %vm861 = vcmp.gt.f32.partialorder %v735, 0.0
    %vm862 = vcmp.gt.f32.partialorder %v738, 0.0
    %vm863 = vcmp.gt.f32.partialorder %v743, 0.0
    %vm864 = vcmp.gt.f32.partialorder %v746, 0.0
    %vm865 = vcmp.gt.f32.partialorder %v751, 0.0
    %vm866 = vcmp.gt.f32.partialorder %v754, 0.0
    %vm867 = vcmp.gt.f32.partialorder %v759, 0.0
    %vm868 = vcmp.gt.f32.partialorder %v762, 0.0
    %vm869 = vcmp.gt.f32.partialorder %v767, 0.0
    %vm870 = vcmp.gt.f32.partialorder %v770, 0.0
    %vm871 = vcmp.gt.f32.partialorder %v775, 0.0
    %vm872 = vcmp.gt.f32.partialorder %v778, 0.0
    %vm873 = vcmp.gt.f32.partialorder %v783, 0.0
    %vm874 = vcmp.gt.f32.partialorder %v786, 0.0
    %vm875 = vcmp.gt.f32.partialorder %v791, 0.0
    %vm876 = vcmp.gt.f32.partialorder %v794, 0.0
    %vm877 = vcmp.gt.f32.partialorder %v799, 0.0
    %vm878 = vcmp.gt.f32.partialorder %v802, 0.0
    %vm879 = vcmp.gt.f32.partialorder %v807, 0.0
    %vm880 = vcmp.gt.f32.partialorder %v810, 0.0
    %vm881 = vcmp.gt.f32.partialorder %v815, 0.0
    %vm882 = vcmp.gt.f32.partialorder %v818, 0.0
    %vm883 = vcmp.gt.f32.partialorder %v823, 0.0
    %vm884 = vcmp.gt.f32.partialorder %v826, 0.0
    %vm885 = vcmp.gt.f32.partialorder %v831, 0.0
    %vm886 = vcmp.gt.f32.partialorder %v834, 0.0
    %vm887 = vcmp.gt.f32.partialorder %v839, 0.0
    %vm888 = vcmp.gt.f32.partialorder %v842, 0.0
    %vm889 = vcmp.gt.f32.partialorder %v847, 0.0
    %vm890 = vcmp.gt.f32.partialorder %v850, 0.0
    %vm891 = vcmp.gt.f32.partialorder %v855, 0.0
    %vm892 = vcmp.gt.f32.partialorder %v858, 0.0
    %v893 = vmin.f32 %v735, 0.0
    %v894 = vmin.f32 %v738, 0.0
    %v895 = vmin.f32 %v743, 0.0
    %v896 = vmin.f32 %v746, 0.0
    %v897 = vmin.f32 %v751, 0.0
    %v898 = vmin.f32 %v754, 0.0
    %v899 = vmin.f32 %v759, 0.0
    %v900 = vmin.f32 %v762, 0.0
    %v901 = vmin.f32 %v767, 0.0
    %v902 = vmin.f32 %v770, 0.0
    %v903 = vmin.f32 %v775, 0.0
    %v904 = vmin.f32 %v778, 0.0
    %v905 = vmin.f32 %v783, 0.0
    %v906 = vmin.f32 %v786, 0.0
    %v907 = vmin.f32 %v791, 0.0
    %v908 = vmin.f32 %v794, 0.0
    %v909 = vmin.f32 %v799, 0.0
    %v910 = vmin.f32 %v802, 0.0
    %v911 = vmin.f32 %v807, 0.0
    %v912 = vmin.f32 %v810, 0.0
    %v913 = vmin.f32 %v815, 0.0
    %v914 = vmin.f32 %v818, 0.0
    %v915 = vmin.f32 %v823, 0.0
    %v916 = vmin.f32 %v826, 0.0
    %v917 = vmin.f32 %v831, 0.0
    %v918 = vmin.f32 %v834, 0.0
    %v919 = vmin.f32 %v839, 0.0
    %v920 = vmin.f32 %v842, 0.0
    %v921 = vmin.f32 %v847, 0.0
    %v922 = vmin.f32 %v850, 0.0
    %v923 = vmin.f32 %v855, 0.0
    %v924 = vmin.f32 %v858, 0.0
    %v925 = vmul.f32 %v893, 1.442695
    %v926 = vpow.pop %v925
    %v927 = vmul.f32 %v894, 1.442695
    %v928 = vpow.pop %v927
    %v929 = vmul.f32 %v895, 1.442695
    %v930 = vpow.pop %v929
    %v931 = vmul.f32 %v896, 1.442695
    %v932 = vpow.pop %v931
    %v933 = vmul.f32 %v897, 1.442695
    %v934 = vpow.pop %v933
    %v935 = vmul.f32 %v898, 1.442695
    %v936 = vpow.pop %v935
    %v937 = vmul.f32 %v899, 1.442695
    %v938 = vpow.pop %v937
    %v939 = vmul.f32 %v900, 1.442695
    %v940 = vpow.pop %v939
    %v941 = vmul.f32 %v901, 1.442695
    %v942 = vpow.pop %v941
    %v943 = vmul.f32 %v902, 1.442695
    %v944 = vpow.pop %v943
    %v945 = vmul.f32 %v903, 1.442695
    %v946 = vpow.pop %v945
    %v947 = vmul.f32 %v904, 1.442695
    %v948 = vpow.pop %v947
    %v949 = vmul.f32 %v905, 1.442695
    %v950 = vpow.pop %v949
    %v951 = vmul.f32 %v906, 1.442695
    %v952 = vpow.pop %v951
    %v953 = vmul.f32 %v907, 1.442695
    %v954 = vpow.pop %v953
    %v955 = vmul.f32 %v908, 1.442695
    %v956 = vpow.pop %v955
    %v957 = vmul.f32 %v909, 1.442695
    %v958 = vpow.pop %v957
    %v959 = vmul.f32 %v910, 1.442695
    %v960 = vpow.pop %v959
    %v961 = vmul.f32 %v911, 1.442695
    %v962 = vpow.pop %v961
    %v963 = vmul.f32 %v912, 1.442695
    %v964 = vpow.pop %v963
    %v965 = vmul.f32 %v913, 1.442695
    %v966 = vpow.pop %v965
    %v967 = vmul.f32 %v914, 1.442695
    %v968 = vpow.pop %v967
    %v969 = vmul.f32 %v915, 1.442695
    %v970 = vpow.pop %v969
    %v971 = vmul.f32 %v916, 1.442695
    %v972 = vpow.pop %v971
    %v973 = vmul.f32 %v917, 1.442695
    %v974 = vpow.pop %v973
    %v975 = vmul.f32 %v918, 1.442695
    %v976 = vpow.pop %v975
    %v977 = vmul.f32 %v919, 1.442695
    %v978 = vpow.pop %v977
    %v979 = vmul.f32 %v920, 1.442695
    %v980 = vpow.pop %v979
    %v981 = vmul.f32 %v921, 1.442695
    %v982 = vpow.pop %v981
    %v983 = vmul.f32 %v922, 1.442695
    %v984 = vpow.pop %v983
    %v985 = vmul.f32 %v923, 1.442695
    %v986 = vpow.pop %v985
    %v987 = vmul.f32 %v924, 1.442695
    %v988 = vpow.pop %v987
    %v989 = vsub.f32 %v926, 1.0
    %v990 = vsub.f32 %v928, 1.0
    %v991 = vsub.f32 %v930, 1.0
    %v992 = vsub.f32 %v932, 1.0
    %v993 = vsub.f32 %v934, 1.0
    %v994 = vsub.f32 %v936, 1.0
    %v995 = vsub.f32 %v938, 1.0
    %v996 = vsub.f32 %v940, 1.0
    %v997 = vsub.f32 %v942, 1.0
    %v998 = vsub.f32 %v944, 1.0
    %v999 = vsub.f32 %v946, 1.0
    %v1000 = vsub.f32 %v948, 1.0
    %v1001 = vsub.f32 %v950, 1.0
    %v1002 = vsub.f32 %v952, 1.0
    %v1003 = vsub.f32 %v954, 1.0
    %v1004 = vsub.f32 %v956, 1.0
    %v1005 = vsub.f32 %v958, 1.0
    %v1006 = vsub.f32 %v960, 1.0
    %v1007 = vsub.f32 %v962, 1.0
    %v1008 = vsub.f32 %v964, 1.0
    %v1009 = vsub.f32 %v966, 1.0
    %v1010 = vsub.f32 %v968, 1.0
    %v1011 = vsub.f32 %v970, 1.0
    %v1012 = vsub.f32 %v972, 1.0
    %v1013 = vsub.f32 %v974, 1.0
    %v1014 = vsub.f32 %v976, 1.0
    %v1015 = vsub.f32 %v978, 1.0
    %v1016 = vsub.f32 %v980, 1.0
    %v1017 = vsub.f32 %v982, 1.0
    %v1018 = vsub.f32 %v984, 1.0
    %v1019 = vsub.f32 %v986, 1.0
    %v1020 = vsub.f32 %v988, 1.0
    %v1021 = vsel %vm861, %v735, %v989
    %v1022 = vsel %vm862, %v738, %v990
    %v1023 = vsel %vm863, %v743, %v991
    %v1024 = vsel %vm864, %v746, %v992
    %v1025 = vsel %vm865, %v751, %v993
    %v1026 = vsel %vm866, %v754, %v994
    %v1027 = vsel %vm867, %v759, %v995
    %v1028 = vsel %vm868, %v762, %v996
    %v1029 = vsel %vm869, %v767, %v997
    %v1030 = vsel %vm870, %v770, %v998
    %v1031 = vsel %vm871, %v775, %v999
    %v1032 = vsel %vm872, %v778, %v1000
    %v1033 = vsel %vm873, %v783, %v1001
    %v1034 = vsel %vm874, %v786, %v1002
    %v1035 = vsel %vm875, %v791, %v1003
    %v1036 = vsel %vm876, %v794, %v1004
    %v1037 = vsel %vm877, %v799, %v1005
    %v1038 = vsel %vm878, %v802, %v1006
    %v1039 = vsel %vm879, %v807, %v1007
    %v1040 = vsel %vm880, %v810, %v1008
    %v1041 = vsel %vm881, %v815, %v1009
    %v1042 = vsel %vm882, %v818, %v1010
    %v1043 = vsel %vm883, %v823, %v1011
    %v1044 = vsel %vm884, %v826, %v1012
    %v1045 = vsel %vm885, %v831, %v1013
    %v1046 = vsel %vm886, %v834, %v1014
    %v1047 = vsel %vm887, %v839, %v1015
    %v1048 = vsel %vm888, %v842, %v1016
    %v1049 = vsel %vm889, %v847, %v1017
    %v1050 = vsel %vm890, %v850, %v1018
    %v1051 = vsel %vm891, %v855, %v1019
    %v1052 = vsel %vm892, %v858, %v1020
    %v1053 = vpack.c.bf16 %v1022, %v1021
    %v1054 = vpack.c.bf16 %v1024, %v1023
    %v1055 = vpack.c.bf16 %v1026, %v1025
    %v1056 = vpack.c.bf16 %v1028, %v1027
    %v1057 = vpack.c.bf16 %v1030, %v1029
    %v1058 = vpack.c.bf16 %v1032, %v1031
    %v1059 = vpack.c.bf16 %v1034, %v1033
    %v1060 = vpack.c.bf16 %v1036, %v1035
    %v1061 = vpack.c.bf16 %v1038, %v1037
    %v1062 = vpack.c.bf16 %v1040, %v1039
    %v1063 = vpack.c.bf16 %v1042, %v1041
    %v1064 = vpack.c.bf16 %v1044, %v1043
    %v1065 = vpack.c.bf16 %v1046, %v1045
    %v1066 = vpack.c.bf16 %v1048, %v1047
    %v1067 = vpack.c.bf16 %v1050, %v1049
    %v1068 = vpack.c.bf16 %v1052, %v1051
    %v1085 = vunpack.c.l.b16 %v1053
    %v1086 = vunpack.c.h.b16 %v1053
    %v1087 = vunpack.c.l.b16 %v1054
    %v1088 = vunpack.c.h.b16 %v1054
    %v1089 = vunpack.c.l.b16 %v1055
    %v1090 = vunpack.c.h.b16 %v1055
    %v1091 = vunpack.c.l.b16 %v1056
    %v1092 = vunpack.c.h.b16 %v1056
    %v1093 = vunpack.c.l.b16 %v1057
    %v1094 = vunpack.c.h.b16 %v1057
    %v1095 = vunpack.c.l.b16 %v1058
    %v1096 = vunpack.c.h.b16 %v1058
    %v1097 = vunpack.c.l.b16 %v1059
    %v1098 = vunpack.c.h.b16 %v1059
    %v1099 = vunpack.c.l.b16 %v1060
    %v1100 = vunpack.c.h.b16 %v1060
    %v1101 = vunpack.c.l.b16 %v1061
    %v1102 = vunpack.c.h.b16 %v1061
    %v1103 = vunpack.c.l.b16 %v1062
    %v1104 = vunpack.c.h.b16 %v1062
    %v1105 = vunpack.c.l.b16 %v1063
    %v1106 = vunpack.c.h.b16 %v1063
    %v1107 = vunpack.c.l.b16 %v1064
    %v1108 = vunpack.c.h.b16 %v1064
    %v1109 = vunpack.c.l.b16 %v1065
    %v1110 = vunpack.c.h.b16 %v1065
    %v1111 = vunpack.c.l.b16 %v1066
    %v1112 = vunpack.c.h.b16 %v1066
    %v1113 = vunpack.c.l.b16 %v1067
    %v1114 = vunpack.c.h.b16 %v1067
    %v1115 = vunpack.c.l.b16 %v1068
    %v1116 = vunpack.c.h.b16 %v1068
    %v1117 = vpack.c.b16 %v1085, %v1085
    %v1118 = vpack.c.b16 %v1086, %v1086
    %v1119 = vpack.c.b16 %v1087, %v1087
    %v1120 = vpack.c.b16 %v1088, %v1088
    %v1121 = vpack.c.b16 %v1089, %v1089
    %v1122 = vpack.c.b16 %v1090, %v1090
    %v1123 = vpack.c.b16 %v1091, %v1091
    %v1124 = vpack.c.b16 %v1092, %v1092
    %v1125 = vpack.c.b16 %v1093, %v1093
    %v1126 = vpack.c.b16 %v1094, %v1094
    %v1127 = vpack.c.b16 %v1095, %v1095
    %v1128 = vpack.c.b16 %v1096, %v1096
    %v1129 = vpack.c.b16 %v1097, %v1097
    %v1130 = vpack.c.b16 %v1098, %v1098
    %v1131 = vpack.c.b16 %v1099, %v1099
    %v1132 = vpack.c.b16 %v1100, %v1100
    %v1133 = vpack.c.b16 %v1101, %v1101
    %v1134 = vpack.c.b16 %v1102, %v1102
    %v1135 = vpack.c.b16 %v1103, %v1103
    %v1136 = vpack.c.b16 %v1104, %v1104
    %v1137 = vpack.c.b16 %v1105, %v1105
    %v1138 = vpack.c.b16 %v1106, %v1106
    %v1139 = vpack.c.b16 %v1107, %v1107
    %v1140 = vpack.c.b16 %v1108, %v1108
    %v1141 = vpack.c.b16 %v1109, %v1109
    %v1142 = vpack.c.b16 %v1110, %v1110
    %v1143 = vpack.c.b16 %v1111, %v1111
    %v1144 = vpack.c.b16 %v1112, %v1112
    %v1145 = vpack.c.b16 %v1113, %v1113
    %v1146 = vpack.c.b16 %v1114, %v1114
    %v1147 = vpack.c.b16 %v1115, %v1115
    %v1148 = vpack.c.b16 %v1116, %v1116
    %vm1181 = vcmask 814080
    %1182 = vst.msk [vmem:[#allocation2] sm:$0xf] %vm1181, %v1117
    %1183 = vst.msk [vmem:[#allocation2 + $0x4] sm:$0xf] %vm1181, %v1118
    %1184 = vst.msk [vmem:[#allocation2 + $0x8] sm:$0xf] %vm1181, %v1119
    %1185 = vst.msk [vmem:[#allocation2 + $0xc] sm:$0xf] %vm1181, %v1120
    %1186 = vst.msk [vmem:[#allocation2 + $0x10] sm:$0xf] %vm1181, %v1121
    %1187 = vst.msk [vmem:[#allocation2 + $0x14] sm:$0xf] %vm1181, %v1122
    %1188 = vst.msk [vmem:[#allocation2 + $0x18] sm:$0xf] %vm1181, %v1123
    %1189 = vst.msk [vmem:[#allocation2 + $0x1c] sm:$0xf] %vm1181, %v1124
    %1190 = vst.msk [vmem:[#allocation2 + $0x20] sm:$0xf] %vm1181, %v1125
    %1191 = vst.msk [vmem:[#allocation2 + $0x24] sm:$0xf] %vm1181, %v1126
    %1192 = vst.msk [vmem:[#allocation2 + $0x28] sm:$0xf] %vm1181, %v1127
    %1193 = vst.msk [vmem:[#allocation2 + $0x2c] sm:$0xf] %vm1181, %v1128
    %1194 = vst.msk [vmem:[#allocation2 + $0x30] sm:$0xf] %vm1181, %v1129
    %1195 = vst.msk [vmem:[#allocation2 + $0x34] sm:$0xf] %vm1181, %v1130
    %1196 = vst.msk [vmem:[#allocation2 + $0x38] sm:$0xf] %vm1181, %v1131
    %1197 = vst.msk [vmem:[#allocation2 + $0x3c] sm:$0xf] %vm1181, %v1132
    %1198 = vst.msk [vmem:[#allocation2 + $0x40] sm:$0xf] %vm1181, %v1133
    %1199 = vst.msk [vmem:[#allocation2 + $0x44] sm:$0xf] %vm1181, %v1134
    %1200 = vst.msk [vmem:[#allocation2 + $0x48] sm:$0xf] %vm1181, %v1135
    %1201 = vst.msk [vmem:[#allocation2 + $0x4c] sm:$0xf] %vm1181, %v1136
    %1202 = vst.msk [vmem:[#allocation2 + $0x50] sm:$0xf] %vm1181, %v1137
    %1203 = vst.msk [vmem:[#allocation2 + $0x54] sm:$0xf] %vm1181, %v1138
    %1204 = vst.msk [vmem:[#allocation2 + $0x58] sm:$0xf] %vm1181, %v1139
    %1205 = vst.msk [vmem:[#allocation2 + $0x5c] sm:$0xf] %vm1181, %v1140
    %1206 = vst.msk [vmem:[#allocation2 + $0x60] sm:$0xf] %vm1181, %v1141
    %1207 = vst.msk [vmem:[#allocation2 + $0x64] sm:$0xf] %vm1181, %v1142
    %1208 = vst.msk [vmem:[#allocation2 + $0x68] sm:$0xf] %vm1181, %v1143
    %1209 = vst.msk [vmem:[#allocation2 + $0x6c] sm:$0xf] %vm1181, %v1144
    %1210 = vst.msk [vmem:[#allocation2 + $0x70] sm:$0xf] %vm1181, %v1145
    %1211 = vst.msk [vmem:[#allocation2 + $0x74] sm:$0xf] %vm1181, %v1146
    %1212 = vst.msk [vmem:[#allocation2 + $0x78] sm:$0xf] %vm1181, %v1147
    %1213 = vst.msk [vmem:[#allocation2 + $0x7c] sm:$0xf] %vm1181, %v1148
    %v1214 = vld [vmem:[#allocation2] sm:$0xf]
    %v1215 = vld [vmem:[#allocation2 + $0x4] sm:$0xf]
    %v1216 = vld [vmem:[#allocation2 + $0x8] sm:$0xf]
    %v1217 = vld [vmem:[#allocation2 + $0xc] sm:$0xf]
    %v1218 = vld [vmem:[#allocation2 + $0x10] sm:$0xf]
    %v1219 = vld [vmem:[#allocation2 + $0x14] sm:$0xf]
    %v1220 = vld [vmem:[#allocation2 + $0x18] sm:$0xf]
    %v1221 = vld [vmem:[#allocation2 + $0x1c] sm:$0xf]
    %v1222 = vld [vmem:[#allocation2 + $0x20] sm:$0xf]
    %v1223 = vld [vmem:[#allocation2 + $0x24] sm:$0xf]
    %v1224 = vld [vmem:[#allocation2 + $0x28] sm:$0xf]
    %v1225 = vld [vmem:[#allocation2 + $0x2c] sm:$0xf]
    %v1226 = vld [vmem:[#allocation2 + $0x30] sm:$0xf]
    %v1227 = vld [vmem:[#allocation2 + $0x34] sm:$0xf]
    %v1228 = vld [vmem:[#allocation2 + $0x38] sm:$0xf]
    %v1229 = vld [vmem:[#allocation2 + $0x3c] sm:$0xf]
    %v1230 = vld [vmem:[%s5] sm:$0xf]
    %v1231 = vld [vmem:[%s5 + $0x4] sm:$0xf]
    %v1232 = vld [vmem:[%s5 + $0x8] sm:$0xf]
    %v1233 = vld [vmem:[%s5 + $0xc] sm:$0xf]
    %v1234 = vld [vmem:[%s5 + $0x10] sm:$0xf]
    %v1235 = vld [vmem:[%s5 + $0x14] sm:$0xf]
    %v1236 = vld [vmem:[%s5 + $0x18] sm:$0xf]
    %v1237 = vld [vmem:[%s5 + $0x1c] sm:$0xf]
    %v1238 = vld [vmem:[%s5 + $0x20] sm:$0xf]
    %v1239 = vld [vmem:[%s5 + $0x24] sm:$0xf]
    %v1240 = vld [vmem:[%s5 + $0x28] sm:$0xf]
    %v1241 = vld [vmem:[%s5 + $0x2c] sm:$0xf]
    %v1242 = vld [vmem:[%s5 + $0x30] sm:$0x3]
    %v1243 = vld [vmem:[#allocation2] sm:$0xe]
    %v1244 = vld [vmem:[#allocation2 + $0x40] sm:$0x1]
    %s1245 = scalar_lea.vmem %s5, 52
    %v1246 = vld [vmem:[%s1245] sm:$0xf]
    %v1247 = vld [vmem:[%s1245 + $0x4] sm:$0xf]
    %v1248 = vld [vmem:[%s1245 + $0x8] sm:$0xf]
    %v1249 = vld [vmem:[%s1245 + $0xc] sm:$0xf]
    %v1250 = vld [vmem:[%s1245 + $0x10] sm:$0xf]
    %v1251 = vld [vmem:[%s1245 + $0x14] sm:$0xf]
    %v1252 = vld [vmem:[%s1245 + $0x18] sm:$0xf]
    %v1253 = vld [vmem:[%s1245 + $0x1c] sm:$0xf]
    %v1254 = vld [vmem:[%s1245 + $0x20] sm:$0xf]
    %v1255 = vld [vmem:[%s1245 + $0x24] sm:$0xf]
    %v1256 = vld [vmem:[%s1245 + $0x28] sm:$0xf]
    %v1257 = vld [vmem:[%s1245 + $0x2c] sm:$0xf]
    %v1258 = vld [vmem:[%s1245 + $0x30] sm:$0x3]
    %v1276 = vunpack.c.l.b16 %v1243
    %v1277 = vunpack.c.l.b16 %v1215
    %v1278 = vunpack.c.l.b16 %v1216
    %v1279 = vunpack.c.l.b16 %v1217
    %v1280 = vunpack.c.l.b16 %v1218
    %v1281 = vunpack.c.l.b16 %v1219
    %v1282 = vunpack.c.l.b16 %v1220
    %v1283 = vunpack.c.l.b16 %v1221
    %v1284 = vunpack.c.l.b16 %v1222
    %v1285 = vunpack.c.l.b16 %v1223
    %v1286 = vunpack.c.l.b16 %v1224
    %v1287 = vunpack.c.l.b16 %v1225
    %v1288 = vunpack.c.l.b16 %v1226
    %v1289 = vunpack.c.l.b16 %v1227
    %v1290 = vunpack.c.l.b16 %v1228
    %v1291 = vunpack.c.l.b16 %v1229
    %v1292 = vunpack.c.l.b16 %v1244
    %v1293 = vpack.c.b16 %v1277, %v1276
    %v1294 = vpack.c.b16 %v1279, %v1278
    %v1295 = vpack.c.b16 %v1281, %v1280
    %v1296 = vpack.c.b16 %v1283, %v1282
    %v1297 = vpack.c.b16 %v1285, %v1284
    %v1298 = vpack.c.b16 %v1287, %v1286
    %v1299 = vpack.c.b16 %v1289, %v1288
    %v1300 = vpack.c.b16 %v1291, %v1290
    %v1301 = vpack.c.b16 %v1292, %v1292
    %vm1302 = vcmask 1046528
    %v1303 = vrot.slane %v1293, 1
    %v1304 = vrot.slane %v1294, 1
    %v1305 = vsel %vm1302, %v1303, %v1304
    %v1306 = vrot.slane %v1295, 1
    %v1307 = vsel %vm1302, %v1304, %v1306
    %v1308 = vrot.slane %v1296, 1
    %v1309 = vsel %vm1302, %v1306, %v1308
    %v1310 = vrot.slane %v1297, 1
    %v1311 = vsel %vm1302, %v1308, %v1310
    %v1312 = vrot.slane %v1298, 1
    %v1313 = vsel %vm1302, %v1310, %v1312
    %v1314 = vrot.slane %v1299, 1
    %v1315 = vsel %vm1302, %v1312, %v1314
    %v1316 = vrot.slane %v1300, 1
    %v1317 = vsel %vm1302, %v1314, %v1316
    %v1318 = vrot.slane %v1301, 1
    %v1319 = vsel %vm1302, %v1316, %v1318
    %v1333 = vunpack.c.l.b16 %v1246
    %v1334 = vunpack.c.l.b16 %v1247
    %v1335 = vunpack.c.l.b16 %v1248
    %v1336 = vunpack.c.l.b16 %v1249
    %v1337 = vunpack.c.l.b16 %v1250
    %v1338 = vunpack.c.l.b16 %v1251
    %v1339 = vunpack.c.l.b16 %v1252
    %v1340 = vunpack.c.l.b16 %v1253
    %v1341 = vunpack.c.l.b16 %v1254
    %v1342 = vunpack.c.l.b16 %v1255
    %v1343 = vunpack.c.l.b16 %v1256
    %v1344 = vunpack.c.l.b16 %v1257
    %v1345 = vunpack.c.l.b16 %v1258
    %v1346 = vpack.c.b16 %v1334, %v1333
    %v1347 = vpack.c.b16 %v1336, %v1335
    %v1348 = vpack.c.b16 %v1338, %v1337
    %v1349 = vpack.c.b16 %v1340, %v1339
    %v1350 = vpack.c.b16 %v1342, %v1341
    %v1351 = vpack.c.b16 %v1344, %v1343
    %v1352 = vpack.c.b16 %v1345, %v1345
    %v1360 = vsel %vm647, %v1305, 0
    %v1363 = vsel %vm647, %v1307, 0
    %v1366 = vsel %vm647, %v1309, 0
    %v1369 = vsel %vm647, %v1311, 0
    %v1372 = vsel %vm647, %v1313, 0
    %v1375 = vsel %vm647, %v1315, 0
    %v1378 = vsel %vm647, %v1317, 0
    %v1381 = vsel %vm647, %v1319, 0
    %v1384 = vsel %vm696, %v1352, 0
    %1386 = vmatprep.subr.bf16.mxu0 0
    %1387 = vmatpush1.bf16.msra.mxu0 0
    %1388 = vmatprep.subr.bf16.mxu0 0
    %1389 = vmatpush1.bf16.msra.mxu0 %v1384
    %1390 = vmatprep.subr.bf16.mxu0 0
    %1391 = vmatpush1.bf16.msra.mxu0 %v1351
    %1392 = vmatprep.subr.bf16.mxu0 0
    %1393 = vmatpush1.bf16.msra.mxu0 %v1350
    %1394 = vmatprep.subr.bf16.mxu0 0
    %1395 = vmatpush1.bf16.msra.mxu0 %v1349
    %1396 = vmatprep.subr.bf16.mxu0 0
    %1397 = vmatpush1.bf16.msra.mxu0 %v1348
    %1398 = vmatprep.subr.bf16.mxu0 0
    %1399 = vmatpush1.bf16.msra.mxu0 %v1347
    %1400 = vmatprep.subr.bf16.mxu0 0
    %1401 = vmatpush1.bf16.msra.mxu0 %v1346
    %1402 = vmatprep.subr.bf16.mxu0 0
    %1403 = vmatpush2.bf16.msra.mxu0 0
    %1404 = vmatprep.subr.bf16.mxu0 0
    %1405 = vmatpush2.bf16.msra.mxu0 0
    %1406 = vmatprep.subr.bf16.mxu0 0
    %1407 = vmatpush2.bf16.msra.mxu0 0
    %1408 = vmatprep.subr.bf16.mxu0 0
    %1409 = vmatpush2.bf16.msra.mxu0 0
    %1410 = vmatprep.subr.bf16.mxu0 0
    %1411 = vmatpush2.bf16.msra.mxu0 0
    %1412 = vmatprep.subr.bf16.mxu0 0
    %1413 = vmatpush2.bf16.msra.mxu0 0
    %1414 = vmatprep.subr.bf16.mxu0 0
    %1415 = vmatpush2.bf16.msra.mxu0 0
    %1416 = vmatprep.subr.bf16.mxu0 0
    %1417 = vmatpush2.bf16.msra.mxu0 0
    %1418 = vmatprep.mubr.bf16.mxu0 0
    %1419 = vmatmul.mubr.bf16.gmra.mxu0 %v1360
    %v1420 = vpop.f32.mrf.mxu0
    %v1421 = vadd.f32 0.0, %v1420
    %v1422 = vpop.f32.mrf.mxu0
    %v1423 = vpop.f32.mrf.mxu0
    %v1424 = vadd.f32 0.0, %v1423
    %v1425 = vpop.f32.mrf.mxu0
    %1426 = vmatprep.mubr.bf16.mxu0 0
    %1427 = vmatmul.mubr.bf16.gmra.mxu0 %v1363
    %v1428 = vpop.f32.mrf.mxu0
    %v1429 = vadd.f32 0.0, %v1428
    %v1430 = vpop.f32.mrf.mxu0
    %v1431 = vpop.f32.mrf.mxu0
    %v1432 = vadd.f32 0.0, %v1431
    %v1433 = vpop.f32.mrf.mxu0
    %1434 = vmatprep.mubr.bf16.mxu0 0
    %1435 = vmatmul.mubr.bf16.gmra.mxu0 %v1366
    %v1436 = vpop.f32.mrf.mxu0
    %v1437 = vadd.f32 0.0, %v1436
    %v1438 = vpop.f32.mrf.mxu0
    %v1439 = vpop.f32.mrf.mxu0
    %v1440 = vadd.f32 0.0, %v1439
    %v1441 = vpop.f32.mrf.mxu0
    %1442 = vmatprep.mubr.bf16.mxu0 0
    %1443 = vmatmul.mubr.bf16.gmra.mxu0 %v1369
    %v1444 = vpop.f32.mrf.mxu0
    %v1445 = vadd.f32 0.0, %v1444
    %v1446 = vpop.f32.mrf.mxu0
    %v1447 = vpop.f32.mrf.mxu0
    %v1448 = vadd.f32 0.0, %v1447
    %v1449 = vpop.f32.mrf.mxu0
    %1450 = vmatprep.mubr.bf16.mxu0 0
    %1451 = vmatmul.mubr.bf16.gmra.mxu0 %v1372
    %v1452 = vpop.f32.mrf.mxu0
    %v1453 = vadd.f32 0.0, %v1452
    %v1454 = vpop.f32.mrf.mxu0
    %v1455 = vpop.f32.mrf.mxu0
    %v1456 = vadd.f32 0.0, %v1455
    %v1457 = vpop.f32.mrf.mxu0
    %1458 = vmatprep.mubr.bf16.mxu0 0
    %1459 = vmatmul.mubr.bf16.gmra.mxu0 %v1375
    %v1460 = vpop.f32.mrf.mxu0
    %v1461 = vadd.f32 0.0, %v1460
    %v1462 = vpop.f32.mrf.mxu0
    %v1463 = vpop.f32.mrf.mxu0
    %v1464 = vadd.f32 0.0, %v1463
    %v1465 = vpop.f32.mrf.mxu0
    %1466 = vmatprep.mubr.bf16.mxu0 0
    %1467 = vmatmul.mubr.bf16.gmra.mxu0 %v1378
    %v1468 = vpop.f32.mrf.mxu0
    %v1469 = vadd.f32 0.0, %v1468
    %v1470 = vpop.f32.mrf.mxu0
    %v1471 = vpop.f32.mrf.mxu0
    %v1472 = vadd.f32 0.0, %v1471
    %v1473 = vpop.f32.mrf.mxu0
    %1474 = vmatprep.mubr.bf16.mxu0 0
    %1475 = vmatmul.mubr.bf16.gmra.mxu0 %v1381
    %v1476 = vpop.f32.mrf.mxu0
    %v1477 = vadd.f32 0.0, %v1476
    %v1478 = vpop.f32.mrf.mxu0
    %v1479 = vpop.f32.mrf.mxu0
    %v1480 = vadd.f32 0.0, %v1479
    %v1481 = vpop.f32.mrf.mxu0
    %1482 = vdwg.mxu0
    %v1484 = vunpack.c.l.b16 %v1214
    %v1485 = vpack.c.b16 %v1277, %v1484
    %v1499 = vunpack.c.l.b16 %v1230
    %v1500 = vunpack.c.l.b16 %v1231
    %v1501 = vunpack.c.l.b16 %v1232
    %v1502 = vunpack.c.l.b16 %v1233
    %v1503 = vunpack.c.l.b16 %v1234
    %v1504 = vunpack.c.l.b16 %v1235
    %v1505 = vunpack.c.l.b16 %v1236
    %v1506 = vunpack.c.l.b16 %v1237
    %v1507 = vunpack.c.l.b16 %v1238
    %v1508 = vunpack.c.l.b16 %v1239
    %v1509 = vunpack.c.l.b16 %v1240
    %v1510 = vunpack.c.l.b16 %v1241
    %v1511 = vunpack.c.l.b16 %v1242
    %v1512 = vpack.c.b16 %v1500, %v1499
    %v1513 = vpack.c.b16 %v1502, %v1501
    %v1514 = vpack.c.b16 %v1504, %v1503
    %v1515 = vpack.c.b16 %v1506, %v1505
    %v1516 = vpack.c.b16 %v1508, %v1507
    %v1517 = vpack.c.b16 %v1510, %v1509
    %v1518 = vpack.c.b16 %v1511, %v1511
    %v1526 = vsel %vm647, %v1485, 0
    %v1529 = vsel %vm647, %v1294, 0
    %v1532 = vsel %vm647, %v1295, 0
    %v1535 = vsel %vm647, %v1296, 0
    %v1538 = vsel %vm647, %v1297, 0
    %v1541 = vsel %vm647, %v1298, 0
    %v1544 = vsel %vm647, %v1299, 0
    %v1547 = vsel %vm647, %v1300, 0
    %v1550 = vsel %vm696, %v1518, 0
    %1552 = vmatprep.subr.bf16.mxu0 0
    %1553 = vmatpush1.bf16.msra.mxu0 0
    %1554 = vmatprep.subr.bf16.mxu0 0
    %1555 = vmatpush1.bf16.msra.mxu0 %v1550
    %1556 = vmatprep.subr.bf16.mxu0 0
    %1557 = vmatpush1.bf16.msra.mxu0 %v1517
    %1558 = vmatprep.subr.bf16.mxu0 0
    %1559 = vmatpush1.bf16.msra.mxu0 %v1516
    %1560 = vmatprep.subr.bf16.mxu0 0
    %1561 = vmatpush1.bf16.msra.mxu0 %v1515
    %1562 = vmatprep.subr.bf16.mxu0 0
    %1563 = vmatpush1.bf16.msra.mxu0 %v1514
    %1564 = vmatprep.subr.bf16.mxu0 0
    %1565 = vmatpush1.bf16.msra.mxu0 %v1513
    %1566 = vmatprep.subr.bf16.mxu0 0
    %1567 = vmatpush1.bf16.msra.mxu0 %v1512
    %1568 = vmatprep.subr.bf16.mxu0 0
    %1569 = vmatpush2.bf16.msra.mxu0 0
    %1570 = vmatprep.subr.bf16.mxu0 0
    %1571 = vmatpush2.bf16.msra.mxu0 0
    %1572 = vmatprep.subr.bf16.mxu0 0
    %1573 = vmatpush2.bf16.msra.mxu0 0
    %1574 = vmatprep.subr.bf16.mxu0 0
    %1575 = vmatpush2.bf16.msra.mxu0 0
    %1576 = vmatprep.subr.bf16.mxu0 0
    %1577 = vmatpush2.bf16.msra.mxu0 0
    %1578 = vmatprep.subr.bf16.mxu0 0
    %1579 = vmatpush2.bf16.msra.mxu0 0
    %1580 = vmatprep.subr.bf16.mxu0 0
    %1581 = vmatpush2.bf16.msra.mxu0 0
    %1582 = vmatprep.subr.bf16.mxu0 0
    %1583 = vmatpush2.bf16.msra.mxu0 0
    %1584 = vmatprep.mubr.bf16.mxu0 0
    %1585 = vmatmul.mubr.bf16.gmra.mxu0 %v1526
    %v1586 = vpop.f32.mrf.mxu0
    %v1587 = vadd.f32 %v1421, %v1586
    %v1588 = vpop.f32.mrf.mxu0
    %v1589 = vpop.f32.mrf.mxu0
    %v1590 = vadd.f32 %v1424, %v1589
    %v1591 = vpop.f32.mrf.mxu0
    %1592 = vmatprep.mubr.bf16.mxu0 0
    %1593 = vmatmul.mubr.bf16.gmra.mxu0 %v1529
    %v1594 = vpop.f32.mrf.mxu0
    %v1595 = vadd.f32 %v1429, %v1594
    %v1596 = vpop.f32.mrf.mxu0
    %v1597 = vpop.f32.mrf.mxu0
    %v1598 = vadd.f32 %v1432, %v1597
    %v1599 = vpop.f32.mrf.mxu0
    %1600 = vmatprep.mubr.bf16.mxu0 0
    %1601 = vmatmul.mubr.bf16.gmra.mxu0 %v1532
    %v1602 = vpop.f32.mrf.mxu0
    %v1603 = vadd.f32 %v1437, %v1602
    %v1604 = vpop.f32.mrf.mxu0
    %v1605 = vpop.f32.mrf.mxu0
    %v1606 = vadd.f32 %v1440, %v1605
    %v1607 = vpop.f32.mrf.mxu0
    %1608 = vmatprep.mubr.bf16.mxu0 0
    %1609 = vmatmul.mubr.bf16.gmra.mxu0 %v1535
    %v1610 = vpop.f32.mrf.mxu0
    %v1611 = vadd.f32 %v1445, %v1610
    %v1612 = vpop.f32.mrf.mxu0
    %v1613 = vpop.f32.mrf.mxu0
    %v1614 = vadd.f32 %v1448, %v1613
    %v1615 = vpop.f32.mrf.mxu0
    %1616 = vmatprep.mubr.bf16.mxu0 0
    %1617 = vmatmul.mubr.bf16.gmra.mxu0 %v1538
    %v1618 = vpop.f32.mrf.mxu0
    %v1619 = vadd.f32 %v1453, %v1618
    %v1620 = vpop.f32.mrf.mxu0
    %v1621 = vpop.f32.mrf.mxu0
    %v1622 = vadd.f32 %v1456, %v1621
    %v1623 = vpop.f32.mrf.mxu0
    %1624 = vmatprep.mubr.bf16.mxu0 0
    %1625 = vmatmul.mubr.bf16.gmra.mxu0 %v1541
    %v1626 = vpop.f32.mrf.mxu0
    %v1627 = vadd.f32 %v1461, %v1626
    %v1628 = vpop.f32.mrf.mxu0
    %v1629 = vpop.f32.mrf.mxu0
    %v1630 = vadd.f32 %v1464, %v1629
    %v1631 = vpop.f32.mrf.mxu0
    %1632 = vmatprep.mubr.bf16.mxu0 0
    %1633 = vmatmul.mubr.bf16.gmra.mxu0 %v1544
    %v1634 = vpop.f32.mrf.mxu0
    %v1635 = vadd.f32 %v1469, %v1634
    %v1636 = vpop.f32.mrf.mxu0
    %v1637 = vpop.f32.mrf.mxu0
    %v1638 = vadd.f32 %v1472, %v1637
    %v1639 = vpop.f32.mrf.mxu0
    %1640 = vmatprep.mubr.bf16.mxu0 0
    %1641 = vmatmul.mubr.bf16.gmra.mxu0 %v1547
    %v1642 = vpop.f32.mrf.mxu0
    %v1643 = vadd.f32 %v1477, %v1642
    %v1644 = vpop.f32.mrf.mxu0
    %v1645 = vpop.f32.mrf.mxu0
    %v1646 = vadd.f32 %v1480, %v1645
    %v1647 = vpop.f32.mrf.mxu0
    %1648 = vdwg.mxu0
    %v1649 = vld [vmem:[#allocation2] sm:$0xc]
    %v1650 = vld [vmem:[#allocation2 + $0x40] sm:$0x3]
    %s1651 = scalar_lea.vmem %s5, 104
    %v1652 = vld [vmem:[%s1651] sm:$0xf]
    %v1653 = vld [vmem:[%s1651 + $0x4] sm:$0xf]
    %v1654 = vld [vmem:[%s1651 + $0x8] sm:$0xf]
    %v1655 = vld [vmem:[%s1651 + $0xc] sm:$0xf]
    %v1656 = vld [vmem:[%s1651 + $0x10] sm:$0xf]
    %v1657 = vld [vmem:[%s1651 + $0x14] sm:$0xf]
    %v1658 = vld [vmem:[%s1651 + $0x18] sm:$0xf]
    %v1659 = vld [vmem:[%s1651 + $0x1c] sm:$0xf]
    %v1660 = vld [vmem:[%s1651 + $0x20] sm:$0xf]
    %v1661 = vld [vmem:[%s1651 + $0x24] sm:$0xf]
    %v1662 = vld [vmem:[%s1651 + $0x28] sm:$0xf]
    %v1663 = vld [vmem:[%s1651 + $0x2c] sm:$0xf]
    %v1664 = vld [vmem:[%s1651 + $0x30] sm:$0x3]
    %v1667 = vunpack.c.l.b16 %v1649
    %v1668 = vunpack.c.l.b16 %v1650
    %v1669 = vpack.c.b16 %v1277, %v1667
    %v1670 = vpack.c.b16 %v1668, %v1668
    %vm1671 = vcmask 1045504
    %v1672 = vrot.slane %v1669, 2
    %v1673 = vrot.slane %v1294, 2
    %v1674 = vsel %vm1671, %v1672, %v1673
    %v1675 = vrot.slane %v1295, 2
    %v1676 = vsel %vm1671, %v1673, %v1675
    %v1677 = vrot.slane %v1296, 2
    %v1678 = vsel %vm1671, %v1675, %v1677
    %v1679 = vrot.slane %v1297, 2
    %v1680 = vsel %vm1671, %v1677, %v1679
    %v1681 = vrot.slane %v1298, 2
    %v1682 = vsel %vm1671, %v1679, %v1681
    %v1683 = vrot.slane %v1299, 2
    %v1684 = vsel %vm1671, %v1681, %v1683
    %v1685 = vrot.slane %v1300, 2
    %v1686 = vsel %vm1671, %v1683, %v1685
    %v1687 = vrot.slane %v1670, 2
    %v1688 = vsel %vm1671, %v1685, %v1687
    %v1702 = vunpack.c.l.b16 %v1652
    %v1703 = vunpack.c.l.b16 %v1653
    %v1704 = vunpack.c.l.b16 %v1654
    %v1705 = vunpack.c.l.b16 %v1655
    %v1706 = vunpack.c.l.b16 %v1656
    %v1707 = vunpack.c.l.b16 %v1657
    %v1708 = vunpack.c.l.b16 %v1658
    %v1709 = vunpack.c.l.b16 %v1659
    %v1710 = vunpack.c.l.b16 %v1660
    %v1711 = vunpack.c.l.b16 %v1661
    %v1712 = vunpack.c.l.b16 %v1662
    %v1713 = vunpack.c.l.b16 %v1663
    %v1714 = vunpack.c.l.b16 %v1664
    %v1715 = vpack.c.b16 %v1703, %v1702
    %v1716 = vpack.c.b16 %v1705, %v1704
    %v1717 = vpack.c.b16 %v1707, %v1706
    %v1718 = vpack.c.b16 %v1709, %v1708
    %v1719 = vpack.c.b16 %v1711, %v1710
    %v1720 = vpack.c.b16 %v1713, %v1712
    %v1721 = vpack.c.b16 %v1714, %v1714
    %v1729 = vsel %vm647, %v1674, 0
    %v1732 = vsel %vm647, %v1676, 0
    %v1735 = vsel %vm647, %v1678, 0
    %v1738 = vsel %vm647, %v1680, 0
    %v1741 = vsel %vm647, %v1682, 0
    %v1744 = vsel %vm647, %v1684, 0
    %v1747 = vsel %vm647, %v1686, 0
    %v1750 = vsel %vm647, %v1688, 0
    %v1753 = vsel %vm696, %v1721, 0
    %1755 = vmatprep.subr.bf16.mxu0 0
    %1756 = vmatpush1.bf16.msra.mxu0 0
    %1757 = vmatprep.subr.bf16.mxu0 0
    %1758 = vmatpush1.bf16.msra.mxu0 %v1753
    %1759 = vmatprep.subr.bf16.mxu0 0
    %1760 = vmatpush1.bf16.msra.mxu0 %v1720
    %1761 = vmatprep.subr.bf16.mxu0 0
    %1762 = vmatpush1.bf16.msra.mxu0 %v1719
    %1763 = vmatprep.subr.bf16.mxu0 0
    %1764 = vmatpush1.bf16.msra.mxu0 %v1718
    %1765 = vmatprep.subr.bf16.mxu0 0
    %1766 = vmatpush1.bf16.msra.mxu0 %v1717
    %1767 = vmatprep.subr.bf16.mxu0 0
    %1768 = vmatpush1.bf16.msra.mxu0 %v1716
    %1769 = vmatprep.subr.bf16.mxu0 0
    %1770 = vmatpush1.bf16.msra.mxu0 %v1715
    %1771 = vmatprep.subr.bf16.mxu0 0
    %1772 = vmatpush2.bf16.msra.mxu0 0
    %1773 = vmatprep.subr.bf16.mxu0 0
    %1774 = vmatpush2.bf16.msra.mxu0 0
    %1775 = vmatprep.subr.bf16.mxu0 0
    %1776 = vmatpush2.bf16.msra.mxu0 0
    %1777 = vmatprep.subr.bf16.mxu0 0
    %1778 = vmatpush2.bf16.msra.mxu0 0
    %1779 = vmatprep.subr.bf16.mxu0 0
    %1780 = vmatpush2.bf16.msra.mxu0 0
    %1781 = vmatprep.subr.bf16.mxu0 0
    %1782 = vmatpush2.bf16.msra.mxu0 0
    %1783 = vmatprep.subr.bf16.mxu0 0
    %1784 = vmatpush2.bf16.msra.mxu0 0
    %1785 = vmatprep.subr.bf16.mxu0 0
    %1786 = vmatpush2.bf16.msra.mxu0 0
    %1787 = vmatprep.mubr.bf16.mxu0 0
    %1788 = vmatmul.mubr.bf16.gmra.mxu0 %v1729
    %v1789 = vpop.f32.mrf.mxu0
    %v1790 = vadd.f32 0.0, %v1789
    %v1791 = vpop.f32.mrf.mxu0
    %v1792 = vpop.f32.mrf.mxu0
    %v1793 = vadd.f32 0.0, %v1792
    %v1794 = vpop.f32.mrf.mxu0
    %1795 = vmatprep.mubr.bf16.mxu0 0
    %1796 = vmatmul.mubr.bf16.gmra.mxu0 %v1732
    %v1797 = vpop.f32.mrf.mxu0
    %v1798 = vadd.f32 0.0, %v1797
    %v1799 = vpop.f32.mrf.mxu0
    %v1800 = vpop.f32.mrf.mxu0
    %v1801 = vadd.f32 0.0, %v1800
    %v1802 = vpop.f32.mrf.mxu0
    %1803 = vmatprep.mubr.bf16.mxu0 0
    %1804 = vmatmul.mubr.bf16.gmra.mxu0 %v1735
    %v1805 = vpop.f32.mrf.mxu0
    %v1806 = vadd.f32 0.0, %v1805
    %v1807 = vpop.f32.mrf.mxu0
    %v1808 = vpop.f32.mrf.mxu0
    %v1809 = vadd.f32 0.0, %v1808
    %v1810 = vpop.f32.mrf.mxu0
    %1811 = vmatprep.mubr.bf16.mxu0 0
    %1812 = vmatmul.mubr.bf16.gmra.mxu0 %v1738
    %v1813 = vpop.f32.mrf.mxu0
    %v1814 = vadd.f32 0.0, %v1813
    %v1815 = vpop.f32.mrf.mxu0
    %v1816 = vpop.f32.mrf.mxu0
    %v1817 = vadd.f32 0.0, %v1816
    %v1818 = vpop.f32.mrf.mxu0
    %1819 = vmatprep.mubr.bf16.mxu0 0
    %1820 = vmatmul.mubr.bf16.gmra.mxu0 %v1741
    %v1821 = vpop.f32.mrf.mxu0
    %v1822 = vadd.f32 0.0, %v1821
    %v1823 = vpop.f32.mrf.mxu0
    %v1824 = vpop.f32.mrf.mxu0
    %v1825 = vadd.f32 0.0, %v1824
    %v1826 = vpop.f32.mrf.mxu0
    %1827 = vmatprep.mubr.bf16.mxu0 0
    %1828 = vmatmul.mubr.bf16.gmra.mxu0 %v1744
    %v1829 = vpop.f32.mrf.mxu0
    %v1830 = vadd.f32 0.0, %v1829
    %v1831 = vpop.f32.mrf.mxu0
    %v1832 = vpop.f32.mrf.mxu0
    %v1833 = vadd.f32 0.0, %v1832
    %v1834 = vpop.f32.mrf.mxu0
    %1835 = vmatprep.mubr.bf16.mxu0 0
    %1836 = vmatmul.mubr.bf16.gmra.mxu0 %v1747
    %v1837 = vpop.f32.mrf.mxu0
    %v1838 = vadd.f32 0.0, %v1837
    %v1839 = vpop.f32.mrf.mxu0
    %v1840 = vpop.f32.mrf.mxu0
    %v1841 = vadd.f32 0.0, %v1840
    %v1842 = vpop.f32.mrf.mxu0
    %1843 = vmatprep.mubr.bf16.mxu0 0
    %1844 = vmatmul.mubr.bf16.gmra.mxu0 %v1750
    %v1845 = vpop.f32.mrf.mxu0
    %v1846 = vadd.f32 0.0, %v1845
    %v1847 = vpop.f32.mrf.mxu0
    %v1848 = vpop.f32.mrf.mxu0
    %v1849 = vadd.f32 0.0, %v1848
    %v1850 = vpop.f32.mrf.mxu0
    %1851 = vdwg.mxu0
    %v1852 = vadd.f32 %v1587, %v1790
    %v1853 = vadd.f32 %v1590, %v1793
    %v1854 = vadd.f32 %v1595, %v1798
    %v1855 = vadd.f32 %v1598, %v1801
    %v1856 = vadd.f32 %v1603, %v1806
    %v1857 = vadd.f32 %v1606, %v1809
    %v1858 = vadd.f32 %v1611, %v1814
    %v1859 = vadd.f32 %v1614, %v1817
    %v1860 = vadd.f32 %v1619, %v1822
    %v1861 = vadd.f32 %v1622, %v1825
    %v1862 = vadd.f32 %v1627, %v1830
    %v1863 = vadd.f32 %v1630, %v1833
    %v1864 = vadd.f32 %v1635, %v1838
    %v1865 = vadd.f32 %v1638, %v1841
    %v1866 = vadd.f32 %v1643, %v1846
    %v1867 = vadd.f32 %v1646, %v1849
    %v1868 = vld [vmem:[#allocation2 + $0x4] sm:$0xe]
    %v1869 = vld [vmem:[#allocation2 + $0x8] sm:$0xf]
    %v1870 = vld [vmem:[#allocation2 + $0xc] sm:$0xf]
    %v1871 = vld [vmem:[#allocation2 + $0x10] sm:$0xf]
    %v1872 = vld [vmem:[#allocation2 + $0x14] sm:$0xf]
    %v1873 = vld [vmem:[#allocation2 + $0x18] sm:$0xf]
    %v1874 = vld [vmem:[#allocation2 + $0x1c] sm:$0xf]
    %v1875 = vld [vmem:[#allocation2 + $0x20] sm:$0xf]
    %v1876 = vld [vmem:[#allocation2 + $0x24] sm:$0xf]
    %v1877 = vld [vmem:[#allocation2 + $0x28] sm:$0xf]
    %v1878 = vld [vmem:[#allocation2 + $0x2c] sm:$0xf]
    %v1879 = vld [vmem:[#allocation2 + $0x30] sm:$0xf]
    %v1880 = vld [vmem:[#allocation2 + $0x34] sm:$0xf]
    %v1881 = vld [vmem:[#allocation2 + $0x38] sm:$0xf]
    %v1882 = vld [vmem:[#allocation2 + $0x3c] sm:$0xf]
    %v1883 = vld [vmem:[#allocation2 + $0x40] sm:$0xf]
    %v1884 = vld [vmem:[#allocation2 + $0x44] sm:$0x1]
    %s1885 = scalar_lea.vmem %s5, 156
    %v1886 = vld [vmem:[%s1885] sm:$0xf]
    %v1887 = vld [vmem:[%s1885 + $0x4] sm:$0xf]
    %v1888 = vld [vmem:[%s1885 + $0x8] sm:$0xf]
    %v1889 = vld [vmem:[%s1885 + $0xc] sm:$0xf]
    %v1890 = vld [vmem:[%s1885 + $0x10] sm:$0xf]
    %v1891 = vld [vmem:[%s1885 + $0x14] sm:$0xf]
    %v1892 = vld [vmem:[%s1885 + $0x18] sm:$0xf]
    %v1893 = vld [vmem:[%s1885 + $0x1c] sm:$0xf]
    %v1894 = vld [vmem:[%s1885 + $0x20] sm:$0xf]
    %v1895 = vld [vmem:[%s1885 + $0x24] sm:$0xf]
    %v1896 = vld [vmem:[%s1885 + $0x28] sm:$0xf]
    %v1897 = vld [vmem:[%s1885 + $0x2c] sm:$0xf]
    %v1898 = vld [vmem:[%s1885 + $0x30] sm:$0x3]
    %v1916 = vunpack.c.l.b16 %v1868
    %v1917 = vunpack.c.l.b16 %v1869
    %v1918 = vunpack.c.l.b16 %v1870
    %v1919 = vunpack.c.l.b16 %v1871
    %v1920 = vunpack.c.l.b16 %v1872
    %v1921 = vunpack.c.l.b16 %v1873
    %v1922 = vunpack.c.l.b16 %v1874
    %v1923 = vunpack.c.l.b16 %v1875
    %v1924 = vunpack.c.l.b16 %v1876
    %v1925 = vunpack.c.l.b16 %v1877
    %v1926 = vunpack.c.l.b16 %v1878
    %v1927 = vunpack.c.l.b16 %v1879
    %v1928 = vunpack.c.l.b16 %v1880
    %v1929 = vunpack.c.l.b16 %v1881
    %v1930 = vunpack.c.l.b16 %v1882
    %v1931 = vunpack.c.l.b16 %v1883
    %v1932 = vunpack.c.l.b16 %v1884
    %v1933 = vpack.c.b16 %v1917, %v1916
    %v1934 = vpack.c.b16 %v1919, %v1918
    %v1935 = vpack.c.b16 %v1921, %v1920
    %v1936 = vpack.c.b16 %v1923, %v1922
    %v1937 = vpack.c.b16 %v1925, %v1924
    %v1938 = vpack.c.b16 %v1927, %v1926
    %v1939 = vpack.c.b16 %v1929, %v1928
    %v1940 = vpack.c.b16 %v1931, %v1930
    %v1941 = vpack.c.b16 %v1932, %v1932
    %v1942 = vrot.slane %v1933, 1
    %v1943 = vrot.slane %v1934, 1
    %v1944 = vsel %vm1302, %v1942, %v1943
    %v1945 = vrot.slane %v1935, 1
    %v1946 = vsel %vm1302, %v1943, %v1945
    %v1947 = vrot.slane %v1936, 1
    %v1948 = vsel %vm1302, %v1945, %v1947
    %v1949 = vrot.slane %v1937, 1
    %v1950 = vsel %vm1302, %v1947, %v1949
    %v1951 = vrot.slane %v1938, 1
    %v1952 = vsel %vm1302, %v1949, %v1951
    %v1953 = vrot.slane %v1939, 1
    %v1954 = vsel %vm1302, %v1951, %v1953
    %v1955 = vrot.slane %v1940, 1
    %v1956 = vsel %vm1302, %v1953, %v1955
    %v1957 = vrot.slane %v1941, 1
    %v1958 = vsel %vm1302, %v1955, %v1957
    %v1972 = vunpack.c.l.b16 %v1886
    %v1973 = vunpack.c.l.b16 %v1887
    %v1974 = vunpack.c.l.b16 %v1888
    %v1975 = vunpack.c.l.b16 %v1889
    %v1976 = vunpack.c.l.b16 %v1890
    %v1977 = vunpack.c.l.b16 %v1891
    %v1978 = vunpack.c.l.b16 %v1892
    %v1979 = vunpack.c.l.b16 %v1893
    %v1980 = vunpack.c.l.b16 %v1894
    %v1981 = vunpack.c.l.b16 %v1895
    %v1982 = vunpack.c.l.b16 %v1896
    %v1983 = vunpack.c.l.b16 %v1897
    %v1984 = vunpack.c.l.b16 %v1898
    %v1985 = vpack.c.b16 %v1973, %v1972
    %v1986 = vpack.c.b16 %v1975, %v1974
    %v1987 = vpack.c.b16 %v1977, %v1976
    %v1988 = vpack.c.b16 %v1979, %v1978
    %v1989 = vpack.c.b16 %v1981, %v1980
    %v1990 = vpack.c.b16 %v1983, %v1982
    %v1991 = vpack.c.b16 %v1984, %v1984
    %v1999 = vsel %vm647, %v1944, 0
    %v2002 = vsel %vm647, %v1946, 0
    %v2005 = vsel %vm647, %v1948, 0
    %v2008 = vsel %vm647, %v1950, 0
    %v2011 = vsel %vm647, %v1952, 0
    %v2014 = vsel %vm647, %v1954, 0
    %v2017 = vsel %vm647, %v1956, 0
    %v2020 = vsel %vm647, %v1958, 0
    %v2023 = vsel %vm696, %v1991, 0
    %2025 = vmatprep.subr.bf16.mxu0 0
    %2026 = vmatpush1.bf16.msra.mxu0 0
    %2027 = vmatprep.subr.bf16.mxu0 0
    %2028 = vmatpush1.bf16.msra.mxu0 %v2023
    %2029 = vmatprep.subr.bf16.mxu0 0
    %2030 = vmatpush1.bf16.msra.mxu0 %v1990
    %2031 = vmatprep.subr.bf16.mxu0 0
    %2032 = vmatpush1.bf16.msra.mxu0 %v1989
    %2033 = vmatprep.subr.bf16.mxu0 0
    %2034 = vmatpush1.bf16.msra.mxu0 %v1988
    %2035 = vmatprep.subr.bf16.mxu0 0
    %2036 = vmatpush1.bf16.msra.mxu0 %v1987
    %2037 = vmatprep.subr.bf16.mxu0 0
    %2038 = vmatpush1.bf16.msra.mxu0 %v1986
    %2039 = vmatprep.subr.bf16.mxu0 0
    %2040 = vmatpush1.bf16.msra.mxu0 %v1985
    %2041 = vmatprep.subr.bf16.mxu0 0
    %2042 = vmatpush2.bf16.msra.mxu0 0
    %2043 = vmatprep.subr.bf16.mxu0 0
    %2044 = vmatpush2.bf16.msra.mxu0 0
    %2045 = vmatprep.subr.bf16.mxu0 0
    %2046 = vmatpush2.bf16.msra.mxu0 0
    %2047 = vmatprep.subr.bf16.mxu0 0
    %2048 = vmatpush2.bf16.msra.mxu0 0
    %2049 = vmatprep.subr.bf16.mxu0 0
    %2050 = vmatpush2.bf16.msra.mxu0 0
    %2051 = vmatprep.subr.bf16.mxu0 0
    %2052 = vmatpush2.bf16.msra.mxu0 0
    %2053 = vmatprep.subr.bf16.mxu0 0
    %2054 = vmatpush2.bf16.msra.mxu0 0
    %2055 = vmatprep.subr.bf16.mxu0 0
    %2056 = vmatpush2.bf16.msra.mxu0 0
    %2057 = vmatprep.mubr.bf16.mxu0 0
    %2058 = vmatmul.mubr.bf16.gmra.mxu0 %v1999
    %v2059 = vpop.f32.mrf.mxu0
    %v2060 = vadd.f32 0.0, %v2059
    %v2061 = vpop.f32.mrf.mxu0
    %v2062 = vpop.f32.mrf.mxu0
    %v2063 = vadd.f32 0.0, %v2062
    %v2064 = vpop.f32.mrf.mxu0
    %2065 = vmatprep.mubr.bf16.mxu0 0
    %2066 = vmatmul.mubr.bf16.gmra.mxu0 %v2002
    %v2067 = vpop.f32.mrf.mxu0
    %v2068 = vadd.f32 0.0, %v2067
    %v2069 = vpop.f32.mrf.mxu0
    %v2070 = vpop.f32.mrf.mxu0
    %v2071 = vadd.f32 0.0, %v2070
    %v2072 = vpop.f32.mrf.mxu0
    %2073 = vmatprep.mubr.bf16.mxu0 0
    %2074 = vmatmul.mubr.bf16.gmra.mxu0 %v2005
    %v2075 = vpop.f32.mrf.mxu0
    %v2076 = vadd.f32 0.0, %v2075
    %v2077 = vpop.f32.mrf.mxu0
    %v2078 = vpop.f32.mrf.mxu0
    %v2079 = vadd.f32 0.0, %v2078
    %v2080 = vpop.f32.mrf.mxu0
    %2081 = vmatprep.mubr.bf16.mxu0 0
    %2082 = vmatmul.mubr.bf16.gmra.mxu0 %v2008
    %v2083 = vpop.f32.mrf.mxu0
    %v2084 = vadd.f32 0.0, %v2083
    %v2085 = vpop.f32.mrf.mxu0
    %v2086 = vpop.f32.mrf.mxu0
    %v2087 = vadd.f32 0.0, %v2086
    %v2088 = vpop.f32.mrf.mxu0
    %2089 = vmatprep.mubr.bf16.mxu0 0
    %2090 = vmatmul.mubr.bf16.gmra.mxu0 %v2011
    %v2091 = vpop.f32.mrf.mxu0
    %v2092 = vadd.f32 0.0, %v2091
    %v2093 = vpop.f32.mrf.mxu0
    %v2094 = vpop.f32.mrf.mxu0
    %v2095 = vadd.f32 0.0, %v2094
    %v2096 = vpop.f32.mrf.mxu0
    %2097 = vmatprep.mubr.bf16.mxu0 0
    %2098 = vmatmul.mubr.bf16.gmra.mxu0 %v2014
    %v2099 = vpop.f32.mrf.mxu0
    %v2100 = vadd.f32 0.0, %v2099
    %v2101 = vpop.f32.mrf.mxu0
    %v2102 = vpop.f32.mrf.mxu0
    %v2103 = vadd.f32 0.0, %v2102
    %v2104 = vpop.f32.mrf.mxu0
    %2105 = vmatprep.mubr.bf16.mxu0 0
    %2106 = vmatmul.mubr.bf16.gmra.mxu0 %v2017
    %v2107 = vpop.f32.mrf.mxu0
    %v2108 = vadd.f32 0.0, %v2107
    %v2109 = vpop.f32.mrf.mxu0
    %v2110 = vpop.f32.mrf.mxu0
    %v2111 = vadd.f32 0.0, %v2110
    %v2112 = vpop.f32.mrf.mxu0
    %2113 = vmatprep.mubr.bf16.mxu0 0
    %2114 = vmatmul.mubr.bf16.gmra.mxu0 %v2020
    %v2115 = vpop.f32.mrf.mxu0
    %v2116 = vadd.f32 0.0, %v2115
    %v2117 = vpop.f32.mrf.mxu0
    %v2118 = vpop.f32.mrf.mxu0
    %v2119 = vadd.f32 0.0, %v2118
    %v2120 = vpop.f32.mrf.mxu0
    %2121 = vdwg.mxu0
    %v2122 = vadd.f32 %v1852, %v2060
    %v2123 = vadd.f32 %v1853, %v2063
    %v2124 = vadd.f32 %v1854, %v2068
    %v2125 = vadd.f32 %v1855, %v2071
    %v2126 = vadd.f32 %v1856, %v2076
    %v2127 = vadd.f32 %v1857, %v2079
    %v2128 = vadd.f32 %v1858, %v2084
    %v2129 = vadd.f32 %v1859, %v2087
    %v2130 = vadd.f32 %v1860, %v2092
    %v2131 = vadd.f32 %v1861, %v2095
    %v2132 = vadd.f32 %v1862, %v2100
    %v2133 = vadd.f32 %v1863, %v2103
    %v2134 = vadd.f32 %v1864, %v2108
    %v2135 = vadd.f32 %v1865, %v2111
    %v2136 = vadd.f32 %v1866, %v2116
    %v2137 = vadd.f32 %v1867, %v2119
    %v2138 = vld [vmem:[#allocation2 + $0x4] sm:$0xc]
    %v2139 = vld [vmem:[#allocation2 + $0x44] sm:$0x3]
    %s2140 = scalar_lea.vmem %s5, 208
    %v2141 = vld [vmem:[%s2140] sm:$0xf]
    %v2142 = vld [vmem:[%s2140 + $0x4] sm:$0xf]
    %v2143 = vld [vmem:[%s2140 + $0x8] sm:$0xf]
    %v2144 = vld [vmem:[%s2140 + $0xc] sm:$0xf]
    %v2145 = vld [vmem:[%s2140 + $0x10] sm:$0xf]
    %v2146 = vld [vmem:[%s2140 + $0x14] sm:$0xf]
    %v2147 = vld [vmem:[%s2140 + $0x18] sm:$0xf]
    %v2148 = vld [vmem:[%s2140 + $0x1c] sm:$0xf]
    %v2149 = vld [vmem:[%s2140 + $0x20] sm:$0xf]
    %v2150 = vld [vmem:[%s2140 + $0x24] sm:$0xf]
    %v2151 = vld [vmem:[%s2140 + $0x28] sm:$0xf]
    %v2152 = vld [vmem:[%s2140 + $0x2c] sm:$0xf]
    %v2153 = vld [vmem:[%s2140 + $0x30] sm:$0x3]
    %v2156 = vunpack.c.l.b16 %v2138
    %v2157 = vunpack.c.l.b16 %v2139
    %v2158 = vpack.c.b16 %v1917, %v2156
    %v2159 = vpack.c.b16 %v2157, %v2157
    %v2160 = vrot.slane %v2158, 2
    %v2161 = vrot.slane %v1934, 2
    %v2162 = vsel %vm1671, %v2160, %v2161
    %v2163 = vrot.slane %v1935, 2
    %v2164 = vsel %vm1671, %v2161, %v2163
    %v2165 = vrot.slane %v1936, 2
    %v2166 = vsel %vm1671, %v2163, %v2165
    %v2167 = vrot.slane %v1937, 2
    %v2168 = vsel %vm1671, %v2165, %v2167
    %v2169 = vrot.slane %v1938, 2
    %v2170 = vsel %vm1671, %v2167, %v2169
    %v2171 = vrot.slane %v1939, 2
    %v2172 = vsel %vm1671, %v2169, %v2171
    %v2173 = vrot.slane %v1940, 2
    %v2174 = vsel %vm1671, %v2171, %v2173
    %v2175 = vrot.slane %v2159, 2
    %v2176 = vsel %vm1671, %v2173, %v2175
    %v2190 = vunpack.c.l.b16 %v2141
    %v2191 = vunpack.c.l.b16 %v2142
    %v2192 = vunpack.c.l.b16 %v2143
    %v2193 = vunpack.c.l.b16 %v2144
    %v2194 = vunpack.c.l.b16 %v2145
    %v2195 = vunpack.c.l.b16 %v2146
    %v2196 = vunpack.c.l.b16 %v2147
    %v2197 = vunpack.c.l.b16 %v2148
    %v2198 = vunpack.c.l.b16 %v2149
    %v2199 = vunpack.c.l.b16 %v2150
    %v2200 = vunpack.c.l.b16 %v2151
    %v2201 = vunpack.c.l.b16 %v2152
    %v2202 = vunpack.c.l.b16 %v2153
    %v2203 = vpack.c.b16 %v2191, %v2190
    %v2204 = vpack.c.b16 %v2193, %v2192
    %v2205 = vpack.c.b16 %v2195, %v2194
    %v2206 = vpack.c.b16 %v2197, %v2196
    %v2207 = vpack.c.b16 %v2199, %v2198
    %v2208 = vpack.c.b16 %v2201, %v2200
    %v2209 = vpack.c.b16 %v2202, %v2202
    %v2217 = vsel %vm647, %v2162, 0
    %v2220 = vsel %vm647, %v2164, 0
    %v2223 = vsel %vm647, %v2166, 0
    %v2226 = vsel %vm647, %v2168, 0
    %v2229 = vsel %vm647, %v2170, 0
    %v2232 = vsel %vm647, %v2172, 0
    %v2235 = vsel %vm647, %v2174, 0
    %v2238 = vsel %vm647, %v2176, 0
    %v2241 = vsel %vm696, %v2209, 0
    %2243 = vmatprep.subr.bf16.mxu0 0
    %2244 = vmatpush1.bf16.msra.mxu0 0
    %2245 = vmatprep.subr.bf16.mxu0 0
    %2246 = vmatpush1.bf16.msra.mxu0 %v2241
    %2247 = vmatprep.subr.bf16.mxu0 0
    %2248 = vmatpush1.bf16.msra.mxu0 %v2208
    %2249 = vmatprep.subr.bf16.mxu0 0
    %2250 = vmatpush1.bf16.msra.mxu0 %v2207
    %2251 = vmatprep.subr.bf16.mxu0 0
    %2252 = vmatpush1.bf16.msra.mxu0 %v2206
    %2253 = vmatprep.subr.bf16.mxu0 0
    %2254 = vmatpush1.bf16.msra.mxu0 %v2205
    %2255 = vmatprep.subr.bf16.mxu0 0
    %2256 = vmatpush1.bf16.msra.mxu0 %v2204
    %2257 = vmatprep.subr.bf16.mxu0 0
    %2258 = vmatpush1.bf16.msra.mxu0 %v2203
    %2259 = vmatprep.subr.bf16.mxu0 0
    %2260 = vmatpush2.bf16.msra.mxu0 0
    %2261 = vmatprep.subr.bf16.mxu0 0
    %2262 = vmatpush2.bf16.msra.mxu0 0
    %2263 = vmatprep.subr.bf16.mxu0 0
    %2264 = vmatpush2.bf16.msra.mxu0 0
    %2265 = vmatprep.subr.bf16.mxu0 0
    %2266 = vmatpush2.bf16.msra.mxu0 0
    %2267 = vmatprep.subr.bf16.mxu0 0
    %2268 = vmatpush2.bf16.msra.mxu0 0
    %2269 = vmatprep.subr.bf16.mxu0 0
    %2270 = vmatpush2.bf16.msra.mxu0 0
    %2271 = vmatprep.subr.bf16.mxu0 0
    %2272 = vmatpush2.bf16.msra.mxu0 0
    %2273 = vmatprep.subr.bf16.mxu0 0
    %2274 = vmatpush2.bf16.msra.mxu0 0
    %2275 = vmatprep.mubr.bf16.mxu0 0
    %2276 = vmatmul.mubr.bf16.gmra.mxu0 %v2217
    %v2277 = vpop.f32.mrf.mxu0
    %v2278 = vadd.f32 0.0, %v2277
    %v2279 = vpop.f32.mrf.mxu0
    %v2280 = vpop.f32.mrf.mxu0
    %v2281 = vadd.f32 0.0, %v2280
    %v2282 = vpop.f32.mrf.mxu0
    %2283 = vmatprep.mubr.bf16.mxu0 0
    %2284 = vmatmul.mubr.bf16.gmra.mxu0 %v2220
    %v2285 = vpop.f32.mrf.mxu0
    %v2286 = vadd.f32 0.0, %v2285
    %v2287 = vpop.f32.mrf.mxu0
    %v2288 = vpop.f32.mrf.mxu0
    %v2289 = vadd.f32 0.0, %v2288
    %v2290 = vpop.f32.mrf.mxu0
    %2291 = vmatprep.mubr.bf16.mxu0 0
    %2292 = vmatmul.mubr.bf16.gmra.mxu0 %v2223
    %v2293 = vpop.f32.mrf.mxu0
    %v2294 = vadd.f32 0.0, %v2293
    %v2295 = vpop.f32.mrf.mxu0
    %v2296 = vpop.f32.mrf.mxu0
    %v2297 = vadd.f32 0.0, %v2296
    %v2298 = vpop.f32.mrf.mxu0
    %2299 = vmatprep.mubr.bf16.mxu0 0
    %2300 = vmatmul.mubr.bf16.gmra.mxu0 %v2226
    %v2301 = vpop.f32.mrf.mxu0
    %v2302 = vadd.f32 0.0, %v2301
    %v2303 = vpop.f32.mrf.mxu0
    %v2304 = vpop.f32.mrf.mxu0
    %v2305 = vadd.f32 0.0, %v2304
    %v2306 = vpop.f32.mrf.mxu0
    %2307 = vmatprep.mubr.bf16.mxu0 0
    %2308 = vmatmul.mubr.bf16.gmra.mxu0 %v2229
    %v2309 = vpop.f32.mrf.mxu0
    %v2310 = vadd.f32 0.0, %v2309
    %v2311 = vpop.f32.mrf.mxu0
    %v2312 = vpop.f32.mrf.mxu0
    %v2313 = vadd.f32 0.0, %v2312
    %v2314 = vpop.f32.mrf.mxu0
    %2315 = vmatprep.mubr.bf16.mxu0 0
    %2316 = vmatmul.mubr.bf16.gmra.mxu0 %v2232
    %v2317 = vpop.f32.mrf.mxu0
    %v2318 = vadd.f32 0.0, %v2317
    %v2319 = vpop.f32.mrf.mxu0
    %v2320 = vpop.f32.mrf.mxu0
    %v2321 = vadd.f32 0.0, %v2320
    %v2322 = vpop.f32.mrf.mxu0
    %2323 = vmatprep.mubr.bf16.mxu0 0
    %2324 = vmatmul.mubr.bf16.gmra.mxu0 %v2235
    %v2325 = vpop.f32.mrf.mxu0
    %v2326 = vadd.f32 0.0, %v2325
    %v2327 = vpop.f32.mrf.mxu0
    %v2328 = vpop.f32.mrf.mxu0
    %v2329 = vadd.f32 0.0, %v2328
    %v2330 = vpop.f32.mrf.mxu0
    %2331 = vmatprep.mubr.bf16.mxu0 0
    %2332 = vmatmul.mubr.bf16.gmra.mxu0 %v2238
    %v2333 = vpop.f32.mrf.mxu0
    %v2334 = vadd.f32 0.0, %v2333
    %v2335 = vpop.f32.mrf.mxu0
    %v2336 = vpop.f32.mrf.mxu0
    %v2337 = vadd.f32 0.0, %v2336
    %v2338 = vpop.f32.mrf.mxu0
    %2339 = vdwg.mxu0
    %v2340 = vadd.f32 %v2122, %v2278
    %v2341 = vadd.f32 %v2123, %v2281
    %v2342 = vadd.f32 %v2124, %v2286
    %v2343 = vadd.f32 %v2125, %v2289
    %v2344 = vadd.f32 %v2126, %v2294
    %v2345 = vadd.f32 %v2127, %v2297
    %v2346 = vadd.f32 %v2128, %v2302
    %v2347 = vadd.f32 %v2129, %v2305
    %v2348 = vadd.f32 %v2130, %v2310
    %v2349 = vadd.f32 %v2131, %v2313
    %v2350 = vadd.f32 %v2132, %v2318
    %v2351 = vadd.f32 %v2133, %v2321
    %v2352 = vadd.f32 %v2134, %v2326
    %v2353 = vadd.f32 %v2135, %v2329
    %v2354 = vadd.f32 %v2136, %v2334
    %v2355 = vadd.f32 %v2137, %v2337
    %v2356 = vld [vmem:[#allocation2 + $0x4] sm:$0x8]
    %v2357 = vld [vmem:[#allocation2 + $0x44] sm:$0x7]
    %s2358 = scalar_lea.vmem %s5, 260
    %v2359 = vld [vmem:[%s2358] sm:$0xf]
    %v2360 = vld [vmem:[%s2358 + $0x4] sm:$0xf]
    %v2361 = vld [vmem:[%s2358 + $0x8] sm:$0xf]
    %v2362 = vld [vmem:[%s2358 + $0xc] sm:$0xf]
    %v2363 = vld [vmem:[%s2358 + $0x10] sm:$0xf]
    %v2364 = vld [vmem:[%s2358 + $0x14] sm:$0xf]
    %v2365 = vld [vmem:[%s2358 + $0x18] sm:$0xf]
    %v2366 = vld [vmem:[%s2358 + $0x1c] sm:$0xf]
    %v2367 = vld [vmem:[%s2358 + $0x20] sm:$0xf]
    %v2368 = vld [vmem:[%s2358 + $0x24] sm:$0xf]
    %v2369 = vld [vmem:[%s2358 + $0x28] sm:$0xf]
    %v2370 = vld [vmem:[%s2358 + $0x2c] sm:$0xf]
    %v2371 = vld [vmem:[%s2358 + $0x30] sm:$0x3]
    %v2374 = vunpack.c.l.b16 %v2356
    %v2375 = vunpack.c.l.b16 %v2357
    %v2376 = vpack.c.b16 %v1917, %v2374
    %v2377 = vpack.c.b16 %v2375, %v2375
    %vm2378 = vcmask 1044480
    %v2379 = vrot.slane %v2376, 3
    %v2380 = vrot.slane %v1934, 3
    %v2381 = vsel %vm2378, %v2379, %v2380
    %v2382 = vrot.slane %v1935, 3
    %v2383 = vsel %vm2378, %v2380, %v2382
    %v2384 = vrot.slane %v1936, 3
    %v2385 = vsel %vm2378, %v2382, %v2384
    %v2386 = vrot.slane %v1937, 3
    %v2387 = vsel %vm2378, %v2384, %v2386
    %v2388 = vrot.slane %v1938, 3
    %v2389 = vsel %vm2378, %v2386, %v2388
    %v2390 = vrot.slane %v1939, 3
    %v2391 = vsel %vm2378, %v2388, %v2390
    %v2392 = vrot.slane %v1940, 3
    %v2393 = vsel %vm2378, %v2390, %v2392
    %v2394 = vrot.slane %v2377, 3
    %v2395 = vsel %vm2378, %v2392, %v2394
    %v2409 = vunpack.c.l.b16 %v2359
    %v2410 = vunpack.c.l.b16 %v2360
    %v2411 = vunpack.c.l.b16 %v2361
    %v2412 = vunpack.c.l.b16 %v2362
    %v2413 = vunpack.c.l.b16 %v2363
    %v2414 = vunpack.c.l.b16 %v2364
    %v2415 = vunpack.c.l.b16 %v2365
    %v2416 = vunpack.c.l.b16 %v2366
    %v2417 = vunpack.c.l.b16 %v2367
    %v2418 = vunpack.c.l.b16 %v2368
    %v2419 = vunpack.c.l.b16 %v2369
    %v2420 = vunpack.c.l.b16 %v2370
    %v2421 = vunpack.c.l.b16 %v2371
    %v2422 = vpack.c.b16 %v2410, %v2409
    %v2423 = vpack.c.b16 %v2412, %v2411
    %v2424 = vpack.c.b16 %v2414, %v2413
    %v2425 = vpack.c.b16 %v2416, %v2415
    %v2426 = vpack.c.b16 %v2418, %v2417
    %v2427 = vpack.c.b16 %v2420, %v2419
    %v2428 = vpack.c.b16 %v2421, %v2421
    %v2436 = vsel %vm647, %v2381, 0
    %v2439 = vsel %vm647, %v2383, 0
    %v2442 = vsel %vm647, %v2385, 0
    %v2445 = vsel %vm647, %v2387, 0
    %v2448 = vsel %vm647, %v2389, 0
    %v2451 = vsel %vm647, %v2391, 0
    %v2454 = vsel %vm647, %v2393, 0
    %v2457 = vsel %vm647, %v2395, 0
    %v2460 = vsel %vm696, %v2428, 0
    %2462 = vmatprep.subr.bf16.mxu0 0
    %2463 = vmatpush1.bf16.msra.mxu0 0
    %2464 = vmatprep.subr.bf16.mxu0 0
    %2465 = vmatpush1.bf16.msra.mxu0 %v2460
    %2466 = vmatprep.subr.bf16.mxu0 0
    %2467 = vmatpush1.bf16.msra.mxu0 %v2427
    %2468 = vmatprep.subr.bf16.mxu0 0
    %2469 = vmatpush1.bf16.msra.mxu0 %v2426
    %2470 = vmatprep.subr.bf16.mxu0 0
    %2471 = vmatpush1.bf16.msra.mxu0 %v2425
    %2472 = vmatprep.subr.bf16.mxu0 0
    %2473 = vmatpush1.bf16.msra.mxu0 %v2424
    %2474 = vmatprep.subr.bf16.mxu0 0
    %2475 = vmatpush1.bf16.msra.mxu0 %v2423
    %2476 = vmatprep.subr.bf16.mxu0 0
    %2477 = vmatpush1.bf16.msra.mxu0 %v2422
    %2478 = vmatprep.subr.bf16.mxu0 0
    %2479 = vmatpush2.bf16.msra.mxu0 0
    %2480 = vmatprep.subr.bf16.mxu0 0
    %2481 = vmatpush2.bf16.msra.mxu0 0
    %2482 = vmatprep.subr.bf16.mxu0 0
    %2483 = vmatpush2.bf16.msra.mxu0 0
    %2484 = vmatprep.subr.bf16.mxu0 0
    %2485 = vmatpush2.bf16.msra.mxu0 0
    %2486 = vmatprep.subr.bf16.mxu0 0
    %2487 = vmatpush2.bf16.msra.mxu0 0
    %2488 = vmatprep.subr.bf16.mxu0 0
    %2489 = vmatpush2.bf16.msra.mxu0 0
    %2490 = vmatprep.subr.bf16.mxu0 0
    %2491 = vmatpush2.bf16.msra.mxu0 0
    %2492 = vmatprep.subr.bf16.mxu0 0
    %2493 = vmatpush2.bf16.msra.mxu0 0
    %2494 = vmatprep.mubr.bf16.mxu0 0
    %2495 = vmatmul.mubr.bf16.gmra.mxu0 %v2436
    %v2496 = vpop.f32.mrf.mxu0
    %v2497 = vadd.f32 0.0, %v2496
    %v2498 = vpop.f32.mrf.mxu0
    %v2499 = vpop.f32.mrf.mxu0
    %v2500 = vadd.f32 0.0, %v2499
    %v2501 = vpop.f32.mrf.mxu0
    %2502 = vmatprep.mubr.bf16.mxu0 0
    %2503 = vmatmul.mubr.bf16.gmra.mxu0 %v2439
    %v2504 = vpop.f32.mrf.mxu0
    %v2505 = vadd.f32 0.0, %v2504
    %v2506 = vpop.f32.mrf.mxu0
    %v2507 = vpop.f32.mrf.mxu0
    %v2508 = vadd.f32 0.0, %v2507
    %v2509 = vpop.f32.mrf.mxu0
    %2510 = vmatprep.mubr.bf16.mxu0 0
    %2511 = vmatmul.mubr.bf16.gmra.mxu0 %v2442
    %v2512 = vpop.f32.mrf.mxu0
    %v2513 = vadd.f32 0.0, %v2512
    %v2514 = vpop.f32.mrf.mxu0
    %v2515 = vpop.f32.mrf.mxu0
    %v2516 = vadd.f32 0.0, %v2515
    %v2517 = vpop.f32.mrf.mxu0
    %2518 = vmatprep.mubr.bf16.mxu0 0
    %2519 = vmatmul.mubr.bf16.gmra.mxu0 %v2445
    %v2520 = vpop.f32.mrf.mxu0
    %v2521 = vadd.f32 0.0, %v2520
    %v2522 = vpop.f32.mrf.mxu0
    %v2523 = vpop.f32.mrf.mxu0
    %v2524 = vadd.f32 0.0, %v2523
    %v2525 = vpop.f32.mrf.mxu0
    %2526 = vmatprep.mubr.bf16.mxu0 0
    %2527 = vmatmul.mubr.bf16.gmra.mxu0 %v2448
    %v2528 = vpop.f32.mrf.mxu0
    %v2529 = vadd.f32 0.0, %v2528
    %v2530 = vpop.f32.mrf.mxu0
    %v2531 = vpop.f32.mrf.mxu0
    %v2532 = vadd.f32 0.0, %v2531
    %v2533 = vpop.f32.mrf.mxu0
    %2534 = vmatprep.mubr.bf16.mxu0 0
    %2535 = vmatmul.mubr.bf16.gmra.mxu0 %v2451
    %v2536 = vpop.f32.mrf.mxu0
    %v2537 = vadd.f32 0.0, %v2536
    %v2538 = vpop.f32.mrf.mxu0
    %v2539 = vpop.f32.mrf.mxu0
    %v2540 = vadd.f32 0.0, %v2539
    %v2541 = vpop.f32.mrf.mxu0
    %2542 = vmatprep.mubr.bf16.mxu0 0
    %2543 = vmatmul.mubr.bf16.gmra.mxu0 %v2454
    %v2544 = vpop.f32.mrf.mxu0
    %v2545 = vadd.f32 0.0, %v2544
    %v2546 = vpop.f32.mrf.mxu0
    %v2547 = vpop.f32.mrf.mxu0
    %v2548 = vadd.f32 0.0, %v2547
    %v2549 = vpop.f32.mrf.mxu0
    %2550 = vmatprep.mubr.bf16.mxu0 0
    %2551 = vmatmul.mubr.bf16.gmra.mxu0 %v2457
    %v2552 = vpop.f32.mrf.mxu0
    %v2553 = vadd.f32 0.0, %v2552
    %v2554 = vpop.f32.mrf.mxu0
    %v2555 = vpop.f32.mrf.mxu0
    %v2556 = vadd.f32 0.0, %v2555
    %v2557 = vpop.f32.mrf.mxu0
    %2558 = vdwg.mxu0
    %v2559 = vadd.f32 %v2340, %v2497
    %v2560 = vadd.f32 %v2341, %v2500
    %v2561 = vadd.f32 %v2342, %v2505
    %v2562 = vadd.f32 %v2343, %v2508
    %v2563 = vadd.f32 %v2344, %v2513
    %v2564 = vadd.f32 %v2345, %v2516
    %v2565 = vadd.f32 %v2346, %v2521
    %v2566 = vadd.f32 %v2347, %v2524
    %v2567 = vadd.f32 %v2348, %v2529
    %v2568 = vadd.f32 %v2349, %v2532
    %v2569 = vadd.f32 %v2350, %v2537
    %v2570 = vadd.f32 %v2351, %v2540
    %v2571 = vadd.f32 %v2352, %v2545
    %v2572 = vadd.f32 %v2353, %v2548
    %v2573 = vadd.f32 %v2354, %v2553
    %v2574 = vadd.f32 %v2355, %v2556
    %v2575 = vld [vmem:[#allocation2 + $0x8] sm:$0xc]
    %v2576 = vld [vmem:[#allocation2 + $0xc] sm:$0xf]
    %v2577 = vld [vmem:[#allocation2 + $0x10] sm:$0xf]
    %v2578 = vld [vmem:[#allocation2 + $0x14] sm:$0xf]
    %v2579 = vld [vmem:[#allocation2 + $0x18] sm:$0xf]
    %v2580 = vld [vmem:[#allocation2 + $0x1c] sm:$0xf]
    %v2581 = vld [vmem:[#allocation2 + $0x20] sm:$0xf]
    %v2582 = vld [vmem:[#allocation2 + $0x24] sm:$0xf]
    %v2583 = vld [vmem:[#allocation2 + $0x28] sm:$0xf]
    %v2584 = vld [vmem:[#allocation2 + $0x2c] sm:$0xf]
    %v2585 = vld [vmem:[#allocation2 + $0x30] sm:$0xf]
    %v2586 = vld [vmem:[#allocation2 + $0x34] sm:$0xf]
    %v2587 = vld [vmem:[#allocation2 + $0x38] sm:$0xf]
    %v2588 = vld [vmem:[#allocation2 + $0x3c] sm:$0xf]
    %v2589 = vld [vmem:[#allocation2 + $0x40] sm:$0xf]
    %v2590 = vld [vmem:[#allocation2 + $0x44] sm:$0xf]
    %v2591 = vld [vmem:[#allocation2 + $0x48] sm:$0x3]
    %s2592 = scalar_lea.vmem %s5, 312
    %v2593 = vld [vmem:[%s2592] sm:$0xf]
    %v2594 = vld [vmem:[%s2592 + $0x4] sm:$0xf]
    %v2595 = vld [vmem:[%s2592 + $0x8] sm:$0xf]
    %v2596 = vld [vmem:[%s2592 + $0xc] sm:$0xf]
    %v2597 = vld [vmem:[%s2592 + $0x10] sm:$0xf]
    %v2598 = vld [vmem:[%s2592 + $0x14] sm:$0xf]
    %v2599 = vld [vmem:[%s2592 + $0x18] sm:$0xf]
    %v2600 = vld [vmem:[%s2592 + $0x1c] sm:$0xf]
    %v2601 = vld [vmem:[%s2592 + $0x20] sm:$0xf]
    %v2602 = vld [vmem:[%s2592 + $0x24] sm:$0xf]
    %v2603 = vld [vmem:[%s2592 + $0x28] sm:$0xf]
    %v2604 = vld [vmem:[%s2592 + $0x2c] sm:$0xf]
    %v2605 = vld [vmem:[%s2592 + $0x30] sm:$0x3]
    %v2623 = vunpack.c.l.b16 %v2575
    %v2624 = vunpack.c.l.b16 %v2576
    %v2625 = vunpack.c.l.b16 %v2577
    %v2626 = vunpack.c.l.b16 %v2578
    %v2627 = vunpack.c.l.b16 %v2579
    %v2628 = vunpack.c.l.b16 %v2580
    %v2629 = vunpack.c.l.b16 %v2581
    %v2630 = vunpack.c.l.b16 %v2582
    %v2631 = vunpack.c.l.b16 %v2583
    %v2632 = vunpack.c.l.b16 %v2584
    %v2633 = vunpack.c.l.b16 %v2585
    %v2634 = vunpack.c.l.b16 %v2586
    %v2635 = vunpack.c.l.b16 %v2587
    %v2636 = vunpack.c.l.b16 %v2588
    %v2637 = vunpack.c.l.b16 %v2589
    %v2638 = vunpack.c.l.b16 %v2590
    %v2639 = vunpack.c.l.b16 %v2591
    %v2640 = vpack.c.b16 %v2624, %v2623
    %v2641 = vpack.c.b16 %v2626, %v2625
    %v2642 = vpack.c.b16 %v2628, %v2627
    %v2643 = vpack.c.b16 %v2630, %v2629
    %v2644 = vpack.c.b16 %v2632, %v2631
    %v2645 = vpack.c.b16 %v2634, %v2633
    %v2646 = vpack.c.b16 %v2636, %v2635
    %v2647 = vpack.c.b16 %v2638, %v2637
    %v2648 = vpack.c.b16 %v2639, %v2639
    %v2649 = vrot.slane %v2640, 2
    %v2650 = vrot.slane %v2641, 2
    %v2651 = vsel %vm1671, %v2649, %v2650
    %v2652 = vrot.slane %v2642, 2
    %v2653 = vsel %vm1671, %v2650, %v2652
    %v2654 = vrot.slane %v2643, 2
    %v2655 = vsel %vm1671, %v2652, %v2654
    %v2656 = vrot.slane %v2644, 2
    %v2657 = vsel %vm1671, %v2654, %v2656
    %v2658 = vrot.slane %v2645, 2
    %v2659 = vsel %vm1671, %v2656, %v2658
    %v2660 = vrot.slane %v2646, 2
    %v2661 = vsel %vm1671, %v2658, %v2660
    %v2662 = vrot.slane %v2647, 2
    %v2663 = vsel %vm1671, %v2660, %v2662
    %v2664 = vrot.slane %v2648, 2
    %v2665 = vsel %vm1671, %v2662, %v2664
    %v2679 = vunpack.c.l.b16 %v2593
    %v2680 = vunpack.c.l.b16 %v2594
    %v2681 = vunpack.c.l.b16 %v2595
    %v2682 = vunpack.c.l.b16 %v2596
    %v2683 = vunpack.c.l.b16 %v2597
    %v2684 = vunpack.c.l.b16 %v2598
    %v2685 = vunpack.c.l.b16 %v2599
    %v2686 = vunpack.c.l.b16 %v2600
    %v2687 = vunpack.c.l.b16 %v2601
    %v2688 = vunpack.c.l.b16 %v2602
    %v2689 = vunpack.c.l.b16 %v2603
    %v2690 = vunpack.c.l.b16 %v2604
    %v2691 = vunpack.c.l.b16 %v2605
    %v2692 = vpack.c.b16 %v2680, %v2679
    %v2693 = vpack.c.b16 %v2682, %v2681
    %v2694 = vpack.c.b16 %v2684, %v2683
    %v2695 = vpack.c.b16 %v2686, %v2685
    %v2696 = vpack.c.b16 %v2688, %v2687
    %v2697 = vpack.c.b16 %v2690, %v2689
    %v2698 = vpack.c.b16 %v2691, %v2691
    %v2706 = vsel %vm647, %v2651, 0
    %v2709 = vsel %vm647, %v2653, 0
    %v2712 = vsel %vm647, %v2655, 0
    %v2715 = vsel %vm647, %v2657, 0
    %v2718 = vsel %vm647, %v2659, 0
    %v2721 = vsel %vm647, %v2661, 0
    %v2724 = vsel %vm647, %v2663, 0
    %v2727 = vsel %vm647, %v2665, 0
    %v2730 = vsel %vm696, %v2698, 0
    %2732 = vmatprep.subr.bf16.mxu0 0
    %2733 = vmatpush1.bf16.msra.mxu0 0
    %2734 = vmatprep.subr.bf16.mxu0 0
    %2735 = vmatpush1.bf16.msra.mxu0 %v2730
    %2736 = vmatprep.subr.bf16.mxu0 0
    %2737 = vmatpush1.bf16.msra.mxu0 %v2697
    %2738 = vmatprep.subr.bf16.mxu0 0
    %2739 = vmatpush1.bf16.msra.mxu0 %v2696
    %2740 = vmatprep.subr.bf16.mxu0 0
    %2741 = vmatpush1.bf16.msra.mxu0 %v2695
    %2742 = vmatprep.subr.bf16.mxu0 0
    %2743 = vmatpush1.bf16.msra.mxu0 %v2694
    %2744 = vmatprep.subr.bf16.mxu0 0
    %2745 = vmatpush1.bf16.msra.mxu0 %v2693
    %2746 = vmatprep.subr.bf16.mxu0 0
    %2747 = vmatpush1.bf16.msra.mxu0 %v2692
    %2748 = vmatprep.subr.bf16.mxu0 0
    %2749 = vmatpush2.bf16.msra.mxu0 0
    %2750 = vmatprep.subr.bf16.mxu0 0
    %2751 = vmatpush2.bf16.msra.mxu0 0
    %2752 = vmatprep.subr.bf16.mxu0 0
    %2753 = vmatpush2.bf16.msra.mxu0 0
    %2754 = vmatprep.subr.bf16.mxu0 0
    %2755 = vmatpush2.bf16.msra.mxu0 0
    %2756 = vmatprep.subr.bf16.mxu0 0
    %2757 = vmatpush2.bf16.msra.mxu0 0
    %2758 = vmatprep.subr.bf16.mxu0 0
    %2759 = vmatpush2.bf16.msra.mxu0 0
    %2760 = vmatprep.subr.bf16.mxu0 0
    %2761 = vmatpush2.bf16.msra.mxu0 0
    %2762 = vmatprep.subr.bf16.mxu0 0
    %2763 = vmatpush2.bf16.msra.mxu0 0
    %2764 = vmatprep.mubr.bf16.mxu0 0
    %2765 = vmatmul.mubr.bf16.gmra.mxu0 %v2706
    %v2766 = vpop.f32.mrf.mxu0
    %v2767 = vadd.f32 0.0, %v2766
    %v2768 = vpop.f32.mrf.mxu0
    %v2769 = vpop.f32.mrf.mxu0
    %v2770 = vadd.f32 0.0, %v2769
    %v2771 = vpop.f32.mrf.mxu0
    %2772 = vmatprep.mubr.bf16.mxu0 0
    %2773 = vmatmul.mubr.bf16.gmra.mxu0 %v2709
    %v2774 = vpop.f32.mrf.mxu0
    %v2775 = vadd.f32 0.0, %v2774
    %v2776 = vpop.f32.mrf.mxu0
    %v2777 = vpop.f32.mrf.mxu0
    %v2778 = vadd.f32 0.0, %v2777
    %v2779 = vpop.f32.mrf.mxu0
    %2780 = vmatprep.mubr.bf16.mxu0 0
    %2781 = vmatmul.mubr.bf16.gmra.mxu0 %v2712
    %v2782 = vpop.f32.mrf.mxu0
    %v2783 = vadd.f32 0.0, %v2782
    %v2784 = vpop.f32.mrf.mxu0
    %v2785 = vpop.f32.mrf.mxu0
    %v2786 = vadd.f32 0.0, %v2785
    %v2787 = vpop.f32.mrf.mxu0
    %2788 = vmatprep.mubr.bf16.mxu0 0
    %2789 = vmatmul.mubr.bf16.gmra.mxu0 %v2715
    %v2790 = vpop.f32.mrf.mxu0
    %v2791 = vadd.f32 0.0, %v2790
    %v2792 = vpop.f32.mrf.mxu0
    %v2793 = vpop.f32.mrf.mxu0
    %v2794 = vadd.f32 0.0, %v2793
    %v2795 = vpop.f32.mrf.mxu0
    %2796 = vmatprep.mubr.bf16.mxu0 0
    %2797 = vmatmul.mubr.bf16.gmra.mxu0 %v2718
    %v2798 = vpop.f32.mrf.mxu0
    %v2799 = vadd.f32 0.0, %v2798
    %v2800 = vpop.f32.mrf.mxu0
    %v2801 = vpop.f32.mrf.mxu0
    %v2802 = vadd.f32 0.0, %v2801
    %v2803 = vpop.f32.mrf.mxu0
    %2804 = vmatprep.mubr.bf16.mxu0 0
    %2805 = vmatmul.mubr.bf16.gmra.mxu0 %v2721
    %v2806 = vpop.f32.mrf.mxu0
    %v2807 = vadd.f32 0.0, %v2806
    %v2808 = vpop.f32.mrf.mxu0
    %v2809 = vpop.f32.mrf.mxu0
    %v2810 = vadd.f32 0.0, %v2809
    %v2811 = vpop.f32.mrf.mxu0
    %2812 = vmatprep.mubr.bf16.mxu0 0
    %2813 = vmatmul.mubr.bf16.gmra.mxu0 %v2724
    %v2814 = vpop.f32.mrf.mxu0
    %v2815 = vadd.f32 0.0, %v2814
    %v2816 = vpop.f32.mrf.mxu0
    %v2817 = vpop.f32.mrf.mxu0
    %v2818 = vadd.f32 0.0, %v2817
    %v2819 = vpop.f32.mrf.mxu0
    %2820 = vmatprep.mubr.bf16.mxu0 0
    %2821 = vmatmul.mubr.bf16.gmra.mxu0 %v2727
    %v2822 = vpop.f32.mrf.mxu0
    %v2823 = vadd.f32 0.0, %v2822
    %v2824 = vpop.f32.mrf.mxu0
    %v2825 = vpop.f32.mrf.mxu0
    %v2826 = vadd.f32 0.0, %v2825
    %v2827 = vpop.f32.mrf.mxu0
    %2828 = vdwg.mxu0
    %v2829 = vadd.f32 %v2559, %v2767
    %v2830 = vadd.f32 %v2560, %v2770
    %v2831 = vadd.f32 %v2561, %v2775
    %v2832 = vadd.f32 %v2562, %v2778
    %v2833 = vadd.f32 %v2563, %v2783
    %v2834 = vadd.f32 %v2564, %v2786
    %v2835 = vadd.f32 %v2565, %v2791
    %v2836 = vadd.f32 %v2566, %v2794
    %v2837 = vadd.f32 %v2567, %v2799
    %v2838 = vadd.f32 %v2568, %v2802
    %v2839 = vadd.f32 %v2569, %v2807
    %v2840 = vadd.f32 %v2570, %v2810
    %v2841 = vadd.f32 %v2571, %v2815
    %v2842 = vadd.f32 %v2572, %v2818
    %v2843 = vadd.f32 %v2573, %v2823
    %v2844 = vadd.f32 %v2574, %v2826
    %v2845 = vld [vmem:[#allocation2 + $0x8] sm:$0x8]
    %v2846 = vld [vmem:[#allocation2 + $0x48] sm:$0x7]
    %s2847 = scalar_lea.vmem %s5, 364
    %v2848 = vld [vmem:[%s2847] sm:$0xf]
    %v2849 = vld [vmem:[%s2847 + $0x4] sm:$0xf]
    %v2850 = vld [vmem:[%s2847 + $0x8] sm:$0xf]
    %v2851 = vld [vmem:[%s2847 + $0xc] sm:$0xf]
    %v2852 = vld [vmem:[%s2847 + $0x10] sm:$0xf]
    %v2853 = vld [vmem:[%s2847 + $0x14] sm:$0xf]
    %v2854 = vld [vmem:[%s2847 + $0x18] sm:$0xf]
    %v2855 = vld [vmem:[%s2847 + $0x1c] sm:$0xf]
    %v2856 = vld [vmem:[%s2847 + $0x20] sm:$0xf]
    %v2857 = vld [vmem:[%s2847 + $0x24] sm:$0xf]
    %v2858 = vld [vmem:[%s2847 + $0x28] sm:$0xf]
    %v2859 = vld [vmem:[%s2847 + $0x2c] sm:$0xf]
    %v2860 = vld [vmem:[%s2847 + $0x30] sm:$0x3]
    %v2863 = vunpack.c.l.b16 %v2845
    %v2864 = vunpack.c.l.b16 %v2846
    %v2865 = vpack.c.b16 %v2624, %v2863
    %v2866 = vpack.c.b16 %v2864, %v2864
    %v2867 = vrot.slane %v2865, 3
    %v2868 = vrot.slane %v2641, 3
    %v2869 = vsel %vm2378, %v2867, %v2868
    %v2870 = vrot.slane %v2642, 3
    %v2871 = vsel %vm2378, %v2868, %v2870
    %v2872 = vrot.slane %v2643, 3
    %v2873 = vsel %vm2378, %v2870, %v2872
    %v2874 = vrot.slane %v2644, 3
    %v2875 = vsel %vm2378, %v2872, %v2874
    %v2876 = vrot.slane %v2645, 3
    %v2877 = vsel %vm2378, %v2874, %v2876
    %v2878 = vrot.slane %v2646, 3
    %v2879 = vsel %vm2378, %v2876, %v2878
    %v2880 = vrot.slane %v2647, 3
    %v2881 = vsel %vm2378, %v2878, %v2880
    %v2882 = vrot.slane %v2866, 3
    %v2883 = vsel %vm2378, %v2880, %v2882
    %v2897 = vunpack.c.l.b16 %v2848
    %v2898 = vunpack.c.l.b16 %v2849
    %v2899 = vunpack.c.l.b16 %v2850
    %v2900 = vunpack.c.l.b16 %v2851
    %v2901 = vunpack.c.l.b16 %v2852
    %v2902 = vunpack.c.l.b16 %v2853
    %v2903 = vunpack.c.l.b16 %v2854
    %v2904 = vunpack.c.l.b16 %v2855
    %v2905 = vunpack.c.l.b16 %v2856
    %v2906 = vunpack.c.l.b16 %v2857
    %v2907 = vunpack.c.l.b16 %v2858
    %v2908 = vunpack.c.l.b16 %v2859
    %v2909 = vunpack.c.l.b16 %v2860
    %v2910 = vpack.c.b16 %v2898, %v2897
    %v2911 = vpack.c.b16 %v2900, %v2899
    %v2912 = vpack.c.b16 %v2902, %v2901
    %v2913 = vpack.c.b16 %v2904, %v2903
    %v2914 = vpack.c.b16 %v2906, %v2905
    %v2915 = vpack.c.b16 %v2908, %v2907
    %v2916 = vpack.c.b16 %v2909, %v2909
    %v2924 = vsel %vm647, %v2869, 0
    %v2927 = vsel %vm647, %v2871, 0
    %v2930 = vsel %vm647, %v2873, 0
    %v2933 = vsel %vm647, %v2875, 0
    %v2936 = vsel %vm647, %v2877, 0
    %v2939 = vsel %vm647, %v2879, 0
    %v2942 = vsel %vm647, %v2881, 0
    %v2945 = vsel %vm647, %v2883, 0
    %v2948 = vsel %vm696, %v2916, 0
    %2950 = vmatprep.subr.bf16.mxu0 0
    %2951 = vmatpush1.bf16.msra.mxu0 0
    %2952 = vmatprep.subr.bf16.mxu0 0
    %2953 = vmatpush1.bf16.msra.mxu0 %v2948
    %2954 = vmatprep.subr.bf16.mxu0 0
    %2955 = vmatpush1.bf16.msra.mxu0 %v2915
    %2956 = vmatprep.subr.bf16.mxu0 0
    %2957 = vmatpush1.bf16.msra.mxu0 %v2914
    %2958 = vmatprep.subr.bf16.mxu0 0
    %2959 = vmatpush1.bf16.msra.mxu0 %v2913
    %2960 = vmatprep.subr.bf16.mxu0 0
    %2961 = vmatpush1.bf16.msra.mxu0 %v2912
    %2962 = vmatprep.subr.bf16.mxu0 0
    %2963 = vmatpush1.bf16.msra.mxu0 %v2911
    %2964 = vmatprep.subr.bf16.mxu0 0
    %2965 = vmatpush1.bf16.msra.mxu0 %v2910
    %2966 = vmatprep.subr.bf16.mxu0 0
    %2967 = vmatpush2.bf16.msra.mxu0 0
    %2968 = vmatprep.subr.bf16.mxu0 0
    %2969 = vmatpush2.bf16.msra.mxu0 0
    %2970 = vmatprep.subr.bf16.mxu0 0
    %2971 = vmatpush2.bf16.msra.mxu0 0
    %2972 = vmatprep.subr.bf16.mxu0 0
    %2973 = vmatpush2.bf16.msra.mxu0 0
    %2974 = vmatprep.subr.bf16.mxu0 0
    %2975 = vmatpush2.bf16.msra.mxu0 0
    %2976 = vmatprep.subr.bf16.mxu0 0
    %2977 = vmatpush2.bf16.msra.mxu0 0
    %2978 = vmatprep.subr.bf16.mxu0 0
    %2979 = vmatpush2.bf16.msra.mxu0 0
    %2980 = vmatprep.subr.bf16.mxu0 0
    %2981 = vmatpush2.bf16.msra.mxu0 0
    %2982 = vmatprep.mubr.bf16.mxu0 0
    %2983 = vmatmul.mubr.bf16.gmra.mxu0 %v2924
    %v2984 = vpop.f32.mrf.mxu0
    %v2985 = vadd.f32 0.0, %v2984
    %v2986 = vpop.f32.mrf.mxu0
    %v2987 = vpop.f32.mrf.mxu0
    %v2988 = vadd.f32 0.0, %v2987
    %v2989 = vpop.f32.mrf.mxu0
    %2990 = vmatprep.mubr.bf16.mxu0 0
    %2991 = vmatmul.mubr.bf16.gmra.mxu0 %v2927
    %v2992 = vpop.f32.mrf.mxu0
    %v2993 = vadd.f32 0.0, %v2992
    %v2994 = vpop.f32.mrf.mxu0
    %v2995 = vpop.f32.mrf.mxu0
    %v2996 = vadd.f32 0.0, %v2995
    %v2997 = vpop.f32.mrf.mxu0
    %2998 = vmatprep.mubr.bf16.mxu0 0
    %2999 = vmatmul.mubr.bf16.gmra.mxu0 %v2930
    %v3000 = vpop.f32.mrf.mxu0
    %v3001 = vadd.f32 0.0, %v3000
    %v3002 = vpop.f32.mrf.mxu0
    %v3003 = vpop.f32.mrf.mxu0
    %v3004 = vadd.f32 0.0, %v3003
    %v3005 = vpop.f32.mrf.mxu0
    %3006 = vmatprep.mubr.bf16.mxu0 0
    %3007 = vmatmul.mubr.bf16.gmra.mxu0 %v2933
    %v3008 = vpop.f32.mrf.mxu0
    %v3009 = vadd.f32 0.0, %v3008
    %v3010 = vpop.f32.mrf.mxu0
    %v3011 = vpop.f32.mrf.mxu0
    %v3012 = vadd.f32 0.0, %v3011
    %v3013 = vpop.f32.mrf.mxu0
    %3014 = vmatprep.mubr.bf16.mxu0 0
    %3015 = vmatmul.mubr.bf16.gmra.mxu0 %v2936
    %v3016 = vpop.f32.mrf.mxu0
    %v3017 = vadd.f32 0.0, %v3016
    %v3018 = vpop.f32.mrf.mxu0
    %v3019 = vpop.f32.mrf.mxu0
    %v3020 = vadd.f32 0.0, %v3019
    %v3021 = vpop.f32.mrf.mxu0
    %3022 = vmatprep.mubr.bf16.mxu0 0
    %3023 = vmatmul.mubr.bf16.gmra.mxu0 %v2939
    %v3024 = vpop.f32.mrf.mxu0
    %v3025 = vadd.f32 0.0, %v3024
    %v3026 = vpop.f32.mrf.mxu0
    %v3027 = vpop.f32.mrf.mxu0
    %v3028 = vadd.f32 0.0, %v3027
    %v3029 = vpop.f32.mrf.mxu0
    %3030 = vmatprep.mubr.bf16.mxu0 0
    %3031 = vmatmul.mubr.bf16.gmra.mxu0 %v2942
    %v3032 = vpop.f32.mrf.mxu0
    %v3033 = vadd.f32 0.0, %v3032
    %v3034 = vpop.f32.mrf.mxu0
    %v3035 = vpop.f32.mrf.mxu0
    %v3036 = vadd.f32 0.0, %v3035
    %v3037 = vpop.f32.mrf.mxu0
    %3038 = vmatprep.mubr.bf16.mxu0 0
    %3039 = vmatmul.mubr.bf16.gmra.mxu0 %v2945
    %v3040 = vpop.f32.mrf.mxu0
    %v3041 = vadd.f32 0.0, %v3040
    %v3042 = vpop.f32.mrf.mxu0
    %v3043 = vpop.f32.mrf.mxu0
    %v3044 = vadd.f32 0.0, %v3043
    %v3045 = vpop.f32.mrf.mxu0
    %3046 = vdwg.mxu0
    %v3047 = vadd.f32 %v2829, %v2985
    %v3048 = vadd.f32 %v2830, %v2988
    %v3049 = vadd.f32 %v2831, %v2993
    %v3050 = vadd.f32 %v2832, %v2996
    %v3051 = vadd.f32 %v2833, %v3001
    %v3052 = vadd.f32 %v2834, %v3004
    %v3053 = vadd.f32 %v2835, %v3009
    %v3054 = vadd.f32 %v2836, %v3012
    %v3055 = vadd.f32 %v2837, %v3017
    %v3056 = vadd.f32 %v2838, %v3020
    %v3057 = vadd.f32 %v2839, %v3025
    %v3058 = vadd.f32 %v2840, %v3028
    %v3059 = vadd.f32 %v2841, %v3033
    %v3060 = vadd.f32 %v2842, %v3036
    %v3061 = vadd.f32 %v2843, %v3041
    %v3062 = vadd.f32 %v2844, %v3044
    %v3063 = vld [vmem:[#allocation2 + $0x48] sm:$0xf]
    %s3064 = scalar_lea.vmem %s5, 416
    %v3065 = vld [vmem:[%s3064] sm:$0xf]
    %v3066 = vld [vmem:[%s3064 + $0x4] sm:$0xf]
    %v3067 = vld [vmem:[%s3064 + $0x8] sm:$0xf]
    %v3068 = vld [vmem:[%s3064 + $0xc] sm:$0xf]
    %v3069 = vld [vmem:[%s3064 + $0x10] sm:$0xf]
    %v3070 = vld [vmem:[%s3064 + $0x14] sm:$0xf]
    %v3071 = vld [vmem:[%s3064 + $0x18] sm:$0xf]
    %v3072 = vld [vmem:[%s3064 + $0x1c] sm:$0xf]
    %v3073 = vld [vmem:[%s3064 + $0x20] sm:$0xf]
    %v3074 = vld [vmem:[%s3064 + $0x24] sm:$0xf]
    %v3075 = vld [vmem:[%s3064 + $0x28] sm:$0xf]
    %v3076 = vld [vmem:[%s3064 + $0x2c] sm:$0xf]
    %v3077 = vld [vmem:[%s3064 + $0x30] sm:$0x3]
    %v3079 = vunpack.c.l.b16 %v3063
    %v3080 = vpack.c.b16 %v2625, %v2624
    %v3081 = vpack.c.b16 %v2627, %v2626
    %v3082 = vpack.c.b16 %v2629, %v2628
    %v3083 = vpack.c.b16 %v2631, %v2630
    %v3084 = vpack.c.b16 %v2633, %v2632
    %v3085 = vpack.c.b16 %v2635, %v2634
    %v3086 = vpack.c.b16 %v2637, %v2636
    %v3087 = vpack.c.b16 %v3079, %v2638
    %v3101 = vunpack.c.l.b16 %v3065
    %v3102 = vunpack.c.l.b16 %v3066
    %v3103 = vunpack.c.l.b16 %v3067
    %v3104 = vunpack.c.l.b16 %v3068
    %v3105 = vunpack.c.l.b16 %v3069
    %v3106 = vunpack.c.l.b16 %v3070
    %v3107 = vunpack.c.l.b16 %v3071
    %v3108 = vunpack.c.l.b16 %v3072
    %v3109 = vunpack.c.l.b16 %v3073
    %v3110 = vunpack.c.l.b16 %v3074
    %v3111 = vunpack.c.l.b16 %v3075
    %v3112 = vunpack.c.l.b16 %v3076
    %v3113 = vunpack.c.l.b16 %v3077
    %v3114 = vpack.c.b16 %v3102, %v3101
    %v3115 = vpack.c.b16 %v3104, %v3103
    %v3116 = vpack.c.b16 %v3106, %v3105
    %v3117 = vpack.c.b16 %v3108, %v3107
    %v3118 = vpack.c.b16 %v3110, %v3109
    %v3119 = vpack.c.b16 %v3112, %v3111
    %v3120 = vpack.c.b16 %v3113, %v3113
    %v3128 = vsel %vm647, %v3080, 0
    %v3131 = vsel %vm647, %v3081, 0
    %v3134 = vsel %vm647, %v3082, 0
    %v3137 = vsel %vm647, %v3083, 0
    %v3140 = vsel %vm647, %v3084, 0
    %v3143 = vsel %vm647, %v3085, 0
    %v3146 = vsel %vm647, %v3086, 0
    %v3149 = vsel %vm647, %v3087, 0
    %v3152 = vsel %vm696, %v3120, 0
    %3154 = vmatprep.subr.bf16.mxu0 0
    %3155 = vmatpush1.bf16.msra.mxu0 0
    %3156 = vmatprep.subr.bf16.mxu0 0
    %3157 = vmatpush1.bf16.msra.mxu0 %v3152
    %3158 = vmatprep.subr.bf16.mxu0 0
    %3159 = vmatpush1.bf16.msra.mxu0 %v3119
    %3160 = vmatprep.subr.bf16.mxu0 0
    %3161 = vmatpush1.bf16.msra.mxu0 %v3118
    %3162 = vmatprep.subr.bf16.mxu0 0
    %3163 = vmatpush1.bf16.msra.mxu0 %v3117
    %3164 = vmatprep.subr.bf16.mxu0 0
    %3165 = vmatpush1.bf16.msra.mxu0 %v3116
    %3166 = vmatprep.subr.bf16.mxu0 0
    %3167 = vmatpush1.bf16.msra.mxu0 %v3115
    %3168 = vmatprep.subr.bf16.mxu0 0
    %3169 = vmatpush1.bf16.msra.mxu0 %v3114
    %3170 = vmatprep.subr.bf16.mxu0 0
    %3171 = vmatpush2.bf16.msra.mxu0 0
    %3172 = vmatprep.subr.bf16.mxu0 0
    %3173 = vmatpush2.bf16.msra.mxu0 0
    %3174 = vmatprep.subr.bf16.mxu0 0
    %3175 = vmatpush2.bf16.msra.mxu0 0
    %3176 = vmatprep.subr.bf16.mxu0 0
    %3177 = vmatpush2.bf16.msra.mxu0 0
    %3178 = vmatprep.subr.bf16.mxu0 0
    %3179 = vmatpush2.bf16.msra.mxu0 0
    %3180 = vmatprep.subr.bf16.mxu0 0
    %3181 = vmatpush2.bf16.msra.mxu0 0
    %3182 = vmatprep.subr.bf16.mxu0 0
    %3183 = vmatpush2.bf16.msra.mxu0 0
    %3184 = vmatprep.subr.bf16.mxu0 0
    %3185 = vmatpush2.bf16.msra.mxu0 0
    %3186 = vmatprep.mubr.bf16.mxu0 0
    %3187 = vmatmul.mubr.bf16.gmra.mxu0 %v3128
    %v3188 = vpop.f32.mrf.mxu0
    %v3189 = vadd.f32 0.0, %v3188
    %v3190 = vpop.f32.mrf.mxu0
    %v3191 = vpop.f32.mrf.mxu0
    %v3192 = vadd.f32 0.0, %v3191
    %v3193 = vpop.f32.mrf.mxu0
    %3194 = vmatprep.mubr.bf16.mxu0 0
    %3195 = vmatmul.mubr.bf16.gmra.mxu0 %v3131
    %v3196 = vpop.f32.mrf.mxu0
    %v3197 = vadd.f32 0.0, %v3196
    %v3198 = vpop.f32.mrf.mxu0
    %v3199 = vpop.f32.mrf.mxu0
    %v3200 = vadd.f32 0.0, %v3199
    %v3201 = vpop.f32.mrf.mxu0
    %3202 = vmatprep.mubr.bf16.mxu0 0
    %3203 = vmatmul.mubr.bf16.gmra.mxu0 %v3134
    %v3204 = vpop.f32.mrf.mxu0
    %v3205 = vadd.f32 0.0, %v3204
    %v3206 = vpop.f32.mrf.mxu0
    %v3207 = vpop.f32.mrf.mxu0
    %v3208 = vadd.f32 0.0, %v3207
    %v3209 = vpop.f32.mrf.mxu0
    %3210 = vmatprep.mubr.bf16.mxu0 0
    %3211 = vmatmul.mubr.bf16.gmra.mxu0 %v3137
    %v3212 = vpop.f32.mrf.mxu0
    %v3213 = vadd.f32 0.0, %v3212
    %v3214 = vpop.f32.mrf.mxu0
    %v3215 = vpop.f32.mrf.mxu0
    %v3216 = vadd.f32 0.0, %v3215
    %v3217 = vpop.f32.mrf.mxu0
    %3218 = vmatprep.mubr.bf16.mxu0 0
    %3219 = vmatmul.mubr.bf16.gmra.mxu0 %v3140
    %v3220 = vpop.f32.mrf.mxu0
    %v3221 = vadd.f32 0.0, %v3220
    %v3222 = vpop.f32.mrf.mxu0
    %v3223 = vpop.f32.mrf.mxu0
    %v3224 = vadd.f32 0.0, %v3223
    %v3225 = vpop.f32.mrf.mxu0
    %3226 = vmatprep.mubr.bf16.mxu0 0
    %3227 = vmatmul.mubr.bf16.gmra.mxu0 %v3143
    %v3228 = vpop.f32.mrf.mxu0
    %v3229 = vadd.f32 0.0, %v3228
    %v3230 = vpop.f32.mrf.mxu0
    %v3231 = vpop.f32.mrf.mxu0
    %v3232 = vadd.f32 0.0, %v3231
    %v3233 = vpop.f32.mrf.mxu0
    %3234 = vmatprep.mubr.bf16.mxu0 0
    %3235 = vmatmul.mubr.bf16.gmra.mxu0 %v3146
    %v3236 = vpop.f32.mrf.mxu0
    %v3237 = vadd.f32 0.0, %v3236
    %v3238 = vpop.f32.mrf.mxu0
    %v3239 = vpop.f32.mrf.mxu0
    %v3240 = vadd.f32 0.0, %v3239
    %v3241 = vpop.f32.mrf.mxu0
    %3242 = vmatprep.mubr.bf16.mxu0 0
    %3243 = vmatmul.mubr.bf16.gmra.mxu0 %v3149
    %v3244 = vpop.f32.mrf.mxu0
    %v3245 = vadd.f32 0.0, %v3244
    %v3246 = vpop.f32.mrf.mxu0
    %v3247 = vpop.f32.mrf.mxu0
    %v3248 = vadd.f32 0.0, %v3247
    %v3249 = vpop.f32.mrf.mxu0
    %3250 = vdwg.mxu0
    %v3251 = vadd.f32 %v3047, %v3189
    %v3252 = vadd.f32 %v3048, %v3192
    %v3253 = vadd.f32 %v3049, %v3197
    %v3254 = vadd.f32 %v3050, %v3200
    %v3255 = vadd.f32 %v3051, %v3205
    %v3256 = vadd.f32 %v3052, %v3208
    %v3257 = vadd.f32 %v3053, %v3213
    %v3258 = vadd.f32 %v3054, %v3216
    %v3259 = vadd.f32 %v3055, %v3221
    %v3260 = vadd.f32 %v3056, %v3224
    %v3261 = vadd.f32 %v3057, %v3229
    %v3262 = vadd.f32 %v3058, %v3232
    %v3263 = vadd.f32 %v3059, %v3237
    %v3264 = vadd.f32 %v3060, %v3240
    %v3265 = vadd.f32 %v3061, %v3245
    %v3266 = vadd.f32 %v3062, %v3248
    %v3267 = vld [vmem:[#allocation2 + $0x18] sm:$0xe]
    %v3268 = vld [vmem:[#allocation2 + $0x1c] sm:$0xf]
    %v3269 = vld [vmem:[#allocation2 + $0x20] sm:$0xf]
    %v3270 = vld [vmem:[#allocation2 + $0x24] sm:$0xf]
    %v3271 = vld [vmem:[#allocation2 + $0x28] sm:$0xf]
    %v3272 = vld [vmem:[#allocation2 + $0x2c] sm:$0xf]
    %v3273 = vld [vmem:[#allocation2 + $0x30] sm:$0xf]
    %v3274 = vld [vmem:[#allocation2 + $0x34] sm:$0xf]
    %v3275 = vld [vmem:[#allocation2 + $0x38] sm:$0xf]
    %v3276 = vld [vmem:[#allocation2 + $0x3c] sm:$0xf]
    %v3277 = vld [vmem:[#allocation2 + $0x40] sm:$0xf]
    %v3278 = vld [vmem:[#allocation2 + $0x44] sm:$0xf]
    %v3279 = vld [vmem:[#allocation2 + $0x48] sm:$0xf]
    %v3280 = vld [vmem:[#allocation2 + $0x4c] sm:$0xf]
    %v3281 = vld [vmem:[#allocation2 + $0x50] sm:$0xf]
    %v3282 = vld [vmem:[#allocation2 + $0x54] sm:$0xf]
    %v3283 = vld [vmem:[#allocation2 + $0x58] sm:$0x1]
    %s3284 = scalar_lea.vmem %s5, 468
    %v3285 = vld [vmem:[%s3284] sm:$0xf]
    %v3286 = vld [vmem:[%s3284 + $0x4] sm:$0xf]
    %v3287 = vld [vmem:[%s3284 + $0x8] sm:$0xf]
    %v3288 = vld [vmem:[%s3284 + $0xc] sm:$0xf]
    %v3289 = vld [vmem:[%s3284 + $0x10] sm:$0xf]
    %v3290 = vld [vmem:[%s3284 + $0x14] sm:$0xf]
    %v3291 = vld [vmem:[%s3284 + $0x18] sm:$0xf]
    %v3292 = vld [vmem:[%s3284 + $0x1c] sm:$0xf]
    %v3293 = vld [vmem:[%s3284 + $0x20] sm:$0xf]
    %v3294 = vld [vmem:[%s3284 + $0x24] sm:$0xf]
    %v3295 = vld [vmem:[%s3284 + $0x28] sm:$0xf]
    %v3296 = vld [vmem:[%s3284 + $0x2c] sm:$0xf]
    %v3297 = vld [vmem:[%s3284 + $0x30] sm:$0x3]
    %v3315 = vunpack.c.l.b16 %v3267
    %v3316 = vunpack.c.l.b16 %v3268
    %v3317 = vunpack.c.l.b16 %v3269
    %v3318 = vunpack.c.l.b16 %v3270
    %v3319 = vunpack.c.l.b16 %v3271
    %v3320 = vunpack.c.l.b16 %v3272
    %v3321 = vunpack.c.l.b16 %v3273
    %v3322 = vunpack.c.l.b16 %v3274
    %v3323 = vunpack.c.l.b16 %v3275
    %v3324 = vunpack.c.l.b16 %v3276
    %v3325 = vunpack.c.l.b16 %v3277
    %v3326 = vunpack.c.l.b16 %v3278
    %v3327 = vunpack.c.l.b16 %v3279
    %v3328 = vunpack.c.l.b16 %v3280
    %v3329 = vunpack.c.l.b16 %v3281
    %v3330 = vunpack.c.l.b16 %v3282
    %v3331 = vunpack.c.l.b16 %v3283
    %v3332 = vpack.c.b16 %v3316, %v3315
    %v3333 = vpack.c.b16 %v3318, %v3317
    %v3334 = vpack.c.b16 %v3320, %v3319
    %v3335 = vpack.c.b16 %v3322, %v3321
    %v3336 = vpack.c.b16 %v3324, %v3323
    %v3337 = vpack.c.b16 %v3326, %v3325
    %v3338 = vpack.c.b16 %v3328, %v3327
    %v3339 = vpack.c.b16 %v3330, %v3329
    %v3340 = vpack.c.b16 %v3331, %v3331
    %v3341 = vrot.slane %v3332, 1
    %v3342 = vrot.slane %v3333, 1
    %v3343 = vsel %vm1302, %v3341, %v3342
    %v3344 = vrot.slane %v3334, 1
    %v3345 = vsel %vm1302, %v3342, %v3344
    %v3346 = vrot.slane %v3335, 1
    %v3347 = vsel %vm1302, %v3344, %v3346
    %v3348 = vrot.slane %v3336, 1
    %v3349 = vsel %vm1302, %v3346, %v3348
    %v3350 = vrot.slane %v3337, 1
    %v3351 = vsel %vm1302, %v3348, %v3350
    %v3352 = vrot.slane %v3338, 1
    %v3353 = vsel %vm1302, %v3350, %v3352
    %v3354 = vrot.slane %v3339, 1
    %v3355 = vsel %vm1302, %v3352, %v3354
    %v3356 = vrot.slane %v3340, 1
    %v3357 = vsel %vm1302, %v3354, %v3356
    %v3371 = vunpack.c.l.b16 %v3285
    %v3372 = vunpack.c.l.b16 %v3286
    %v3373 = vunpack.c.l.b16 %v3287
    %v3374 = vunpack.c.l.b16 %v3288
    %v3375 = vunpack.c.l.b16 %v3289
    %v3376 = vunpack.c.l.b16 %v3290
    %v3377 = vunpack.c.l.b16 %v3291
    %v3378 = vunpack.c.l.b16 %v3292
    %v3379 = vunpack.c.l.b16 %v3293
    %v3380 = vunpack.c.l.b16 %v3294
    %v3381 = vunpack.c.l.b16 %v3295
    %v3382 = vunpack.c.l.b16 %v3296
    %v3383 = vunpack.c.l.b16 %v3297
    %v3384 = vpack.c.b16 %v3372, %v3371
    %v3385 = vpack.c.b16 %v3374, %v3373
    %v3386 = vpack.c.b16 %v3376, %v3375
    %v3387 = vpack.c.b16 %v3378, %v3377
    %v3388 = vpack.c.b16 %v3380, %v3379
    %v3389 = vpack.c.b16 %v3382, %v3381
    %v3390 = vpack.c.b16 %v3383, %v3383
    %v3398 = vsel %vm647, %v3343, 0
    %v3401 = vsel %vm647, %v3345, 0
    %v3404 = vsel %vm647, %v3347, 0
    %v3407 = vsel %vm647, %v3349, 0
    %v3410 = vsel %vm647, %v3351, 0
    %v3413 = vsel %vm647, %v3353, 0
    %v3416 = vsel %vm647, %v3355, 0
    %v3419 = vsel %vm647, %v3357, 0
    %v3422 = vsel %vm696, %v3390, 0
    %3424 = vmatprep.subr.bf16.mxu0 0
    %3425 = vmatpush1.bf16.msra.mxu0 0
    %3426 = vmatprep.subr.bf16.mxu0 0
    %3427 = vmatpush1.bf16.msra.mxu0 %v3422
    %3428 = vmatprep.subr.bf16.mxu0 0
    %3429 = vmatpush1.bf16.msra.mxu0 %v3389
    %3430 = vmatprep.subr.bf16.mxu0 0
    %3431 = vmatpush1.bf16.msra.mxu0 %v3388
    %3432 = vmatprep.subr.bf16.mxu0 0
    %3433 = vmatpush1.bf16.msra.mxu0 %v3387
    %3434 = vmatprep.subr.bf16.mxu0 0
    %3435 = vmatpush1.bf16.msra.mxu0 %v3386
    %3436 = vmatprep.subr.bf16.mxu0 0
    %3437 = vmatpush1.bf16.msra.mxu0 %v3385
    %3438 = vmatprep.subr.bf16.mxu0 0
    %3439 = vmatpush1.bf16.msra.mxu0 %v3384
    %3440 = vmatprep.subr.bf16.mxu0 0
    %3441 = vmatpush2.bf16.msra.mxu0 0
    %3442 = vmatprep.subr.bf16.mxu0 0
    %3443 = vmatpush2.bf16.msra.mxu0 0
    %3444 = vmatprep.subr.bf16.mxu0 0
    %3445 = vmatpush2.bf16.msra.mxu0 0
    %3446 = vmatprep.subr.bf16.mxu0 0
    %3447 = vmatpush2.bf16.msra.mxu0 0
    %3448 = vmatprep.subr.bf16.mxu0 0
    %3449 = vmatpush2.bf16.msra.mxu0 0
    %3450 = vmatprep.subr.bf16.mxu0 0
    %3451 = vmatpush2.bf16.msra.mxu0 0
    %3452 = vmatprep.subr.bf16.mxu0 0
    %3453 = vmatpush2.bf16.msra.mxu0 0
    %3454 = vmatprep.subr.bf16.mxu0 0
    %3455 = vmatpush2.bf16.msra.mxu0 0
    %3456 = vmatprep.mubr.bf16.mxu0 0
    %3457 = vmatmul.mubr.bf16.gmra.mxu0 %v3398
    %v3458 = vpop.f32.mrf.mxu0
    %v3459 = vadd.f32 0.0, %v3458
    %v3460 = vpop.f32.mrf.mxu0
    %v3461 = vpop.f32.mrf.mxu0
    %v3462 = vadd.f32 0.0, %v3461
    %v3463 = vpop.f32.mrf.mxu0
    %3464 = vmatprep.mubr.bf16.mxu0 0
    %3465 = vmatmul.mubr.bf16.gmra.mxu0 %v3401
    %v3466 = vpop.f32.mrf.mxu0
    %v3467 = vadd.f32 0.0, %v3466
    %v3468 = vpop.f32.mrf.mxu0
    %v3469 = vpop.f32.mrf.mxu0
    %v3470 = vadd.f32 0.0, %v3469
    %v3471 = vpop.f32.mrf.mxu0
    %3472 = vmatprep.mubr.bf16.mxu0 0
    %3473 = vmatmul.mubr.bf16.gmra.mxu0 %v3404
    %v3474 = vpop.f32.mrf.mxu0
    %v3475 = vadd.f32 0.0, %v3474
    %v3476 = vpop.f32.mrf.mxu0
    %v3477 = vpop.f32.mrf.mxu0
    %v3478 = vadd.f32 0.0, %v3477
    %v3479 = vpop.f32.mrf.mxu0
    %3480 = vmatprep.mubr.bf16.mxu0 0
    %3481 = vmatmul.mubr.bf16.gmra.mxu0 %v3407
    %v3482 = vpop.f32.mrf.mxu0
    %v3483 = vadd.f32 0.0, %v3482
    %v3484 = vpop.f32.mrf.mxu0
    %v3485 = vpop.f32.mrf.mxu0
    %v3486 = vadd.f32 0.0, %v3485
    %v3487 = vpop.f32.mrf.mxu0
    %3488 = vmatprep.mubr.bf16.mxu0 0
    %3489 = vmatmul.mubr.bf16.gmra.mxu0 %v3410
    %v3490 = vpop.f32.mrf.mxu0
    %v3491 = vadd.f32 0.0, %v3490
    %v3492 = vpop.f32.mrf.mxu0
    %v3493 = vpop.f32.mrf.mxu0
    %v3494 = vadd.f32 0.0, %v3493
    %v3495 = vpop.f32.mrf.mxu0
    %3496 = vmatprep.mubr.bf16.mxu0 0
    %3497 = vmatmul.mubr.bf16.gmra.mxu0 %v3413
    %v3498 = vpop.f32.mrf.mxu0
    %v3499 = vadd.f32 0.0, %v3498
    %v3500 = vpop.f32.mrf.mxu0
    %v3501 = vpop.f32.mrf.mxu0
    %v3502 = vadd.f32 0.0, %v3501
    %v3503 = vpop.f32.mrf.mxu0
    %3504 = vmatprep.mubr.bf16.mxu0 0
    %3505 = vmatmul.mubr.bf16.gmra.mxu0 %v3416
    %v3506 = vpop.f32.mrf.mxu0
    %v3507 = vadd.f32 0.0, %v3506
    %v3508 = vpop.f32.mrf.mxu0
    %v3509 = vpop.f32.mrf.mxu0
    %v3510 = vadd.f32 0.0, %v3509
    %v3511 = vpop.f32.mrf.mxu0
    %3512 = vmatprep.mubr.bf16.mxu0 0
    %3513 = vmatmul.mubr.bf16.gmra.mxu0 %v3419
    %v3514 = vpop.f32.mrf.mxu0
    %v3515 = vadd.f32 0.0, %v3514
    %v3516 = vpop.f32.mrf.mxu0
    %v3517 = vpop.f32.mrf.mxu0
    %v3518 = vadd.f32 0.0, %v3517
    %v3519 = vpop.f32.mrf.mxu0
    %3520 = vdwg.mxu0
    %v3521 = vadd.f32 %v3251, %v3459
    %v3522 = vadd.f32 %v3252, %v3462
    %v3523 = vadd.f32 %v3253, %v3467
    %v3524 = vadd.f32 %v3254, %v3470
    %v3525 = vadd.f32 %v3255, %v3475
    %v3526 = vadd.f32 %v3256, %v3478
    %v3527 = vadd.f32 %v3257, %v3483
    %v3528 = vadd.f32 %v3258, %v3486
    %v3529 = vadd.f32 %v3259, %v3491
    %v3530 = vadd.f32 %v3260, %v3494
    %v3531 = vadd.f32 %v3261, %v3499
    %v3532 = vadd.f32 %v3262, %v3502
    %v3533 = vadd.f32 %v3263, %v3507
    %v3534 = vadd.f32 %v3264, %v3510
    %v3535 = vadd.f32 %v3265, %v3515
    %v3536 = vadd.f32 %v3266, %v3518
    %v3537 = vld [vmem:[#allocation2 + $0x18] sm:$0xc]
    %v3538 = vld [vmem:[#allocation2 + $0x58] sm:$0x3]
    %s3539 = scalar_lea.vmem %s5, 520
    %v3540 = vld [vmem:[%s3539] sm:$0xf]
    %v3541 = vld [vmem:[%s3539 + $0x4] sm:$0xf]
    %v3542 = vld [vmem:[%s3539 + $0x8] sm:$0xf]
    %v3543 = vld [vmem:[%s3539 + $0xc] sm:$0xf]
    %v3544 = vld [vmem:[%s3539 + $0x10] sm:$0xf]
    %v3545 = vld [vmem:[%s3539 + $0x14] sm:$0xf]
    %v3546 = vld [vmem:[%s3539 + $0x18] sm:$0xf]
    %v3547 = vld [vmem:[%s3539 + $0x1c] sm:$0xf]
    %v3548 = vld [vmem:[%s3539 + $0x20] sm:$0xf]
    %v3549 = vld [vmem:[%s3539 + $0x24] sm:$0xf]
    %v3550 = vld [vmem:[%s3539 + $0x28] sm:$0xf]
    %v3551 = vld [vmem:[%s3539 + $0x2c] sm:$0xf]
    %v3552 = vld [vmem:[%s3539 + $0x30] sm:$0x3]
    %v3555 = vunpack.c.l.b16 %v3537
    %v3556 = vunpack.c.l.b16 %v3538
    %v3557 = vpack.c.b16 %v3316, %v3555
    %v3558 = vpack.c.b16 %v3556, %v3556
    %v3559 = vrot.slane %v3557, 2
    %v3560 = vrot.slane %v3333, 2
    %v3561 = vsel %vm1671, %v3559, %v3560
    %v3562 = vrot.slane %v3334, 2
    %v3563 = vsel %vm1671, %v3560, %v3562
    %v3564 = vrot.slane %v3335, 2
    %v3565 = vsel %vm1671, %v3562, %v3564
    %v3566 = vrot.slane %v3336, 2
    %v3567 = vsel %vm1671, %v3564, %v3566
    %v3568 = vrot.slane %v3337, 2
    %v3569 = vsel %vm1671, %v3566, %v3568
    %v3570 = vrot.slane %v3338, 2
    %v3571 = vsel %vm1671, %v3568, %v3570
    %v3572 = vrot.slane %v3339, 2
    %v3573 = vsel %vm1671, %v3570, %v3572
    %v3574 = vrot.slane %v3558, 2
    %v3575 = vsel %vm1671, %v3572, %v3574
    %v3589 = vunpack.c.l.b16 %v3540
    %v3590 = vunpack.c.l.b16 %v3541
    %v3591 = vunpack.c.l.b16 %v3542
    %v3592 = vunpack.c.l.b16 %v3543
    %v3593 = vunpack.c.l.b16 %v3544
    %v3594 = vunpack.c.l.b16 %v3545
    %v3595 = vunpack.c.l.b16 %v3546
    %v3596 = vunpack.c.l.b16 %v3547
    %v3597 = vunpack.c.l.b16 %v3548
    %v3598 = vunpack.c.l.b16 %v3549
    %v3599 = vunpack.c.l.b16 %v3550
    %v3600 = vunpack.c.l.b16 %v3551
    %v3601 = vunpack.c.l.b16 %v3552
    %v3602 = vpack.c.b16 %v3590, %v3589
    %v3603 = vpack.c.b16 %v3592, %v3591
    %v3604 = vpack.c.b16 %v3594, %v3593
    %v3605 = vpack.c.b16 %v3596, %v3595
    %v3606 = vpack.c.b16 %v3598, %v3597
    %v3607 = vpack.c.b16 %v3600, %v3599
    %v3608 = vpack.c.b16 %v3601, %v3601
    %v3616 = vsel %vm647, %v3561, 0
    %v3619 = vsel %vm647, %v3563, 0
    %v3622 = vsel %vm647, %v3565, 0
    %v3625 = vsel %vm647, %v3567, 0
    %v3628 = vsel %vm647, %v3569, 0
    %v3631 = vsel %vm647, %v3571, 0
    %v3634 = vsel %vm647, %v3573, 0
    %v3637 = vsel %vm647, %v3575, 0
    %v3640 = vsel %vm696, %v3608, 0
    %3642 = vmatprep.subr.bf16.mxu0 0
    %3643 = vmatpush1.bf16.msra.mxu0 0
    %3644 = vmatprep.subr.bf16.mxu0 0
    %3645 = vmatpush1.bf16.msra.mxu0 %v3640
    %3646 = vmatprep.subr.bf16.mxu0 0
    %3647 = vmatpush1.bf16.msra.mxu0 %v3607
    %3648 = vmatprep.subr.bf16.mxu0 0
    %3649 = vmatpush1.bf16.msra.mxu0 %v3606
    %3650 = vmatprep.subr.bf16.mxu0 0
    %3651 = vmatpush1.bf16.msra.mxu0 %v3605
    %3652 = vmatprep.subr.bf16.mxu0 0
    %3653 = vmatpush1.bf16.msra.mxu0 %v3604
    %3654 = vmatprep.subr.bf16.mxu0 0
    %3655 = vmatpush1.bf16.msra.mxu0 %v3603
    %3656 = vmatprep.subr.bf16.mxu0 0
    %3657 = vmatpush1.bf16.msra.mxu0 %v3602
    %3658 = vmatprep.subr.bf16.mxu0 0
    %3659 = vmatpush2.bf16.msra.mxu0 0
    %3660 = vmatprep.subr.bf16.mxu0 0
    %3661 = vmatpush2.bf16.msra.mxu0 0
    %3662 = vmatprep.subr.bf16.mxu0 0
    %3663 = vmatpush2.bf16.msra.mxu0 0
    %3664 = vmatprep.subr.bf16.mxu0 0
    %3665 = vmatpush2.bf16.msra.mxu0 0
    %3666 = vmatprep.subr.bf16.mxu0 0
    %3667 = vmatpush2.bf16.msra.mxu0 0
    %3668 = vmatprep.subr.bf16.mxu0 0
    %3669 = vmatpush2.bf16.msra.mxu0 0
    %3670 = vmatprep.subr.bf16.mxu0 0
    %3671 = vmatpush2.bf16.msra.mxu0 0
    %3672 = vmatprep.subr.bf16.mxu0 0
    %3673 = vmatpush2.bf16.msra.mxu0 0
    %3674 = vmatprep.mubr.bf16.mxu0 0
    %3675 = vmatmul.mubr.bf16.gmra.mxu0 %v3616
    %v3676 = vpop.f32.mrf.mxu0
    %v3677 = vadd.f32 0.0, %v3676
    %v3678 = vpop.f32.mrf.mxu0
    %v3679 = vpop.f32.mrf.mxu0
    %v3680 = vadd.f32 0.0, %v3679
    %v3681 = vpop.f32.mrf.mxu0
    %3682 = vmatprep.mubr.bf16.mxu0 0
    %3683 = vmatmul.mubr.bf16.gmra.mxu0 %v3619
    %v3684 = vpop.f32.mrf.mxu0
    %v3685 = vadd.f32 0.0, %v3684
    %v3686 = vpop.f32.mrf.mxu0
    %v3687 = vpop.f32.mrf.mxu0
    %v3688 = vadd.f32 0.0, %v3687
    %v3689 = vpop.f32.mrf.mxu0
    %3690 = vmatprep.mubr.bf16.mxu0 0
    %3691 = vmatmul.mubr.bf16.gmra.mxu0 %v3622
    %v3692 = vpop.f32.mrf.mxu0
    %v3693 = vadd.f32 0.0, %v3692
    %v3694 = vpop.f32.mrf.mxu0
    %v3695 = vpop.f32.mrf.mxu0
    %v3696 = vadd.f32 0.0, %v3695
    %v3697 = vpop.f32.mrf.mxu0
    %3698 = vmatprep.mubr.bf16.mxu0 0
    %3699 = vmatmul.mubr.bf16.gmra.mxu0 %v3625
    %v3700 = vpop.f32.mrf.mxu0
    %v3701 = vadd.f32 0.0, %v3700
    %v3702 = vpop.f32.mrf.mxu0
    %v3703 = vpop.f32.mrf.mxu0
    %v3704 = vadd.f32 0.0, %v3703
    %v3705 = vpop.f32.mrf.mxu0
    %3706 = vmatprep.mubr.bf16.mxu0 0
    %3707 = vmatmul.mubr.bf16.gmra.mxu0 %v3628
    %v3708 = vpop.f32.mrf.mxu0
    %v3709 = vadd.f32 0.0, %v3708
    %v3710 = vpop.f32.mrf.mxu0
    %v3711 = vpop.f32.mrf.mxu0
    %v3712 = vadd.f32 0.0, %v3711
    %v3713 = vpop.f32.mrf.mxu0
    %3714 = vmatprep.mubr.bf16.mxu0 0
    %3715 = vmatmul.mubr.bf16.gmra.mxu0 %v3631
    %v3716 = vpop.f32.mrf.mxu0
    %v3717 = vadd.f32 0.0, %v3716
    %v3718 = vpop.f32.mrf.mxu0
    %v3719 = vpop.f32.mrf.mxu0
    %v3720 = vadd.f32 0.0, %v3719
    %v3721 = vpop.f32.mrf.mxu0
    %3722 = vmatprep.mubr.bf16.mxu0 0
    %3723 = vmatmul.mubr.bf16.gmra.mxu0 %v3634
    %v3724 = vpop.f32.mrf.mxu0
    %v3725 = vadd.f32 0.0, %v3724
    %v3726 = vpop.f32.mrf.mxu0
    %v3727 = vpop.f32.mrf.mxu0
    %v3728 = vadd.f32 0.0, %v3727
    %v3729 = vpop.f32.mrf.mxu0
    %3730 = vmatprep.mubr.bf16.mxu0 0
    %3731 = vmatmul.mubr.bf16.gmra.mxu0 %v3637
    %v3732 = vpop.f32.mrf.mxu0
    %v3733 = vadd.f32 0.0, %v3732
    %v3734 = vpop.f32.mrf.mxu0
    %v3735 = vpop.f32.mrf.mxu0
    %v3736 = vadd.f32 0.0, %v3735
    %v3737 = vpop.f32.mrf.mxu0
    %3738 = vdwg.mxu0
    %v3739 = vadd.f32 %v3521, %v3677
    %v3740 = vadd.f32 %v3522, %v3680
    %v3741 = vadd.f32 %v3523, %v3685
    %v3742 = vadd.f32 %v3524, %v3688
    %v3743 = vadd.f32 %v3525, %v3693
    %v3744 = vadd.f32 %v3526, %v3696
    %v3745 = vadd.f32 %v3527, %v3701
    %v3746 = vadd.f32 %v3528, %v3704
    %v3747 = vadd.f32 %v3529, %v3709
    %v3748 = vadd.f32 %v3530, %v3712
    %v3749 = vadd.f32 %v3531, %v3717
    %v3750 = vadd.f32 %v3532, %v3720
    %v3751 = vadd.f32 %v3533, %v3725
    %v3752 = vadd.f32 %v3534, %v3728
    %v3753 = vadd.f32 %v3535, %v3733
    %v3754 = vadd.f32 %v3536, %v3736
    %v3755 = vld [vmem:[#allocation2 + $0x18] sm:$0x8]
    %v3756 = vld [vmem:[#allocation2 + $0x58] sm:$0x7]
    %s3757 = scalar_lea.vmem %s5, 572
    %v3758 = vld [vmem:[%s3757] sm:$0xf]
    %v3759 = vld [vmem:[%s3757 + $0x4] sm:$0xf]
    %v3760 = vld [vmem:[%s3757 + $0x8] sm:$0xf]
    %v3761 = vld [vmem:[%s3757 + $0xc] sm:$0xf]
    %v3762 = vld [vmem:[%s3757 + $0x10] sm:$0xf]
    %v3763 = vld [vmem:[%s3757 + $0x14] sm:$0xf]
    %v3764 = vld [vmem:[%s3757 + $0x18] sm:$0xf]
    %v3765 = vld [vmem:[%s3757 + $0x1c] sm:$0xf]
    %v3766 = vld [vmem:[%s3757 + $0x20] sm:$0xf]
    %v3767 = vld [vmem:[%s3757 + $0x24] sm:$0xf]
    %v3768 = vld [vmem:[%s3757 + $0x28] sm:$0xf]
    %v3769 = vld [vmem:[%s3757 + $0x2c] sm:$0xf]
    %v3770 = vld [vmem:[%s3757 + $0x30] sm:$0x3]
    %v3773 = vunpack.c.l.b16 %v3755
    %v3774 = vunpack.c.l.b16 %v3756
    %v3775 = vpack.c.b16 %v3316, %v3773
    %v3776 = vpack.c.b16 %v3774, %v3774
    %v3777 = vrot.slane %v3775, 3
    %v3778 = vrot.slane %v3333, 3
    %v3779 = vsel %vm2378, %v3777, %v3778
    %v3780 = vrot.slane %v3334, 3
    %v3781 = vsel %vm2378, %v3778, %v3780
    %v3782 = vrot.slane %v3335, 3
    %v3783 = vsel %vm2378, %v3780, %v3782
    %v3784 = vrot.slane %v3336, 3
    %v3785 = vsel %vm2378, %v3782, %v3784
    %v3786 = vrot.slane %v3337, 3
    %v3787 = vsel %vm2378, %v3784, %v3786
    %v3788 = vrot.slane %v3338, 3
    %v3789 = vsel %vm2378, %v3786, %v3788
    %v3790 = vrot.slane %v3339, 3
    %v3791 = vsel %vm2378, %v3788, %v3790
    %v3792 = vrot.slane %v3776, 3
    %v3793 = vsel %vm2378, %v3790, %v3792
    %v3807 = vunpack.c.l.b16 %v3758
    %v3808 = vunpack.c.l.b16 %v3759
    %v3809 = vunpack.c.l.b16 %v3760
    %v3810 = vunpack.c.l.b16 %v3761
    %v3811 = vunpack.c.l.b16 %v3762
    %v3812 = vunpack.c.l.b16 %v3763
    %v3813 = vunpack.c.l.b16 %v3764
    %v3814 = vunpack.c.l.b16 %v3765
    %v3815 = vunpack.c.l.b16 %v3766
    %v3816 = vunpack.c.l.b16 %v3767
    %v3817 = vunpack.c.l.b16 %v3768
    %v3818 = vunpack.c.l.b16 %v3769
    %v3819 = vunpack.c.l.b16 %v3770
    %v3820 = vpack.c.b16 %v3808, %v3807
    %v3821 = vpack.c.b16 %v3810, %v3809
    %v3822 = vpack.c.b16 %v3812, %v3811
    %v3823 = vpack.c.b16 %v3814, %v3813
    %v3824 = vpack.c.b16 %v3816, %v3815
    %v3825 = vpack.c.b16 %v3818, %v3817
    %v3826 = vpack.c.b16 %v3819, %v3819
    %v3834 = vsel %vm647, %v3779, 0
    %v3837 = vsel %vm647, %v3781, 0
    %v3840 = vsel %vm647, %v3783, 0
    %v3843 = vsel %vm647, %v3785, 0
    %v3846 = vsel %vm647, %v3787, 0
    %v3849 = vsel %vm647, %v3789, 0
    %v3852 = vsel %vm647, %v3791, 0
    %v3855 = vsel %vm647, %v3793, 0
    %v3858 = vsel %vm696, %v3826, 0
    %3860 = vmatprep.subr.bf16.mxu0 0
    %3861 = vmatpush1.bf16.msra.mxu0 0
    %3862 = vmatprep.subr.bf16.mxu0 0
    %3863 = vmatpush1.bf16.msra.mxu0 %v3858
    %3864 = vmatprep.subr.bf16.mxu0 0
    %3865 = vmatpush1.bf16.msra.mxu0 %v3825
    %3866 = vmatprep.subr.bf16.mxu0 0
    %3867 = vmatpush1.bf16.msra.mxu0 %v3824
    %3868 = vmatprep.subr.bf16.mxu0 0
    %3869 = vmatpush1.bf16.msra.mxu0 %v3823
    %3870 = vmatprep.subr.bf16.mxu0 0
    %3871 = vmatpush1.bf16.msra.mxu0 %v3822
    %3872 = vmatprep.subr.bf16.mxu0 0
    %3873 = vmatpush1.bf16.msra.mxu0 %v3821
    %3874 = vmatprep.subr.bf16.mxu0 0
    %3875 = vmatpush1.bf16.msra.mxu0 %v3820
    %3876 = vmatprep.subr.bf16.mxu0 0
    %3877 = vmatpush2.bf16.msra.mxu0 0
    %3878 = vmatprep.subr.bf16.mxu0 0
    %3879 = vmatpush2.bf16.msra.mxu0 0
    %3880 = vmatprep.subr.bf16.mxu0 0
    %3881 = vmatpush2.bf16.msra.mxu0 0
    %3882 = vmatprep.subr.bf16.mxu0 0
    %3883 = vmatpush2.bf16.msra.mxu0 0
    %3884 = vmatprep.subr.bf16.mxu0 0
    %3885 = vmatpush2.bf16.msra.mxu0 0
    %3886 = vmatprep.subr.bf16.mxu0 0
    %3887 = vmatpush2.bf16.msra.mxu0 0
    %3888 = vmatprep.subr.bf16.mxu0 0
    %3889 = vmatpush2.bf16.msra.mxu0 0
    %3890 = vmatprep.subr.bf16.mxu0 0
    %3891 = vmatpush2.bf16.msra.mxu0 0
    %3892 = vmatprep.mubr.bf16.mxu0 0
    %3893 = vmatmul.mubr.bf16.gmra.mxu0 %v3834
    %v3894 = vpop.f32.mrf.mxu0
    %v3895 = vadd.f32 0.0, %v3894
    %v3896 = vpop.f32.mrf.mxu0
    %v3897 = vpop.f32.mrf.mxu0
    %v3898 = vadd.f32 0.0, %v3897
    %v3899 = vpop.f32.mrf.mxu0
    %3900 = vmatprep.mubr.bf16.mxu0 0
    %3901 = vmatmul.mubr.bf16.gmra.mxu0 %v3837
    %v3902 = vpop.f32.mrf.mxu0
    %v3903 = vadd.f32 0.0, %v3902
    %v3904 = vpop.f32.mrf.mxu0
    %v3905 = vpop.f32.mrf.mxu0
    %v3906 = vadd.f32 0.0, %v3905
    %v3907 = vpop.f32.mrf.mxu0
    %3908 = vmatprep.mubr.bf16.mxu0 0
    %3909 = vmatmul.mubr.bf16.gmra.mxu0 %v3840
    %v3910 = vpop.f32.mrf.mxu0
    %v3911 = vadd.f32 0.0, %v3910
    %v3912 = vpop.f32.mrf.mxu0
    %v3913 = vpop.f32.mrf.mxu0
    %v3914 = vadd.f32 0.0, %v3913
    %v3915 = vpop.f32.mrf.mxu0
    %3916 = vmatprep.mubr.bf16.mxu0 0
    %3917 = vmatmul.mubr.bf16.gmra.mxu0 %v3843
    %v3918 = vpop.f32.mrf.mxu0
    %v3919 = vadd.f32 0.0, %v3918
    %v3920 = vpop.f32.mrf.mxu0
    %v3921 = vpop.f32.mrf.mxu0
    %v3922 = vadd.f32 0.0, %v3921
    %v3923 = vpop.f32.mrf.mxu0
    %3924 = vmatprep.mubr.bf16.mxu0 0
    %3925 = vmatmul.mubr.bf16.gmra.mxu0 %v3846
    %v3926 = vpop.f32.mrf.mxu0
    %v3927 = vadd.f32 0.0, %v3926
    %v3928 = vpop.f32.mrf.mxu0
    %v3929 = vpop.f32.mrf.mxu0
    %v3930 = vadd.f32 0.0, %v3929
    %v3931 = vpop.f32.mrf.mxu0
    %3932 = vmatprep.mubr.bf16.mxu0 0
    %3933 = vmatmul.mubr.bf16.gmra.mxu0 %v3849
    %v3934 = vpop.f32.mrf.mxu0
    %v3935 = vadd.f32 0.0, %v3934
    %v3936 = vpop.f32.mrf.mxu0
    %v3937 = vpop.f32.mrf.mxu0
    %v3938 = vadd.f32 0.0, %v3937
    %v3939 = vpop.f32.mrf.mxu0
    %3940 = vmatprep.mubr.bf16.mxu0 0
    %3941 = vmatmul.mubr.bf16.gmra.mxu0 %v3852
    %v3942 = vpop.f32.mrf.mxu0
    %v3943 = vadd.f32 0.0, %v3942
    %v3944 = vpop.f32.mrf.mxu0
    %v3945 = vpop.f32.mrf.mxu0
    %v3946 = vadd.f32 0.0, %v3945
    %v3947 = vpop.f32.mrf.mxu0
    %3948 = vmatprep.mubr.bf16.mxu0 0
    %3949 = vmatmul.mubr.bf16.gmra.mxu0 %v3855
    %v3950 = vpop.f32.mrf.mxu0
    %v3951 = vadd.f32 0.0, %v3950
    %v3952 = vpop.f32.mrf.mxu0
    %v3953 = vpop.f32.mrf.mxu0
    %v3954 = vadd.f32 0.0, %v3953
    %v3955 = vpop.f32.mrf.mxu0
    %3956 = vdwg.mxu0
    %v3957 = vadd.f32 %v3739, %v3895
    %v3958 = vadd.f32 %v3740, %v3898
    %v3959 = vadd.f32 %v3741, %v3903
    %v3960 = vadd.f32 %v3742, %v3906
    %v3961 = vadd.f32 %v3743, %v3911
    %v3962 = vadd.f32 %v3744, %v3914
    %v3963 = vadd.f32 %v3745, %v3919
    %v3964 = vadd.f32 %v3746, %v3922
    %v3965 = vadd.f32 %v3747, %v3927
    %v3966 = vadd.f32 %v3748, %v3930
    %v3967 = vadd.f32 %v3749, %v3935
    %v3968 = vadd.f32 %v3750, %v3938
    %v3969 = vadd.f32 %v3751, %v3943
    %v3970 = vadd.f32 %v3752, %v3946
    %v3971 = vadd.f32 %v3753, %v3951
    %v3972 = vadd.f32 %v3754, %v3954
    %v3973 = vld [vmem:[#allocation2 + $0x1c] sm:$0xc]
    %v3974 = vld [vmem:[#allocation2 + $0x20] sm:$0xf]
    %v3975 = vld [vmem:[#allocation2 + $0x24] sm:$0xf]
    %v3976 = vld [vmem:[#allocation2 + $0x28] sm:$0xf]
    %v3977 = vld [vmem:[#allocation2 + $0x2c] sm:$0xf]
    %v3978 = vld [vmem:[#allocation2 + $0x30] sm:$0xf]
    %v3979 = vld [vmem:[#allocation2 + $0x34] sm:$0xf]
    %v3980 = vld [vmem:[#allocation2 + $0x38] sm:$0xf]
    %v3981 = vld [vmem:[#allocation2 + $0x3c] sm:$0xf]
    %v3982 = vld [vmem:[#allocation2 + $0x40] sm:$0xf]
    %v3983 = vld [vmem:[#allocation2 + $0x44] sm:$0xf]
    %v3984 = vld [vmem:[#allocation2 + $0x48] sm:$0xf]
    %v3985 = vld [vmem:[#allocation2 + $0x4c] sm:$0xf]
    %v3986 = vld [vmem:[#allocation2 + $0x50] sm:$0xf]
    %v3987 = vld [vmem:[#allocation2 + $0x54] sm:$0xf]
    %v3988 = vld [vmem:[#allocation2 + $0x58] sm:$0xf]
    %v3989 = vld [vmem:[#allocation2 + $0x5c] sm:$0x3]
    %s3990 = scalar_lea.vmem %s5, 624
    %v3991 = vld [vmem:[%s3990] sm:$0xf]
    %v3992 = vld [vmem:[%s3990 + $0x4] sm:$0xf]
    %v3993 = vld [vmem:[%s3990 + $0x8] sm:$0xf]
    %v3994 = vld [vmem:[%s3990 + $0xc] sm:$0xf]
    %v3995 = vld [vmem:[%s3990 + $0x10] sm:$0xf]
    %v3996 = vld [vmem:[%s3990 + $0x14] sm:$0xf]
    %v3997 = vld [vmem:[%s3990 + $0x18] sm:$0xf]
    %v3998 = vld [vmem:[%s3990 + $0x1c] sm:$0xf]
    %v3999 = vld [vmem:[%s3990 + $0x20] sm:$0xf]
    %v4000 = vld [vmem:[%s3990 + $0x24] sm:$0xf]
    %v4001 = vld [vmem:[%s3990 + $0x28] sm:$0xf]
    %v4002 = vld [vmem:[%s3990 + $0x2c] sm:$0xf]
    %v4003 = vld [vmem:[%s3990 + $0x30] sm:$0x3]
    %v4021 = vunpack.c.l.b16 %v3973
    %v4022 = vunpack.c.l.b16 %v3974
    %v4023 = vunpack.c.l.b16 %v3975
    %v4024 = vunpack.c.l.b16 %v3976
    %v4025 = vunpack.c.l.b16 %v3977
    %v4026 = vunpack.c.l.b16 %v3978
    %v4027 = vunpack.c.l.b16 %v3979
    %v4028 = vunpack.c.l.b16 %v3980
    %v4029 = vunpack.c.l.b16 %v3981
    %v4030 = vunpack.c.l.b16 %v3982
    %v4031 = vunpack.c.l.b16 %v3983
    %v4032 = vunpack.c.l.b16 %v3984
    %v4033 = vunpack.c.l.b16 %v3985
    %v4034 = vunpack.c.l.b16 %v3986
    %v4035 = vunpack.c.l.b16 %v3987
    %v4036 = vunpack.c.l.b16 %v3988
    %v4037 = vunpack.c.l.b16 %v3989
    %v4038 = vpack.c.b16 %v4022, %v4021
    %v4039 = vpack.c.b16 %v4024, %v4023
    %v4040 = vpack.c.b16 %v4026, %v4025
    %v4041 = vpack.c.b16 %v4028, %v4027
    %v4042 = vpack.c.b16 %v4030, %v4029
    %v4043 = vpack.c.b16 %v4032, %v4031
    %v4044 = vpack.c.b16 %v4034, %v4033
    %v4045 = vpack.c.b16 %v4036, %v4035
    %v4046 = vpack.c.b16 %v4037, %v4037
    %v4047 = vrot.slane %v4038, 2
    %v4048 = vrot.slane %v4039, 2
    %v4049 = vsel %vm1671, %v4047, %v4048
    %v4050 = vrot.slane %v4040, 2
    %v4051 = vsel %vm1671, %v4048, %v4050
    %v4052 = vrot.slane %v4041, 2
    %v4053 = vsel %vm1671, %v4050, %v4052
    %v4054 = vrot.slane %v4042, 2
    %v4055 = vsel %vm1671, %v4052, %v4054
    %v4056 = vrot.slane %v4043, 2
    %v4057 = vsel %vm1671, %v4054, %v4056
    %v4058 = vrot.slane %v4044, 2
    %v4059 = vsel %vm1671, %v4056, %v4058
    %v4060 = vrot.slane %v4045, 2
    %v4061 = vsel %vm1671, %v4058, %v4060
    %v4062 = vrot.slane %v4046, 2
    %v4063 = vsel %vm1671, %v4060, %v4062
    %v4077 = vunpack.c.l.b16 %v3991
    %v4078 = vunpack.c.l.b16 %v3992
    %v4079 = vunpack.c.l.b16 %v3993
    %v4080 = vunpack.c.l.b16 %v3994
    %v4081 = vunpack.c.l.b16 %v3995
    %v4082 = vunpack.c.l.b16 %v3996
    %v4083 = vunpack.c.l.b16 %v3997
    %v4084 = vunpack.c.l.b16 %v3998
    %v4085 = vunpack.c.l.b16 %v3999
    %v4086 = vunpack.c.l.b16 %v4000
    %v4087 = vunpack.c.l.b16 %v4001
    %v4088 = vunpack.c.l.b16 %v4002
    %v4089 = vunpack.c.l.b16 %v4003
    %v4090 = vpack.c.b16 %v4078, %v4077
    %v4091 = vpack.c.b16 %v4080, %v4079
    %v4092 = vpack.c.b16 %v4082, %v4081
    %v4093 = vpack.c.b16 %v4084, %v4083
    %v4094 = vpack.c.b16 %v4086, %v4085
    %v4095 = vpack.c.b16 %v4088, %v4087
    %v4096 = vpack.c.b16 %v4089, %v4089
    %v4104 = vsel %vm647, %v4049, 0
    %v4107 = vsel %vm647, %v4051, 0
    %v4110 = vsel %vm647, %v4053, 0
    %v4113 = vsel %vm647, %v4055, 0
    %v4116 = vsel %vm647, %v4057, 0
    %v4119 = vsel %vm647, %v4059, 0
    %v4122 = vsel %vm647, %v4061, 0
    %v4125 = vsel %vm647, %v4063, 0
    %v4128 = vsel %vm696, %v4096, 0
    %4130 = vmatprep.subr.bf16.mxu0 0
    %4131 = vmatpush1.bf16.msra.mxu0 0
    %4132 = vmatprep.subr.bf16.mxu0 0
    %4133 = vmatpush1.bf16.msra.mxu0 %v4128
    %4134 = vmatprep.subr.bf16.mxu0 0
    %4135 = vmatpush1.bf16.msra.mxu0 %v4095
    %4136 = vmatprep.subr.bf16.mxu0 0
    %4137 = vmatpush1.bf16.msra.mxu0 %v4094
    %4138 = vmatprep.subr.bf16.mxu0 0
    %4139 = vmatpush1.bf16.msra.mxu0 %v4093
    %4140 = vmatprep.subr.bf16.mxu0 0
    %4141 = vmatpush1.bf16.msra.mxu0 %v4092
    %4142 = vmatprep.subr.bf16.mxu0 0
    %4143 = vmatpush1.bf16.msra.mxu0 %v4091
    %4144 = vmatprep.subr.bf16.mxu0 0
    %4145 = vmatpush1.bf16.msra.mxu0 %v4090
    %4146 = vmatprep.subr.bf16.mxu0 0
    %4147 = vmatpush2.bf16.msra.mxu0 0
    %4148 = vmatprep.subr.bf16.mxu0 0
    %4149 = vmatpush2.bf16.msra.mxu0 0
    %4150 = vmatprep.subr.bf16.mxu0 0
    %4151 = vmatpush2.bf16.msra.mxu0 0
    %4152 = vmatprep.subr.bf16.mxu0 0
    %4153 = vmatpush2.bf16.msra.mxu0 0
    %4154 = vmatprep.subr.bf16.mxu0 0
    %4155 = vmatpush2.bf16.msra.mxu0 0
    %4156 = vmatprep.subr.bf16.mxu0 0
    %4157 = vmatpush2.bf16.msra.mxu0 0
    %4158 = vmatprep.subr.bf16.mxu0 0
    %4159 = vmatpush2.bf16.msra.mxu0 0
    %4160 = vmatprep.subr.bf16.mxu0 0
    %4161 = vmatpush2.bf16.msra.mxu0 0
    %4162 = vmatprep.mubr.bf16.mxu0 0
    %4163 = vmatmul.mubr.bf16.gmra.mxu0 %v4104
    %v4164 = vpop.f32.mrf.mxu0
    %v4165 = vadd.f32 0.0, %v4164
    %v4166 = vpop.f32.mrf.mxu0
    %v4167 = vpop.f32.mrf.mxu0
    %v4168 = vadd.f32 0.0, %v4167
    %v4169 = vpop.f32.mrf.mxu0
    %4170 = vmatprep.mubr.bf16.mxu0 0
    %4171 = vmatmul.mubr.bf16.gmra.mxu0 %v4107
    %v4172 = vpop.f32.mrf.mxu0
    %v4173 = vadd.f32 0.0, %v4172
    %v4174 = vpop.f32.mrf.mxu0
    %v4175 = vpop.f32.mrf.mxu0
    %v4176 = vadd.f32 0.0, %v4175
    %v4177 = vpop.f32.mrf.mxu0
    %4178 = vmatprep.mubr.bf16.mxu0 0
    %4179 = vmatmul.mubr.bf16.gmra.mxu0 %v4110
    %v4180 = vpop.f32.mrf.mxu0
    %v4181 = vadd.f32 0.0, %v4180
    %v4182 = vpop.f32.mrf.mxu0
    %v4183 = vpop.f32.mrf.mxu0
    %v4184 = vadd.f32 0.0, %v4183
    %v4185 = vpop.f32.mrf.mxu0
    %4186 = vmatprep.mubr.bf16.mxu0 0
    %4187 = vmatmul.mubr.bf16.gmra.mxu0 %v4113
    %v4188 = vpop.f32.mrf.mxu0
    %v4189 = vadd.f32 0.0, %v4188
    %v4190 = vpop.f32.mrf.mxu0
    %v4191 = vpop.f32.mrf.mxu0
    %v4192 = vadd.f32 0.0, %v4191
    %v4193 = vpop.f32.mrf.mxu0
    %4194 = vmatprep.mubr.bf16.mxu0 0
    %4195 = vmatmul.mubr.bf16.gmra.mxu0 %v4116
    %v4196 = vpop.f32.mrf.mxu0
    %v4197 = vadd.f32 0.0, %v4196
    %v4198 = vpop.f32.mrf.mxu0
    %v4199 = vpop.f32.mrf.mxu0
    %v4200 = vadd.f32 0.0, %v4199
    %v4201 = vpop.f32.mrf.mxu0
    %4202 = vmatprep.mubr.bf16.mxu0 0
    %4203 = vmatmul.mubr.bf16.gmra.mxu0 %v4119
    %v4204 = vpop.f32.mrf.mxu0
    %v4205 = vadd.f32 0.0, %v4204
    %v4206 = vpop.f32.mrf.mxu0
    %v4207 = vpop.f32.mrf.mxu0
    %v4208 = vadd.f32 0.0, %v4207
    %v4209 = vpop.f32.mrf.mxu0
    %4210 = vmatprep.mubr.bf16.mxu0 0
    %4211 = vmatmul.mubr.bf16.gmra.mxu0 %v4122
    %v4212 = vpop.f32.mrf.mxu0
    %v4213 = vadd.f32 0.0, %v4212
    %v4214 = vpop.f32.mrf.mxu0
    %v4215 = vpop.f32.mrf.mxu0
    %v4216 = vadd.f32 0.0, %v4215
    %v4217 = vpop.f32.mrf.mxu0
    %4218 = vmatprep.mubr.bf16.mxu0 0
    %4219 = vmatmul.mubr.bf16.gmra.mxu0 %v4125
    %v4220 = vpop.f32.mrf.mxu0
    %v4221 = vadd.f32 0.0, %v4220
    %v4222 = vpop.f32.mrf.mxu0
    %v4223 = vpop.f32.mrf.mxu0
    %v4224 = vadd.f32 0.0, %v4223
    %v4225 = vpop.f32.mrf.mxu0
    %4226 = vdwg.mxu0
    %v4227 = vadd.f32 %v3957, %v4165
    %v4228 = vadd.f32 %v3958, %v4168
    %v4229 = vadd.f32 %v3959, %v4173
    %v4230 = vadd.f32 %v3960, %v4176
    %v4231 = vadd.f32 %v3961, %v4181
    %v4232 = vadd.f32 %v3962, %v4184
    %v4233 = vadd.f32 %v3963, %v4189
    %v4234 = vadd.f32 %v3964, %v4192
    %v4235 = vadd.f32 %v3965, %v4197
    %v4236 = vadd.f32 %v3966, %v4200
    %v4237 = vadd.f32 %v3967, %v4205
    %v4238 = vadd.f32 %v3968, %v4208
    %v4239 = vadd.f32 %v3969, %v4213
    %v4240 = vadd.f32 %v3970, %v4216
    %v4241 = vadd.f32 %v3971, %v4221
    %v4242 = vadd.f32 %v3972, %v4224
    %v4243 = vld [vmem:[#allocation2 + $0x1c] sm:$0x8]
    %v4244 = vld [vmem:[#allocation2 + $0x5c] sm:$0x7]
    %s4245 = scalar_lea.vmem %s5, 676
    %v4246 = vld [vmem:[%s4245] sm:$0xf]
    %v4247 = vld [vmem:[%s4245 + $0x4] sm:$0xf]
    %v4248 = vld [vmem:[%s4245 + $0x8] sm:$0xf]
    %v4249 = vld [vmem:[%s4245 + $0xc] sm:$0xf]
    %v4250 = vld [vmem:[%s4245 + $0x10] sm:$0xf]
    %v4251 = vld [vmem:[%s4245 + $0x14] sm:$0xf]
    %v4252 = vld [vmem:[%s4245 + $0x18] sm:$0xf]
    %v4253 = vld [vmem:[%s4245 + $0x1c] sm:$0xf]
    %v4254 = vld [vmem:[%s4245 + $0x20] sm:$0xf]
    %v4255 = vld [vmem:[%s4245 + $0x24] sm:$0xf]
    %v4256 = vld [vmem:[%s4245 + $0x28] sm:$0xf]
    %v4257 = vld [vmem:[%s4245 + $0x2c] sm:$0xf]
    %v4258 = vld [vmem:[%s4245 + $0x30] sm:$0x3]
    %v4261 = vunpack.c.l.b16 %v4243
    %v4262 = vunpack.c.l.b16 %v4244
    %v4263 = vpack.c.b16 %v4022, %v4261
    %v4264 = vpack.c.b16 %v4262, %v4262
    %v4265 = vrot.slane %v4263, 3
    %v4266 = vrot.slane %v4039, 3
    %v4267 = vsel %vm2378, %v4265, %v4266
    %v4268 = vrot.slane %v4040, 3
    %v4269 = vsel %vm2378, %v4266, %v4268
    %v4270 = vrot.slane %v4041, 3
    %v4271 = vsel %vm2378, %v4268, %v4270
    %v4272 = vrot.slane %v4042, 3
    %v4273 = vsel %vm2378, %v4270, %v4272
    %v4274 = vrot.slane %v4043, 3
    %v4275 = vsel %vm2378, %v4272, %v4274
    %v4276 = vrot.slane %v4044, 3
    %v4277 = vsel %vm2378, %v4274, %v4276
    %v4278 = vrot.slane %v4045, 3
    %v4279 = vsel %vm2378, %v4276, %v4278
    %v4280 = vrot.slane %v4264, 3
    %v4281 = vsel %vm2378, %v4278, %v4280
    %v4295 = vunpack.c.l.b16 %v4246
    %v4296 = vunpack.c.l.b16 %v4247
    %v4297 = vunpack.c.l.b16 %v4248
    %v4298 = vunpack.c.l.b16 %v4249
    %v4299 = vunpack.c.l.b16 %v4250
    %v4300 = vunpack.c.l.b16 %v4251
    %v4301 = vunpack.c.l.b16 %v4252
    %v4302 = vunpack.c.l.b16 %v4253
    %v4303 = vunpack.c.l.b16 %v4254
    %v4304 = vunpack.c.l.b16 %v4255
    %v4305 = vunpack.c.l.b16 %v4256
    %v4306 = vunpack.c.l.b16 %v4257
    %v4307 = vunpack.c.l.b16 %v4258
    %v4308 = vpack.c.b16 %v4296, %v4295
    %v4309 = vpack.c.b16 %v4298, %v4297
    %v4310 = vpack.c.b16 %v4300, %v4299
    %v4311 = vpack.c.b16 %v4302, %v4301
    %v4312 = vpack.c.b16 %v4304, %v4303
    %v4313 = vpack.c.b16 %v4306, %v4305
    %v4314 = vpack.c.b16 %v4307, %v4307
    %v4322 = vsel %vm647, %v4267, 0
    %v4325 = vsel %vm647, %v4269, 0
    %v4328 = vsel %vm647, %v4271, 0
    %v4331 = vsel %vm647, %v4273, 0
    %v4334 = vsel %vm647, %v4275, 0
    %v4337 = vsel %vm647, %v4277, 0
    %v4340 = vsel %vm647, %v4279, 0
    %v4343 = vsel %vm647, %v4281, 0
    %v4346 = vsel %vm696, %v4314, 0
    %4348 = vmatprep.subr.bf16.mxu0 0
    %4349 = vmatpush1.bf16.msra.mxu0 0
    %4350 = vmatprep.subr.bf16.mxu0 0
    %4351 = vmatpush1.bf16.msra.mxu0 %v4346
    %4352 = vmatprep.subr.bf16.mxu0 0
    %4353 = vmatpush1.bf16.msra.mxu0 %v4313
    %4354 = vmatprep.subr.bf16.mxu0 0
    %4355 = vmatpush1.bf16.msra.mxu0 %v4312
    %4356 = vmatprep.subr.bf16.mxu0 0
    %4357 = vmatpush1.bf16.msra.mxu0 %v4311
    %4358 = vmatprep.subr.bf16.mxu0 0
    %4359 = vmatpush1.bf16.msra.mxu0 %v4310
    %4360 = vmatprep.subr.bf16.mxu0 0
    %4361 = vmatpush1.bf16.msra.mxu0 %v4309
    %4362 = vmatprep.subr.bf16.mxu0 0
    %4363 = vmatpush1.bf16.msra.mxu0 %v4308
    %4364 = vmatprep.subr.bf16.mxu0 0
    %4365 = vmatpush2.bf16.msra.mxu0 0
    %4366 = vmatprep.subr.bf16.mxu0 0
    %4367 = vmatpush2.bf16.msra.mxu0 0
    %4368 = vmatprep.subr.bf16.mxu0 0
    %4369 = vmatpush2.bf16.msra.mxu0 0
    %4370 = vmatprep.subr.bf16.mxu0 0
    %4371 = vmatpush2.bf16.msra.mxu0 0
    %4372 = vmatprep.subr.bf16.mxu0 0
    %4373 = vmatpush2.bf16.msra.mxu0 0
    %4374 = vmatprep.subr.bf16.mxu0 0
    %4375 = vmatpush2.bf16.msra.mxu0 0
    %4376 = vmatprep.subr.bf16.mxu0 0
    %4377 = vmatpush2.bf16.msra.mxu0 0
    %4378 = vmatprep.subr.bf16.mxu0 0
    %4379 = vmatpush2.bf16.msra.mxu0 0
    %4380 = vmatprep.mubr.bf16.mxu0 0
    %4381 = vmatmul.mubr.bf16.gmra.mxu0 %v4322
    %v4382 = vpop.f32.mrf.mxu0
    %v4383 = vadd.f32 0.0, %v4382
    %v4384 = vpop.f32.mrf.mxu0
    %v4385 = vpop.f32.mrf.mxu0
    %v4386 = vadd.f32 0.0, %v4385
    %v4387 = vpop.f32.mrf.mxu0
    %4388 = vmatprep.mubr.bf16.mxu0 0
    %4389 = vmatmul.mubr.bf16.gmra.mxu0 %v4325
    %v4390 = vpop.f32.mrf.mxu0
    %v4391 = vadd.f32 0.0, %v4390
    %v4392 = vpop.f32.mrf.mxu0
    %v4393 = vpop.f32.mrf.mxu0
    %v4394 = vadd.f32 0.0, %v4393
    %v4395 = vpop.f32.mrf.mxu0
    %4396 = vmatprep.mubr.bf16.mxu0 0
    %4397 = vmatmul.mubr.bf16.gmra.mxu0 %v4328
    %v4398 = vpop.f32.mrf.mxu0
    %v4399 = vadd.f32 0.0, %v4398
    %v4400 = vpop.f32.mrf.mxu0
    %v4401 = vpop.f32.mrf.mxu0
    %v4402 = vadd.f32 0.0, %v4401
    %v4403 = vpop.f32.mrf.mxu0
    %4404 = vmatprep.mubr.bf16.mxu0 0
    %4405 = vmatmul.mubr.bf16.gmra.mxu0 %v4331
    %v4406 = vpop.f32.mrf.mxu0
    %v4407 = vadd.f32 0.0, %v4406
    %v4408 = vpop.f32.mrf.mxu0
    %v4409 = vpop.f32.mrf.mxu0
    %v4410 = vadd.f32 0.0, %v4409
    %v4411 = vpop.f32.mrf.mxu0
    %4412 = vmatprep.mubr.bf16.mxu0 0
    %4413 = vmatmul.mubr.bf16.gmra.mxu0 %v4334
    %v4414 = vpop.f32.mrf.mxu0
    %v4415 = vadd.f32 0.0, %v4414
    %v4416 = vpop.f32.mrf.mxu0
    %v4417 = vpop.f32.mrf.mxu0
    %v4418 = vadd.f32 0.0, %v4417
    %v4419 = vpop.f32.mrf.mxu0
    %4420 = vmatprep.mubr.bf16.mxu0 0
    %4421 = vmatmul.mubr.bf16.gmra.mxu0 %v4337
    %v4422 = vpop.f32.mrf.mxu0
    %v4423 = vadd.f32 0.0, %v4422
    %v4424 = vpop.f32.mrf.mxu0
    %v4425 = vpop.f32.mrf.mxu0
    %v4426 = vadd.f32 0.0, %v4425
    %v4427 = vpop.f32.mrf.mxu0
    %4428 = vmatprep.mubr.bf16.mxu0 0
    %4429 = vmatmul.mubr.bf16.gmra.mxu0 %v4340
    %v4430 = vpop.f32.mrf.mxu0
    %v4431 = vadd.f32 0.0, %v4430
    %v4432 = vpop.f32.mrf.mxu0
    %v4433 = vpop.f32.mrf.mxu0
    %v4434 = vadd.f32 0.0, %v4433
    %v4435 = vpop.f32.mrf.mxu0
    %4436 = vmatprep.mubr.bf16.mxu0 0
    %4437 = vmatmul.mubr.bf16.gmra.mxu0 %v4343
    %v4438 = vpop.f32.mrf.mxu0
    %v4439 = vadd.f32 0.0, %v4438
    %v4440 = vpop.f32.mrf.mxu0
    %v4441 = vpop.f32.mrf.mxu0
    %v4442 = vadd.f32 0.0, %v4441
    %v4443 = vpop.f32.mrf.mxu0
    %4444 = vdwg.mxu0
    %v4445 = vadd.f32 %v4227, %v4383
    %v4446 = vadd.f32 %v4228, %v4386
    %v4447 = vadd.f32 %v4229, %v4391
    %v4448 = vadd.f32 %v4230, %v4394
    %v4449 = vadd.f32 %v4231, %v4399
    %v4450 = vadd.f32 %v4232, %v4402
    %v4451 = vadd.f32 %v4233, %v4407
    %v4452 = vadd.f32 %v4234, %v4410
    %v4453 = vadd.f32 %v4235, %v4415
    %v4454 = vadd.f32 %v4236, %v4418
    %v4455 = vadd.f32 %v4237, %v4423
    %v4456 = vadd.f32 %v4238, %v4426
    %v4457 = vadd.f32 %v4239, %v4431
    %v4458 = vadd.f32 %v4240, %v4434
    %v4459 = vadd.f32 %v4241, %v4439
    %v4460 = vadd.f32 %v4242, %v4442
    %v4461 = vld [vmem:[#allocation2 + $0x5c] sm:$0xf]
    %s4462 = scalar_lea.vmem %s5, 728
    %v4463 = vld [vmem:[%s4462] sm:$0xf]
    %v4464 = vld [vmem:[%s4462 + $0x4] sm:$0xf]
    %v4465 = vld [vmem:[%s4462 + $0x8] sm:$0xf]
    %v4466 = vld [vmem:[%s4462 + $0xc] sm:$0xf]
    %v4467 = vld [vmem:[%s4462 + $0x10] sm:$0xf]
    %v4468 = vld [vmem:[%s4462 + $0x14] sm:$0xf]
    %v4469 = vld [vmem:[%s4462 + $0x18] sm:$0xf]
    %v4470 = vld [vmem:[%s4462 + $0x1c] sm:$0xf]
    %v4471 = vld [vmem:[%s4462 + $0x20] sm:$0xf]
    %v4472 = vld [vmem:[%s4462 + $0x24] sm:$0xf]
    %v4473 = vld [vmem:[%s4462 + $0x28] sm:$0xf]
    %v4474 = vld [vmem:[%s4462 + $0x2c] sm:$0xf]
    %v4475 = vld [vmem:[%s4462 + $0x30] sm:$0x3]
    %v4477 = vunpack.c.l.b16 %v4461
    %v4478 = vpack.c.b16 %v4023, %v4022
    %v4479 = vpack.c.b16 %v4025, %v4024
    %v4480 = vpack.c.b16 %v4027, %v4026
    %v4481 = vpack.c.b16 %v4029, %v4028
    %v4482 = vpack.c.b16 %v4031, %v4030
    %v4483 = vpack.c.b16 %v4033, %v4032
    %v4484 = vpack.c.b16 %v4035, %v4034
    %v4485 = vpack.c.b16 %v4477, %v4036
    %v4499 = vunpack.c.l.b16 %v4463
    %v4500 = vunpack.c.l.b16 %v4464
    %v4501 = vunpack.c.l.b16 %v4465
    %v4502 = vunpack.c.l.b16 %v4466
    %v4503 = vunpack.c.l.b16 %v4467
    %v4504 = vunpack.c.l.b16 %v4468
    %v4505 = vunpack.c.l.b16 %v4469
    %v4506 = vunpack.c.l.b16 %v4470
    %v4507 = vunpack.c.l.b16 %v4471
    %v4508 = vunpack.c.l.b16 %v4472
    %v4509 = vunpack.c.l.b16 %v4473
    %v4510 = vunpack.c.l.b16 %v4474
    %v4511 = vunpack.c.l.b16 %v4475
    %v4512 = vpack.c.b16 %v4500, %v4499
    %v4513 = vpack.c.b16 %v4502, %v4501
    %v4514 = vpack.c.b16 %v4504, %v4503
    %v4515 = vpack.c.b16 %v4506, %v4505
    %v4516 = vpack.c.b16 %v4508, %v4507
    %v4517 = vpack.c.b16 %v4510, %v4509
    %v4518 = vpack.c.b16 %v4511, %v4511
    %v4526 = vsel %vm647, %v4478, 0
    %v4529 = vsel %vm647, %v4479, 0
    %v4532 = vsel %vm647, %v4480, 0
    %v4535 = vsel %vm647, %v4481, 0
    %v4538 = vsel %vm647, %v4482, 0
    %v4541 = vsel %vm647, %v4483, 0
    %v4544 = vsel %vm647, %v4484, 0
    %v4547 = vsel %vm647, %v4485, 0
    %v4550 = vsel %vm696, %v4518, 0
    %4552 = vmatprep.subr.bf16.mxu0 0
    %4553 = vmatpush1.bf16.msra.mxu0 0
    %4554 = vmatprep.subr.bf16.mxu0 0
    %4555 = vmatpush1.bf16.msra.mxu0 %v4550
    %4556 = vmatprep.subr.bf16.mxu0 0
    %4557 = vmatpush1.bf16.msra.mxu0 %v4517
    %4558 = vmatprep.subr.bf16.mxu0 0
    %4559 = vmatpush1.bf16.msra.mxu0 %v4516
    %4560 = vmatprep.subr.bf16.mxu0 0
    %4561 = vmatpush1.bf16.msra.mxu0 %v4515
    %4562 = vmatprep.subr.bf16.mxu0 0
    %4563 = vmatpush1.bf16.msra.mxu0 %v4514
    %4564 = vmatprep.subr.bf16.mxu0 0
    %4565 = vmatpush1.bf16.msra.mxu0 %v4513
    %4566 = vmatprep.subr.bf16.mxu0 0
    %4567 = vmatpush1.bf16.msra.mxu0 %v4512
    %4568 = vmatprep.subr.bf16.mxu0 0
    %4569 = vmatpush2.bf16.msra.mxu0 0
    %4570 = vmatprep.subr.bf16.mxu0 0
    %4571 = vmatpush2.bf16.msra.mxu0 0
    %4572 = vmatprep.subr.bf16.mxu0 0
    %4573 = vmatpush2.bf16.msra.mxu0 0
    %4574 = vmatprep.subr.bf16.mxu0 0
    %4575 = vmatpush2.bf16.msra.mxu0 0
    %4576 = vmatprep.subr.bf16.mxu0 0
    %4577 = vmatpush2.bf16.msra.mxu0 0
    %4578 = vmatprep.subr.bf16.mxu0 0
    %4579 = vmatpush2.bf16.msra.mxu0 0
    %4580 = vmatprep.subr.bf16.mxu0 0
    %4581 = vmatpush2.bf16.msra.mxu0 0
    %4582 = vmatprep.subr.bf16.mxu0 0
    %4583 = vmatpush2.bf16.msra.mxu0 0
    %4584 = vmatprep.mubr.bf16.mxu0 0
    %4585 = vmatmul.mubr.bf16.gmra.mxu0 %v4526
    %v4586 = vpop.f32.mrf.mxu0
    %v4587 = vadd.f32 0.0, %v4586
    %v4588 = vpop.f32.mrf.mxu0
    %v4589 = vpop.f32.mrf.mxu0
    %v4590 = vadd.f32 0.0, %v4589
    %v4591 = vpop.f32.mrf.mxu0
    %4592 = vmatprep.mubr.bf16.mxu0 0
    %4593 = vmatmul.mubr.bf16.gmra.mxu0 %v4529
    %v4594 = vpop.f32.mrf.mxu0
    %v4595 = vadd.f32 0.0, %v4594
    %v4596 = vpop.f32.mrf.mxu0
    %v4597 = vpop.f32.mrf.mxu0
    %v4598 = vadd.f32 0.0, %v4597
    %v4599 = vpop.f32.mrf.mxu0
    %4600 = vmatprep.mubr.bf16.mxu0 0
    %4601 = vmatmul.mubr.bf16.gmra.mxu0 %v4532
    %v4602 = vpop.f32.mrf.mxu0
    %v4603 = vadd.f32 0.0, %v4602
    %v4604 = vpop.f32.mrf.mxu0
    %v4605 = vpop.f32.mrf.mxu0
    %v4606 = vadd.f32 0.0, %v4605
    %v4607 = vpop.f32.mrf.mxu0
    %4608 = vmatprep.mubr.bf16.mxu0 0
    %4609 = vmatmul.mubr.bf16.gmra.mxu0 %v4535
    %v4610 = vpop.f32.mrf.mxu0
    %v4611 = vadd.f32 0.0, %v4610
    %v4612 = vpop.f32.mrf.mxu0
    %v4613 = vpop.f32.mrf.mxu0
    %v4614 = vadd.f32 0.0, %v4613
    %v4615 = vpop.f32.mrf.mxu0
    %4616 = vmatprep.mubr.bf16.mxu0 0
    %4617 = vmatmul.mubr.bf16.gmra.mxu0 %v4538
    %v4618 = vpop.f32.mrf.mxu0
    %v4619 = vadd.f32 0.0, %v4618
    %v4620 = vpop.f32.mrf.mxu0
    %v4621 = vpop.f32.mrf.mxu0
    %v4622 = vadd.f32 0.0, %v4621
    %v4623 = vpop.f32.mrf.mxu0
    %4624 = vmatprep.mubr.bf16.mxu0 0
    %4625 = vmatmul.mubr.bf16.gmra.mxu0 %v4541
    %v4626 = vpop.f32.mrf.mxu0
    %v4627 = vadd.f32 0.0, %v4626
    %v4628 = vpop.f32.mrf.mxu0
    %v4629 = vpop.f32.mrf.mxu0
    %v4630 = vadd.f32 0.0, %v4629
    %v4631 = vpop.f32.mrf.mxu0
    %4632 = vmatprep.mubr.bf16.mxu0 0
    %4633 = vmatmul.mubr.bf16.gmra.mxu0 %v4544
    %v4634 = vpop.f32.mrf.mxu0
    %v4635 = vadd.f32 0.0, %v4634
    %v4636 = vpop.f32.mrf.mxu0
    %v4637 = vpop.f32.mrf.mxu0
    %v4638 = vadd.f32 0.0, %v4637
    %v4639 = vpop.f32.mrf.mxu0
    %4640 = vmatprep.mubr.bf16.mxu0 0
    %4641 = vmatmul.mubr.bf16.gmra.mxu0 %v4547
    %v4642 = vpop.f32.mrf.mxu0
    %v4643 = vadd.f32 0.0, %v4642
    %v4644 = vpop.f32.mrf.mxu0
    %v4645 = vpop.f32.mrf.mxu0
    %v4646 = vadd.f32 0.0, %v4645
    %v4647 = vpop.f32.mrf.mxu0
    %4648 = vdwg.mxu0
    %v4649 = vadd.f32 %v4445, %v4587
    %v4650 = vadd.f32 %v4446, %v4590
    %v4651 = vadd.f32 %v4447, %v4595
    %v4652 = vadd.f32 %v4448, %v4598
    %v4653 = vadd.f32 %v4449, %v4603
    %v4654 = vadd.f32 %v4450, %v4606
    %v4655 = vadd.f32 %v4451, %v4611
    %v4656 = vadd.f32 %v4452, %v4614
    %v4657 = vadd.f32 %v4453, %v4619
    %v4658 = vadd.f32 %v4454, %v4622
    %v4659 = vadd.f32 %v4455, %v4627
    %v4660 = vadd.f32 %v4456, %v4630
    %v4661 = vadd.f32 %v4457, %v4635
    %v4662 = vadd.f32 %v4458, %v4638
    %v4663 = vadd.f32 %v4459, %v4643
    %v4664 = vadd.f32 %v4460, %v4646
    %v4665 = vld [vmem:[#allocation2 + $0x20] sm:$0x8]
    %v4666 = vld [vmem:[#allocation2 + $0x24] sm:$0xf]
    %v4667 = vld [vmem:[#allocation2 + $0x28] sm:$0xf]
    %v4668 = vld [vmem:[#allocation2 + $0x2c] sm:$0xf]
    %v4669 = vld [vmem:[#allocation2 + $0x30] sm:$0xf]
    %v4670 = vld [vmem:[#allocation2 + $0x34] sm:$0xf]
    %v4671 = vld [vmem:[#allocation2 + $0x38] sm:$0xf]
    %v4672 = vld [vmem:[#allocation2 + $0x3c] sm:$0xf]
    %v4673 = vld [vmem:[#allocation2 + $0x40] sm:$0xf]
    %v4674 = vld [vmem:[#allocation2 + $0x44] sm:$0xf]
    %v4675 = vld [vmem:[#allocation2 + $0x48] sm:$0xf]
    %v4676 = vld [vmem:[#allocation2 + $0x4c] sm:$0xf]
    %v4677 = vld [vmem:[#allocation2 + $0x50] sm:$0xf]
    %v4678 = vld [vmem:[#allocation2 + $0x54] sm:$0xf]
    %v4679 = vld [vmem:[#allocation2 + $0x58] sm:$0xf]
    %v4680 = vld [vmem:[#allocation2 + $0x5c] sm:$0xf]
    %v4681 = vld [vmem:[#allocation2 + $0x60] sm:$0x7]
    %s4682 = scalar_lea.vmem %s5, 780
    %v4683 = vld [vmem:[%s4682] sm:$0xf]
    %v4684 = vld [vmem:[%s4682 + $0x4] sm:$0xf]
    %v4685 = vld [vmem:[%s4682 + $0x8] sm:$0xf]
    %v4686 = vld [vmem:[%s4682 + $0xc] sm:$0xf]
    %v4687 = vld [vmem:[%s4682 + $0x10] sm:$0xf]
    %v4688 = vld [vmem:[%s4682 + $0x14] sm:$0xf]
    %v4689 = vld [vmem:[%s4682 + $0x18] sm:$0xf]
    %v4690 = vld [vmem:[%s4682 + $0x1c] sm:$0xf]
    %v4691 = vld [vmem:[%s4682 + $0x20] sm:$0xf]
    %v4692 = vld [vmem:[%s4682 + $0x24] sm:$0xf]
    %v4693 = vld [vmem:[%s4682 + $0x28] sm:$0xf]
    %v4694 = vld [vmem:[%s4682 + $0x2c] sm:$0xf]
    %v4695 = vld [vmem:[%s4682 + $0x30] sm:$0x3]
    %v4713 = vunpack.c.l.b16 %v4665
    %v4714 = vunpack.c.l.b16 %v4666
    %v4715 = vunpack.c.l.b16 %v4667
    %v4716 = vunpack.c.l.b16 %v4668
    %v4717 = vunpack.c.l.b16 %v4669
    %v4718 = vunpack.c.l.b16 %v4670
    %v4719 = vunpack.c.l.b16 %v4671
    %v4720 = vunpack.c.l.b16 %v4672
    %v4721 = vunpack.c.l.b16 %v4673
    %v4722 = vunpack.c.l.b16 %v4674
    %v4723 = vunpack.c.l.b16 %v4675
    %v4724 = vunpack.c.l.b16 %v4676
    %v4725 = vunpack.c.l.b16 %v4677
    %v4726 = vunpack.c.l.b16 %v4678
    %v4727 = vunpack.c.l.b16 %v4679
    %v4728 = vunpack.c.l.b16 %v4680
    %v4729 = vunpack.c.l.b16 %v4681
    %v4730 = vpack.c.b16 %v4714, %v4713
    %v4731 = vpack.c.b16 %v4716, %v4715
    %v4732 = vpack.c.b16 %v4718, %v4717
    %v4733 = vpack.c.b16 %v4720, %v4719
    %v4734 = vpack.c.b16 %v4722, %v4721
    %v4735 = vpack.c.b16 %v4724, %v4723
    %v4736 = vpack.c.b16 %v4726, %v4725
    %v4737 = vpack.c.b16 %v4728, %v4727
    %v4738 = vpack.c.b16 %v4729, %v4729
    %v4739 = vrot.slane %v4730, 3
    %v4740 = vrot.slane %v4731, 3
    %v4741 = vsel %vm2378, %v4739, %v4740
    %v4742 = vrot.slane %v4732, 3
    %v4743 = vsel %vm2378, %v4740, %v4742
    %v4744 = vrot.slane %v4733, 3
    %v4745 = vsel %vm2378, %v4742, %v4744
    %v4746 = vrot.slane %v4734, 3
    %v4747 = vsel %vm2378, %v4744, %v4746
    %v4748 = vrot.slane %v4735, 3
    %v4749 = vsel %vm2378, %v4746, %v4748
    %v4750 = vrot.slane %v4736, 3
    %v4751 = vsel %vm2378, %v4748, %v4750
    %v4752 = vrot.slane %v4737, 3
    %v4753 = vsel %vm2378, %v4750, %v4752
    %v4754 = vrot.slane %v4738, 3
    %v4755 = vsel %vm2378, %v4752, %v4754
    %v4769 = vunpack.c.l.b16 %v4683
    %v4770 = vunpack.c.l.b16 %v4684
    %v4771 = vunpack.c.l.b16 %v4685
    %v4772 = vunpack.c.l.b16 %v4686
    %v4773 = vunpack.c.l.b16 %v4687
    %v4774 = vunpack.c.l.b16 %v4688
    %v4775 = vunpack.c.l.b16 %v4689
    %v4776 = vunpack.c.l.b16 %v4690
    %v4777 = vunpack.c.l.b16 %v4691
    %v4778 = vunpack.c.l.b16 %v4692
    %v4779 = vunpack.c.l.b16 %v4693
    %v4780 = vunpack.c.l.b16 %v4694
    %v4781 = vunpack.c.l.b16 %v4695
    %v4782 = vpack.c.b16 %v4770, %v4769
    %v4783 = vpack.c.b16 %v4772, %v4771
    %v4784 = vpack.c.b16 %v4774, %v4773
    %v4785 = vpack.c.b16 %v4776, %v4775
    %v4786 = vpack.c.b16 %v4778, %v4777
    %v4787 = vpack.c.b16 %v4780, %v4779
    %v4788 = vpack.c.b16 %v4781, %v4781
    %v4796 = vsel %vm647, %v4741, 0
    %v4799 = vsel %vm647, %v4743, 0
    %v4802 = vsel %vm647, %v4745, 0
    %v4805 = vsel %vm647, %v4747, 0
    %v4808 = vsel %vm647, %v4749, 0
    %v4811 = vsel %vm647, %v4751, 0
    %v4814 = vsel %vm647, %v4753, 0
    %v4817 = vsel %vm647, %v4755, 0
    %v4820 = vsel %vm696, %v4788, 0
    %4822 = vmatprep.subr.bf16.mxu0 0
    %4823 = vmatpush1.bf16.msra.mxu0 0
    %4824 = vmatprep.subr.bf16.mxu0 0
    %4825 = vmatpush1.bf16.msra.mxu0 %v4820
    %4826 = vmatprep.subr.bf16.mxu0 0
    %4827 = vmatpush1.bf16.msra.mxu0 %v4787
    %4828 = vmatprep.subr.bf16.mxu0 0
    %4829 = vmatpush1.bf16.msra.mxu0 %v4786
    %4830 = vmatprep.subr.bf16.mxu0 0
    %4831 = vmatpush1.bf16.msra.mxu0 %v4785
    %4832 = vmatprep.subr.bf16.mxu0 0
    %4833 = vmatpush1.bf16.msra.mxu0 %v4784
    %4834 = vmatprep.subr.bf16.mxu0 0
    %4835 = vmatpush1.bf16.msra.mxu0 %v4783
    %4836 = vmatprep.subr.bf16.mxu0 0
    %4837 = vmatpush1.bf16.msra.mxu0 %v4782
    %4838 = vmatprep.subr.bf16.mxu0 0
    %4839 = vmatpush2.bf16.msra.mxu0 0
    %4840 = vmatprep.subr.bf16.mxu0 0
    %4841 = vmatpush2.bf16.msra.mxu0 0
    %4842 = vmatprep.subr.bf16.mxu0 0
    %4843 = vmatpush2.bf16.msra.mxu0 0
    %4844 = vmatprep.subr.bf16.mxu0 0
    %4845 = vmatpush2.bf16.msra.mxu0 0
    %4846 = vmatprep.subr.bf16.mxu0 0
    %4847 = vmatpush2.bf16.msra.mxu0 0
    %4848 = vmatprep.subr.bf16.mxu0 0
    %4849 = vmatpush2.bf16.msra.mxu0 0
    %4850 = vmatprep.subr.bf16.mxu0 0
    %4851 = vmatpush2.bf16.msra.mxu0 0
    %4852 = vmatprep.subr.bf16.mxu0 0
    %4853 = vmatpush2.bf16.msra.mxu0 0
    %4854 = vmatprep.mubr.bf16.mxu0 0
    %4855 = vmatmul.mubr.bf16.gmra.mxu0 %v4796
    %v4856 = vpop.f32.mrf.mxu0
    %v4857 = vadd.f32 0.0, %v4856
    %v4858 = vpop.f32.mrf.mxu0
    %v4859 = vpop.f32.mrf.mxu0
    %v4860 = vadd.f32 0.0, %v4859
    %v4861 = vpop.f32.mrf.mxu0
    %4862 = vmatprep.mubr.bf16.mxu0 0
    %4863 = vmatmul.mubr.bf16.gmra.mxu0 %v4799
    %v4864 = vpop.f32.mrf.mxu0
    %v4865 = vadd.f32 0.0, %v4864
    %v4866 = vpop.f32.mrf.mxu0
    %v4867 = vpop.f32.mrf.mxu0
    %v4868 = vadd.f32 0.0, %v4867
    %v4869 = vpop.f32.mrf.mxu0
    %4870 = vmatprep.mubr.bf16.mxu0 0
    %4871 = vmatmul.mubr.bf16.gmra.mxu0 %v4802
    %v4872 = vpop.f32.mrf.mxu0
    %v4873 = vadd.f32 0.0, %v4872
    %v4874 = vpop.f32.mrf.mxu0
    %v4875 = vpop.f32.mrf.mxu0
    %v4876 = vadd.f32 0.0, %v4875
    %v4877 = vpop.f32.mrf.mxu0
    %4878 = vmatprep.mubr.bf16.mxu0 0
    %4879 = vmatmul.mubr.bf16.gmra.mxu0 %v4805
    %v4880 = vpop.f32.mrf.mxu0
    %v4881 = vadd.f32 0.0, %v4880
    %v4882 = vpop.f32.mrf.mxu0
    %v4883 = vpop.f32.mrf.mxu0
    %v4884 = vadd.f32 0.0, %v4883
    %v4885 = vpop.f32.mrf.mxu0
    %4886 = vmatprep.mubr.bf16.mxu0 0
    %4887 = vmatmul.mubr.bf16.gmra.mxu0 %v4808
    %v4888 = vpop.f32.mrf.mxu0
    %v4889 = vadd.f32 0.0, %v4888
    %v4890 = vpop.f32.mrf.mxu0
    %v4891 = vpop.f32.mrf.mxu0
    %v4892 = vadd.f32 0.0, %v4891
    %v4893 = vpop.f32.mrf.mxu0
    %4894 = vmatprep.mubr.bf16.mxu0 0
    %4895 = vmatmul.mubr.bf16.gmra.mxu0 %v4811
    %v4896 = vpop.f32.mrf.mxu0
    %v4897 = vadd.f32 0.0, %v4896
    %v4898 = vpop.f32.mrf.mxu0
    %v4899 = vpop.f32.mrf.mxu0
    %v4900 = vadd.f32 0.0, %v4899
    %v4901 = vpop.f32.mrf.mxu0
    %4902 = vmatprep.mubr.bf16.mxu0 0
    %4903 = vmatmul.mubr.bf16.gmra.mxu0 %v4814
    %v4904 = vpop.f32.mrf.mxu0
    %v4905 = vadd.f32 0.0, %v4904
    %v4906 = vpop.f32.mrf.mxu0
    %v4907 = vpop.f32.mrf.mxu0
    %v4908 = vadd.f32 0.0, %v4907
    %v4909 = vpop.f32.mrf.mxu0
    %4910 = vmatprep.mubr.bf16.mxu0 0
    %4911 = vmatmul.mubr.bf16.gmra.mxu0 %v4817
    %v4912 = vpop.f32.mrf.mxu0
    %v4913 = vadd.f32 0.0, %v4912
    %v4914 = vpop.f32.mrf.mxu0
    %v4915 = vpop.f32.mrf.mxu0
    %v4916 = vadd.f32 0.0, %v4915
    %v4917 = vpop.f32.mrf.mxu0
    %4918 = vdwg.mxu0
    %v4919 = vadd.f32 %v4649, %v4857
    %v4920 = vadd.f32 %v4650, %v4860
    %v4921 = vadd.f32 %v4651, %v4865
    %v4922 = vadd.f32 %v4652, %v4868
    %v4923 = vadd.f32 %v4653, %v4873
    %v4924 = vadd.f32 %v4654, %v4876
    %v4925 = vadd.f32 %v4655, %v4881
    %v4926 = vadd.f32 %v4656, %v4884
    %v4927 = vadd.f32 %v4657, %v4889
    %v4928 = vadd.f32 %v4658, %v4892
    %v4929 = vadd.f32 %v4659, %v4897
    %v4930 = vadd.f32 %v4660, %v4900
    %v4931 = vadd.f32 %v4661, %v4905
    %v4932 = vadd.f32 %v4662, %v4908
    %v4933 = vadd.f32 %v4663, %v4913
    %v4934 = vadd.f32 %v4664, %v4916
    %v4935 = vld [vmem:[#allocation2 + $0x60] sm:$0xf]
    %s4936 = scalar_lea.vmem %s5, 832
    %v4937 = vld [vmem:[%s4936] sm:$0xf]
    %v4938 = vld [vmem:[%s4936 + $0x4] sm:$0xf]
    %v4939 = vld [vmem:[%s4936 + $0x8] sm:$0xf]
    %v4940 = vld [vmem:[%s4936 + $0xc] sm:$0xf]
    %v4941 = vld [vmem:[%s4936 + $0x10] sm:$0xf]
    %v4942 = vld [vmem:[%s4936 + $0x14] sm:$0xf]
    %v4943 = vld [vmem:[%s4936 + $0x18] sm:$0xf]
    %v4944 = vld [vmem:[%s4936 + $0x1c] sm:$0xf]
    %v4945 = vld [vmem:[%s4936 + $0x20] sm:$0xf]
    %v4946 = vld [vmem:[%s4936 + $0x24] sm:$0xf]
    %v4947 = vld [vmem:[%s4936 + $0x28] sm:$0xf]
    %v4948 = vld [vmem:[%s4936 + $0x2c] sm:$0xf]
    %v4949 = vld [vmem:[%s4936 + $0x30] sm:$0x3]
    %v4951 = vunpack.c.l.b16 %v4935
    %v4952 = vpack.c.b16 %v4715, %v4714
    %v4953 = vpack.c.b16 %v4717, %v4716
    %v4954 = vpack.c.b16 %v4719, %v4718
    %v4955 = vpack.c.b16 %v4721, %v4720
    %v4956 = vpack.c.b16 %v4723, %v4722
    %v4957 = vpack.c.b16 %v4725, %v4724
    %v4958 = vpack.c.b16 %v4727, %v4726
    %v4959 = vpack.c.b16 %v4951, %v4728
    %v4973 = vunpack.c.l.b16 %v4937
    %v4974 = vunpack.c.l.b16 %v4938
    %v4975 = vunpack.c.l.b16 %v4939
    %v4976 = vunpack.c.l.b16 %v4940
    %v4977 = vunpack.c.l.b16 %v4941
    %v4978 = vunpack.c.l.b16 %v4942
    %v4979 = vunpack.c.l.b16 %v4943
    %v4980 = vunpack.c.l.b16 %v4944
    %v4981 = vunpack.c.l.b16 %v4945
    %v4982 = vunpack.c.l.b16 %v4946
    %v4983 = vunpack.c.l.b16 %v4947
    %v4984 = vunpack.c.l.b16 %v4948
    %v4985 = vunpack.c.l.b16 %v4949
    %v4986 = vpack.c.b16 %v4974, %v4973
    %v4987 = vpack.c.b16 %v4976, %v4975
    %v4988 = vpack.c.b16 %v4978, %v4977
    %v4989 = vpack.c.b16 %v4980, %v4979
    %v4990 = vpack.c.b16 %v4982, %v4981
    %v4991 = vpack.c.b16 %v4984, %v4983
    %v4992 = vpack.c.b16 %v4985, %v4985
    %v5000 = vsel %vm647, %v4952, 0
    %v5003 = vsel %vm647, %v4953, 0
    %v5006 = vsel %vm647, %v4954, 0
    %v5009 = vsel %vm647, %v4955, 0
    %v5012 = vsel %vm647, %v4956, 0
    %v5015 = vsel %vm647, %v4957, 0
    %v5018 = vsel %vm647, %v4958, 0
    %v5021 = vsel %vm647, %v4959, 0
    %v5024 = vsel %vm696, %v4992, 0
    %5026 = vmatprep.subr.bf16.mxu0 0
    %5027 = vmatpush1.bf16.msra.mxu0 0
    %5028 = vmatprep.subr.bf16.mxu0 0
    %5029 = vmatpush1.bf16.msra.mxu0 %v5024
    %5030 = vmatprep.subr.bf16.mxu0 0
    %5031 = vmatpush1.bf16.msra.mxu0 %v4991
    %5032 = vmatprep.subr.bf16.mxu0 0
    %5033 = vmatpush1.bf16.msra.mxu0 %v4990
    %5034 = vmatprep.subr.bf16.mxu0 0
    %5035 = vmatpush1.bf16.msra.mxu0 %v4989
    %5036 = vmatprep.subr.bf16.mxu0 0
    %5037 = vmatpush1.bf16.msra.mxu0 %v4988
    %5038 = vmatprep.subr.bf16.mxu0 0
    %5039 = vmatpush1.bf16.msra.mxu0 %v4987
    %5040 = vmatprep.subr.bf16.mxu0 0
    %5041 = vmatpush1.bf16.msra.mxu0 %v4986
    %5042 = vmatprep.subr.bf16.mxu0 0
    %5043 = vmatpush2.bf16.msra.mxu0 0
    %5044 = vmatprep.subr.bf16.mxu0 0
    %5045 = vmatpush2.bf16.msra.mxu0 0
    %5046 = vmatprep.subr.bf16.mxu0 0
    %5047 = vmatpush2.bf16.msra.mxu0 0
    %5048 = vmatprep.subr.bf16.mxu0 0
    %5049 = vmatpush2.bf16.msra.mxu0 0
    %5050 = vmatprep.subr.bf16.mxu0 0
    %5051 = vmatpush2.bf16.msra.mxu0 0
    %5052 = vmatprep.subr.bf16.mxu0 0
    %5053 = vmatpush2.bf16.msra.mxu0 0
    %5054 = vmatprep.subr.bf16.mxu0 0
    %5055 = vmatpush2.bf16.msra.mxu0 0
    %5056 = vmatprep.subr.bf16.mxu0 0
    %5057 = vmatpush2.bf16.msra.mxu0 0
    %5058 = vmatprep.mubr.bf16.mxu0 0
    %5059 = vmatmul.mubr.bf16.gmra.mxu0 %v5000
    %v5060 = vpop.f32.mrf.mxu0
    %v5061 = vadd.f32 0.0, %v5060
    %v5062 = vpop.f32.mrf.mxu0
    %v5063 = vpop.f32.mrf.mxu0
    %v5064 = vadd.f32 0.0, %v5063
    %v5065 = vpop.f32.mrf.mxu0
    %5066 = vmatprep.mubr.bf16.mxu0 0
    %5067 = vmatmul.mubr.bf16.gmra.mxu0 %v5003
    %v5068 = vpop.f32.mrf.mxu0
    %v5069 = vadd.f32 0.0, %v5068
    %v5070 = vpop.f32.mrf.mxu0
    %v5071 = vpop.f32.mrf.mxu0
    %v5072 = vadd.f32 0.0, %v5071
    %v5073 = vpop.f32.mrf.mxu0
    %5074 = vmatprep.mubr.bf16.mxu0 0
    %5075 = vmatmul.mubr.bf16.gmra.mxu0 %v5006
    %v5076 = vpop.f32.mrf.mxu0
    %v5077 = vadd.f32 0.0, %v5076
    %v5078 = vpop.f32.mrf.mxu0
    %v5079 = vpop.f32.mrf.mxu0
    %v5080 = vadd.f32 0.0, %v5079
    %v5081 = vpop.f32.mrf.mxu0
    %5082 = vmatprep.mubr.bf16.mxu0 0
    %5083 = vmatmul.mubr.bf16.gmra.mxu0 %v5009
    %v5084 = vpop.f32.mrf.mxu0
    %v5085 = vadd.f32 0.0, %v5084
    %v5086 = vpop.f32.mrf.mxu0
    %v5087 = vpop.f32.mrf.mxu0
    %v5088 = vadd.f32 0.0, %v5087
    %v5089 = vpop.f32.mrf.mxu0
    %5090 = vmatprep.mubr.bf16.mxu0 0
    %5091 = vmatmul.mubr.bf16.gmra.mxu0 %v5012
    %v5092 = vpop.f32.mrf.mxu0
    %v5093 = vadd.f32 0.0, %v5092
    %v5094 = vpop.f32.mrf.mxu0
    %v5095 = vpop.f32.mrf.mxu0
    %v5096 = vadd.f32 0.0, %v5095
    %v5097 = vpop.f32.mrf.mxu0
    %5098 = vmatprep.mubr.bf16.mxu0 0
    %5099 = vmatmul.mubr.bf16.gmra.mxu0 %v5015
    %v5100 = vpop.f32.mrf.mxu0
    %v5101 = vadd.f32 0.0, %v5100
    %v5102 = vpop.f32.mrf.mxu0
    %v5103 = vpop.f32.mrf.mxu0
    %v5104 = vadd.f32 0.0, %v5103
    %v5105 = vpop.f32.mrf.mxu0
    %5106 = vmatprep.mubr.bf16.mxu0 0
    %5107 = vmatmul.mubr.bf16.gmra.mxu0 %v5018
    %v5108 = vpop.f32.mrf.mxu0
    %v5109 = vadd.f32 0.0, %v5108
    %v5110 = vpop.f32.mrf.mxu0
    %v5111 = vpop.f32.mrf.mxu0
    %v5112 = vadd.f32 0.0, %v5111
    %v5113 = vpop.f32.mrf.mxu0
    %5114 = vmatprep.mubr.bf16.mxu0 0
    %5115 = vmatmul.mubr.bf16.gmra.mxu0 %v5021
    %v5116 = vpop.f32.mrf.mxu0
    %v5117 = vadd.f32 0.0, %v5116
    %v5118 = vpop.f32.mrf.mxu0
    %v5119 = vpop.f32.mrf.mxu0
    %v5120 = vadd.f32 0.0, %v5119
    %v5121 = vpop.f32.mrf.mxu0
    %5122 = vdwg.mxu0
    %v5123 = vadd.f32 %v4919, %v5061
    %v5124 = vadd.f32 %v4920, %v5064
    %v5125 = vadd.f32 %v4921, %v5069
    %v5126 = vadd.f32 %v4922, %v5072
    %v5127 = vadd.f32 %v4923, %v5077
    %v5128 = vadd.f32 %v4924, %v5080
    %v5129 = vadd.f32 %v4925, %v5085
    %v5130 = vadd.f32 %v4926, %v5088
    %v5131 = vadd.f32 %v4927, %v5093
    %v5132 = vadd.f32 %v4928, %v5096
    %v5133 = vadd.f32 %v4929, %v5101
    %v5134 = vadd.f32 %v4930, %v5104
    %v5135 = vadd.f32 %v4931, %v5109
    %v5136 = vadd.f32 %v4932, %v5112
    %v5137 = vadd.f32 %v4933, %v5117
    %v5138 = vadd.f32 %v4934, %v5120
    %v5139 = vld [vmem:[#allocation2 + $0x24] sm:$0xe]
    %v5140 = vld [vmem:[#allocation2 + $0x28] sm:$0xf]
    %v5141 = vld [vmem:[#allocation2 + $0x2c] sm:$0xf]
    %v5142 = vld [vmem:[#allocation2 + $0x30] sm:$0xf]
    %v5143 = vld [vmem:[#allocation2 + $0x34] sm:$0xf]
    %v5144 = vld [vmem:[#allocation2 + $0x38] sm:$0xf]
    %v5145 = vld [vmem:[#allocation2 + $0x3c] sm:$0xf]
    %v5146 = vld [vmem:[#allocation2 + $0x40] sm:$0xf]
    %v5147 = vld [vmem:[#allocation2 + $0x44] sm:$0xf]
    %v5148 = vld [vmem:[#allocation2 + $0x48] sm:$0xf]
    %v5149 = vld [vmem:[#allocation2 + $0x4c] sm:$0xf]
    %v5150 = vld [vmem:[#allocation2 + $0x50] sm:$0xf]
    %v5151 = vld [vmem:[#allocation2 + $0x54] sm:$0xf]
    %v5152 = vld [vmem:[#allocation2 + $0x58] sm:$0xf]
    %v5153 = vld [vmem:[#allocation2 + $0x5c] sm:$0xf]
    %v5154 = vld [vmem:[#allocation2 + $0x60] sm:$0xf]
    %v5155 = vld [vmem:[#allocation2 + $0x64] sm:$0x1]
    %s5156 = scalar_lea.vmem %s5, 884
    %v5157 = vld [vmem:[%s5156] sm:$0xf]
    %v5158 = vld [vmem:[%s5156 + $0x4] sm:$0xf]
    %v5159 = vld [vmem:[%s5156 + $0x8] sm:$0xf]
    %v5160 = vld [vmem:[%s5156 + $0xc] sm:$0xf]
    %v5161 = vld [vmem:[%s5156 + $0x10] sm:$0xf]
    %v5162 = vld [vmem:[%s5156 + $0x14] sm:$0xf]
    %v5163 = vld [vmem:[%s5156 + $0x18] sm:$0xf]
    %v5164 = vld [vmem:[%s5156 + $0x1c] sm:$0xf]
    %v5165 = vld [vmem:[%s5156 + $0x20] sm:$0xf]
    %v5166 = vld [vmem:[%s5156 + $0x24] sm:$0xf]
    %v5167 = vld [vmem:[%s5156 + $0x28] sm:$0xf]
    %v5168 = vld [vmem:[%s5156 + $0x2c] sm:$0xf]
    %v5169 = vld [vmem:[%s5156 + $0x30] sm:$0x3]
    %v5187 = vunpack.c.l.b16 %v5139
    %v5188 = vunpack.c.l.b16 %v5140
    %v5189 = vunpack.c.l.b16 %v5141
    %v5190 = vunpack.c.l.b16 %v5142
    %v5191 = vunpack.c.l.b16 %v5143
    %v5192 = vunpack.c.l.b16 %v5144
    %v5193 = vunpack.c.l.b16 %v5145
    %v5194 = vunpack.c.l.b16 %v5146
    %v5195 = vunpack.c.l.b16 %v5147
    %v5196 = vunpack.c.l.b16 %v5148
    %v5197 = vunpack.c.l.b16 %v5149
    %v5198 = vunpack.c.l.b16 %v5150
    %v5199 = vunpack.c.l.b16 %v5151
    %v5200 = vunpack.c.l.b16 %v5152
    %v5201 = vunpack.c.l.b16 %v5153
    %v5202 = vunpack.c.l.b16 %v5154
    %v5203 = vunpack.c.l.b16 %v5155
    %v5204 = vpack.c.b16 %v5188, %v5187
    %v5205 = vpack.c.b16 %v5190, %v5189
    %v5206 = vpack.c.b16 %v5192, %v5191
    %v5207 = vpack.c.b16 %v5194, %v5193
    %v5208 = vpack.c.b16 %v5196, %v5195
    %v5209 = vpack.c.b16 %v5198, %v5197
    %v5210 = vpack.c.b16 %v5200, %v5199
    %v5211 = vpack.c.b16 %v5202, %v5201
    %v5212 = vpack.c.b16 %v5203, %v5203
    %v5213 = vrot.slane %v5204, 1
    %v5214 = vrot.slane %v5205, 1
    %v5215 = vsel %vm1302, %v5213, %v5214
    %v5216 = vrot.slane %v5206, 1
    %v5217 = vsel %vm1302, %v5214, %v5216
    %v5218 = vrot.slane %v5207, 1
    %v5219 = vsel %vm1302, %v5216, %v5218
    %v5220 = vrot.slane %v5208, 1
    %v5221 = vsel %vm1302, %v5218, %v5220
    %v5222 = vrot.slane %v5209, 1
    %v5223 = vsel %vm1302, %v5220, %v5222
    %v5224 = vrot.slane %v5210, 1
    %v5225 = vsel %vm1302, %v5222, %v5224
    %v5226 = vrot.slane %v5211, 1
    %v5227 = vsel %vm1302, %v5224, %v5226
    %v5228 = vrot.slane %v5212, 1
    %v5229 = vsel %vm1302, %v5226, %v5228
    %v5243 = vunpack.c.l.b16 %v5157
    %v5244 = vunpack.c.l.b16 %v5158
    %v5245 = vunpack.c.l.b16 %v5159
    %v5246 = vunpack.c.l.b16 %v5160
    %v5247 = vunpack.c.l.b16 %v5161
    %v5248 = vunpack.c.l.b16 %v5162
    %v5249 = vunpack.c.l.b16 %v5163
    %v5250 = vunpack.c.l.b16 %v5164
    %v5251 = vunpack.c.l.b16 %v5165
    %v5252 = vunpack.c.l.b16 %v5166
    %v5253 = vunpack.c.l.b16 %v5167
    %v5254 = vunpack.c.l.b16 %v5168
    %v5255 = vunpack.c.l.b16 %v5169
    %v5256 = vpack.c.b16 %v5244, %v5243
    %v5257 = vpack.c.b16 %v5246, %v5245
    %v5258 = vpack.c.b16 %v5248, %v5247
    %v5259 = vpack.c.b16 %v5250, %v5249
    %v5260 = vpack.c.b16 %v5252, %v5251
    %v5261 = vpack.c.b16 %v5254, %v5253
    %v5262 = vpack.c.b16 %v5255, %v5255
    %v5270 = vsel %vm647, %v5215, 0
    %v5273 = vsel %vm647, %v5217, 0
    %v5276 = vsel %vm647, %v5219, 0
    %v5279 = vsel %vm647, %v5221, 0
    %v5282 = vsel %vm647, %v5223, 0
    %v5285 = vsel %vm647, %v5225, 0
    %v5288 = vsel %vm647, %v5227, 0
    %v5291 = vsel %vm647, %v5229, 0
    %v5294 = vsel %vm696, %v5262, 0
    %5296 = vmatprep.subr.bf16.mxu0 0
    %5297 = vmatpush1.bf16.msra.mxu0 0
    %5298 = vmatprep.subr.bf16.mxu0 0
    %5299 = vmatpush1.bf16.msra.mxu0 %v5294
    %5300 = vmatprep.subr.bf16.mxu0 0
    %5301 = vmatpush1.bf16.msra.mxu0 %v5261
    %5302 = vmatprep.subr.bf16.mxu0 0
    %5303 = vmatpush1.bf16.msra.mxu0 %v5260
    %5304 = vmatprep.subr.bf16.mxu0 0
    %5305 = vmatpush1.bf16.msra.mxu0 %v5259
    %5306 = vmatprep.subr.bf16.mxu0 0
    %5307 = vmatpush1.bf16.msra.mxu0 %v5258
    %5308 = vmatprep.subr.bf16.mxu0 0
    %5309 = vmatpush1.bf16.msra.mxu0 %v5257
    %5310 = vmatprep.subr.bf16.mxu0 0
    %5311 = vmatpush1.bf16.msra.mxu0 %v5256
    %5312 = vmatprep.subr.bf16.mxu0 0
    %5313 = vmatpush2.bf16.msra.mxu0 0
    %5314 = vmatprep.subr.bf16.mxu0 0
    %5315 = vmatpush2.bf16.msra.mxu0 0
    %5316 = vmatprep.subr.bf16.mxu0 0
    %5317 = vmatpush2.bf16.msra.mxu0 0
    %5318 = vmatprep.subr.bf16.mxu0 0
    %5319 = vmatpush2.bf16.msra.mxu0 0
    %5320 = vmatprep.subr.bf16.mxu0 0
    %5321 = vmatpush2.bf16.msra.mxu0 0
    %5322 = vmatprep.subr.bf16.mxu0 0
    %5323 = vmatpush2.bf16.msra.mxu0 0
    %5324 = vmatprep.subr.bf16.mxu0 0
    %5325 = vmatpush2.bf16.msra.mxu0 0
    %5326 = vmatprep.subr.bf16.mxu0 0
    %5327 = vmatpush2.bf16.msra.mxu0 0
    %5328 = vmatprep.mubr.bf16.mxu0 0
    %5329 = vmatmul.mubr.bf16.gmra.mxu0 %v5270
    %v5330 = vpop.f32.mrf.mxu0
    %v5331 = vadd.f32 0.0, %v5330
    %v5332 = vpop.f32.mrf.mxu0
    %v5333 = vpop.f32.mrf.mxu0
    %v5334 = vadd.f32 0.0, %v5333
    %v5335 = vpop.f32.mrf.mxu0
    %5336 = vmatprep.mubr.bf16.mxu0 0
    %5337 = vmatmul.mubr.bf16.gmra.mxu0 %v5273
    %v5338 = vpop.f32.mrf.mxu0
    %v5339 = vadd.f32 0.0, %v5338
    %v5340 = vpop.f32.mrf.mxu0
    %v5341 = vpop.f32.mrf.mxu0
    %v5342 = vadd.f32 0.0, %v5341
    %v5343 = vpop.f32.mrf.mxu0
    %5344 = vmatprep.mubr.bf16.mxu0 0
    %5345 = vmatmul.mubr.bf16.gmra.mxu0 %v5276
    %v5346 = vpop.f32.mrf.mxu0
    %v5347 = vadd.f32 0.0, %v5346
    %v5348 = vpop.f32.mrf.mxu0
    %v5349 = vpop.f32.mrf.mxu0
    %v5350 = vadd.f32 0.0, %v5349
    %v5351 = vpop.f32.mrf.mxu0
    %5352 = vmatprep.mubr.bf16.mxu0 0
    %5353 = vmatmul.mubr.bf16.gmra.mxu0 %v5279
    %v5354 = vpop.f32.mrf.mxu0
    %v5355 = vadd.f32 0.0, %v5354
    %v5356 = vpop.f32.mrf.mxu0
    %v5357 = vpop.f32.mrf.mxu0
    %v5358 = vadd.f32 0.0, %v5357
    %v5359 = vpop.f32.mrf.mxu0
    %5360 = vmatprep.mubr.bf16.mxu0 0
    %5361 = vmatmul.mubr.bf16.gmra.mxu0 %v5282
    %v5362 = vpop.f32.mrf.mxu0
    %v5363 = vadd.f32 0.0, %v5362
    %v5364 = vpop.f32.mrf.mxu0
    %v5365 = vpop.f32.mrf.mxu0
    %v5366 = vadd.f32 0.0, %v5365
    %v5367 = vpop.f32.mrf.mxu0
    %5368 = vmatprep.mubr.bf16.mxu0 0
    %5369 = vmatmul.mubr.bf16.gmra.mxu0 %v5285
    %v5370 = vpop.f32.mrf.mxu0
    %v5371 = vadd.f32 0.0, %v5370
    %v5372 = vpop.f32.mrf.mxu0
    %v5373 = vpop.f32.mrf.mxu0
    %v5374 = vadd.f32 0.0, %v5373
    %v5375 = vpop.f32.mrf.mxu0
    %5376 = vmatprep.mubr.bf16.mxu0 0
    %5377 = vmatmul.mubr.bf16.gmra.mxu0 %v5288
    %v5378 = vpop.f32.mrf.mxu0
    %v5379 = vadd.f32 0.0, %v5378
    %v5380 = vpop.f32.mrf.mxu0
    %v5381 = vpop.f32.mrf.mxu0
    %v5382 = vadd.f32 0.0, %v5381
    %v5383 = vpop.f32.mrf.mxu0
    %5384 = vmatprep.mubr.bf16.mxu0 0
    %5385 = vmatmul.mubr.bf16.gmra.mxu0 %v5291
    %v5386 = vpop.f32.mrf.mxu0
    %v5387 = vadd.f32 0.0, %v5386
    %v5388 = vpop.f32.mrf.mxu0
    %v5389 = vpop.f32.mrf.mxu0
    %v5390 = vadd.f32 0.0, %v5389
    %v5391 = vpop.f32.mrf.mxu0
    %5392 = vdwg.mxu0
    %v5393 = vadd.f32 %v5123, %v5331
    %v5394 = vadd.f32 %v5124, %v5334
    %v5395 = vadd.f32 %v5125, %v5339
    %v5396 = vadd.f32 %v5126, %v5342
    %v5397 = vadd.f32 %v5127, %v5347
    %v5398 = vadd.f32 %v5128, %v5350
    %v5399 = vadd.f32 %v5129, %v5355
    %v5400 = vadd.f32 %v5130, %v5358
    %v5401 = vadd.f32 %v5131, %v5363
    %v5402 = vadd.f32 %v5132, %v5366
    %v5403 = vadd.f32 %v5133, %v5371
    %v5404 = vadd.f32 %v5134, %v5374
    %v5405 = vadd.f32 %v5135, %v5379
    %v5406 = vadd.f32 %v5136, %v5382
    %v5407 = vadd.f32 %v5137, %v5387
    %v5408 = vadd.f32 %v5138, %v5390
    %v5409 = vld [vmem:[#allocation2 + $0x30] sm:$0xc]
    %v5410 = vld [vmem:[#allocation2 + $0x34] sm:$0xf]
    %v5411 = vld [vmem:[#allocation2 + $0x38] sm:$0xf]
    %v5412 = vld [vmem:[#allocation2 + $0x3c] sm:$0xf]
    %v5413 = vld [vmem:[#allocation2 + $0x40] sm:$0xf]
    %v5414 = vld [vmem:[#allocation2 + $0x44] sm:$0xf]
    %v5415 = vld [vmem:[#allocation2 + $0x48] sm:$0xf]
    %v5416 = vld [vmem:[#allocation2 + $0x4c] sm:$0xf]
    %v5417 = vld [vmem:[#allocation2 + $0x50] sm:$0xf]
    %v5418 = vld [vmem:[#allocation2 + $0x54] sm:$0xf]
    %v5419 = vld [vmem:[#allocation2 + $0x58] sm:$0xf]
    %v5420 = vld [vmem:[#allocation2 + $0x5c] sm:$0xf]
    %v5421 = vld [vmem:[#allocation2 + $0x60] sm:$0xf]
    %v5422 = vld [vmem:[#allocation2 + $0x64] sm:$0xf]
    %v5423 = vld [vmem:[#allocation2 + $0x68] sm:$0xf]
    %v5424 = vld [vmem:[#allocation2 + $0x6c] sm:$0xf]
    %v5425 = vld [vmem:[#allocation2 + $0x70] sm:$0x3]
    %s5426 = scalar_lea.vmem %s5, 936
    %v5427 = vld [vmem:[%s5426] sm:$0xf]
    %v5428 = vld [vmem:[%s5426 + $0x4] sm:$0xf]
    %v5429 = vld [vmem:[%s5426 + $0x8] sm:$0xf]
    %v5430 = vld [vmem:[%s5426 + $0xc] sm:$0xf]
    %v5431 = vld [vmem:[%s5426 + $0x10] sm:$0xf]
    %v5432 = vld [vmem:[%s5426 + $0x14] sm:$0xf]
    %v5433 = vld [vmem:[%s5426 + $0x18] sm:$0xf]
    %v5434 = vld [vmem:[%s5426 + $0x1c] sm:$0xf]
    %v5435 = vld [vmem:[%s5426 + $0x20] sm:$0xf]
    %v5436 = vld [vmem:[%s5426 + $0x24] sm:$0xf]
    %v5437 = vld [vmem:[%s5426 + $0x28] sm:$0xf]
    %v5438 = vld [vmem:[%s5426 + $0x2c] sm:$0xf]
    %v5439 = vld [vmem:[%s5426 + $0x30] sm:$0x3]
    %v5457 = vunpack.c.l.b16 %v5409
    %v5458 = vunpack.c.l.b16 %v5410
    %v5459 = vunpack.c.l.b16 %v5411
    %v5460 = vunpack.c.l.b16 %v5412
    %v5461 = vunpack.c.l.b16 %v5413
    %v5462 = vunpack.c.l.b16 %v5414
    %v5463 = vunpack.c.l.b16 %v5415
    %v5464 = vunpack.c.l.b16 %v5416
    %v5465 = vunpack.c.l.b16 %v5417
    %v5466 = vunpack.c.l.b16 %v5418
    %v5467 = vunpack.c.l.b16 %v5419
    %v5468 = vunpack.c.l.b16 %v5420
    %v5469 = vunpack.c.l.b16 %v5421
    %v5470 = vunpack.c.l.b16 %v5422
    %v5471 = vunpack.c.l.b16 %v5423
    %v5472 = vunpack.c.l.b16 %v5424
    %v5473 = vunpack.c.l.b16 %v5425
    %v5474 = vpack.c.b16 %v5458, %v5457
    %v5475 = vpack.c.b16 %v5460, %v5459
    %v5476 = vpack.c.b16 %v5462, %v5461
    %v5477 = vpack.c.b16 %v5464, %v5463
    %v5478 = vpack.c.b16 %v5466, %v5465
    %v5479 = vpack.c.b16 %v5468, %v5467
    %v5480 = vpack.c.b16 %v5470, %v5469
    %v5481 = vpack.c.b16 %v5472, %v5471
    %v5482 = vpack.c.b16 %v5473, %v5473
    %v5483 = vrot.slane %v5474, 2
    %v5484 = vrot.slane %v5475, 2
    %v5485 = vsel %vm1671, %v5483, %v5484
    %v5486 = vrot.slane %v5476, 2
    %v5487 = vsel %vm1671, %v5484, %v5486
    %v5488 = vrot.slane %v5477, 2
    %v5489 = vsel %vm1671, %v5486, %v5488
    %v5490 = vrot.slane %v5478, 2
    %v5491 = vsel %vm1671, %v5488, %v5490
    %v5492 = vrot.slane %v5479, 2
    %v5493 = vsel %vm1671, %v5490, %v5492
    %v5494 = vrot.slane %v5480, 2
    %v5495 = vsel %vm1671, %v5492, %v5494
    %v5496 = vrot.slane %v5481, 2
    %v5497 = vsel %vm1671, %v5494, %v5496
    %v5498 = vrot.slane %v5482, 2
    %v5499 = vsel %vm1671, %v5496, %v5498
    %v5513 = vunpack.c.l.b16 %v5427
    %v5514 = vunpack.c.l.b16 %v5428
    %v5515 = vunpack.c.l.b16 %v5429
    %v5516 = vunpack.c.l.b16 %v5430
    %v5517 = vunpack.c.l.b16 %v5431
    %v5518 = vunpack.c.l.b16 %v5432
    %v5519 = vunpack.c.l.b16 %v5433
    %v5520 = vunpack.c.l.b16 %v5434
    %v5521 = vunpack.c.l.b16 %v5435
    %v5522 = vunpack.c.l.b16 %v5436
    %v5523 = vunpack.c.l.b16 %v5437
    %v5524 = vunpack.c.l.b16 %v5438
    %v5525 = vunpack.c.l.b16 %v5439
    %v5526 = vpack.c.b16 %v5514, %v5513
    %v5527 = vpack.c.b16 %v5516, %v5515
    %v5528 = vpack.c.b16 %v5518, %v5517
    %v5529 = vpack.c.b16 %v5520, %v5519
    %v5530 = vpack.c.b16 %v5522, %v5521
    %v5531 = vpack.c.b16 %v5524, %v5523
    %v5532 = vpack.c.b16 %v5525, %v5525
    %v5540 = vsel %vm647, %v5485, 0
    %v5543 = vsel %vm647, %v5487, 0
    %v5546 = vsel %vm647, %v5489, 0
    %v5549 = vsel %vm647, %v5491, 0
    %v5552 = vsel %vm647, %v5493, 0
    %v5555 = vsel %vm647, %v5495, 0
    %v5558 = vsel %vm647, %v5497, 0
    %v5561 = vsel %vm647, %v5499, 0
    %v5564 = vsel %vm696, %v5532, 0
    %5566 = vmatprep.subr.bf16.mxu0 0
    %5567 = vmatpush1.bf16.msra.mxu0 0
    %5568 = vmatprep.subr.bf16.mxu0 0
    %5569 = vmatpush1.bf16.msra.mxu0 %v5564
    %5570 = vmatprep.subr.bf16.mxu0 0
    %5571 = vmatpush1.bf16.msra.mxu0 %v5531
    %5572 = vmatprep.subr.bf16.mxu0 0
    %5573 = vmatpush1.bf16.msra.mxu0 %v5530
    %5574 = vmatprep.subr.bf16.mxu0 0
    %5575 = vmatpush1.bf16.msra.mxu0 %v5529
    %5576 = vmatprep.subr.bf16.mxu0 0
    %5577 = vmatpush1.bf16.msra.mxu0 %v5528
    %5578 = vmatprep.subr.bf16.mxu0 0
    %5579 = vmatpush1.bf16.msra.mxu0 %v5527
    %5580 = vmatprep.subr.bf16.mxu0 0
    %5581 = vmatpush1.bf16.msra.mxu0 %v5526
    %5582 = vmatprep.subr.bf16.mxu0 0
    %5583 = vmatpush2.bf16.msra.mxu0 0
    %5584 = vmatprep.subr.bf16.mxu0 0
    %5585 = vmatpush2.bf16.msra.mxu0 0
    %5586 = vmatprep.subr.bf16.mxu0 0
    %5587 = vmatpush2.bf16.msra.mxu0 0
    %5588 = vmatprep.subr.bf16.mxu0 0
    %5589 = vmatpush2.bf16.msra.mxu0 0
    %5590 = vmatprep.subr.bf16.mxu0 0
    %5591 = vmatpush2.bf16.msra.mxu0 0
    %5592 = vmatprep.subr.bf16.mxu0 0
    %5593 = vmatpush2.bf16.msra.mxu0 0
    %5594 = vmatprep.subr.bf16.mxu0 0
    %5595 = vmatpush2.bf16.msra.mxu0 0
    %5596 = vmatprep.subr.bf16.mxu0 0
    %5597 = vmatpush2.bf16.msra.mxu0 0
    %5598 = vmatprep.mubr.bf16.mxu0 0
    %5599 = vmatmul.mubr.bf16.gmra.mxu0 %v5540
    %v5600 = vpop.f32.mrf.mxu0
    %v5601 = vadd.f32 0.0, %v5600
    %v5602 = vpop.f32.mrf.mxu0
    %v5603 = vpop.f32.mrf.mxu0
    %v5604 = vadd.f32 0.0, %v5603
    %v5605 = vpop.f32.mrf.mxu0
    %5606 = vmatprep.mubr.bf16.mxu0 0
    %5607 = vmatmul.mubr.bf16.gmra.mxu0 %v5543
    %v5608 = vpop.f32.mrf.mxu0
    %v5609 = vadd.f32 0.0, %v5608
    %v5610 = vpop.f32.mrf.mxu0
    %v5611 = vpop.f32.mrf.mxu0
    %v5612 = vadd.f32 0.0, %v5611
    %v5613 = vpop.f32.mrf.mxu0
    %5614 = vmatprep.mubr.bf16.mxu0 0
    %5615 = vmatmul.mubr.bf16.gmra.mxu0 %v5546
    %v5616 = vpop.f32.mrf.mxu0
    %v5617 = vadd.f32 0.0, %v5616
    %v5618 = vpop.f32.mrf.mxu0
    %v5619 = vpop.f32.mrf.mxu0
    %v5620 = vadd.f32 0.0, %v5619
    %v5621 = vpop.f32.mrf.mxu0
    %5622 = vmatprep.mubr.bf16.mxu0 0
    %5623 = vmatmul.mubr.bf16.gmra.mxu0 %v5549
    %v5624 = vpop.f32.mrf.mxu0
    %v5625 = vadd.f32 0.0, %v5624
    %v5626 = vpop.f32.mrf.mxu0
    %v5627 = vpop.f32.mrf.mxu0
    %v5628 = vadd.f32 0.0, %v5627
    %v5629 = vpop.f32.mrf.mxu0
    %5630 = vmatprep.mubr.bf16.mxu0 0
    %5631 = vmatmul.mubr.bf16.gmra.mxu0 %v5552
    %v5632 = vpop.f32.mrf.mxu0
    %v5633 = vadd.f32 0.0, %v5632
    %v5634 = vpop.f32.mrf.mxu0
    %v5635 = vpop.f32.mrf.mxu0
    %v5636 = vadd.f32 0.0, %v5635
    %v5637 = vpop.f32.mrf.mxu0
    %5638 = vmatprep.mubr.bf16.mxu0 0
    %5639 = vmatmul.mubr.bf16.gmra.mxu0 %v5555
    %v5640 = vpop.f32.mrf.mxu0
    %v5641 = vadd.f32 0.0, %v5640
    %v5642 = vpop.f32.mrf.mxu0
    %v5643 = vpop.f32.mrf.mxu0
    %v5644 = vadd.f32 0.0, %v5643
    %v5645 = vpop.f32.mrf.mxu0
    %5646 = vmatprep.mubr.bf16.mxu0 0
    %5647 = vmatmul.mubr.bf16.gmra.mxu0 %v5558
    %v5648 = vpop.f32.mrf.mxu0
    %v5649 = vadd.f32 0.0, %v5648
    %v5650 = vpop.f32.mrf.mxu0
    %v5651 = vpop.f32.mrf.mxu0
    %v5652 = vadd.f32 0.0, %v5651
    %v5653 = vpop.f32.mrf.mxu0
    %5654 = vmatprep.mubr.bf16.mxu0 0
    %5655 = vmatmul.mubr.bf16.gmra.mxu0 %v5561
    %v5656 = vpop.f32.mrf.mxu0
    %v5657 = vadd.f32 0.0, %v5656
    %v5658 = vpop.f32.mrf.mxu0
    %v5659 = vpop.f32.mrf.mxu0
    %v5660 = vadd.f32 0.0, %v5659
    %v5661 = vpop.f32.mrf.mxu0
    %5662 = vdwg.mxu0
    %v5663 = vadd.f32 %v5393, %v5601
    %v5664 = vadd.f32 %v5394, %v5604
    %v5665 = vadd.f32 %v5395, %v5609
    %v5666 = vadd.f32 %v5396, %v5612
    %v5667 = vadd.f32 %v5397, %v5617
    %v5668 = vadd.f32 %v5398, %v5620
    %v5669 = vadd.f32 %v5399, %v5625
    %v5670 = vadd.f32 %v5400, %v5628
    %v5671 = vadd.f32 %v5401, %v5633
    %v5672 = vadd.f32 %v5402, %v5636
    %v5673 = vadd.f32 %v5403, %v5641
    %v5674 = vadd.f32 %v5404, %v5644
    %v5675 = vadd.f32 %v5405, %v5649
    %v5676 = vadd.f32 %v5406, %v5652
    %v5677 = vadd.f32 %v5407, %v5657
    %v5678 = vadd.f32 %v5408, %v5660
    %v5679 = vld [vmem:[#allocation2 + $0x30] sm:$0x8]
    %v5680 = vld [vmem:[#allocation2 + $0x70] sm:$0x7]
    %s5681 = scalar_lea.vmem %s5, 988
    %v5682 = vld [vmem:[%s5681] sm:$0xf]
    %v5683 = vld [vmem:[%s5681 + $0x4] sm:$0xf]
    %v5684 = vld [vmem:[%s5681 + $0x8] sm:$0xf]
    %v5685 = vld [vmem:[%s5681 + $0xc] sm:$0xf]
    %v5686 = vld [vmem:[%s5681 + $0x10] sm:$0xf]
    %v5687 = vld [vmem:[%s5681 + $0x14] sm:$0xf]
    %v5688 = vld [vmem:[%s5681 + $0x18] sm:$0xf]
    %v5689 = vld [vmem:[%s5681 + $0x1c] sm:$0xf]
    %v5690 = vld [vmem:[%s5681 + $0x20] sm:$0xf]
    %v5691 = vld [vmem:[%s5681 + $0x24] sm:$0xf]
    %v5692 = vld [vmem:[%s5681 + $0x28] sm:$0xf]
    %v5693 = vld [vmem:[%s5681 + $0x2c] sm:$0xf]
    %v5694 = vld [vmem:[%s5681 + $0x30] sm:$0x3]
    %v5697 = vunpack.c.l.b16 %v5679
    %v5698 = vunpack.c.l.b16 %v5680
    %v5699 = vpack.c.b16 %v5458, %v5697
    %v5700 = vpack.c.b16 %v5698, %v5698
    %v5701 = vrot.slane %v5699, 3
    %v5702 = vrot.slane %v5475, 3
    %v5703 = vsel %vm2378, %v5701, %v5702
    %v5704 = vrot.slane %v5476, 3
    %v5705 = vsel %vm2378, %v5702, %v5704
    %v5706 = vrot.slane %v5477, 3
    %v5707 = vsel %vm2378, %v5704, %v5706
    %v5708 = vrot.slane %v5478, 3
    %v5709 = vsel %vm2378, %v5706, %v5708
    %v5710 = vrot.slane %v5479, 3
    %v5711 = vsel %vm2378, %v5708, %v5710
    %v5712 = vrot.slane %v5480, 3
    %v5713 = vsel %vm2378, %v5710, %v5712
    %v5714 = vrot.slane %v5481, 3
    %v5715 = vsel %vm2378, %v5712, %v5714
    %v5716 = vrot.slane %v5700, 3
    %v5717 = vsel %vm2378, %v5714, %v5716
    %v5731 = vunpack.c.l.b16 %v5682
    %v5732 = vunpack.c.l.b16 %v5683
    %v5733 = vunpack.c.l.b16 %v5684
    %v5734 = vunpack.c.l.b16 %v5685
    %v5735 = vunpack.c.l.b16 %v5686
    %v5736 = vunpack.c.l.b16 %v5687
    %v5737 = vunpack.c.l.b16 %v5688
    %v5738 = vunpack.c.l.b16 %v5689
    %v5739 = vunpack.c.l.b16 %v5690
    %v5740 = vunpack.c.l.b16 %v5691
    %v5741 = vunpack.c.l.b16 %v5692
    %v5742 = vunpack.c.l.b16 %v5693
    %v5743 = vunpack.c.l.b16 %v5694
    %v5744 = vpack.c.b16 %v5732, %v5731
    %v5745 = vpack.c.b16 %v5734, %v5733
    %v5746 = vpack.c.b16 %v5736, %v5735
    %v5747 = vpack.c.b16 %v5738, %v5737
    %v5748 = vpack.c.b16 %v5740, %v5739
    %v5749 = vpack.c.b16 %v5742, %v5741
    %v5750 = vpack.c.b16 %v5743, %v5743
    %v5758 = vsel %vm647, %v5703, 0
    %v5761 = vsel %vm647, %v5705, 0
    %v5764 = vsel %vm647, %v5707, 0
    %v5767 = vsel %vm647, %v5709, 0
    %v5770 = vsel %vm647, %v5711, 0
    %v5773 = vsel %vm647, %v5713, 0
    %v5776 = vsel %vm647, %v5715, 0
    %v5779 = vsel %vm647, %v5717, 0
    %v5782 = vsel %vm696, %v5750, 0
    %5784 = vmatprep.subr.bf16.mxu0 0
    %5785 = vmatpush1.bf16.msra.mxu0 0
    %5786 = vmatprep.subr.bf16.mxu0 0
    %5787 = vmatpush1.bf16.msra.mxu0 %v5782
    %5788 = vmatprep.subr.bf16.mxu0 0
    %5789 = vmatpush1.bf16.msra.mxu0 %v5749
    %5790 = vmatprep.subr.bf16.mxu0 0
    %5791 = vmatpush1.bf16.msra.mxu0 %v5748
    %5792 = vmatprep.subr.bf16.mxu0 0
    %5793 = vmatpush1.bf16.msra.mxu0 %v5747
    %5794 = vmatprep.subr.bf16.mxu0 0
    %5795 = vmatpush1.bf16.msra.mxu0 %v5746
    %5796 = vmatprep.subr.bf16.mxu0 0
    %5797 = vmatpush1.bf16.msra.mxu0 %v5745
    %5798 = vmatprep.subr.bf16.mxu0 0
    %5799 = vmatpush1.bf16.msra.mxu0 %v5744
    %5800 = vmatprep.subr.bf16.mxu0 0
    %5801 = vmatpush2.bf16.msra.mxu0 0
    %5802 = vmatprep.subr.bf16.mxu0 0
    %5803 = vmatpush2.bf16.msra.mxu0 0
    %5804 = vmatprep.subr.bf16.mxu0 0
    %5805 = vmatpush2.bf16.msra.mxu0 0
    %5806 = vmatprep.subr.bf16.mxu0 0
    %5807 = vmatpush2.bf16.msra.mxu0 0
    %5808 = vmatprep.subr.bf16.mxu0 0
    %5809 = vmatpush2.bf16.msra.mxu0 0
    %5810 = vmatprep.subr.bf16.mxu0 0
    %5811 = vmatpush2.bf16.msra.mxu0 0
    %5812 = vmatprep.subr.bf16.mxu0 0
    %5813 = vmatpush2.bf16.msra.mxu0 0
    %5814 = vmatprep.subr.bf16.mxu0 0
    %5815 = vmatpush2.bf16.msra.mxu0 0
    %5816 = vmatprep.mubr.bf16.mxu0 0
    %5817 = vmatmul.mubr.bf16.gmra.mxu0 %v5758
    %v5818 = vpop.f32.mrf.mxu0
    %v5819 = vadd.f32 0.0, %v5818
    %v5820 = vpop.f32.mrf.mxu0
    %v5821 = vpop.f32.mrf.mxu0
    %v5822 = vadd.f32 0.0, %v5821
    %v5823 = vpop.f32.mrf.mxu0
    %5824 = vmatprep.mubr.bf16.mxu0 0
    %5825 = vmatmul.mubr.bf16.gmra.mxu0 %v5761
    %v5826 = vpop.f32.mrf.mxu0
    %v5827 = vadd.f32 0.0, %v5826
    %v5828 = vpop.f32.mrf.mxu0
    %v5829 = vpop.f32.mrf.mxu0
    %v5830 = vadd.f32 0.0, %v5829
    %v5831 = vpop.f32.mrf.mxu0
    %5832 = vmatprep.mubr.bf16.mxu0 0
    %5833 = vmatmul.mubr.bf16.gmra.mxu0 %v5764
    %v5834 = vpop.f32.mrf.mxu0
    %v5835 = vadd.f32 0.0, %v5834
    %v5836 = vpop.f32.mrf.mxu0
    %v5837 = vpop.f32.mrf.mxu0
    %v5838 = vadd.f32 0.0, %v5837
    %v5839 = vpop.f32.mrf.mxu0
    %5840 = vmatprep.mubr.bf16.mxu0 0
    %5841 = vmatmul.mubr.bf16.gmra.mxu0 %v5767
    %v5842 = vpop.f32.mrf.mxu0
    %v5843 = vadd.f32 0.0, %v5842
    %v5844 = vpop.f32.mrf.mxu0
    %v5845 = vpop.f32.mrf.mxu0
    %v5846 = vadd.f32 0.0, %v5845
    %v5847 = vpop.f32.mrf.mxu0
    %5848 = vmatprep.mubr.bf16.mxu0 0
    %5849 = vmatmul.mubr.bf16.gmra.mxu0 %v5770
    %v5850 = vpop.f32.mrf.mxu0
    %v5851 = vadd.f32 0.0, %v5850
    %v5852 = vpop.f32.mrf.mxu0
    %v5853 = vpop.f32.mrf.mxu0
    %v5854 = vadd.f32 0.0, %v5853
    %v5855 = vpop.f32.mrf.mxu0
    %5856 = vmatprep.mubr.bf16.mxu0 0
    %5857 = vmatmul.mubr.bf16.gmra.mxu0 %v5773
    %v5858 = vpop.f32.mrf.mxu0
    %v5859 = vadd.f32 0.0, %v5858
    %v5860 = vpop.f32.mrf.mxu0
    %v5861 = vpop.f32.mrf.mxu0
    %v5862 = vadd.f32 0.0, %v5861
    %v5863 = vpop.f32.mrf.mxu0
    %5864 = vmatprep.mubr.bf16.mxu0 0
    %5865 = vmatmul.mubr.bf16.gmra.mxu0 %v5776
    %v5866 = vpop.f32.mrf.mxu0
    %v5867 = vadd.f32 0.0, %v5866
    %v5868 = vpop.f32.mrf.mxu0
    %v5869 = vpop.f32.mrf.mxu0
    %v5870 = vadd.f32 0.0, %v5869
    %v5871 = vpop.f32.mrf.mxu0
    %5872 = vmatprep.mubr.bf16.mxu0 0
    %5873 = vmatmul.mubr.bf16.gmra.mxu0 %v5779
    %v5874 = vpop.f32.mrf.mxu0
    %v5875 = vadd.f32 0.0, %v5874
    %v5876 = vpop.f32.mrf.mxu0
    %v5877 = vpop.f32.mrf.mxu0
    %v5878 = vadd.f32 0.0, %v5877
    %v5879 = vpop.f32.mrf.mxu0
    %5880 = vdwg.mxu0
    %v5881 = vadd.f32 %v5663, %v5819
    %v5882 = vadd.f32 %v5664, %v5822
    %v5883 = vadd.f32 %v5665, %v5827
    %v5884 = vadd.f32 %v5666, %v5830
    %v5885 = vadd.f32 %v5667, %v5835
    %v5886 = vadd.f32 %v5668, %v5838
    %v5887 = vadd.f32 %v5669, %v5843
    %v5888 = vadd.f32 %v5670, %v5846
    %v5889 = vadd.f32 %v5671, %v5851
    %v5890 = vadd.f32 %v5672, %v5854
    %v5891 = vadd.f32 %v5673, %v5859
    %v5892 = vadd.f32 %v5674, %v5862
    %v5893 = vadd.f32 %v5675, %v5867
    %v5894 = vadd.f32 %v5676, %v5870
    %v5895 = vadd.f32 %v5677, %v5875
    %v5896 = vadd.f32 %v5678, %v5878
    %v5897 = vld [vmem:[#allocation2 + $0x70] sm:$0xf]
    %s5898 = scalar_lea.vmem %s5, 1040
    %v5899 = vld [vmem:[%s5898] sm:$0xf]
    %v5900 = vld [vmem:[%s5898 + $0x4] sm:$0xf]
    %v5901 = vld [vmem:[%s5898 + $0x8] sm:$0xf]
    %v5902 = vld [vmem:[%s5898 + $0xc] sm:$0xf]
    %v5903 = vld [vmem:[%s5898 + $0x10] sm:$0xf]
    %v5904 = vld [vmem:[%s5898 + $0x14] sm:$0xf]
    %v5905 = vld [vmem:[%s5898 + $0x18] sm:$0xf]
    %v5906 = vld [vmem:[%s5898 + $0x1c] sm:$0xf]
    %v5907 = vld [vmem:[%s5898 + $0x20] sm:$0xf]
    %v5908 = vld [vmem:[%s5898 + $0x24] sm:$0xf]
    %v5909 = vld [vmem:[%s5898 + $0x28] sm:$0xf]
    %v5910 = vld [vmem:[%s5898 + $0x2c] sm:$0xf]
    %v5911 = vld [vmem:[%s5898 + $0x30] sm:$0x3]
    %v5913 = vunpack.c.l.b16 %v5897
    %v5914 = vpack.c.b16 %v5459, %v5458
    %v5915 = vpack.c.b16 %v5461, %v5460
    %v5916 = vpack.c.b16 %v5463, %v5462
    %v5917 = vpack.c.b16 %v5465, %v5464
    %v5918 = vpack.c.b16 %v5467, %v5466
    %v5919 = vpack.c.b16 %v5469, %v5468
    %v5920 = vpack.c.b16 %v5471, %v5470
    %v5921 = vpack.c.b16 %v5913, %v5472
    %v5935 = vunpack.c.l.b16 %v5899
    %v5936 = vunpack.c.l.b16 %v5900
    %v5937 = vunpack.c.l.b16 %v5901
    %v5938 = vunpack.c.l.b16 %v5902
    %v5939 = vunpack.c.l.b16 %v5903
    %v5940 = vunpack.c.l.b16 %v5904
    %v5941 = vunpack.c.l.b16 %v5905
    %v5942 = vunpack.c.l.b16 %v5906
    %v5943 = vunpack.c.l.b16 %v5907
    %v5944 = vunpack.c.l.b16 %v5908
    %v5945 = vunpack.c.l.b16 %v5909
    %v5946 = vunpack.c.l.b16 %v5910
    %v5947 = vunpack.c.l.b16 %v5911
    %v5948 = vpack.c.b16 %v5936, %v5935
    %v5949 = vpack.c.b16 %v5938, %v5937
    %v5950 = vpack.c.b16 %v5940, %v5939
    %v5951 = vpack.c.b16 %v5942, %v5941
    %v5952 = vpack.c.b16 %v5944, %v5943
    %v5953 = vpack.c.b16 %v5946, %v5945
    %v5954 = vpack.c.b16 %v5947, %v5947
    %v5962 = vsel %vm647, %v5914, 0
    %v5965 = vsel %vm647, %v5915, 0
    %v5968 = vsel %vm647, %v5916, 0
    %v5971 = vsel %vm647, %v5917, 0
    %v5974 = vsel %vm647, %v5918, 0
    %v5977 = vsel %vm647, %v5919, 0
    %v5980 = vsel %vm647, %v5920, 0
    %v5983 = vsel %vm647, %v5921, 0
    %v5986 = vsel %vm696, %v5954, 0
    %5988 = vmatprep.subr.bf16.mxu0 0
    %5989 = vmatpush1.bf16.msra.mxu0 0
    %5990 = vmatprep.subr.bf16.mxu0 0
    %5991 = vmatpush1.bf16.msra.mxu0 %v5986
    %5992 = vmatprep.subr.bf16.mxu0 0
    %5993 = vmatpush1.bf16.msra.mxu0 %v5953
    %5994 = vmatprep.subr.bf16.mxu0 0
    %5995 = vmatpush1.bf16.msra.mxu0 %v5952
    %5996 = vmatprep.subr.bf16.mxu0 0
    %5997 = vmatpush1.bf16.msra.mxu0 %v5951
    %5998 = vmatprep.subr.bf16.mxu0 0
    %5999 = vmatpush1.bf16.msra.mxu0 %v5950
    %6000 = vmatprep.subr.bf16.mxu0 0
    %6001 = vmatpush1.bf16.msra.mxu0 %v5949
    %6002 = vmatprep.subr.bf16.mxu0 0
    %6003 = vmatpush1.bf16.msra.mxu0 %v5948
    %6004 = vmatprep.subr.bf16.mxu0 0
    %6005 = vmatpush2.bf16.msra.mxu0 0
    %6006 = vmatprep.subr.bf16.mxu0 0
    %6007 = vmatpush2.bf16.msra.mxu0 0
    %6008 = vmatprep.subr.bf16.mxu0 0
    %6009 = vmatpush2.bf16.msra.mxu0 0
    %6010 = vmatprep.subr.bf16.mxu0 0
    %6011 = vmatpush2.bf16.msra.mxu0 0
    %6012 = vmatprep.subr.bf16.mxu0 0
    %6013 = vmatpush2.bf16.msra.mxu0 0
    %6014 = vmatprep.subr.bf16.mxu0 0
    %6015 = vmatpush2.bf16.msra.mxu0 0
    %6016 = vmatprep.subr.bf16.mxu0 0
    %6017 = vmatpush2.bf16.msra.mxu0 0
    %6018 = vmatprep.subr.bf16.mxu0 0
    %6019 = vmatpush2.bf16.msra.mxu0 0
    %6020 = vmatprep.mubr.bf16.mxu0 0
    %6021 = vmatmul.mubr.bf16.gmra.mxu0 %v5962
    %v6022 = vpop.f32.mrf.mxu0
    %v6023 = vadd.f32 0.0, %v6022
    %v6024 = vpop.f32.mrf.mxu0
    %v6025 = vpop.f32.mrf.mxu0
    %v6026 = vadd.f32 0.0, %v6025
    %v6027 = vpop.f32.mrf.mxu0
    %6028 = vmatprep.mubr.bf16.mxu0 0
    %6029 = vmatmul.mubr.bf16.gmra.mxu0 %v5965
    %v6030 = vpop.f32.mrf.mxu0
    %v6031 = vadd.f32 0.0, %v6030
    %v6032 = vpop.f32.mrf.mxu0
    %v6033 = vpop.f32.mrf.mxu0
    %v6034 = vadd.f32 0.0, %v6033
    %v6035 = vpop.f32.mrf.mxu0
    %6036 = vmatprep.mubr.bf16.mxu0 0
    %6037 = vmatmul.mubr.bf16.gmra.mxu0 %v5968
    %v6038 = vpop.f32.mrf.mxu0
    %v6039 = vadd.f32 0.0, %v6038
    %v6040 = vpop.f32.mrf.mxu0
    %v6041 = vpop.f32.mrf.mxu0
    %v6042 = vadd.f32 0.0, %v6041
    %v6043 = vpop.f32.mrf.mxu0
    %6044 = vmatprep.mubr.bf16.mxu0 0
    %6045 = vmatmul.mubr.bf16.gmra.mxu0 %v5971
    %v6046 = vpop.f32.mrf.mxu0
    %v6047 = vadd.f32 0.0, %v6046
    %v6048 = vpop.f32.mrf.mxu0
    %v6049 = vpop.f32.mrf.mxu0
    %v6050 = vadd.f32 0.0, %v6049
    %v6051 = vpop.f32.mrf.mxu0
    %6052 = vmatprep.mubr.bf16.mxu0 0
    %6053 = vmatmul.mubr.bf16.gmra.mxu0 %v5974
    %v6054 = vpop.f32.mrf.mxu0
    %v6055 = vadd.f32 0.0, %v6054
    %v6056 = vpop.f32.mrf.mxu0
    %v6057 = vpop.f32.mrf.mxu0
    %v6058 = vadd.f32 0.0, %v6057
    %v6059 = vpop.f32.mrf.mxu0
    %6060 = vmatprep.mubr.bf16.mxu0 0
    %6061 = vmatmul.mubr.bf16.gmra.mxu0 %v5977
    %v6062 = vpop.f32.mrf.mxu0
    %v6063 = vadd.f32 0.0, %v6062
    %v6064 = vpop.f32.mrf.mxu0
    %v6065 = vpop.f32.mrf.mxu0
    %v6066 = vadd.f32 0.0, %v6065
    %v6067 = vpop.f32.mrf.mxu0
    %6068 = vmatprep.mubr.bf16.mxu0 0
    %6069 = vmatmul.mubr.bf16.gmra.mxu0 %v5980
    %v6070 = vpop.f32.mrf.mxu0
    %v6071 = vadd.f32 0.0, %v6070
    %v6072 = vpop.f32.mrf.mxu0
    %v6073 = vpop.f32.mrf.mxu0
    %v6074 = vadd.f32 0.0, %v6073
    %v6075 = vpop.f32.mrf.mxu0
    %6076 = vmatprep.mubr.bf16.mxu0 0
    %6077 = vmatmul.mubr.bf16.gmra.mxu0 %v5983
    %v6078 = vpop.f32.mrf.mxu0
    %v6079 = vadd.f32 0.0, %v6078
    %v6080 = vpop.f32.mrf.mxu0
    %v6081 = vpop.f32.mrf.mxu0
    %v6082 = vadd.f32 0.0, %v6081
    %v6083 = vpop.f32.mrf.mxu0
    %6084 = vdwg.mxu0
    %v6085 = vadd.f32 %v5881, %v6023
    %v6086 = vadd.f32 %v5882, %v6026
    %v6087 = vadd.f32 %v5883, %v6031
    %v6088 = vadd.f32 %v5884, %v6034
    %v6089 = vadd.f32 %v5885, %v6039
    %v6090 = vadd.f32 %v5886, %v6042
    %v6091 = vadd.f32 %v5887, %v6047
    %v6092 = vadd.f32 %v5888, %v6050
    %v6093 = vadd.f32 %v5889, %v6055
    %v6094 = vadd.f32 %v5890, %v6058
    %v6095 = vadd.f32 %v5891, %v6063
    %v6096 = vadd.f32 %v5892, %v6066
    %v6097 = vadd.f32 %v5893, %v6071
    %v6098 = vadd.f32 %v5894, %v6074
    %v6099 = vadd.f32 %v5895, %v6079
    %v6100 = vadd.f32 %v5896, %v6082
    %v6101 = vld [vmem:[#allocation2 + $0x34] sm:$0x8]
    %v6102 = vld [vmem:[#allocation2 + $0x38] sm:$0xf]
    %v6103 = vld [vmem:[#allocation2 + $0x3c] sm:$0xf]
    %v6104 = vld [vmem:[#allocation2 + $0x40] sm:$0xf]
    %v6105 = vld [vmem:[#allocation2 + $0x44] sm:$0xf]
    %v6106 = vld [vmem:[#allocation2 + $0x48] sm:$0xf]
    %v6107 = vld [vmem:[#allocation2 + $0x4c] sm:$0xf]
    %v6108 = vld [vmem:[#allocation2 + $0x50] sm:$0xf]
    %v6109 = vld [vmem:[#allocation2 + $0x54] sm:$0xf]
    %v6110 = vld [vmem:[#allocation2 + $0x58] sm:$0xf]
    %v6111 = vld [vmem:[#allocation2 + $0x5c] sm:$0xf]
    %v6112 = vld [vmem:[#allocation2 + $0x60] sm:$0xf]
    %v6113 = vld [vmem:[#allocation2 + $0x64] sm:$0xf]
    %v6114 = vld [vmem:[#allocation2 + $0x68] sm:$0xf]
    %v6115 = vld [vmem:[#allocation2 + $0x6c] sm:$0xf]
    %v6116 = vld [vmem:[#allocation2 + $0x70] sm:$0xf]
    %v6117 = vld [vmem:[#allocation2 + $0x74] sm:$0x7]
    %s6118 = scalar_lea.vmem %s5, 1092
    %v6119 = vld [vmem:[%s6118] sm:$0xf]
    %v6120 = vld [vmem:[%s6118 + $0x4] sm:$0xf]
    %v6121 = vld [vmem:[%s6118 + $0x8] sm:$0xf]
    %v6122 = vld [vmem:[%s6118 + $0xc] sm:$0xf]
    %v6123 = vld [vmem:[%s6118 + $0x10] sm:$0xf]
    %v6124 = vld [vmem:[%s6118 + $0x14] sm:$0xf]
    %v6125 = vld [vmem:[%s6118 + $0x18] sm:$0xf]
    %v6126 = vld [vmem:[%s6118 + $0x1c] sm:$0xf]
    %v6127 = vld [vmem:[%s6118 + $0x20] sm:$0xf]
    %v6128 = vld [vmem:[%s6118 + $0x24] sm:$0xf]
    %v6129 = vld [vmem:[%s6118 + $0x28] sm:$0xf]
    %v6130 = vld [vmem:[%s6118 + $0x2c] sm:$0xf]
    %v6131 = vld [vmem:[%s6118 + $0x30] sm:$0x3]
    %v6149 = vunpack.c.l.b16 %v6101
    %v6150 = vunpack.c.l.b16 %v6102
    %v6151 = vunpack.c.l.b16 %v6103
    %v6152 = vunpack.c.l.b16 %v6104
    %v6153 = vunpack.c.l.b16 %v6105
    %v6154 = vunpack.c.l.b16 %v6106
    %v6155 = vunpack.c.l.b16 %v6107
    %v6156 = vunpack.c.l.b16 %v6108
    %v6157 = vunpack.c.l.b16 %v6109
    %v6158 = vunpack.c.l.b16 %v6110
    %v6159 = vunpack.c.l.b16 %v6111
    %v6160 = vunpack.c.l.b16 %v6112
    %v6161 = vunpack.c.l.b16 %v6113
    %v6162 = vunpack.c.l.b16 %v6114
    %v6163 = vunpack.c.l.b16 %v6115
    %v6164 = vunpack.c.l.b16 %v6116
    %v6165 = vunpack.c.l.b16 %v6117
    %v6166 = vpack.c.b16 %v6150, %v6149
    %v6167 = vpack.c.b16 %v6152, %v6151
    %v6168 = vpack.c.b16 %v6154, %v6153
    %v6169 = vpack.c.b16 %v6156, %v6155
    %v6170 = vpack.c.b16 %v6158, %v6157
    %v6171 = vpack.c.b16 %v6160, %v6159
    %v6172 = vpack.c.b16 %v6162, %v6161
    %v6173 = vpack.c.b16 %v6164, %v6163
    %v6174 = vpack.c.b16 %v6165, %v6165
    %v6175 = vrot.slane %v6166, 3
    %v6176 = vrot.slane %v6167, 3
    %v6177 = vsel %vm2378, %v6175, %v6176
    %v6178 = vrot.slane %v6168, 3
    %v6179 = vsel %vm2378, %v6176, %v6178
    %v6180 = vrot.slane %v6169, 3
    %v6181 = vsel %vm2378, %v6178, %v6180
    %v6182 = vrot.slane %v6170, 3
    %v6183 = vsel %vm2378, %v6180, %v6182
    %v6184 = vrot.slane %v6171, 3
    %v6185 = vsel %vm2378, %v6182, %v6184
    %v6186 = vrot.slane %v6172, 3
    %v6187 = vsel %vm2378, %v6184, %v6186
    %v6188 = vrot.slane %v6173, 3
    %v6189 = vsel %vm2378, %v6186, %v6188
    %v6190 = vrot.slane %v6174, 3
    %v6191 = vsel %vm2378, %v6188, %v6190
    %v6205 = vunpack.c.l.b16 %v6119
    %v6206 = vunpack.c.l.b16 %v6120
    %v6207 = vunpack.c.l.b16 %v6121
    %v6208 = vunpack.c.l.b16 %v6122
    %v6209 = vunpack.c.l.b16 %v6123
    %v6210 = vunpack.c.l.b16 %v6124
    %v6211 = vunpack.c.l.b16 %v6125
    %v6212 = vunpack.c.l.b16 %v6126
    %v6213 = vunpack.c.l.b16 %v6127
    %v6214 = vunpack.c.l.b16 %v6128
    %v6215 = vunpack.c.l.b16 %v6129
    %v6216 = vunpack.c.l.b16 %v6130
    %v6217 = vunpack.c.l.b16 %v6131
    %v6218 = vpack.c.b16 %v6206, %v6205
    %v6219 = vpack.c.b16 %v6208, %v6207
    %v6220 = vpack.c.b16 %v6210, %v6209
    %v6221 = vpack.c.b16 %v6212, %v6211
    %v6222 = vpack.c.b16 %v6214, %v6213
    %v6223 = vpack.c.b16 %v6216, %v6215
    %v6224 = vpack.c.b16 %v6217, %v6217
    %v6232 = vsel %vm647, %v6177, 0
    %v6235 = vsel %vm647, %v6179, 0
    %v6238 = vsel %vm647, %v6181, 0
    %v6241 = vsel %vm647, %v6183, 0
    %v6244 = vsel %vm647, %v6185, 0
    %v6247 = vsel %vm647, %v6187, 0
    %v6250 = vsel %vm647, %v6189, 0
    %v6253 = vsel %vm647, %v6191, 0
    %v6256 = vsel %vm696, %v6224, 0
    %6258 = vmatprep.subr.bf16.mxu0 0
    %6259 = vmatpush1.bf16.msra.mxu0 0
    %6260 = vmatprep.subr.bf16.mxu0 0
    %6261 = vmatpush1.bf16.msra.mxu0 %v6256
    %6262 = vmatprep.subr.bf16.mxu0 0
    %6263 = vmatpush1.bf16.msra.mxu0 %v6223
    %6264 = vmatprep.subr.bf16.mxu0 0
    %6265 = vmatpush1.bf16.msra.mxu0 %v6222
    %6266 = vmatprep.subr.bf16.mxu0 0
    %6267 = vmatpush1.bf16.msra.mxu0 %v6221
    %6268 = vmatprep.subr.bf16.mxu0 0
    %6269 = vmatpush1.bf16.msra.mxu0 %v6220
    %6270 = vmatprep.subr.bf16.mxu0 0
    %6271 = vmatpush1.bf16.msra.mxu0 %v6219
    %6272 = vmatprep.subr.bf16.mxu0 0
    %6273 = vmatpush1.bf16.msra.mxu0 %v6218
    %6274 = vmatprep.subr.bf16.mxu0 0
    %6275 = vmatpush2.bf16.msra.mxu0 0
    %6276 = vmatprep.subr.bf16.mxu0 0
    %6277 = vmatpush2.bf16.msra.mxu0 0
    %6278 = vmatprep.subr.bf16.mxu0 0
    %6279 = vmatpush2.bf16.msra.mxu0 0
    %6280 = vmatprep.subr.bf16.mxu0 0
    %6281 = vmatpush2.bf16.msra.mxu0 0
    %6282 = vmatprep.subr.bf16.mxu0 0
    %6283 = vmatpush2.bf16.msra.mxu0 0
    %6284 = vmatprep.subr.bf16.mxu0 0
    %6285 = vmatpush2.bf16.msra.mxu0 0
    %6286 = vmatprep.subr.bf16.mxu0 0
    %6287 = vmatpush2.bf16.msra.mxu0 0
    %6288 = vmatprep.subr.bf16.mxu0 0
    %6289 = vmatpush2.bf16.msra.mxu0 0
    %6290 = vmatprep.mubr.bf16.mxu0 0
    %6291 = vmatmul.mubr.bf16.gmra.mxu0 %v6232
    %v6292 = vpop.f32.mrf.mxu0
    %v6293 = vadd.f32 0.0, %v6292
    %v6294 = vpop.f32.mrf.mxu0
    %v6295 = vpop.f32.mrf.mxu0
    %v6296 = vadd.f32 0.0, %v6295
    %v6297 = vpop.f32.mrf.mxu0
    %6298 = vmatprep.mubr.bf16.mxu0 0
    %6299 = vmatmul.mubr.bf16.gmra.mxu0 %v6235
    %v6300 = vpop.f32.mrf.mxu0
    %v6301 = vadd.f32 0.0, %v6300
    %v6302 = vpop.f32.mrf.mxu0
    %v6303 = vpop.f32.mrf.mxu0
    %v6304 = vadd.f32 0.0, %v6303
    %v6305 = vpop.f32.mrf.mxu0
    %6306 = vmatprep.mubr.bf16.mxu0 0
    %6307 = vmatmul.mubr.bf16.gmra.mxu0 %v6238
    %v6308 = vpop.f32.mrf.mxu0
    %v6309 = vadd.f32 0.0, %v6308
    %v6310 = vpop.f32.mrf.mxu0
    %v6311 = vpop.f32.mrf.mxu0
    %v6312 = vadd.f32 0.0, %v6311
    %v6313 = vpop.f32.mrf.mxu0
    %6314 = vmatprep.mubr.bf16.mxu0 0
    %6315 = vmatmul.mubr.bf16.gmra.mxu0 %v6241
    %v6316 = vpop.f32.mrf.mxu0
    %v6317 = vadd.f32 0.0, %v6316
    %v6318 = vpop.f32.mrf.mxu0
    %v6319 = vpop.f32.mrf.mxu0
    %v6320 = vadd.f32 0.0, %v6319
    %v6321 = vpop.f32.mrf.mxu0
    %6322 = vmatprep.mubr.bf16.mxu0 0
    %6323 = vmatmul.mubr.bf16.gmra.mxu0 %v6244
    %v6324 = vpop.f32.mrf.mxu0
    %v6325 = vadd.f32 0.0, %v6324
    %v6326 = vpop.f32.mrf.mxu0
    %v6327 = vpop.f32.mrf.mxu0
    %v6328 = vadd.f32 0.0, %v6327
    %v6329 = vpop.f32.mrf.mxu0
    %6330 = vmatprep.mubr.bf16.mxu0 0
    %6331 = vmatmul.mubr.bf16.gmra.mxu0 %v6247
    %v6332 = vpop.f32.mrf.mxu0
    %v6333 = vadd.f32 0.0, %v6332
    %v6334 = vpop.f32.mrf.mxu0
    %v6335 = vpop.f32.mrf.mxu0
    %v6336 = vadd.f32 0.0, %v6335
    %v6337 = vpop.f32.mrf.mxu0
    %6338 = vmatprep.mubr.bf16.mxu0 0
    %6339 = vmatmul.mubr.bf16.gmra.mxu0 %v6250
    %v6340 = vpop.f32.mrf.mxu0
    %v6341 = vadd.f32 0.0, %v6340
    %v6342 = vpop.f32.mrf.mxu0
    %v6343 = vpop.f32.mrf.mxu0
    %v6344 = vadd.f32 0.0, %v6343
    %v6345 = vpop.f32.mrf.mxu0
    %6346 = vmatprep.mubr.bf16.mxu0 0
    %6347 = vmatmul.mubr.bf16.gmra.mxu0 %v6253
    %v6348 = vpop.f32.mrf.mxu0
    %v6349 = vadd.f32 0.0, %v6348
    %v6350 = vpop.f32.mrf.mxu0
    %v6351 = vpop.f32.mrf.mxu0
    %v6352 = vadd.f32 0.0, %v6351
    %v6353 = vpop.f32.mrf.mxu0
    %6354 = vdwg.mxu0
    %v6355 = vadd.f32 %v6085, %v6293
    %v6356 = vadd.f32 %v6086, %v6296
    %v6357 = vadd.f32 %v6087, %v6301
    %v6358 = vadd.f32 %v6088, %v6304
    %v6359 = vadd.f32 %v6089, %v6309
    %v6360 = vadd.f32 %v6090, %v6312
    %v6361 = vadd.f32 %v6091, %v6317
    %v6362 = vadd.f32 %v6092, %v6320
    %v6363 = vadd.f32 %v6093, %v6325
    %v6364 = vadd.f32 %v6094, %v6328
    %v6365 = vadd.f32 %v6095, %v6333
    %v6366 = vadd.f32 %v6096, %v6336
    %v6367 = vadd.f32 %v6097, %v6341
    %v6368 = vadd.f32 %v6098, %v6344
    %v6369 = vadd.f32 %v6099, %v6349
    %v6370 = vadd.f32 %v6100, %v6352
    %v6371 = vld [vmem:[#allocation2 + $0x74] sm:$0xf]
    %s6372 = scalar_lea.vmem %s5, 1144
    %v6373 = vld [vmem:[%s6372] sm:$0xf]
    %v6374 = vld [vmem:[%s6372 + $0x4] sm:$0xf]
    %v6375 = vld [vmem:[%s6372 + $0x8] sm:$0xf]
    %v6376 = vld [vmem:[%s6372 + $0xc] sm:$0xf]
    %v6377 = vld [vmem:[%s6372 + $0x10] sm:$0xf]
    %v6378 = vld [vmem:[%s6372 + $0x14] sm:$0xf]
    %v6379 = vld [vmem:[%s6372 + $0x18] sm:$0xf]
    %v6380 = vld [vmem:[%s6372 + $0x1c] sm:$0xf]
    %v6381 = vld [vmem:[%s6372 + $0x20] sm:$0xf]
    %v6382 = vld [vmem:[%s6372 + $0x24] sm:$0xf]
    %v6383 = vld [vmem:[%s6372 + $0x28] sm:$0xf]
    %v6384 = vld [vmem:[%s6372 + $0x2c] sm:$0xf]
    %v6385 = vld [vmem:[%s6372 + $0x30] sm:$0x3]
    %v6387 = vunpack.c.l.b16 %v6371
    %v6388 = vpack.c.b16 %v6151, %v6150
    %v6389 = vpack.c.b16 %v6153, %v6152
    %v6390 = vpack.c.b16 %v6155, %v6154
    %v6391 = vpack.c.b16 %v6157, %v6156
    %v6392 = vpack.c.b16 %v6159, %v6158
    %v6393 = vpack.c.b16 %v6161, %v6160
    %v6394 = vpack.c.b16 %v6163, %v6162
    %v6395 = vpack.c.b16 %v6387, %v6164
    %v6409 = vunpack.c.l.b16 %v6373
    %v6410 = vunpack.c.l.b16 %v6374
    %v6411 = vunpack.c.l.b16 %v6375
    %v6412 = vunpack.c.l.b16 %v6376
    %v6413 = vunpack.c.l.b16 %v6377
    %v6414 = vunpack.c.l.b16 %v6378
    %v6415 = vunpack.c.l.b16 %v6379
    %v6416 = vunpack.c.l.b16 %v6380
    %v6417 = vunpack.c.l.b16 %v6381
    %v6418 = vunpack.c.l.b16 %v6382
    %v6419 = vunpack.c.l.b16 %v6383
    %v6420 = vunpack.c.l.b16 %v6384
    %v6421 = vunpack.c.l.b16 %v6385
    %v6422 = vpack.c.b16 %v6410, %v6409
    %v6423 = vpack.c.b16 %v6412, %v6411
    %v6424 = vpack.c.b16 %v6414, %v6413
    %v6425 = vpack.c.b16 %v6416, %v6415
    %v6426 = vpack.c.b16 %v6418, %v6417
    %v6427 = vpack.c.b16 %v6420, %v6419
    %v6428 = vpack.c.b16 %v6421, %v6421
    %v6436 = vsel %vm647, %v6388, 0
    %v6439 = vsel %vm647, %v6389, 0
    %v6442 = vsel %vm647, %v6390, 0
    %v6445 = vsel %vm647, %v6391, 0
    %v6448 = vsel %vm647, %v6392, 0
    %v6451 = vsel %vm647, %v6393, 0
    %v6454 = vsel %vm647, %v6394, 0
    %v6457 = vsel %vm647, %v6395, 0
    %v6460 = vsel %vm696, %v6428, 0
    %6462 = vmatprep.subr.bf16.mxu0 0
    %6463 = vmatpush1.bf16.msra.mxu0 0
    %6464 = vmatprep.subr.bf16.mxu0 0
    %6465 = vmatpush1.bf16.msra.mxu0 %v6460
    %6466 = vmatprep.subr.bf16.mxu0 0
    %6467 = vmatpush1.bf16.msra.mxu0 %v6427
    %6468 = vmatprep.subr.bf16.mxu0 0
    %6469 = vmatpush1.bf16.msra.mxu0 %v6426
    %6470 = vmatprep.subr.bf16.mxu0 0
    %6471 = vmatpush1.bf16.msra.mxu0 %v6425
    %6472 = vmatprep.subr.bf16.mxu0 0
    %6473 = vmatpush1.bf16.msra.mxu0 %v6424
    %6474 = vmatprep.subr.bf16.mxu0 0
    %6475 = vmatpush1.bf16.msra.mxu0 %v6423
    %6476 = vmatprep.subr.bf16.mxu0 0
    %6477 = vmatpush1.bf16.msra.mxu0 %v6422
    %6478 = vmatprep.subr.bf16.mxu0 0
    %6479 = vmatpush2.bf16.msra.mxu0 0
    %6480 = vmatprep.subr.bf16.mxu0 0
    %6481 = vmatpush2.bf16.msra.mxu0 0
    %6482 = vmatprep.subr.bf16.mxu0 0
    %6483 = vmatpush2.bf16.msra.mxu0 0
    %6484 = vmatprep.subr.bf16.mxu0 0
    %6485 = vmatpush2.bf16.msra.mxu0 0
    %6486 = vmatprep.subr.bf16.mxu0 0
    %6487 = vmatpush2.bf16.msra.mxu0 0
    %6488 = vmatprep.subr.bf16.mxu0 0
    %6489 = vmatpush2.bf16.msra.mxu0 0
    %6490 = vmatprep.subr.bf16.mxu0 0
    %6491 = vmatpush2.bf16.msra.mxu0 0
    %6492 = vmatprep.subr.bf16.mxu0 0
    %6493 = vmatpush2.bf16.msra.mxu0 0
    %6494 = vmatprep.mubr.bf16.mxu0 0
    %6495 = vmatmul.mubr.bf16.gmra.mxu0 %v6436
    %v6496 = vpop.f32.mrf.mxu0
    %v6497 = vadd.f32 0.0, %v6496
    %v6498 = vpop.f32.mrf.mxu0
    %v6499 = vpop.f32.mrf.mxu0
    %v6500 = vadd.f32 0.0, %v6499
    %v6501 = vpop.f32.mrf.mxu0
    %6502 = vmatprep.mubr.bf16.mxu0 0
    %6503 = vmatmul.mubr.bf16.gmra.mxu0 %v6439
    %v6504 = vpop.f32.mrf.mxu0
    %v6505 = vadd.f32 0.0, %v6504
    %v6506 = vpop.f32.mrf.mxu0
    %v6507 = vpop.f32.mrf.mxu0
    %v6508 = vadd.f32 0.0, %v6507
    %v6509 = vpop.f32.mrf.mxu0
    %6510 = vmatprep.mubr.bf16.mxu0 0
    %6511 = vmatmul.mubr.bf16.gmra.mxu0 %v6442
    %v6512 = vpop.f32.mrf.mxu0
    %v6513 = vadd.f32 0.0, %v6512
    %v6514 = vpop.f32.mrf.mxu0
    %v6515 = vpop.f32.mrf.mxu0
    %v6516 = vadd.f32 0.0, %v6515
    %v6517 = vpop.f32.mrf.mxu0
    %6518 = vmatprep.mubr.bf16.mxu0 0
    %6519 = vmatmul.mubr.bf16.gmra.mxu0 %v6445
    %v6520 = vpop.f32.mrf.mxu0
    %v6521 = vadd.f32 0.0, %v6520
    %v6522 = vpop.f32.mrf.mxu0
    %v6523 = vpop.f32.mrf.mxu0
    %v6524 = vadd.f32 0.0, %v6523
    %v6525 = vpop.f32.mrf.mxu0
    %6526 = vmatprep.mubr.bf16.mxu0 0
    %6527 = vmatmul.mubr.bf16.gmra.mxu0 %v6448
    %v6528 = vpop.f32.mrf.mxu0
    %v6529 = vadd.f32 0.0, %v6528
    %v6530 = vpop.f32.mrf.mxu0
    %v6531 = vpop.f32.mrf.mxu0
    %v6532 = vadd.f32 0.0, %v6531
    %v6533 = vpop.f32.mrf.mxu0
    %6534 = vmatprep.mubr.bf16.mxu0 0
    %6535 = vmatmul.mubr.bf16.gmra.mxu0 %v6451
    %v6536 = vpop.f32.mrf.mxu0
    %v6537 = vadd.f32 0.0, %v6536
    %v6538 = vpop.f32.mrf.mxu0
    %v6539 = vpop.f32.mrf.mxu0
    %v6540 = vadd.f32 0.0, %v6539
    %v6541 = vpop.f32.mrf.mxu0
    %6542 = vmatprep.mubr.bf16.mxu0 0
    %6543 = vmatmul.mubr.bf16.gmra.mxu0 %v6454
    %v6544 = vpop.f32.mrf.mxu0
    %v6545 = vadd.f32 0.0, %v6544
    %v6546 = vpop.f32.mrf.mxu0
    %v6547 = vpop.f32.mrf.mxu0
    %v6548 = vadd.f32 0.0, %v6547
    %v6549 = vpop.f32.mrf.mxu0
    %6550 = vmatprep.mubr.bf16.mxu0 0
    %6551 = vmatmul.mubr.bf16.gmra.mxu0 %v6457
    %v6552 = vpop.f32.mrf.mxu0
    %v6553 = vadd.f32 0.0, %v6552
    %v6554 = vpop.f32.mrf.mxu0
    %v6555 = vpop.f32.mrf.mxu0
    %v6556 = vadd.f32 0.0, %v6555
    %v6557 = vpop.f32.mrf.mxu0
    %6558 = vdwg.mxu0
    %v6559 = vadd.f32 %v6355, %v6497
    %v6560 = vadd.f32 %v6356, %v6500
    %v6561 = vadd.f32 %v6357, %v6505
    %v6562 = vadd.f32 %v6358, %v6508
    %v6563 = vadd.f32 %v6359, %v6513
    %v6564 = vadd.f32 %v6360, %v6516
    %v6565 = vadd.f32 %v6361, %v6521
    %v6566 = vadd.f32 %v6362, %v6524
    %v6567 = vadd.f32 %v6363, %v6529
    %v6568 = vadd.f32 %v6364, %v6532
    %v6569 = vadd.f32 %v6365, %v6537
    %v6570 = vadd.f32 %v6366, %v6540
    %v6571 = vadd.f32 %v6367, %v6545
    %v6572 = vadd.f32 %v6368, %v6548
    %v6573 = vadd.f32 %v6369, %v6553
    %v6574 = vadd.f32 %v6370, %v6556
    %v6575 = vld [vmem:[#allocation2 + $0x38] sm:$0xe]
    %v6576 = vld [vmem:[#allocation2 + $0x3c] sm:$0xf]
    %v6577 = vld [vmem:[#allocation2 + $0x40] sm:$0xf]
    %v6578 = vld [vmem:[#allocation2 + $0x44] sm:$0xf]
    %v6579 = vld [vmem:[#allocation2 + $0x48] sm:$0xf]
    %v6580 = vld [vmem:[#allocation2 + $0x4c] sm:$0xf]
    %v6581 = vld [vmem:[#allocation2 + $0x50] sm:$0xf]
    %v6582 = vld [vmem:[#allocation2 + $0x54] sm:$0xf]
    %v6583 = vld [vmem:[#allocation2 + $0x58] sm:$0xf]
    %v6584 = vld [vmem:[#allocation2 + $0x5c] sm:$0xf]
    %v6585 = vld [vmem:[#allocation2 + $0x60] sm:$0xf]
    %v6586 = vld [vmem:[#allocation2 + $0x64] sm:$0xf]
    %v6587 = vld [vmem:[#allocation2 + $0x68] sm:$0xf]
    %v6588 = vld [vmem:[#allocation2 + $0x6c] sm:$0xf]
    %v6589 = vld [vmem:[#allocation2 + $0x70] sm:$0xf]
    %v6590 = vld [vmem:[#allocation2 + $0x74] sm:$0xf]
    %v6591 = vld [vmem:[#allocation2 + $0x78] sm:$0x1]
    %s6592 = scalar_lea.vmem %s5, 1196
    %v6593 = vld [vmem:[%s6592] sm:$0xf]
    %v6594 = vld [vmem:[%s6592 + $0x4] sm:$0xf]
    %v6595 = vld [vmem:[%s6592 + $0x8] sm:$0xf]
    %v6596 = vld [vmem:[%s6592 + $0xc] sm:$0xf]
    %v6597 = vld [vmem:[%s6592 + $0x10] sm:$0xf]
    %v6598 = vld [vmem:[%s6592 + $0x14] sm:$0xf]
    %v6599 = vld [vmem:[%s6592 + $0x18] sm:$0xf]
    %v6600 = vld [vmem:[%s6592 + $0x1c] sm:$0xf]
    %v6601 = vld [vmem:[%s6592 + $0x20] sm:$0xf]
    %v6602 = vld [vmem:[%s6592 + $0x24] sm:$0xf]
    %v6603 = vld [vmem:[%s6592 + $0x28] sm:$0xf]
    %v6604 = vld [vmem:[%s6592 + $0x2c] sm:$0xf]
    %v6605 = vld [vmem:[%s6592 + $0x30] sm:$0x3]
    %v6623 = vunpack.c.l.b16 %v6575
    %v6624 = vunpack.c.l.b16 %v6576
    %v6625 = vunpack.c.l.b16 %v6577
    %v6626 = vunpack.c.l.b16 %v6578
    %v6627 = vunpack.c.l.b16 %v6579
    %v6628 = vunpack.c.l.b16 %v6580
    %v6629 = vunpack.c.l.b16 %v6581
    %v6630 = vunpack.c.l.b16 %v6582
    %v6631 = vunpack.c.l.b16 %v6583
    %v6632 = vunpack.c.l.b16 %v6584
    %v6633 = vunpack.c.l.b16 %v6585
    %v6634 = vunpack.c.l.b16 %v6586
    %v6635 = vunpack.c.l.b16 %v6587
    %v6636 = vunpack.c.l.b16 %v6588
    %v6637 = vunpack.c.l.b16 %v6589
    %v6638 = vunpack.c.l.b16 %v6590
    %v6639 = vunpack.c.l.b16 %v6591
    %v6640 = vpack.c.b16 %v6624, %v6623
    %v6641 = vpack.c.b16 %v6626, %v6625
    %v6642 = vpack.c.b16 %v6628, %v6627
    %v6643 = vpack.c.b16 %v6630, %v6629
    %v6644 = vpack.c.b16 %v6632, %v6631
    %v6645 = vpack.c.b16 %v6634, %v6633
    %v6646 = vpack.c.b16 %v6636, %v6635
    %v6647 = vpack.c.b16 %v6638, %v6637
    %v6648 = vpack.c.b16 %v6639, %v6639
    %v6649 = vrot.slane %v6640, 1
    %v6650 = vrot.slane %v6641, 1
    %v6651 = vsel %vm1302, %v6649, %v6650
    %v6652 = vrot.slane %v6642, 1
    %v6653 = vsel %vm1302, %v6650, %v6652
    %v6654 = vrot.slane %v6643, 1
    %v6655 = vsel %vm1302, %v6652, %v6654
    %v6656 = vrot.slane %v6644, 1
    %v6657 = vsel %vm1302, %v6654, %v6656
    %v6658 = vrot.slane %v6645, 1
    %v6659 = vsel %vm1302, %v6656, %v6658
    %v6660 = vrot.slane %v6646, 1
    %v6661 = vsel %vm1302, %v6658, %v6660
    %v6662 = vrot.slane %v6647, 1
    %v6663 = vsel %vm1302, %v6660, %v6662
    %v6664 = vrot.slane %v6648, 1
    %v6665 = vsel %vm1302, %v6662, %v6664
    %v6679 = vunpack.c.l.b16 %v6593
    %v6680 = vunpack.c.l.b16 %v6594
    %v6681 = vunpack.c.l.b16 %v6595
    %v6682 = vunpack.c.l.b16 %v6596
    %v6683 = vunpack.c.l.b16 %v6597
    %v6684 = vunpack.c.l.b16 %v6598
    %v6685 = vunpack.c.l.b16 %v6599
    %v6686 = vunpack.c.l.b16 %v6600
    %v6687 = vunpack.c.l.b16 %v6601
    %v6688 = vunpack.c.l.b16 %v6602
    %v6689 = vunpack.c.l.b16 %v6603
    %v6690 = vunpack.c.l.b16 %v6604
    %v6691 = vunpack.c.l.b16 %v6605
    %v6692 = vpack.c.b16 %v6680, %v6679
    %v6693 = vpack.c.b16 %v6682, %v6681
    %v6694 = vpack.c.b16 %v6684, %v6683
    %v6695 = vpack.c.b16 %v6686, %v6685
    %v6696 = vpack.c.b16 %v6688, %v6687
    %v6697 = vpack.c.b16 %v6690, %v6689
    %v6698 = vpack.c.b16 %v6691, %v6691
    %v6706 = vsel %vm647, %v6651, 0
    %v6709 = vsel %vm647, %v6653, 0
    %v6712 = vsel %vm647, %v6655, 0
    %v6715 = vsel %vm647, %v6657, 0
    %v6718 = vsel %vm647, %v6659, 0
    %v6721 = vsel %vm647, %v6661, 0
    %v6724 = vsel %vm647, %v6663, 0
    %v6727 = vsel %vm647, %v6665, 0
    %v6730 = vsel %vm696, %v6698, 0
    %6732 = vmatprep.subr.bf16.mxu0 0
    %6733 = vmatpush1.bf16.msra.mxu0 0
    %6734 = vmatprep.subr.bf16.mxu0 0
    %6735 = vmatpush1.bf16.msra.mxu0 %v6730
    %6736 = vmatprep.subr.bf16.mxu0 0
    %6737 = vmatpush1.bf16.msra.mxu0 %v6697
    %6738 = vmatprep.subr.bf16.mxu0 0
    %6739 = vmatpush1.bf16.msra.mxu0 %v6696
    %6740 = vmatprep.subr.bf16.mxu0 0
    %6741 = vmatpush1.bf16.msra.mxu0 %v6695
    %6742 = vmatprep.subr.bf16.mxu0 0
    %6743 = vmatpush1.bf16.msra.mxu0 %v6694
    %6744 = vmatprep.subr.bf16.mxu0 0
    %6745 = vmatpush1.bf16.msra.mxu0 %v6693
    %6746 = vmatprep.subr.bf16.mxu0 0
    %6747 = vmatpush1.bf16.msra.mxu0 %v6692
    %6748 = vmatprep.subr.bf16.mxu0 0
    %6749 = vmatpush2.bf16.msra.mxu0 0
    %6750 = vmatprep.subr.bf16.mxu0 0
    %6751 = vmatpush2.bf16.msra.mxu0 0
    %6752 = vmatprep.subr.bf16.mxu0 0
    %6753 = vmatpush2.bf16.msra.mxu0 0
    %6754 = vmatprep.subr.bf16.mxu0 0
    %6755 = vmatpush2.bf16.msra.mxu0 0
    %6756 = vmatprep.subr.bf16.mxu0 0
    %6757 = vmatpush2.bf16.msra.mxu0 0
    %6758 = vmatprep.subr.bf16.mxu0 0
    %6759 = vmatpush2.bf16.msra.mxu0 0
    %6760 = vmatprep.subr.bf16.mxu0 0
    %6761 = vmatpush2.bf16.msra.mxu0 0
    %6762 = vmatprep.subr.bf16.mxu0 0
    %6763 = vmatpush2.bf16.msra.mxu0 0
    %6764 = vmatprep.mubr.bf16.mxu0 0
    %6765 = vmatmul.mubr.bf16.gmra.mxu0 %v6706
    %v6766 = vpop.f32.mrf.mxu0
    %v6767 = vadd.f32 0.0, %v6766
    %v6768 = vpop.f32.mrf.mxu0
    %v6769 = vpop.f32.mrf.mxu0
    %v6770 = vadd.f32 0.0, %v6769
    %v6771 = vpop.f32.mrf.mxu0
    %6772 = vmatprep.mubr.bf16.mxu0 0
    %6773 = vmatmul.mubr.bf16.gmra.mxu0 %v6709
    %v6774 = vpop.f32.mrf.mxu0
    %v6775 = vadd.f32 0.0, %v6774
    %v6776 = vpop.f32.mrf.mxu0
    %v6777 = vpop.f32.mrf.mxu0
    %v6778 = vadd.f32 0.0, %v6777
    %v6779 = vpop.f32.mrf.mxu0
    %6780 = vmatprep.mubr.bf16.mxu0 0
    %6781 = vmatmul.mubr.bf16.gmra.mxu0 %v6712
    %v6782 = vpop.f32.mrf.mxu0
    %v6783 = vadd.f32 0.0, %v6782
    %v6784 = vpop.f32.mrf.mxu0
    %v6785 = vpop.f32.mrf.mxu0
    %v6786 = vadd.f32 0.0, %v6785
    %v6787 = vpop.f32.mrf.mxu0
    %6788 = vmatprep.mubr.bf16.mxu0 0
    %6789 = vmatmul.mubr.bf16.gmra.mxu0 %v6715
    %v6790 = vpop.f32.mrf.mxu0
    %v6791 = vadd.f32 0.0, %v6790
    %v6792 = vpop.f32.mrf.mxu0
    %v6793 = vpop.f32.mrf.mxu0
    %v6794 = vadd.f32 0.0, %v6793
    %v6795 = vpop.f32.mrf.mxu0
    %6796 = vmatprep.mubr.bf16.mxu0 0
    %6797 = vmatmul.mubr.bf16.gmra.mxu0 %v6718
    %v6798 = vpop.f32.mrf.mxu0
    %v6799 = vadd.f32 0.0, %v6798
    %v6800 = vpop.f32.mrf.mxu0
    %v6801 = vpop.f32.mrf.mxu0
    %v6802 = vadd.f32 0.0, %v6801
    %v6803 = vpop.f32.mrf.mxu0
    %6804 = vmatprep.mubr.bf16.mxu0 0
    %6805 = vmatmul.mubr.bf16.gmra.mxu0 %v6721
    %v6806 = vpop.f32.mrf.mxu0
    %v6807 = vadd.f32 0.0, %v6806
    %v6808 = vpop.f32.mrf.mxu0
    %v6809 = vpop.f32.mrf.mxu0
    %v6810 = vadd.f32 0.0, %v6809
    %v6811 = vpop.f32.mrf.mxu0
    %6812 = vmatprep.mubr.bf16.mxu0 0
    %6813 = vmatmul.mubr.bf16.gmra.mxu0 %v6724
    %v6814 = vpop.f32.mrf.mxu0
    %v6815 = vadd.f32 0.0, %v6814
    %v6816 = vpop.f32.mrf.mxu0
    %v6817 = vpop.f32.mrf.mxu0
    %v6818 = vadd.f32 0.0, %v6817
    %v6819 = vpop.f32.mrf.mxu0
    %6820 = vmatprep.mubr.bf16.mxu0 0
    %6821 = vmatmul.mubr.bf16.gmra.mxu0 %v6727
    %v6822 = vpop.f32.mrf.mxu0
    %v6823 = vadd.f32 0.0, %v6822
    %v6824 = vpop.f32.mrf.mxu0
    %v6825 = vpop.f32.mrf.mxu0
    %v6826 = vadd.f32 0.0, %v6825
    %v6827 = vpop.f32.mrf.mxu0
    %6828 = vdwg.mxu0
    %v6829 = vadd.f32 %v6559, %v6767
    %v6830 = vadd.f32 %v6560, %v6770
    %v6831 = vadd.f32 %v6561, %v6775
    %v6832 = vadd.f32 %v6562, %v6778
    %v6833 = vadd.f32 %v6563, %v6783
    %v6834 = vadd.f32 %v6564, %v6786
    %v6835 = vadd.f32 %v6565, %v6791
    %v6836 = vadd.f32 %v6566, %v6794
    %v6837 = vadd.f32 %v6567, %v6799
    %v6838 = vadd.f32 %v6568, %v6802
    %v6839 = vadd.f32 %v6569, %v6807
    %v6840 = vadd.f32 %v6570, %v6810
    %v6841 = vadd.f32 %v6571, %v6815
    %v6842 = vadd.f32 %v6572, %v6818
    %v6843 = vadd.f32 %v6573, %v6823
    %v6844 = vadd.f32 %v6574, %v6826
    %v6845 = vld [vmem:[#allocation2 + $0x78] sm:$0xf]
    %s6846 = scalar_lea.vmem %s5, 1248
    %v6847 = vld [vmem:[%s6846] sm:$0xf]
    %v6848 = vld [vmem:[%s6846 + $0x4] sm:$0xf]
    %v6849 = vld [vmem:[%s6846 + $0x8] sm:$0xf]
    %v6850 = vld [vmem:[%s6846 + $0xc] sm:$0xf]
    %v6851 = vld [vmem:[%s6846 + $0x10] sm:$0xf]
    %v6852 = vld [vmem:[%s6846 + $0x14] sm:$0xf]
    %v6853 = vld [vmem:[%s6846 + $0x18] sm:$0xf]
    %v6854 = vld [vmem:[%s6846 + $0x1c] sm:$0xf]
    %v6855 = vld [vmem:[%s6846 + $0x20] sm:$0xf]
    %v6856 = vld [vmem:[%s6846 + $0x24] sm:$0xf]
    %v6857 = vld [vmem:[%s6846 + $0x28] sm:$0xf]
    %v6858 = vld [vmem:[%s6846 + $0x2c] sm:$0xf]
    %v6859 = vld [vmem:[%s6846 + $0x30] sm:$0x3]
    %v6861 = vunpack.c.l.b16 %v6845
    %v6862 = vpack.c.b16 %v6625, %v6624
    %v6863 = vpack.c.b16 %v6627, %v6626
    %v6864 = vpack.c.b16 %v6629, %v6628
    %v6865 = vpack.c.b16 %v6631, %v6630
    %v6866 = vpack.c.b16 %v6633, %v6632
    %v6867 = vpack.c.b16 %v6635, %v6634
    %v6868 = vpack.c.b16 %v6637, %v6636
    %v6869 = vpack.c.b16 %v6861, %v6638
    %v6883 = vunpack.c.l.b16 %v6847
    %v6884 = vunpack.c.l.b16 %v6848
    %v6885 = vunpack.c.l.b16 %v6849
    %v6886 = vunpack.c.l.b16 %v6850
    %v6887 = vunpack.c.l.b16 %v6851
    %v6888 = vunpack.c.l.b16 %v6852
    %v6889 = vunpack.c.l.b16 %v6853
    %v6890 = vunpack.c.l.b16 %v6854
    %v6891 = vunpack.c.l.b16 %v6855
    %v6892 = vunpack.c.l.b16 %v6856
    %v6893 = vunpack.c.l.b16 %v6857
    %v6894 = vunpack.c.l.b16 %v6858
    %v6895 = vunpack.c.l.b16 %v6859
    %v6896 = vpack.c.b16 %v6884, %v6883
    %v6897 = vpack.c.b16 %v6886, %v6885
    %v6898 = vpack.c.b16 %v6888, %v6887
    %v6899 = vpack.c.b16 %v6890, %v6889
    %v6900 = vpack.c.b16 %v6892, %v6891
    %v6901 = vpack.c.b16 %v6894, %v6893
    %v6902 = vpack.c.b16 %v6895, %v6895
    %v6910 = vsel %vm647, %v6862, 0
    %v6913 = vsel %vm647, %v6863, 0
    %v6916 = vsel %vm647, %v6864, 0
    %v6919 = vsel %vm647, %v6865, 0
    %v6922 = vsel %vm647, %v6866, 0
    %v6925 = vsel %vm647, %v6867, 0
    %v6928 = vsel %vm647, %v6868, 0
    %v6931 = vsel %vm647, %v6869, 0
    %v6934 = vsel %vm696, %v6902, 0
    %6936 = vmatprep.subr.bf16.mxu0 0
    %6937 = vmatpush1.bf16.msra.mxu0 0
    %6938 = vmatprep.subr.bf16.mxu0 0
    %6939 = vmatpush1.bf16.msra.mxu0 %v6934
    %6940 = vmatprep.subr.bf16.mxu0 0
    %6941 = vmatpush1.bf16.msra.mxu0 %v6901
    %6942 = vmatprep.subr.bf16.mxu0 0
    %6943 = vmatpush1.bf16.msra.mxu0 %v6900
    %6944 = vmatprep.subr.bf16.mxu0 0
    %6945 = vmatpush1.bf16.msra.mxu0 %v6899
    %6946 = vmatprep.subr.bf16.mxu0 0
    %6947 = vmatpush1.bf16.msra.mxu0 %v6898
    %6948 = vmatprep.subr.bf16.mxu0 0
    %6949 = vmatpush1.bf16.msra.mxu0 %v6897
    %6950 = vmatprep.subr.bf16.mxu0 0
    %6951 = vmatpush1.bf16.msra.mxu0 %v6896
    %6952 = vmatprep.subr.bf16.mxu0 0
    %6953 = vmatpush2.bf16.msra.mxu0 0
    %6954 = vmatprep.subr.bf16.mxu0 0
    %6955 = vmatpush2.bf16.msra.mxu0 0
    %6956 = vmatprep.subr.bf16.mxu0 0
    %6957 = vmatpush2.bf16.msra.mxu0 0
    %6958 = vmatprep.subr.bf16.mxu0 0
    %6959 = vmatpush2.bf16.msra.mxu0 0
    %6960 = vmatprep.subr.bf16.mxu0 0
    %6961 = vmatpush2.bf16.msra.mxu0 0
    %6962 = vmatprep.subr.bf16.mxu0 0
    %6963 = vmatpush2.bf16.msra.mxu0 0
    %6964 = vmatprep.subr.bf16.mxu0 0
    %6965 = vmatpush2.bf16.msra.mxu0 0
    %6966 = vmatprep.subr.bf16.mxu0 0
    %6967 = vmatpush2.bf16.msra.mxu0 0
    %6968 = vmatprep.mubr.bf16.mxu0 0
    %6969 = vmatmul.mubr.bf16.gmra.mxu0 %v6910
    %v6970 = vpop.f32.mrf.mxu0
    %v6971 = vadd.f32 0.0, %v6970
    %v6972 = vpop.f32.mrf.mxu0
    %v6973 = vpop.f32.mrf.mxu0
    %v6974 = vadd.f32 0.0, %v6973
    %v6975 = vpop.f32.mrf.mxu0
    %6976 = vmatprep.mubr.bf16.mxu0 0
    %6977 = vmatmul.mubr.bf16.gmra.mxu0 %v6913
    %v6978 = vpop.f32.mrf.mxu0
    %v6979 = vadd.f32 0.0, %v6978
    %v6980 = vpop.f32.mrf.mxu0
    %v6981 = vpop.f32.mrf.mxu0
    %v6982 = vadd.f32 0.0, %v6981
    %v6983 = vpop.f32.mrf.mxu0
    %6984 = vmatprep.mubr.bf16.mxu0 0
    %6985 = vmatmul.mubr.bf16.gmra.mxu0 %v6916
    %v6986 = vpop.f32.mrf.mxu0
    %v6987 = vadd.f32 0.0, %v6986
    %v6988 = vpop.f32.mrf.mxu0
    %v6989 = vpop.f32.mrf.mxu0
    %v6990 = vadd.f32 0.0, %v6989
    %v6991 = vpop.f32.mrf.mxu0
    %6992 = vmatprep.mubr.bf16.mxu0 0
    %6993 = vmatmul.mubr.bf16.gmra.mxu0 %v6919
    %v6994 = vpop.f32.mrf.mxu0
    %v6995 = vadd.f32 0.0, %v6994
    %v6996 = vpop.f32.mrf.mxu0
    %v6997 = vpop.f32.mrf.mxu0
    %v6998 = vadd.f32 0.0, %v6997
    %v6999 = vpop.f32.mrf.mxu0
    %7000 = vmatprep.mubr.bf16.mxu0 0
    %7001 = vmatmul.mubr.bf16.gmra.mxu0 %v6922
    %v7002 = vpop.f32.mrf.mxu0
    %v7003 = vadd.f32 0.0, %v7002
    %v7004 = vpop.f32.mrf.mxu0
    %v7005 = vpop.f32.mrf.mxu0
    %v7006 = vadd.f32 0.0, %v7005
    %v7007 = vpop.f32.mrf.mxu0
    %7008 = vmatprep.mubr.bf16.mxu0 0
    %7009 = vmatmul.mubr.bf16.gmra.mxu0 %v6925
    %v7010 = vpop.f32.mrf.mxu0
    %v7011 = vadd.f32 0.0, %v7010
    %v7012 = vpop.f32.mrf.mxu0
    %v7013 = vpop.f32.mrf.mxu0
    %v7014 = vadd.f32 0.0, %v7013
    %v7015 = vpop.f32.mrf.mxu0
    %7016 = vmatprep.mubr.bf16.mxu0 0
    %7017 = vmatmul.mubr.bf16.gmra.mxu0 %v6928
    %v7018 = vpop.f32.mrf.mxu0
    %v7019 = vadd.f32 0.0, %v7018
    %v7020 = vpop.f32.mrf.mxu0
    %v7021 = vpop.f32.mrf.mxu0
    %v7022 = vadd.f32 0.0, %v7021
    %v7023 = vpop.f32.mrf.mxu0
    %7024 = vmatprep.mubr.bf16.mxu0 0
    %7025 = vmatmul.mubr.bf16.gmra.mxu0 %v6931
    %v7026 = vpop.f32.mrf.mxu0
    %v7027 = vadd.f32 0.0, %v7026
    %v7028 = vpop.f32.mrf.mxu0
    %v7029 = vpop.f32.mrf.mxu0
    %v7030 = vadd.f32 0.0, %v7029
    %v7031 = vpop.f32.mrf.mxu0
    %7032 = vdwg.mxu0
    %v7033 = vadd.f32 %v6829, %v6971
    %v7034 = vadd.f32 %v6830, %v6974
    %v7035 = vadd.f32 %v6831, %v6979
    %v7036 = vadd.f32 %v6832, %v6982
    %v7037 = vadd.f32 %v6833, %v6987
    %v7038 = vadd.f32 %v6834, %v6990
    %v7039 = vadd.f32 %v6835, %v6995
    %v7040 = vadd.f32 %v6836, %v6998
    %v7041 = vadd.f32 %v6837, %v7003
    %v7042 = vadd.f32 %v6838, %v7006
    %v7043 = vadd.f32 %v6839, %v7011
    %v7044 = vadd.f32 %v6840, %v7014
    %v7045 = vadd.f32 %v6841, %v7019
    %v7046 = vadd.f32 %v6842, %v7022
    %v7047 = vadd.f32 %v6843, %v7027
    %v7048 = vadd.f32 %v6844, %v7030
    %v7049 = vld [vmem:[#allocation2 + $0x3c] sm:$0xe]
    %v7050 = vld [vmem:[#allocation2 + $0x40] sm:$0xf]
    %v7051 = vld [vmem:[#allocation2 + $0x44] sm:$0xf]
    %v7052 = vld [vmem:[#allocation2 + $0x48] sm:$0xf]
    %v7053 = vld [vmem:[#allocation2 + $0x4c] sm:$0xf]
    %v7054 = vld [vmem:[#allocation2 + $0x50] sm:$0xf]
    %v7055 = vld [vmem:[#allocation2 + $0x54] sm:$0xf]
    %v7056 = vld [vmem:[#allocation2 + $0x58] sm:$0xf]
    %v7057 = vld [vmem:[#allocation2 + $0x5c] sm:$0xf]
    %v7058 = vld [vmem:[#allocation2 + $0x60] sm:$0xf]
    %v7059 = vld [vmem:[#allocation2 + $0x64] sm:$0xf]
    %v7060 = vld [vmem:[#allocation2 + $0x68] sm:$0xf]
    %v7061 = vld [vmem:[#allocation2 + $0x6c] sm:$0xf]
    %v7062 = vld [vmem:[#allocation2 + $0x70] sm:$0xf]
    %v7063 = vld [vmem:[#allocation2 + $0x74] sm:$0xf]
    %v7064 = vld [vmem:[#allocation2 + $0x78] sm:$0xf]
    %v7065 = vld [vmem:[#allocation2 + $0x7c] sm:$0x1]
    %s7066 = scalar_lea.vmem %s5, 1300
    %v7067 = vld [vmem:[%s7066] sm:$0xf]
    %v7068 = vld [vmem:[%s7066 + $0x4] sm:$0xf]
    %v7069 = vld [vmem:[%s7066 + $0x8] sm:$0xf]
    %v7070 = vld [vmem:[%s7066 + $0xc] sm:$0xf]
    %v7071 = vld [vmem:[%s7066 + $0x10] sm:$0xf]
    %v7072 = vld [vmem:[%s7066 + $0x14] sm:$0xf]
    %v7073 = vld [vmem:[%s7066 + $0x18] sm:$0xf]
    %v7074 = vld [vmem:[%s7066 + $0x1c] sm:$0xf]
    %v7075 = vld [vmem:[%s7066 + $0x20] sm:$0xf]
    %v7076 = vld [vmem:[%s7066 + $0x24] sm:$0xf]
    %v7077 = vld [vmem:[%s7066 + $0x28] sm:$0xf]
    %v7078 = vld [vmem:[%s7066 + $0x2c] sm:$0xf]
    %v7079 = vld [vmem:[%s7066 + $0x30] sm:$0x3]
    %v7097 = vunpack.c.l.b16 %v7049
    %v7098 = vunpack.c.l.b16 %v7050
    %v7099 = vunpack.c.l.b16 %v7051
    %v7100 = vunpack.c.l.b16 %v7052
    %v7101 = vunpack.c.l.b16 %v7053
    %v7102 = vunpack.c.l.b16 %v7054
    %v7103 = vunpack.c.l.b16 %v7055
    %v7104 = vunpack.c.l.b16 %v7056
    %v7105 = vunpack.c.l.b16 %v7057
    %v7106 = vunpack.c.l.b16 %v7058
    %v7107 = vunpack.c.l.b16 %v7059
    %v7108 = vunpack.c.l.b16 %v7060
    %v7109 = vunpack.c.l.b16 %v7061
    %v7110 = vunpack.c.l.b16 %v7062
    %v7111 = vunpack.c.l.b16 %v7063
    %v7112 = vunpack.c.l.b16 %v7064
    %v7113 = vunpack.c.l.b16 %v7065
    %v7114 = vpack.c.b16 %v7098, %v7097
    %v7115 = vpack.c.b16 %v7100, %v7099
    %v7116 = vpack.c.b16 %v7102, %v7101
    %v7117 = vpack.c.b16 %v7104, %v7103
    %v7118 = vpack.c.b16 %v7106, %v7105
    %v7119 = vpack.c.b16 %v7108, %v7107
    %v7120 = vpack.c.b16 %v7110, %v7109
    %v7121 = vpack.c.b16 %v7112, %v7111
    %v7122 = vpack.c.b16 %v7113, %v7113
    %v7123 = vrot.slane %v7114, 1
    %v7124 = vrot.slane %v7115, 1
    %v7125 = vsel %vm1302, %v7123, %v7124
    %v7126 = vrot.slane %v7116, 1
    %v7127 = vsel %vm1302, %v7124, %v7126
    %v7128 = vrot.slane %v7117, 1
    %v7129 = vsel %vm1302, %v7126, %v7128
    %v7130 = vrot.slane %v7118, 1
    %v7131 = vsel %vm1302, %v7128, %v7130
    %v7132 = vrot.slane %v7119, 1
    %v7133 = vsel %vm1302, %v7130, %v7132
    %v7134 = vrot.slane %v7120, 1
    %v7135 = vsel %vm1302, %v7132, %v7134
    %v7136 = vrot.slane %v7121, 1
    %v7137 = vsel %vm1302, %v7134, %v7136
    %v7138 = vrot.slane %v7122, 1
    %v7139 = vsel %vm1302, %v7136, %v7138
    %v7153 = vunpack.c.l.b16 %v7067
    %v7154 = vunpack.c.l.b16 %v7068
    %v7155 = vunpack.c.l.b16 %v7069
    %v7156 = vunpack.c.l.b16 %v7070
    %v7157 = vunpack.c.l.b16 %v7071
    %v7158 = vunpack.c.l.b16 %v7072
    %v7159 = vunpack.c.l.b16 %v7073
    %v7160 = vunpack.c.l.b16 %v7074
    %v7161 = vunpack.c.l.b16 %v7075
    %v7162 = vunpack.c.l.b16 %v7076
    %v7163 = vunpack.c.l.b16 %v7077
    %v7164 = vunpack.c.l.b16 %v7078
    %v7165 = vunpack.c.l.b16 %v7079
    %v7166 = vpack.c.b16 %v7154, %v7153
    %v7167 = vpack.c.b16 %v7156, %v7155
    %v7168 = vpack.c.b16 %v7158, %v7157
    %v7169 = vpack.c.b16 %v7160, %v7159
    %v7170 = vpack.c.b16 %v7162, %v7161
    %v7171 = vpack.c.b16 %v7164, %v7163
    %v7172 = vpack.c.b16 %v7165, %v7165
    %v7180 = vsel %vm647, %v7125, 0
    %v7183 = vsel %vm647, %v7127, 0
    %v7186 = vsel %vm647, %v7129, 0
    %v7189 = vsel %vm647, %v7131, 0
    %v7192 = vsel %vm647, %v7133, 0
    %v7195 = vsel %vm647, %v7135, 0
    %v7198 = vsel %vm647, %v7137, 0
    %v7201 = vsel %vm647, %v7139, 0
    %v7204 = vsel %vm696, %v7172, 0
    %7206 = vmatprep.subr.bf16.mxu0 0
    %7207 = vmatpush1.bf16.msra.mxu0 0
    %7208 = vmatprep.subr.bf16.mxu0 0
    %7209 = vmatpush1.bf16.msra.mxu0 %v7204
    %7210 = vmatprep.subr.bf16.mxu0 0
    %7211 = vmatpush1.bf16.msra.mxu0 %v7171
    %7212 = vmatprep.subr.bf16.mxu0 0
    %7213 = vmatpush1.bf16.msra.mxu0 %v7170
    %7214 = vmatprep.subr.bf16.mxu0 0
    %7215 = vmatpush1.bf16.msra.mxu0 %v7169
    %7216 = vmatprep.subr.bf16.mxu0 0
    %7217 = vmatpush1.bf16.msra.mxu0 %v7168
    %7218 = vmatprep.subr.bf16.mxu0 0
    %7219 = vmatpush1.bf16.msra.mxu0 %v7167
    %7220 = vmatprep.subr.bf16.mxu0 0
    %7221 = vmatpush1.bf16.msra.mxu0 %v7166
    %7222 = vmatprep.subr.bf16.mxu0 0
    %7223 = vmatpush2.bf16.msra.mxu0 0
    %7224 = vmatprep.subr.bf16.mxu0 0
    %7225 = vmatpush2.bf16.msra.mxu0 0
    %7226 = vmatprep.subr.bf16.mxu0 0
    %7227 = vmatpush2.bf16.msra.mxu0 0
    %7228 = vmatprep.subr.bf16.mxu0 0
    %7229 = vmatpush2.bf16.msra.mxu0 0
    %7230 = vmatprep.subr.bf16.mxu0 0
    %7231 = vmatpush2.bf16.msra.mxu0 0
    %7232 = vmatprep.subr.bf16.mxu0 0
    %7233 = vmatpush2.bf16.msra.mxu0 0
    %7234 = vmatprep.subr.bf16.mxu0 0
    %7235 = vmatpush2.bf16.msra.mxu0 0
    %7236 = vmatprep.subr.bf16.mxu0 0
    %7237 = vmatpush2.bf16.msra.mxu0 0
    %7238 = vmatprep.mubr.bf16.mxu0 0
    %7239 = vmatmul.mubr.bf16.gmra.mxu0 %v7180
    %v7240 = vpop.f32.mrf.mxu0
    %v7241 = vadd.f32 0.0, %v7240
    %v7242 = vpop.f32.mrf.mxu0
    %v7243 = vpop.f32.mrf.mxu0
    %v7244 = vadd.f32 0.0, %v7243
    %v7245 = vpop.f32.mrf.mxu0
    %7246 = vmatprep.mubr.bf16.mxu0 0
    %7247 = vmatmul.mubr.bf16.gmra.mxu0 %v7183
    %v7248 = vpop.f32.mrf.mxu0
    %v7249 = vadd.f32 0.0, %v7248
    %v7250 = vpop.f32.mrf.mxu0
    %v7251 = vpop.f32.mrf.mxu0
    %v7252 = vadd.f32 0.0, %v7251
    %v7253 = vpop.f32.mrf.mxu0
    %7254 = vmatprep.mubr.bf16.mxu0 0
    %7255 = vmatmul.mubr.bf16.gmra.mxu0 %v7186
    %v7256 = vpop.f32.mrf.mxu0
    %v7257 = vadd.f32 0.0, %v7256
    %v7258 = vpop.f32.mrf.mxu0
    %v7259 = vpop.f32.mrf.mxu0
    %v7260 = vadd.f32 0.0, %v7259
    %v7261 = vpop.f32.mrf.mxu0
    %7262 = vmatprep.mubr.bf16.mxu0 0
    %7263 = vmatmul.mubr.bf16.gmra.mxu0 %v7189
    %v7264 = vpop.f32.mrf.mxu0
    %v7265 = vadd.f32 0.0, %v7264
    %v7266 = vpop.f32.mrf.mxu0
    %v7267 = vpop.f32.mrf.mxu0
    %v7268 = vadd.f32 0.0, %v7267
    %v7269 = vpop.f32.mrf.mxu0
    %7270 = vmatprep.mubr.bf16.mxu0 0
    %7271 = vmatmul.mubr.bf16.gmra.mxu0 %v7192
    %v7272 = vpop.f32.mrf.mxu0
    %v7273 = vadd.f32 0.0, %v7272
    %v7274 = vpop.f32.mrf.mxu0
    %v7275 = vpop.f32.mrf.mxu0
    %v7276 = vadd.f32 0.0, %v7275
    %v7277 = vpop.f32.mrf.mxu0
    %7278 = vmatprep.mubr.bf16.mxu0 0
    %7279 = vmatmul.mubr.bf16.gmra.mxu0 %v7195
    %v7280 = vpop.f32.mrf.mxu0
    %v7281 = vadd.f32 0.0, %v7280
    %v7282 = vpop.f32.mrf.mxu0
    %v7283 = vpop.f32.mrf.mxu0
    %v7284 = vadd.f32 0.0, %v7283
    %v7285 = vpop.f32.mrf.mxu0
    %7286 = vmatprep.mubr.bf16.mxu0 0
    %7287 = vmatmul.mubr.bf16.gmra.mxu0 %v7198
    %v7288 = vpop.f32.mrf.mxu0
    %v7289 = vadd.f32 0.0, %v7288
    %v7290 = vpop.f32.mrf.mxu0
    %v7291 = vpop.f32.mrf.mxu0
    %v7292 = vadd.f32 0.0, %v7291
    %v7293 = vpop.f32.mrf.mxu0
    %7294 = vmatprep.mubr.bf16.mxu0 0
    %7295 = vmatmul.mubr.bf16.gmra.mxu0 %v7201
    %v7296 = vpop.f32.mrf.mxu0
    %v7297 = vadd.f32 0.0, %v7296
    %v7298 = vpop.f32.mrf.mxu0
    %v7299 = vpop.f32.mrf.mxu0
    %v7300 = vadd.f32 0.0, %v7299
    %v7301 = vpop.f32.mrf.mxu0
    %7302 = vdwg.mxu0
    %v7303 = vadd.f32 %v7033, %v7241
    %v7304 = vadd.f32 %v7034, %v7244
    %v7305 = vadd.f32 %v7035, %v7249
    %v7306 = vadd.f32 %v7036, %v7252
    %v7307 = vadd.f32 %v7037, %v7257
    %v7308 = vadd.f32 %v7038, %v7260
    %v7309 = vadd.f32 %v7039, %v7265
    %v7310 = vadd.f32 %v7040, %v7268
    %v7311 = vadd.f32 %v7041, %v7273
    %v7312 = vadd.f32 %v7042, %v7276
    %v7313 = vadd.f32 %v7043, %v7281
    %v7314 = vadd.f32 %v7044, %v7284
    %v7315 = vadd.f32 %v7045, %v7289
    %v7316 = vadd.f32 %v7046, %v7292
    %v7317 = vadd.f32 %v7047, %v7297
    %v7318 = vadd.f32 %v7048, %v7300
    %v7319 = vld [vmem:[#allocation2 + $0x3c] sm:$0xc]
    %v7320 = vld [vmem:[#allocation2 + $0x7c] sm:$0x3]
    %s7321 = scalar_lea.vmem %s5, 1352
    %v7322 = vld [vmem:[%s7321] sm:$0xf]
    %v7323 = vld [vmem:[%s7321 + $0x4] sm:$0xf]
    %v7324 = vld [vmem:[%s7321 + $0x8] sm:$0xf]
    %v7325 = vld [vmem:[%s7321 + $0xc] sm:$0xf]
    %v7326 = vld [vmem:[%s7321 + $0x10] sm:$0xf]
    %v7327 = vld [vmem:[%s7321 + $0x14] sm:$0xf]
    %v7328 = vld [vmem:[%s7321 + $0x18] sm:$0xf]
    %v7329 = vld [vmem:[%s7321 + $0x1c] sm:$0xf]
    %v7330 = vld [vmem:[%s7321 + $0x20] sm:$0xf]
    %v7331 = vld [vmem:[%s7321 + $0x24] sm:$0xf]
    %v7332 = vld [vmem:[%s7321 + $0x28] sm:$0xf]
    %v7333 = vld [vmem:[%s7321 + $0x2c] sm:$0xf]
    %v7334 = vld [vmem:[%s7321 + $0x30] sm:$0x3]
    %v7337 = vunpack.c.l.b16 %v7319
    %v7338 = vunpack.c.l.b16 %v7320
    %v7339 = vpack.c.b16 %v7098, %v7337
    %v7340 = vpack.c.b16 %v7338, %v7338
    %v7341 = vrot.slane %v7339, 2
    %v7342 = vrot.slane %v7115, 2
    %v7343 = vsel %vm1671, %v7341, %v7342
    %v7344 = vrot.slane %v7116, 2
    %v7345 = vsel %vm1671, %v7342, %v7344
    %v7346 = vrot.slane %v7117, 2
    %v7347 = vsel %vm1671, %v7344, %v7346
    %v7348 = vrot.slane %v7118, 2
    %v7349 = vsel %vm1671, %v7346, %v7348
    %v7350 = vrot.slane %v7119, 2
    %v7351 = vsel %vm1671, %v7348, %v7350
    %v7352 = vrot.slane %v7120, 2
    %v7353 = vsel %vm1671, %v7350, %v7352
    %v7354 = vrot.slane %v7121, 2
    %v7355 = vsel %vm1671, %v7352, %v7354
    %v7356 = vrot.slane %v7340, 2
    %v7357 = vsel %vm1671, %v7354, %v7356
    %v7371 = vunpack.c.l.b16 %v7322
    %v7372 = vunpack.c.l.b16 %v7323
    %v7373 = vunpack.c.l.b16 %v7324
    %v7374 = vunpack.c.l.b16 %v7325
    %v7375 = vunpack.c.l.b16 %v7326
    %v7376 = vunpack.c.l.b16 %v7327
    %v7377 = vunpack.c.l.b16 %v7328
    %v7378 = vunpack.c.l.b16 %v7329
    %v7379 = vunpack.c.l.b16 %v7330
    %v7380 = vunpack.c.l.b16 %v7331
    %v7381 = vunpack.c.l.b16 %v7332
    %v7382 = vunpack.c.l.b16 %v7333
    %v7383 = vunpack.c.l.b16 %v7334
    %v7384 = vpack.c.b16 %v7372, %v7371
    %v7385 = vpack.c.b16 %v7374, %v7373
    %v7386 = vpack.c.b16 %v7376, %v7375
    %v7387 = vpack.c.b16 %v7378, %v7377
    %v7388 = vpack.c.b16 %v7380, %v7379
    %v7389 = vpack.c.b16 %v7382, %v7381
    %v7390 = vpack.c.b16 %v7383, %v7383
    %v7398 = vsel %vm647, %v7343, 0
    %v7401 = vsel %vm647, %v7345, 0
    %v7404 = vsel %vm647, %v7347, 0
    %v7407 = vsel %vm647, %v7349, 0
    %v7410 = vsel %vm647, %v7351, 0
    %v7413 = vsel %vm647, %v7353, 0
    %v7416 = vsel %vm647, %v7355, 0
    %v7419 = vsel %vm647, %v7357, 0
    %v7422 = vsel %vm696, %v7390, 0
    %7424 = vmatprep.subr.bf16.mxu0 0
    %7425 = vmatpush1.bf16.msra.mxu0 0
    %7426 = vmatprep.subr.bf16.mxu0 0
    %7427 = vmatpush1.bf16.msra.mxu0 %v7422
    %7428 = vmatprep.subr.bf16.mxu0 0
    %7429 = vmatpush1.bf16.msra.mxu0 %v7389
    %7430 = vmatprep.subr.bf16.mxu0 0
    %7431 = vmatpush1.bf16.msra.mxu0 %v7388
    %7432 = vmatprep.subr.bf16.mxu0 0
    %7433 = vmatpush1.bf16.msra.mxu0 %v7387
    %7434 = vmatprep.subr.bf16.mxu0 0
    %7435 = vmatpush1.bf16.msra.mxu0 %v7386
    %7436 = vmatprep.subr.bf16.mxu0 0
    %7437 = vmatpush1.bf16.msra.mxu0 %v7385
    %7438 = vmatprep.subr.bf16.mxu0 0
    %7439 = vmatpush1.bf16.msra.mxu0 %v7384
    %7440 = vmatprep.subr.bf16.mxu0 0
    %7441 = vmatpush2.bf16.msra.mxu0 0
    %7442 = vmatprep.subr.bf16.mxu0 0
    %7443 = vmatpush2.bf16.msra.mxu0 0
    %7444 = vmatprep.subr.bf16.mxu0 0
    %7445 = vmatpush2.bf16.msra.mxu0 0
    %7446 = vmatprep.subr.bf16.mxu0 0
    %7447 = vmatpush2.bf16.msra.mxu0 0
    %7448 = vmatprep.subr.bf16.mxu0 0
    %7449 = vmatpush2.bf16.msra.mxu0 0
    %7450 = vmatprep.subr.bf16.mxu0 0
    %7451 = vmatpush2.bf16.msra.mxu0 0
    %7452 = vmatprep.subr.bf16.mxu0 0
    %7453 = vmatpush2.bf16.msra.mxu0 0
    %7454 = vmatprep.subr.bf16.mxu0 0
    %7455 = vmatpush2.bf16.msra.mxu0 0
    %7456 = vmatprep.mubr.bf16.mxu0 0
    %7457 = vmatmul.mubr.bf16.gmra.mxu0 %v7398
    %v7458 = vpop.f32.mrf.mxu0
    %v7459 = vadd.f32 0.0, %v7458
    %v7460 = vpop.f32.mrf.mxu0
    %v7461 = vpop.f32.mrf.mxu0
    %v7462 = vadd.f32 0.0, %v7461
    %v7463 = vpop.f32.mrf.mxu0
    %7464 = vmatprep.mubr.bf16.mxu0 0
    %7465 = vmatmul.mubr.bf16.gmra.mxu0 %v7401
    %v7466 = vpop.f32.mrf.mxu0
    %v7467 = vadd.f32 0.0, %v7466
    %v7468 = vpop.f32.mrf.mxu0
    %v7469 = vpop.f32.mrf.mxu0
    %v7470 = vadd.f32 0.0, %v7469
    %v7471 = vpop.f32.mrf.mxu0
    %7472 = vmatprep.mubr.bf16.mxu0 0
    %7473 = vmatmul.mubr.bf16.gmra.mxu0 %v7404
    %v7474 = vpop.f32.mrf.mxu0
    %v7475 = vadd.f32 0.0, %v7474
    %v7476 = vpop.f32.mrf.mxu0
    %v7477 = vpop.f32.mrf.mxu0
    %v7478 = vadd.f32 0.0, %v7477
    %v7479 = vpop.f32.mrf.mxu0
    %7480 = vmatprep.mubr.bf16.mxu0 0
    %7481 = vmatmul.mubr.bf16.gmra.mxu0 %v7407
    %v7482 = vpop.f32.mrf.mxu0
    %v7483 = vadd.f32 0.0, %v7482
    %v7484 = vpop.f32.mrf.mxu0
    %v7485 = vpop.f32.mrf.mxu0
    %v7486 = vadd.f32 0.0, %v7485
    %v7487 = vpop.f32.mrf.mxu0
    %7488 = vmatprep.mubr.bf16.mxu0 0
    %7489 = vmatmul.mubr.bf16.gmra.mxu0 %v7410
    %v7490 = vpop.f32.mrf.mxu0
    %v7491 = vadd.f32 0.0, %v7490
    %v7492 = vpop.f32.mrf.mxu0
    %v7493 = vpop.f32.mrf.mxu0
    %v7494 = vadd.f32 0.0, %v7493
    %v7495 = vpop.f32.mrf.mxu0
    %7496 = vmatprep.mubr.bf16.mxu0 0
    %7497 = vmatmul.mubr.bf16.gmra.mxu0 %v7413
    %v7498 = vpop.f32.mrf.mxu0
    %v7499 = vadd.f32 0.0, %v7498
    %v7500 = vpop.f32.mrf.mxu0
    %v7501 = vpop.f32.mrf.mxu0
    %v7502 = vadd.f32 0.0, %v7501
    %v7503 = vpop.f32.mrf.mxu0
    %7504 = vmatprep.mubr.bf16.mxu0 0
    %7505 = vmatmul.mubr.bf16.gmra.mxu0 %v7416
    %v7506 = vpop.f32.mrf.mxu0
    %v7507 = vadd.f32 0.0, %v7506
    %v7508 = vpop.f32.mrf.mxu0
    %v7509 = vpop.f32.mrf.mxu0
    %v7510 = vadd.f32 0.0, %v7509
    %v7511 = vpop.f32.mrf.mxu0
    %7512 = vmatprep.mubr.bf16.mxu0 0
    %7513 = vmatmul.mubr.bf16.gmra.mxu0 %v7419
    %v7514 = vpop.f32.mrf.mxu0
    %v7515 = vadd.f32 0.0, %v7514
    %v7516 = vpop.f32.mrf.mxu0
    %v7517 = vpop.f32.mrf.mxu0
    %v7518 = vadd.f32 0.0, %v7517
    %v7519 = vpop.f32.mrf.mxu0
    %7520 = vdwg.mxu0
    %v7521 = vadd.f32 %v7303, %v7459
    %v7522 = vadd.f32 %v7304, %v7462
    %v7523 = vadd.f32 %v7305, %v7467
    %v7524 = vadd.f32 %v7306, %v7470
    %v7525 = vadd.f32 %v7307, %v7475
    %v7526 = vadd.f32 %v7308, %v7478
    %v7527 = vadd.f32 %v7309, %v7483
    %v7528 = vadd.f32 %v7310, %v7486
    %v7529 = vadd.f32 %v7311, %v7491
    %v7530 = vadd.f32 %v7312, %v7494
    %v7531 = vadd.f32 %v7313, %v7499
    %v7532 = vadd.f32 %v7314, %v7502
    %v7533 = vadd.f32 %v7315, %v7507
    %v7534 = vadd.f32 %v7316, %v7510
    %v7535 = vadd.f32 %v7317, %v7515
    %v7536 = vadd.f32 %v7318, %v7518
    %v7537 = vld [vmem:[%s6] sm:$0x1]
    %v7539 = vlaneseq
    %v7540 = vshrl.u32 %v7539, 7
    %v7541 = vsub.s32 0, %v7540
    %v7542 = vrot.slane %v7537, %v7541
    %v7544 = vadd.f32 %v7521, %v7542
    %v7545 = vadd.f32 %v7522, %v7542
    %v7546 = vadd.f32 %v7523, %v7542
    %v7547 = vadd.f32 %v7524, %v7542
    %v7548 = vadd.f32 %v7525, %v7542
    %v7549 = vadd.f32 %v7526, %v7542
    %v7550 = vadd.f32 %v7527, %v7542
    %v7551 = vadd.f32 %v7528, %v7542
    %v7552 = vadd.f32 %v7529, %v7542
    %v7553 = vadd.f32 %v7530, %v7542
    %v7554 = vadd.f32 %v7531, %v7542
    %v7555 = vadd.f32 %v7532, %v7542
    %v7556 = vadd.f32 %v7533, %v7542
    %v7557 = vadd.f32 %v7534, %v7542
    %v7558 = vadd.f32 %v7535, %v7542
    %v7559 = vadd.f32 %v7536, %v7542
    %vm7560 = vcmp.gt.f32.partialorder %v7544, 0.0
    %vm7561 = vcmp.gt.f32.partialorder %v7545, 0.0
    %vm7562 = vcmp.gt.f32.partialorder %v7546, 0.0
    %vm7563 = vcmp.gt.f32.partialorder %v7547, 0.0
    %vm7564 = vcmp.gt.f32.partialorder %v7548, 0.0
    %vm7565 = vcmp.gt.f32.partialorder %v7549, 0.0
    %vm7566 = vcmp.gt.f32.partialorder %v7550, 0.0
    %vm7567 = vcmp.gt.f32.partialorder %v7551, 0.0
    %vm7568 = vcmp.gt.f32.partialorder %v7552, 0.0
    %vm7569 = vcmp.gt.f32.partialorder %v7553, 0.0
    %vm7570 = vcmp.gt.f32.partialorder %v7554, 0.0
    %vm7571 = vcmp.gt.f32.partialorder %v7555, 0.0
    %vm7572 = vcmp.gt.f32.partialorder %v7556, 0.0
    %vm7573 = vcmp.gt.f32.partialorder %v7557, 0.0
    %vm7574 = vcmp.gt.f32.partialorder %v7558, 0.0
    %vm7575 = vcmp.gt.f32.partialorder %v7559, 0.0
    %v7576 = vmin.f32 %v7544, 0.0
    %v7577 = vmin.f32 %v7545, 0.0
    %v7578 = vmin.f32 %v7546, 0.0
    %v7579 = vmin.f32 %v7547, 0.0
    %v7580 = vmin.f32 %v7548, 0.0
    %v7581 = vmin.f32 %v7549, 0.0
    %v7582 = vmin.f32 %v7550, 0.0
    %v7583 = vmin.f32 %v7551, 0.0
    %v7584 = vmin.f32 %v7552, 0.0
    %v7585 = vmin.f32 %v7553, 0.0
    %v7586 = vmin.f32 %v7554, 0.0
    %v7587 = vmin.f32 %v7555, 0.0
    %v7588 = vmin.f32 %v7556, 0.0
    %v7589 = vmin.f32 %v7557, 0.0
    %v7590 = vmin.f32 %v7558, 0.0
    %v7591 = vmin.f32 %v7559, 0.0
    %v7592 = vmul.f32 %v7576, 1.442695
    %v7593 = vpow.pop %v7592
    %v7594 = vmul.f32 %v7577, 1.442695
    %v7595 = vpow.pop %v7594
    %v7596 = vmul.f32 %v7578, 1.442695
    %v7597 = vpow.pop %v7596
    %v7598 = vmul.f32 %v7579, 1.442695
    %v7599 = vpow.pop %v7598
    %v7600 = vmul.f32 %v7580, 1.442695
    %v7601 = vpow.pop %v7600
    %v7602 = vmul.f32 %v7581, 1.442695
    %v7603 = vpow.pop %v7602
    %v7604 = vmul.f32 %v7582, 1.442695
    %v7605 = vpow.pop %v7604
    %v7606 = vmul.f32 %v7583, 1.442695
    %v7607 = vpow.pop %v7606
    %v7608 = vmul.f32 %v7584, 1.442695
    %v7609 = vpow.pop %v7608
    %v7610 = vmul.f32 %v7585, 1.442695
    %v7611 = vpow.pop %v7610
    %v7612 = vmul.f32 %v7586, 1.442695
    %v7613 = vpow.pop %v7612
    %v7614 = vmul.f32 %v7587, 1.442695
    %v7615 = vpow.pop %v7614
    %v7616 = vmul.f32 %v7588, 1.442695
    %v7617 = vpow.pop %v7616
    %v7618 = vmul.f32 %v7589, 1.442695
    %v7619 = vpow.pop %v7618
    %v7620 = vmul.f32 %v7590, 1.442695
    %v7621 = vpow.pop %v7620
    %v7622 = vmul.f32 %v7591, 1.442695
    %v7623 = vpow.pop %v7622
    %v7624 = vsub.f32 %v7593, 1.0
    %v7625 = vsub.f32 %v7595, 1.0
    %v7626 = vsub.f32 %v7597, 1.0
    %v7627 = vsub.f32 %v7599, 1.0
    %v7628 = vsub.f32 %v7601, 1.0
    %v7629 = vsub.f32 %v7603, 1.0
    %v7630 = vsub.f32 %v7605, 1.0
    %v7631 = vsub.f32 %v7607, 1.0
    %v7632 = vsub.f32 %v7609, 1.0
    %v7633 = vsub.f32 %v7611, 1.0
    %v7634 = vsub.f32 %v7613, 1.0
    %v7635 = vsub.f32 %v7615, 1.0
    %v7636 = vsub.f32 %v7617, 1.0
    %v7637 = vsub.f32 %v7619, 1.0
    %v7638 = vsub.f32 %v7621, 1.0
    %v7639 = vsub.f32 %v7623, 1.0
    %v7640 = vsel %vm7560, %v7544, %v7624
    %v7641 = vsel %vm7561, %v7545, %v7625
    %v7642 = vsel %vm7562, %v7546, %v7626
    %v7643 = vsel %vm7563, %v7547, %v7627
    %v7644 = vsel %vm7564, %v7548, %v7628
    %v7645 = vsel %vm7565, %v7549, %v7629
    %v7646 = vsel %vm7566, %v7550, %v7630
    %v7647 = vsel %vm7567, %v7551, %v7631
    %v7648 = vsel %vm7568, %v7552, %v7632
    %v7649 = vsel %vm7569, %v7553, %v7633
    %v7650 = vsel %vm7570, %v7554, %v7634
    %v7651 = vsel %vm7571, %v7555, %v7635
    %v7652 = vsel %vm7572, %v7556, %v7636
    %v7653 = vsel %vm7573, %v7557, %v7637
    %v7654 = vsel %vm7574, %v7558, %v7638
    %v7655 = vsel %vm7575, %v7559, %v7639
    %v7656 = vpack.c.bf16 %v7641, %v7640
    %v7657 = vpack.c.bf16 %v7643, %v7642
    %v7658 = vpack.c.bf16 %v7645, %v7644
    %v7659 = vpack.c.bf16 %v7647, %v7646
    %v7660 = vpack.c.bf16 %v7649, %v7648
    %v7661 = vpack.c.bf16 %v7651, %v7650
    %v7662 = vpack.c.bf16 %v7653, %v7652
    %v7663 = vpack.c.bf16 %v7655, %v7654
    %v7672 = vunpack.c.l.b16 %v7656
    %v7673 = vunpack.c.h.b16 %v7656
    %v7674 = vunpack.c.l.b16 %v7657
    %v7675 = vunpack.c.h.b16 %v7657
    %v7676 = vunpack.c.l.b16 %v7658
    %v7677 = vunpack.c.h.b16 %v7658
    %v7678 = vunpack.c.l.b16 %v7659
    %v7679 = vunpack.c.h.b16 %v7659
    %v7680 = vunpack.c.l.b16 %v7660
    %v7681 = vunpack.c.h.b16 %v7660
    %v7682 = vunpack.c.l.b16 %v7661
    %v7683 = vunpack.c.h.b16 %v7661
    %v7684 = vunpack.c.l.b16 %v7662
    %v7685 = vunpack.c.h.b16 %v7662
    %v7686 = vunpack.c.l.b16 %v7663
    %v7687 = vunpack.c.h.b16 %v7663
    %v7688 = vpack.c.b16 %v7672, %v7672
    %v7689 = vpack.c.b16 %v7673, %v7673
    %v7690 = vpack.c.b16 %v7674, %v7674
    %v7691 = vpack.c.b16 %v7675, %v7675
    %v7692 = vpack.c.b16 %v7676, %v7676
    %v7693 = vpack.c.b16 %v7677, %v7677
    %v7694 = vpack.c.b16 %v7678, %v7678
    %v7695 = vpack.c.b16 %v7679, %v7679
    %v7696 = vpack.c.b16 %v7680, %v7680
    %v7697 = vpack.c.b16 %v7681, %v7681
    %v7698 = vpack.c.b16 %v7682, %v7682
    %v7699 = vpack.c.b16 %v7683, %v7683
    %v7700 = vpack.c.b16 %v7684, %v7684
    %v7701 = vpack.c.b16 %v7685, %v7685
    %v7702 = vpack.c.b16 %v7686, %v7686
    %v7703 = vpack.c.b16 %v7687, %v7687
    %vm7720 = vcmask 404480
    %7721 = vst.msk [vmem:[#allocation3] sm:$0xf] %vm7720, %v7688
    %7722 = vst.msk [vmem:[#allocation3 + $0x4] sm:$0xf] %vm7720, %v7689
    %7723 = vst.msk [vmem:[#allocation3 + $0x8] sm:$0xf] %vm7720, %v7690
    %7724 = vst.msk [vmem:[#allocation3 + $0xc] sm:$0xf] %vm7720, %v7691
    %7725 = vst.msk [vmem:[#allocation3 + $0x10] sm:$0xf] %vm7720, %v7692
    %7726 = vst.msk [vmem:[#allocation3 + $0x14] sm:$0xf] %vm7720, %v7693
    %7727 = vst.msk [vmem:[#allocation3 + $0x18] sm:$0xf] %vm7720, %v7694
    %7728 = vst.msk [vmem:[#allocation3 + $0x1c] sm:$0xf] %vm7720, %v7695
    %7729 = vst.msk [vmem:[#allocation3 + $0x20] sm:$0xf] %vm7720, %v7696
    %7730 = vst.msk [vmem:[#allocation3 + $0x24] sm:$0xf] %vm7720, %v7697
    %7731 = vst.msk [vmem:[#allocation3 + $0x28] sm:$0xf] %vm7720, %v7698
    %7732 = vst.msk [vmem:[#allocation3 + $0x2c] sm:$0xf] %vm7720, %v7699
    %7733 = vst.msk [vmem:[#allocation3 + $0x30] sm:$0xf] %vm7720, %v7700
    %7734 = vst.msk [vmem:[#allocation3 + $0x34] sm:$0xf] %vm7720, %v7701
    %7735 = vst.msk [vmem:[#allocation3 + $0x38] sm:$0xf] %vm7720, %v7702
    %7736 = vst.msk [vmem:[#allocation3 + $0x3c] sm:$0xf] %vm7720, %v7703
    %v7737 = vld [vmem:[#allocation3] sm:$0x1]
    %v7738 = vld [vmem:[%s7] sm:$0xf]
    %v7739 = vld [vmem:[%s7 + $0x4] sm:$0xf]
    %v7740 = vld [vmem:[%s7 + $0x8] sm:$0xf]
    %v7741 = vld [vmem:[%s7 + $0xc] sm:$0xf]
    %v7742 = vld [vmem:[%s7 + $0x10] sm:$0xf]
    %v7743 = vld [vmem:[%s7 + $0x14] sm:$0xf]
    %v7744 = vld [vmem:[%s7 + $0x18] sm:$0x1]
    %v7745 = vld [vmem:[#allocation3] sm:$0x2]
    %s7746 = scalar_lea.vmem %s7, 28
    %v7747 = vld [vmem:[%s7746] sm:$0xf]
    %v7748 = vld [vmem:[%s7746 + $0x4] sm:$0xf]
    %v7749 = vld [vmem:[%s7746 + $0x8] sm:$0xf]
    %v7750 = vld [vmem:[%s7746 + $0xc] sm:$0xf]
    %v7751 = vld [vmem:[%s7746 + $0x10] sm:$0xf]
    %v7752 = vld [vmem:[%s7746 + $0x14] sm:$0xf]
    %v7753 = vld [vmem:[%s7746 + $0x18] sm:$0x1]
    %v7755 = vunpack.c.l.b16 %v7745
    %v7756 = vpack.c.b16 %v7755, %v7755
    %v7757 = vrot.slane %v7756, 1
    %v7765 = vunpack.c.l.b16 %v7747
    %v7766 = vunpack.c.l.b16 %v7748
    %v7767 = vunpack.c.l.b16 %v7749
    %v7768 = vunpack.c.l.b16 %v7750
    %v7769 = vunpack.c.l.b16 %v7751
    %v7770 = vunpack.c.l.b16 %v7752
    %v7771 = vunpack.c.l.b16 %v7753
    %v7772 = vpack.c.b16 %v7766, %v7765
    %v7773 = vpack.c.b16 %v7768, %v7767
    %v7774 = vpack.c.b16 %v7770, %v7769
    %v7775 = vpack.c.b16 %v7771, %v7771
    %vm7779 = vcmask 408576
    %v7781 = vsel %vm7779, %v7757, 0
    %vm7783 = vcmask 1040384
    %v7785 = vsel %vm7783, %v7775, 0
    %7787 = vmatprep.subr.bf16.mxu0 0
    %7788 = vmatpush1.bf16.msra.mxu0 0
    %7789 = vmatprep.subr.bf16.mxu0 0
    %7790 = vmatpush1.bf16.msra.mxu0 0
    %7791 = vmatprep.subr.bf16.mxu0 0
    %7792 = vmatpush1.bf16.msra.mxu0 0
    %7793 = vmatprep.subr.bf16.mxu0 0
    %7794 = vmatpush1.bf16.msra.mxu0 0
    %7795 = vmatprep.subr.bf16.mxu0 0
    %7796 = vmatpush1.bf16.msra.mxu0 %v7785
    %7797 = vmatprep.subr.bf16.mxu0 0
    %7798 = vmatpush1.bf16.msra.mxu0 %v7774
    %7799 = vmatprep.subr.bf16.mxu0 0
    %7800 = vmatpush1.bf16.msra.mxu0 %v7773
    %7801 = vmatprep.subr.bf16.mxu0 0
    %7802 = vmatpush1.bf16.msra.mxu0 %v7772
    %7803 = vmatprep.subr.bf16.mxu0 0
    %7804 = vmatpush2.bf16.msra.mxu0 0
    %7805 = vmatprep.subr.bf16.mxu0 0
    %7806 = vmatpush2.bf16.msra.mxu0 0
    %7807 = vmatprep.subr.bf16.mxu0 0
    %7808 = vmatpush2.bf16.msra.mxu0 0
    %7809 = vmatprep.subr.bf16.mxu0 0
    %7810 = vmatpush2.bf16.msra.mxu0 0
    %7811 = vmatprep.subr.bf16.mxu0 0
    %7812 = vmatpush2.bf16.msra.mxu0 0
    %7813 = vmatprep.subr.bf16.mxu0 0
    %7814 = vmatpush2.bf16.msra.mxu0 0
    %7815 = vmatprep.subr.bf16.mxu0 0
    %7816 = vmatpush2.bf16.msra.mxu0 0
    %7817 = vmatprep.subr.bf16.mxu0 0
    %7818 = vmatpush2.bf16.msra.mxu0 0
    %7819 = vmatprep.mubr.bf16.mxu0 0
    %7820 = vmatmul.mubr.bf16.gmra.mxu0 %v7781
    %v7821 = vpop.f32.mrf.mxu0
    %v7822 = vadd.f32 0.0, %v7821
    %v7823 = vpop.f32.mrf.mxu0
    %v7824 = vpop.f32.mrf.mxu0
    %v7825 = vpop.f32.mrf.mxu0
    %7826 = vdwg.mxu0
    %v7834 = vunpack.c.l.b16 %v7738
    %v7835 = vunpack.c.l.b16 %v7739
    %v7836 = vunpack.c.l.b16 %v7740
    %v7837 = vunpack.c.l.b16 %v7741
    %v7838 = vunpack.c.l.b16 %v7742
    %v7839 = vunpack.c.l.b16 %v7743
    %v7840 = vunpack.c.l.b16 %v7744
    %v7841 = vpack.c.b16 %v7835, %v7834
    %v7842 = vpack.c.b16 %v7837, %v7836
    %v7843 = vpack.c.b16 %v7839, %v7838
    %v7844 = vpack.c.b16 %v7840, %v7840
    %v7849 = vsel %vm7779, %v7737, 0
    %v7852 = vsel %vm7783, %v7844, 0
    %7854 = vmatprep.subr.bf16.mxu0 0
    %7855 = vmatpush1.bf16.msra.mxu0 0
    %7856 = vmatprep.subr.bf16.mxu0 0
    %7857 = vmatpush1.bf16.msra.mxu0 0
    %7858 = vmatprep.subr.bf16.mxu0 0
    %7859 = vmatpush1.bf16.msra.mxu0 0
    %7860 = vmatprep.subr.bf16.mxu0 0
    %7861 = vmatpush1.bf16.msra.mxu0 0
    %7862 = vmatprep.subr.bf16.mxu0 0
    %7863 = vmatpush1.bf16.msra.mxu0 %v7852
    %7864 = vmatprep.subr.bf16.mxu0 0
    %7865 = vmatpush1.bf16.msra.mxu0 %v7843
    %7866 = vmatprep.subr.bf16.mxu0 0
    %7867 = vmatpush1.bf16.msra.mxu0 %v7842
    %7868 = vmatprep.subr.bf16.mxu0 0
    %7869 = vmatpush1.bf16.msra.mxu0 %v7841
    %7870 = vmatprep.subr.bf16.mxu0 0
    %7871 = vmatpush2.bf16.msra.mxu0 0
    %7872 = vmatprep.subr.bf16.mxu0 0
    %7873 = vmatpush2.bf16.msra.mxu0 0
    %7874 = vmatprep.subr.bf16.mxu0 0
    %7875 = vmatpush2.bf16.msra.mxu0 0
    %7876 = vmatprep.subr.bf16.mxu0 0
    %7877 = vmatpush2.bf16.msra.mxu0 0
    %7878 = vmatprep.subr.bf16.mxu0 0
    %7879 = vmatpush2.bf16.msra.mxu0 0
    %7880 = vmatprep.subr.bf16.mxu0 0
    %7881 = vmatpush2.bf16.msra.mxu0 0
    %7882 = vmatprep.subr.bf16.mxu0 0
    %7883 = vmatpush2.bf16.msra.mxu0 0
    %7884 = vmatprep.subr.bf16.mxu0 0
    %7885 = vmatpush2.bf16.msra.mxu0 0
    %7886 = vmatprep.mubr.bf16.mxu0 0
    %7887 = vmatmul.mubr.bf16.gmra.mxu0 %v7849
    %v7888 = vpop.f32.mrf.mxu0
    %v7889 = vadd.f32 %v7822, %v7888
    %v7890 = vpop.f32.mrf.mxu0
    %v7891 = vpop.f32.mrf.mxu0
    %v7892 = vpop.f32.mrf.mxu0
    %7893 = vdwg.mxu0
    %v7894 = vld [vmem:[#allocation3] sm:$0x4]
    %s7895 = scalar_lea.vmem %s7, 56
    %v7896 = vld [vmem:[%s7895] sm:$0xf]
    %v7897 = vld [vmem:[%s7895 + $0x4] sm:$0xf]
    %v7898 = vld [vmem:[%s7895 + $0x8] sm:$0xf]
    %v7899 = vld [vmem:[%s7895 + $0xc] sm:$0xf]
    %v7900 = vld [vmem:[%s7895 + $0x10] sm:$0xf]
    %v7901 = vld [vmem:[%s7895 + $0x14] sm:$0xf]
    %v7902 = vld [vmem:[%s7895 + $0x18] sm:$0x1]
    %v7904 = vunpack.c.l.b16 %v7894
    %v7905 = vpack.c.b16 %v7904, %v7904
    %v7906 = vrot.slane %v7905, 2
    %v7914 = vunpack.c.l.b16 %v7896
    %v7915 = vunpack.c.l.b16 %v7897
    %v7916 = vunpack.c.l.b16 %v7898
    %v7917 = vunpack.c.l.b16 %v7899
    %v7918 = vunpack.c.l.b16 %v7900
    %v7919 = vunpack.c.l.b16 %v7901
    %v7920 = vunpack.c.l.b16 %v7902
    %v7921 = vpack.c.b16 %v7915, %v7914
    %v7922 = vpack.c.b16 %v7917, %v7916
    %v7923 = vpack.c.b16 %v7919, %v7918
    %v7924 = vpack.c.b16 %v7920, %v7920
    %v7929 = vsel %vm7779, %v7906, 0
    %v7932 = vsel %vm7783, %v7924, 0
    %7934 = vmatprep.subr.bf16.mxu0 0
    %7935 = vmatpush1.bf16.msra.mxu0 0
    %7936 = vmatprep.subr.bf16.mxu0 0
    %7937 = vmatpush1.bf16.msra.mxu0 0
    %7938 = vmatprep.subr.bf16.mxu0 0
    %7939 = vmatpush1.bf16.msra.mxu0 0
    %7940 = vmatprep.subr.bf16.mxu0 0
    %7941 = vmatpush1.bf16.msra.mxu0 0
    %7942 = vmatprep.subr.bf16.mxu0 0
    %7943 = vmatpush1.bf16.msra.mxu0 %v7932
    %7944 = vmatprep.subr.bf16.mxu0 0
    %7945 = vmatpush1.bf16.msra.mxu0 %v7923
    %7946 = vmatprep.subr.bf16.mxu0 0
    %7947 = vmatpush1.bf16.msra.mxu0 %v7922
    %7948 = vmatprep.subr.bf16.mxu0 0
    %7949 = vmatpush1.bf16.msra.mxu0 %v7921
    %7950 = vmatprep.subr.bf16.mxu0 0
    %7951 = vmatpush2.bf16.msra.mxu0 0
    %7952 = vmatprep.subr.bf16.mxu0 0
    %7953 = vmatpush2.bf16.msra.mxu0 0
    %7954 = vmatprep.subr.bf16.mxu0 0
    %7955 = vmatpush2.bf16.msra.mxu0 0
    %7956 = vmatprep.subr.bf16.mxu0 0
    %7957 = vmatpush2.bf16.msra.mxu0 0
    %7958 = vmatprep.subr.bf16.mxu0 0
    %7959 = vmatpush2.bf16.msra.mxu0 0
    %7960 = vmatprep.subr.bf16.mxu0 0
    %7961 = vmatpush2.bf16.msra.mxu0 0
    %7962 = vmatprep.subr.bf16.mxu0 0
    %7963 = vmatpush2.bf16.msra.mxu0 0
    %7964 = vmatprep.subr.bf16.mxu0 0
    %7965 = vmatpush2.bf16.msra.mxu0 0
    %7966 = vmatprep.mubr.bf16.mxu0 0
    %7967 = vmatmul.mubr.bf16.gmra.mxu0 %v7929
    %v7968 = vpop.f32.mrf.mxu0
    %v7969 = vadd.f32 0.0, %v7968
    %v7970 = vpop.f32.mrf.mxu0
    %v7971 = vpop.f32.mrf.mxu0
    %v7972 = vpop.f32.mrf.mxu0
    %7973 = vdwg.mxu0
    %v7974 = vadd.f32 %v7889, %v7969
    %v7975 = vld [vmem:[#allocation3 + $0x4] sm:$0x2]
    %s7976 = scalar_lea.vmem %s7, 84
    %v7977 = vld [vmem:[%s7976] sm:$0xf]
    %v7978 = vld [vmem:[%s7976 + $0x4] sm:$0xf]
    %v7979 = vld [vmem:[%s7976 + $0x8] sm:$0xf]
    %v7980 = vld [vmem:[%s7976 + $0xc] sm:$0xf]
    %v7981 = vld [vmem:[%s7976 + $0x10] sm:$0xf]
    %v7982 = vld [vmem:[%s7976 + $0x14] sm:$0xf]
    %v7983 = vld [vmem:[%s7976 + $0x18] sm:$0x1]
    %v7985 = vunpack.c.l.b16 %v7975
    %v7986 = vpack.c.b16 %v7985, %v7985
    %v7987 = vrot.slane %v7986, 1
    %v7995 = vunpack.c.l.b16 %v7977
    %v7996 = vunpack.c.l.b16 %v7978
    %v7997 = vunpack.c.l.b16 %v7979
    %v7998 = vunpack.c.l.b16 %v7980
    %v7999 = vunpack.c.l.b16 %v7981
    %v8000 = vunpack.c.l.b16 %v7982
    %v8001 = vunpack.c.l.b16 %v7983
    %v8002 = vpack.c.b16 %v7996, %v7995
    %v8003 = vpack.c.b16 %v7998, %v7997
    %v8004 = vpack.c.b16 %v8000, %v7999
    %v8005 = vpack.c.b16 %v8001, %v8001
    %v8010 = vsel %vm7779, %v7987, 0
    %v8013 = vsel %vm7783, %v8005, 0
    %8015 = vmatprep.subr.bf16.mxu0 0
    %8016 = vmatpush1.bf16.msra.mxu0 0
    %8017 = vmatprep.subr.bf16.mxu0 0
    %8018 = vmatpush1.bf16.msra.mxu0 0
    %8019 = vmatprep.subr.bf16.mxu0 0
    %8020 = vmatpush1.bf16.msra.mxu0 0
    %8021 = vmatprep.subr.bf16.mxu0 0
    %8022 = vmatpush1.bf16.msra.mxu0 0
    %8023 = vmatprep.subr.bf16.mxu0 0
    %8024 = vmatpush1.bf16.msra.mxu0 %v8013
    %8025 = vmatprep.subr.bf16.mxu0 0
    %8026 = vmatpush1.bf16.msra.mxu0 %v8004
    %8027 = vmatprep.subr.bf16.mxu0 0
    %8028 = vmatpush1.bf16.msra.mxu0 %v8003
    %8029 = vmatprep.subr.bf16.mxu0 0
    %8030 = vmatpush1.bf16.msra.mxu0 %v8002
    %8031 = vmatprep.subr.bf16.mxu0 0
    %8032 = vmatpush2.bf16.msra.mxu0 0
    %8033 = vmatprep.subr.bf16.mxu0 0
    %8034 = vmatpush2.bf16.msra.mxu0 0
    %8035 = vmatprep.subr.bf16.mxu0 0
    %8036 = vmatpush2.bf16.msra.mxu0 0
    %8037 = vmatprep.subr.bf16.mxu0 0
    %8038 = vmatpush2.bf16.msra.mxu0 0
    %8039 = vmatprep.subr.bf16.mxu0 0
    %8040 = vmatpush2.bf16.msra.mxu0 0
    %8041 = vmatprep.subr.bf16.mxu0 0
    %8042 = vmatpush2.bf16.msra.mxu0 0
    %8043 = vmatprep.subr.bf16.mxu0 0
    %8044 = vmatpush2.bf16.msra.mxu0 0
    %8045 = vmatprep.subr.bf16.mxu0 0
    %8046 = vmatpush2.bf16.msra.mxu0 0
    %8047 = vmatprep.mubr.bf16.mxu0 0
    %8048 = vmatmul.mubr.bf16.gmra.mxu0 %v8010
    %v8049 = vpop.f32.mrf.mxu0
    %v8050 = vadd.f32 0.0, %v8049
    %v8051 = vpop.f32.mrf.mxu0
    %v8052 = vpop.f32.mrf.mxu0
    %v8053 = vpop.f32.mrf.mxu0
    %8054 = vdwg.mxu0
    %v8055 = vadd.f32 %v7974, %v8050
    %v8056 = vld [vmem:[#allocation3 + $0x4] sm:$0x4]
    %s8057 = scalar_lea.vmem %s7, 112
    %v8058 = vld [vmem:[%s8057] sm:$0xf]
    %v8059 = vld [vmem:[%s8057 + $0x4] sm:$0xf]
    %v8060 = vld [vmem:[%s8057 + $0x8] sm:$0xf]
    %v8061 = vld [vmem:[%s8057 + $0xc] sm:$0xf]
    %v8062 = vld [vmem:[%s8057 + $0x10] sm:$0xf]
    %v8063 = vld [vmem:[%s8057 + $0x14] sm:$0xf]
    %v8064 = vld [vmem:[%s8057 + $0x18] sm:$0x1]
    %v8066 = vunpack.c.l.b16 %v8056
    %v8067 = vpack.c.b16 %v8066, %v8066
    %v8068 = vrot.slane %v8067, 2
    %v8076 = vunpack.c.l.b16 %v8058
    %v8077 = vunpack.c.l.b16 %v8059
    %v8078 = vunpack.c.l.b16 %v8060
    %v8079 = vunpack.c.l.b16 %v8061
    %v8080 = vunpack.c.l.b16 %v8062
    %v8081 = vunpack.c.l.b16 %v8063
    %v8082 = vunpack.c.l.b16 %v8064
    %v8083 = vpack.c.b16 %v8077, %v8076
    %v8084 = vpack.c.b16 %v8079, %v8078
    %v8085 = vpack.c.b16 %v8081, %v8080
    %v8086 = vpack.c.b16 %v8082, %v8082
    %v8091 = vsel %vm7779, %v8068, 0
    %v8094 = vsel %vm7783, %v8086, 0
    %8096 = vmatprep.subr.bf16.mxu0 0
    %8097 = vmatpush1.bf16.msra.mxu0 0
    %8098 = vmatprep.subr.bf16.mxu0 0
    %8099 = vmatpush1.bf16.msra.mxu0 0
    %8100 = vmatprep.subr.bf16.mxu0 0
    %8101 = vmatpush1.bf16.msra.mxu0 0
    %8102 = vmatprep.subr.bf16.mxu0 0
    %8103 = vmatpush1.bf16.msra.mxu0 0
    %8104 = vmatprep.subr.bf16.mxu0 0
    %8105 = vmatpush1.bf16.msra.mxu0 %v8094
    %8106 = vmatprep.subr.bf16.mxu0 0
    %8107 = vmatpush1.bf16.msra.mxu0 %v8085
    %8108 = vmatprep.subr.bf16.mxu0 0
    %8109 = vmatpush1.bf16.msra.mxu0 %v8084
    %8110 = vmatprep.subr.bf16.mxu0 0
    %8111 = vmatpush1.bf16.msra.mxu0 %v8083
    %8112 = vmatprep.subr.bf16.mxu0 0
    %8113 = vmatpush2.bf16.msra.mxu0 0
    %8114 = vmatprep.subr.bf16.mxu0 0
    %8115 = vmatpush2.bf16.msra.mxu0 0
    %8116 = vmatprep.subr.bf16.mxu0 0
    %8117 = vmatpush2.bf16.msra.mxu0 0
    %8118 = vmatprep.subr.bf16.mxu0 0
    %8119 = vmatpush2.bf16.msra.mxu0 0
    %8120 = vmatprep.subr.bf16.mxu0 0
    %8121 = vmatpush2.bf16.msra.mxu0 0
    %8122 = vmatprep.subr.bf16.mxu0 0
    %8123 = vmatpush2.bf16.msra.mxu0 0
    %8124 = vmatprep.subr.bf16.mxu0 0
    %8125 = vmatpush2.bf16.msra.mxu0 0
    %8126 = vmatprep.subr.bf16.mxu0 0
    %8127 = vmatpush2.bf16.msra.mxu0 0
    %8128 = vmatprep.mubr.bf16.mxu0 0
    %8129 = vmatmul.mubr.bf16.gmra.mxu0 %v8091
    %v8130 = vpop.f32.mrf.mxu0
    %v8131 = vadd.f32 0.0, %v8130
    %v8132 = vpop.f32.mrf.mxu0
    %v8133 = vpop.f32.mrf.mxu0
    %v8134 = vpop.f32.mrf.mxu0
    %8135 = vdwg.mxu0
    %v8136 = vadd.f32 %v8055, %v8131
    %v8137 = vld [vmem:[#allocation3 + $0x4] sm:$0x8]
    %s8138 = scalar_lea.vmem %s7, 140
    %v8139 = vld [vmem:[%s8138] sm:$0xf]
    %v8140 = vld [vmem:[%s8138 + $0x4] sm:$0xf]
    %v8141 = vld [vmem:[%s8138 + $0x8] sm:$0xf]
    %v8142 = vld [vmem:[%s8138 + $0xc] sm:$0xf]
    %v8143 = vld [vmem:[%s8138 + $0x10] sm:$0xf]
    %v8144 = vld [vmem:[%s8138 + $0x14] sm:$0xf]
    %v8145 = vld [vmem:[%s8138 + $0x18] sm:$0x1]
    %v8147 = vunpack.c.l.b16 %v8137
    %v8148 = vpack.c.b16 %v8147, %v8147
    %v8149 = vrot.slane %v8148, 3
    %v8157 = vunpack.c.l.b16 %v8139
    %v8158 = vunpack.c.l.b16 %v8140
    %v8159 = vunpack.c.l.b16 %v8141
    %v8160 = vunpack.c.l.b16 %v8142
    %v8161 = vunpack.c.l.b16 %v8143
    %v8162 = vunpack.c.l.b16 %v8144
    %v8163 = vunpack.c.l.b16 %v8145
    %v8164 = vpack.c.b16 %v8158, %v8157
    %v8165 = vpack.c.b16 %v8160, %v8159
    %v8166 = vpack.c.b16 %v8162, %v8161
    %v8167 = vpack.c.b16 %v8163, %v8163
    %v8172 = vsel %vm7779, %v8149, 0
    %v8175 = vsel %vm7783, %v8167, 0
    %8177 = vmatprep.subr.bf16.mxu0 0
    %8178 = vmatpush1.bf16.msra.mxu0 0
    %8179 = vmatprep.subr.bf16.mxu0 0
    %8180 = vmatpush1.bf16.msra.mxu0 0
    %8181 = vmatprep.subr.bf16.mxu0 0
    %8182 = vmatpush1.bf16.msra.mxu0 0
    %8183 = vmatprep.subr.bf16.mxu0 0
    %8184 = vmatpush1.bf16.msra.mxu0 0
    %8185 = vmatprep.subr.bf16.mxu0 0
    %8186 = vmatpush1.bf16.msra.mxu0 %v8175
    %8187 = vmatprep.subr.bf16.mxu0 0
    %8188 = vmatpush1.bf16.msra.mxu0 %v8166
    %8189 = vmatprep.subr.bf16.mxu0 0
    %8190 = vmatpush1.bf16.msra.mxu0 %v8165
    %8191 = vmatprep.subr.bf16.mxu0 0
    %8192 = vmatpush1.bf16.msra.mxu0 %v8164
    %8193 = vmatprep.subr.bf16.mxu0 0
    %8194 = vmatpush2.bf16.msra.mxu0 0
    %8195 = vmatprep.subr.bf16.mxu0 0
    %8196 = vmatpush2.bf16.msra.mxu0 0
    %8197 = vmatprep.subr.bf16.mxu0 0
    %8198 = vmatpush2.bf16.msra.mxu0 0
    %8199 = vmatprep.subr.bf16.mxu0 0
    %8200 = vmatpush2.bf16.msra.mxu0 0
    %8201 = vmatprep.subr.bf16.mxu0 0
    %8202 = vmatpush2.bf16.msra.mxu0 0
    %8203 = vmatprep.subr.bf16.mxu0 0
    %8204 = vmatpush2.bf16.msra.mxu0 0
    %8205 = vmatprep.subr.bf16.mxu0 0
    %8206 = vmatpush2.bf16.msra.mxu0 0
    %8207 = vmatprep.subr.bf16.mxu0 0
    %8208 = vmatpush2.bf16.msra.mxu0 0
    %8209 = vmatprep.mubr.bf16.mxu0 0
    %8210 = vmatmul.mubr.bf16.gmra.mxu0 %v8172
    %v8211 = vpop.f32.mrf.mxu0
    %v8212 = vadd.f32 0.0, %v8211
    %v8213 = vpop.f32.mrf.mxu0
    %v8214 = vpop.f32.mrf.mxu0
    %v8215 = vpop.f32.mrf.mxu0
    %8216 = vdwg.mxu0
    %v8217 = vadd.f32 %v8136, %v8212
    %v8218 = vld [vmem:[#allocation3 + $0x8] sm:$0x4]
    %s8219 = scalar_lea.vmem %s7, 168
    %v8220 = vld [vmem:[%s8219] sm:$0xf]
    %v8221 = vld [vmem:[%s8219 + $0x4] sm:$0xf]
    %v8222 = vld [vmem:[%s8219 + $0x8] sm:$0xf]
    %v8223 = vld [vmem:[%s8219 + $0xc] sm:$0xf]
    %v8224 = vld [vmem:[%s8219 + $0x10] sm:$0xf]
    %v8225 = vld [vmem:[%s8219 + $0x14] sm:$0xf]
    %v8226 = vld [vmem:[%s8219 + $0x18] sm:$0x1]
    %v8228 = vunpack.c.l.b16 %v8218
    %v8229 = vpack.c.b16 %v8228, %v8228
    %v8230 = vrot.slane %v8229, 2
    %v8238 = vunpack.c.l.b16 %v8220
    %v8239 = vunpack.c.l.b16 %v8221
    %v8240 = vunpack.c.l.b16 %v8222
    %v8241 = vunpack.c.l.b16 %v8223
    %v8242 = vunpack.c.l.b16 %v8224
    %v8243 = vunpack.c.l.b16 %v8225
    %v8244 = vunpack.c.l.b16 %v8226
    %v8245 = vpack.c.b16 %v8239, %v8238
    %v8246 = vpack.c.b16 %v8241, %v8240
    %v8247 = vpack.c.b16 %v8243, %v8242
    %v8248 = vpack.c.b16 %v8244, %v8244
    %v8253 = vsel %vm7779, %v8230, 0
    %v8256 = vsel %vm7783, %v8248, 0
    %8258 = vmatprep.subr.bf16.mxu0 0
    %8259 = vmatpush1.bf16.msra.mxu0 0
    %8260 = vmatprep.subr.bf16.mxu0 0
    %8261 = vmatpush1.bf16.msra.mxu0 0
    %8262 = vmatprep.subr.bf16.mxu0 0
    %8263 = vmatpush1.bf16.msra.mxu0 0
    %8264 = vmatprep.subr.bf16.mxu0 0
    %8265 = vmatpush1.bf16.msra.mxu0 0
    %8266 = vmatprep.subr.bf16.mxu0 0
    %8267 = vmatpush1.bf16.msra.mxu0 %v8256
    %8268 = vmatprep.subr.bf16.mxu0 0
    %8269 = vmatpush1.bf16.msra.mxu0 %v8247
    %8270 = vmatprep.subr.bf16.mxu0 0
    %8271 = vmatpush1.bf16.msra.mxu0 %v8246
    %8272 = vmatprep.subr.bf16.mxu0 0
    %8273 = vmatpush1.bf16.msra.mxu0 %v8245
    %8274 = vmatprep.subr.bf16.mxu0 0
    %8275 = vmatpush2.bf16.msra.mxu0 0
    %8276 = vmatprep.subr.bf16.mxu0 0
    %8277 = vmatpush2.bf16.msra.mxu0 0
    %8278 = vmatprep.subr.bf16.mxu0 0
    %8279 = vmatpush2.bf16.msra.mxu0 0
    %8280 = vmatprep.subr.bf16.mxu0 0
    %8281 = vmatpush2.bf16.msra.mxu0 0
    %8282 = vmatprep.subr.bf16.mxu0 0
    %8283 = vmatpush2.bf16.msra.mxu0 0
    %8284 = vmatprep.subr.bf16.mxu0 0
    %8285 = vmatpush2.bf16.msra.mxu0 0
    %8286 = vmatprep.subr.bf16.mxu0 0
    %8287 = vmatpush2.bf16.msra.mxu0 0
    %8288 = vmatprep.subr.bf16.mxu0 0
    %8289 = vmatpush2.bf16.msra.mxu0 0
    %8290 = vmatprep.mubr.bf16.mxu0 0
    %8291 = vmatmul.mubr.bf16.gmra.mxu0 %v8253
    %v8292 = vpop.f32.mrf.mxu0
    %v8293 = vadd.f32 0.0, %v8292
    %v8294 = vpop.f32.mrf.mxu0
    %v8295 = vpop.f32.mrf.mxu0
    %v8296 = vpop.f32.mrf.mxu0
    %8297 = vdwg.mxu0
    %v8298 = vadd.f32 %v8217, %v8293
    %v8299 = vld [vmem:[#allocation3 + $0x8] sm:$0x8]
    %s8300 = scalar_lea.vmem %s7, 196
    %v8301 = vld [vmem:[%s8300] sm:$0xf]
    %v8302 = vld [vmem:[%s8300 + $0x4] sm:$0xf]
    %v8303 = vld [vmem:[%s8300 + $0x8] sm:$0xf]
    %v8304 = vld [vmem:[%s8300 + $0xc] sm:$0xf]
    %v8305 = vld [vmem:[%s8300 + $0x10] sm:$0xf]
    %v8306 = vld [vmem:[%s8300 + $0x14] sm:$0xf]
    %v8307 = vld [vmem:[%s8300 + $0x18] sm:$0x1]
    %v8309 = vunpack.c.l.b16 %v8299
    %v8310 = vpack.c.b16 %v8309, %v8309
    %v8311 = vrot.slane %v8310, 3
    %v8319 = vunpack.c.l.b16 %v8301
    %v8320 = vunpack.c.l.b16 %v8302
    %v8321 = vunpack.c.l.b16 %v8303
    %v8322 = vunpack.c.l.b16 %v8304
    %v8323 = vunpack.c.l.b16 %v8305
    %v8324 = vunpack.c.l.b16 %v8306
    %v8325 = vunpack.c.l.b16 %v8307
    %v8326 = vpack.c.b16 %v8320, %v8319
    %v8327 = vpack.c.b16 %v8322, %v8321
    %v8328 = vpack.c.b16 %v8324, %v8323
    %v8329 = vpack.c.b16 %v8325, %v8325
    %v8334 = vsel %vm7779, %v8311, 0
    %v8337 = vsel %vm7783, %v8329, 0
    %8339 = vmatprep.subr.bf16.mxu0 0
    %8340 = vmatpush1.bf16.msra.mxu0 0
    %8341 = vmatprep.subr.bf16.mxu0 0
    %8342 = vmatpush1.bf16.msra.mxu0 0
    %8343 = vmatprep.subr.bf16.mxu0 0
    %8344 = vmatpush1.bf16.msra.mxu0 0
    %8345 = vmatprep.subr.bf16.mxu0 0
    %8346 = vmatpush1.bf16.msra.mxu0 0
    %8347 = vmatprep.subr.bf16.mxu0 0
    %8348 = vmatpush1.bf16.msra.mxu0 %v8337
    %8349 = vmatprep.subr.bf16.mxu0 0
    %8350 = vmatpush1.bf16.msra.mxu0 %v8328
    %8351 = vmatprep.subr.bf16.mxu0 0
    %8352 = vmatpush1.bf16.msra.mxu0 %v8327
    %8353 = vmatprep.subr.bf16.mxu0 0
    %8354 = vmatpush1.bf16.msra.mxu0 %v8326
    %8355 = vmatprep.subr.bf16.mxu0 0
    %8356 = vmatpush2.bf16.msra.mxu0 0
    %8357 = vmatprep.subr.bf16.mxu0 0
    %8358 = vmatpush2.bf16.msra.mxu0 0
    %8359 = vmatprep.subr.bf16.mxu0 0
    %8360 = vmatpush2.bf16.msra.mxu0 0
    %8361 = vmatprep.subr.bf16.mxu0 0
    %8362 = vmatpush2.bf16.msra.mxu0 0
    %8363 = vmatprep.subr.bf16.mxu0 0
    %8364 = vmatpush2.bf16.msra.mxu0 0
    %8365 = vmatprep.subr.bf16.mxu0 0
    %8366 = vmatpush2.bf16.msra.mxu0 0
    %8367 = vmatprep.subr.bf16.mxu0 0
    %8368 = vmatpush2.bf16.msra.mxu0 0
    %8369 = vmatprep.subr.bf16.mxu0 0
    %8370 = vmatpush2.bf16.msra.mxu0 0
    %8371 = vmatprep.mubr.bf16.mxu0 0
    %8372 = vmatmul.mubr.bf16.gmra.mxu0 %v8334
    %v8373 = vpop.f32.mrf.mxu0
    %v8374 = vadd.f32 0.0, %v8373
    %v8375 = vpop.f32.mrf.mxu0
    %v8376 = vpop.f32.mrf.mxu0
    %v8377 = vpop.f32.mrf.mxu0
    %8378 = vdwg.mxu0
    %v8379 = vadd.f32 %v8298, %v8374
    %v8380 = vld [vmem:[#allocation3 + $0xc] sm:$0x1]
    %s8381 = scalar_lea.vmem %s7, 224
    %v8382 = vld [vmem:[%s8381] sm:$0xf]
    %v8383 = vld [vmem:[%s8381 + $0x4] sm:$0xf]
    %v8384 = vld [vmem:[%s8381 + $0x8] sm:$0xf]
    %v8385 = vld [vmem:[%s8381 + $0xc] sm:$0xf]
    %v8386 = vld [vmem:[%s8381 + $0x10] sm:$0xf]
    %v8387 = vld [vmem:[%s8381 + $0x14] sm:$0xf]
    %v8388 = vld [vmem:[%s8381 + $0x18] sm:$0x1]
    %v8396 = vunpack.c.l.b16 %v8382
    %v8397 = vunpack.c.l.b16 %v8383
    %v8398 = vunpack.c.l.b16 %v8384
    %v8399 = vunpack.c.l.b16 %v8385
    %v8400 = vunpack.c.l.b16 %v8386
    %v8401 = vunpack.c.l.b16 %v8387
    %v8402 = vunpack.c.l.b16 %v8388
    %v8403 = vpack.c.b16 %v8397, %v8396
    %v8404 = vpack.c.b16 %v8399, %v8398
    %v8405 = vpack.c.b16 %v8401, %v8400
    %v8406 = vpack.c.b16 %v8402, %v8402
    %v8411 = vsel %vm7779, %v8380, 0
    %v8414 = vsel %vm7783, %v8406, 0
    %8416 = vmatprep.subr.bf16.mxu0 0
    %8417 = vmatpush1.bf16.msra.mxu0 0
    %8418 = vmatprep.subr.bf16.mxu0 0
    %8419 = vmatpush1.bf16.msra.mxu0 0
    %8420 = vmatprep.subr.bf16.mxu0 0
    %8421 = vmatpush1.bf16.msra.mxu0 0
    %8422 = vmatprep.subr.bf16.mxu0 0
    %8423 = vmatpush1.bf16.msra.mxu0 0
    %8424 = vmatprep.subr.bf16.mxu0 0
    %8425 = vmatpush1.bf16.msra.mxu0 %v8414
    %8426 = vmatprep.subr.bf16.mxu0 0
    %8427 = vmatpush1.bf16.msra.mxu0 %v8405
    %8428 = vmatprep.subr.bf16.mxu0 0
    %8429 = vmatpush1.bf16.msra.mxu0 %v8404
    %8430 = vmatprep.subr.bf16.mxu0 0
    %8431 = vmatpush1.bf16.msra.mxu0 %v8403
    %8432 = vmatprep.subr.bf16.mxu0 0
    %8433 = vmatpush2.bf16.msra.mxu0 0
    %8434 = vmatprep.subr.bf16.mxu0 0
    %8435 = vmatpush2.bf16.msra.mxu0 0
    %8436 = vmatprep.subr.bf16.mxu0 0
    %8437 = vmatpush2.bf16.msra.mxu0 0
    %8438 = vmatprep.subr.bf16.mxu0 0
    %8439 = vmatpush2.bf16.msra.mxu0 0
    %8440 = vmatprep.subr.bf16.mxu0 0
    %8441 = vmatpush2.bf16.msra.mxu0 0
    %8442 = vmatprep.subr.bf16.mxu0 0
    %8443 = vmatpush2.bf16.msra.mxu0 0
    %8444 = vmatprep.subr.bf16.mxu0 0
    %8445 = vmatpush2.bf16.msra.mxu0 0
    %8446 = vmatprep.subr.bf16.mxu0 0
    %8447 = vmatpush2.bf16.msra.mxu0 0
    %8448 = vmatprep.mubr.bf16.mxu0 0
    %8449 = vmatmul.mubr.bf16.gmra.mxu0 %v8411
    %v8450 = vpop.f32.mrf.mxu0
    %v8451 = vadd.f32 0.0, %v8450
    %v8452 = vpop.f32.mrf.mxu0
    %v8453 = vpop.f32.mrf.mxu0
    %v8454 = vpop.f32.mrf.mxu0
    %8455 = vdwg.mxu0
    %v8456 = vadd.f32 %v8379, %v8451
    %v8457 = vld [vmem:[#allocation3 + $0x18] sm:$0x2]
    %s8458 = scalar_lea.vmem %s7, 252
    %v8459 = vld [vmem:[%s8458] sm:$0xf]
    %v8460 = vld [vmem:[%s8458 + $0x4] sm:$0xf]
    %v8461 = vld [vmem:[%s8458 + $0x8] sm:$0xf]
    %v8462 = vld [vmem:[%s8458 + $0xc] sm:$0xf]
    %v8463 = vld [vmem:[%s8458 + $0x10] sm:$0xf]
    %v8464 = vld [vmem:[%s8458 + $0x14] sm:$0xf]
    %v8465 = vld [vmem:[%s8458 + $0x18] sm:$0x1]
    %v8467 = vunpack.c.l.b16 %v8457
    %v8468 = vpack.c.b16 %v8467, %v8467
    %v8469 = vrot.slane %v8468, 1
    %v8477 = vunpack.c.l.b16 %v8459
    %v8478 = vunpack.c.l.b16 %v8460
    %v8479 = vunpack.c.l.b16 %v8461
    %v8480 = vunpack.c.l.b16 %v8462
    %v8481 = vunpack.c.l.b16 %v8463
    %v8482 = vunpack.c.l.b16 %v8464
    %v8483 = vunpack.c.l.b16 %v8465
    %v8484 = vpack.c.b16 %v8478, %v8477
    %v8485 = vpack.c.b16 %v8480, %v8479
    %v8486 = vpack.c.b16 %v8482, %v8481
    %v8487 = vpack.c.b16 %v8483, %v8483
    %v8492 = vsel %vm7779, %v8469, 0
    %v8495 = vsel %vm7783, %v8487, 0
    %8497 = vmatprep.subr.bf16.mxu0 0
    %8498 = vmatpush1.bf16.msra.mxu0 0
    %8499 = vmatprep.subr.bf16.mxu0 0
    %8500 = vmatpush1.bf16.msra.mxu0 0
    %8501 = vmatprep.subr.bf16.mxu0 0
    %8502 = vmatpush1.bf16.msra.mxu0 0
    %8503 = vmatprep.subr.bf16.mxu0 0
    %8504 = vmatpush1.bf16.msra.mxu0 0
    %8505 = vmatprep.subr.bf16.mxu0 0
    %8506 = vmatpush1.bf16.msra.mxu0 %v8495
    %8507 = vmatprep.subr.bf16.mxu0 0
    %8508 = vmatpush1.bf16.msra.mxu0 %v8486
    %8509 = vmatprep.subr.bf16.mxu0 0
    %8510 = vmatpush1.bf16.msra.mxu0 %v8485
    %8511 = vmatprep.subr.bf16.mxu0 0
    %8512 = vmatpush1.bf16.msra.mxu0 %v8484
    %8513 = vmatprep.subr.bf16.mxu0 0
    %8514 = vmatpush2.bf16.msra.mxu0 0
    %8515 = vmatprep.subr.bf16.mxu0 0
    %8516 = vmatpush2.bf16.msra.mxu0 0
    %8517 = vmatprep.subr.bf16.mxu0 0
    %8518 = vmatpush2.bf16.msra.mxu0 0
    %8519 = vmatprep.subr.bf16.mxu0 0
    %8520 = vmatpush2.bf16.msra.mxu0 0
    %8521 = vmatprep.subr.bf16.mxu0 0
    %8522 = vmatpush2.bf16.msra.mxu0 0
    %8523 = vmatprep.subr.bf16.mxu0 0
    %8524 = vmatpush2.bf16.msra.mxu0 0
    %8525 = vmatprep.subr.bf16.mxu0 0
    %8526 = vmatpush2.bf16.msra.mxu0 0
    %8527 = vmatprep.subr.bf16.mxu0 0
    %8528 = vmatpush2.bf16.msra.mxu0 0
    %8529 = vmatprep.mubr.bf16.mxu0 0
    %8530 = vmatmul.mubr.bf16.gmra.mxu0 %v8492
    %v8531 = vpop.f32.mrf.mxu0
    %v8532 = vadd.f32 0.0, %v8531
    %v8533 = vpop.f32.mrf.mxu0
    %v8534 = vpop.f32.mrf.mxu0
    %v8535 = vpop.f32.mrf.mxu0
    %8536 = vdwg.mxu0
    %v8537 = vadd.f32 %v8456, %v8532
    %v8538 = vld [vmem:[#allocation3 + $0x18] sm:$0x4]
    %s8539 = scalar_lea.vmem %s7, 280
    %v8540 = vld [vmem:[%s8539] sm:$0xf]
    %v8541 = vld [vmem:[%s8539 + $0x4] sm:$0xf]
    %v8542 = vld [vmem:[%s8539 + $0x8] sm:$0xf]
    %v8543 = vld [vmem:[%s8539 + $0xc] sm:$0xf]
    %v8544 = vld [vmem:[%s8539 + $0x10] sm:$0xf]
    %v8545 = vld [vmem:[%s8539 + $0x14] sm:$0xf]
    %v8546 = vld [vmem:[%s8539 + $0x18] sm:$0x1]
    %v8548 = vunpack.c.l.b16 %v8538
    %v8549 = vpack.c.b16 %v8548, %v8548
    %v8550 = vrot.slane %v8549, 2
    %v8558 = vunpack.c.l.b16 %v8540
    %v8559 = vunpack.c.l.b16 %v8541
    %v8560 = vunpack.c.l.b16 %v8542
    %v8561 = vunpack.c.l.b16 %v8543
    %v8562 = vunpack.c.l.b16 %v8544
    %v8563 = vunpack.c.l.b16 %v8545
    %v8564 = vunpack.c.l.b16 %v8546
    %v8565 = vpack.c.b16 %v8559, %v8558
    %v8566 = vpack.c.b16 %v8561, %v8560
    %v8567 = vpack.c.b16 %v8563, %v8562
    %v8568 = vpack.c.b16 %v8564, %v8564
    %v8573 = vsel %vm7779, %v8550, 0
    %v8576 = vsel %vm7783, %v8568, 0
    %8578 = vmatprep.subr.bf16.mxu0 0
    %8579 = vmatpush1.bf16.msra.mxu0 0
    %8580 = vmatprep.subr.bf16.mxu0 0
    %8581 = vmatpush1.bf16.msra.mxu0 0
    %8582 = vmatprep.subr.bf16.mxu0 0
    %8583 = vmatpush1.bf16.msra.mxu0 0
    %8584 = vmatprep.subr.bf16.mxu0 0
    %8585 = vmatpush1.bf16.msra.mxu0 0
    %8586 = vmatprep.subr.bf16.mxu0 0
    %8587 = vmatpush1.bf16.msra.mxu0 %v8576
    %8588 = vmatprep.subr.bf16.mxu0 0
    %8589 = vmatpush1.bf16.msra.mxu0 %v8567
    %8590 = vmatprep.subr.bf16.mxu0 0
    %8591 = vmatpush1.bf16.msra.mxu0 %v8566
    %8592 = vmatprep.subr.bf16.mxu0 0
    %8593 = vmatpush1.bf16.msra.mxu0 %v8565
    %8594 = vmatprep.subr.bf16.mxu0 0
    %8595 = vmatpush2.bf16.msra.mxu0 0
    %8596 = vmatprep.subr.bf16.mxu0 0
    %8597 = vmatpush2.bf16.msra.mxu0 0
    %8598 = vmatprep.subr.bf16.mxu0 0
    %8599 = vmatpush2.bf16.msra.mxu0 0
    %8600 = vmatprep.subr.bf16.mxu0 0
    %8601 = vmatpush2.bf16.msra.mxu0 0
    %8602 = vmatprep.subr.bf16.mxu0 0
    %8603 = vmatpush2.bf16.msra.mxu0 0
    %8604 = vmatprep.subr.bf16.mxu0 0
    %8605 = vmatpush2.bf16.msra.mxu0 0
    %8606 = vmatprep.subr.bf16.mxu0 0
    %8607 = vmatpush2.bf16.msra.mxu0 0
    %8608 = vmatprep.subr.bf16.mxu0 0
    %8609 = vmatpush2.bf16.msra.mxu0 0
    %8610 = vmatprep.mubr.bf16.mxu0 0
    %8611 = vmatmul.mubr.bf16.gmra.mxu0 %v8573
    %v8612 = vpop.f32.mrf.mxu0
    %v8613 = vadd.f32 0.0, %v8612
    %v8614 = vpop.f32.mrf.mxu0
    %v8615 = vpop.f32.mrf.mxu0
    %v8616 = vpop.f32.mrf.mxu0
    %8617 = vdwg.mxu0
    %v8618 = vadd.f32 %v8537, %v8613
    %v8619 = vld [vmem:[#allocation3 + $0x18] sm:$0x8]
    %s8620 = scalar_lea.vmem %s7, 308
    %v8621 = vld [vmem:[%s8620] sm:$0xf]
    %v8622 = vld [vmem:[%s8620 + $0x4] sm:$0xf]
    %v8623 = vld [vmem:[%s8620 + $0x8] sm:$0xf]
    %v8624 = vld [vmem:[%s8620 + $0xc] sm:$0xf]
    %v8625 = vld [vmem:[%s8620 + $0x10] sm:$0xf]
    %v8626 = vld [vmem:[%s8620 + $0x14] sm:$0xf]
    %v8627 = vld [vmem:[%s8620 + $0x18] sm:$0x1]
    %v8629 = vunpack.c.l.b16 %v8619
    %v8630 = vpack.c.b16 %v8629, %v8629
    %v8631 = vrot.slane %v8630, 3
    %v8639 = vunpack.c.l.b16 %v8621
    %v8640 = vunpack.c.l.b16 %v8622
    %v8641 = vunpack.c.l.b16 %v8623
    %v8642 = vunpack.c.l.b16 %v8624
    %v8643 = vunpack.c.l.b16 %v8625
    %v8644 = vunpack.c.l.b16 %v8626
    %v8645 = vunpack.c.l.b16 %v8627
    %v8646 = vpack.c.b16 %v8640, %v8639
    %v8647 = vpack.c.b16 %v8642, %v8641
    %v8648 = vpack.c.b16 %v8644, %v8643
    %v8649 = vpack.c.b16 %v8645, %v8645
    %v8654 = vsel %vm7779, %v8631, 0
    %v8657 = vsel %vm7783, %v8649, 0
    %8659 = vmatprep.subr.bf16.mxu0 0
    %8660 = vmatpush1.bf16.msra.mxu0 0
    %8661 = vmatprep.subr.bf16.mxu0 0
    %8662 = vmatpush1.bf16.msra.mxu0 0
    %8663 = vmatprep.subr.bf16.mxu0 0
    %8664 = vmatpush1.bf16.msra.mxu0 0
    %8665 = vmatprep.subr.bf16.mxu0 0
    %8666 = vmatpush1.bf16.msra.mxu0 0
    %8667 = vmatprep.subr.bf16.mxu0 0
    %8668 = vmatpush1.bf16.msra.mxu0 %v8657
    %8669 = vmatprep.subr.bf16.mxu0 0
    %8670 = vmatpush1.bf16.msra.mxu0 %v8648
    %8671 = vmatprep.subr.bf16.mxu0 0
    %8672 = vmatpush1.bf16.msra.mxu0 %v8647
    %8673 = vmatprep.subr.bf16.mxu0 0
    %8674 = vmatpush1.bf16.msra.mxu0 %v8646
    %8675 = vmatprep.subr.bf16.mxu0 0
    %8676 = vmatpush2.bf16.msra.mxu0 0
    %8677 = vmatprep.subr.bf16.mxu0 0
    %8678 = vmatpush2.bf16.msra.mxu0 0
    %8679 = vmatprep.subr.bf16.mxu0 0
    %8680 = vmatpush2.bf16.msra.mxu0 0
    %8681 = vmatprep.subr.bf16.mxu0 0
    %8682 = vmatpush2.bf16.msra.mxu0 0
    %8683 = vmatprep.subr.bf16.mxu0 0
    %8684 = vmatpush2.bf16.msra.mxu0 0
    %8685 = vmatprep.subr.bf16.mxu0 0
    %8686 = vmatpush2.bf16.msra.mxu0 0
    %8687 = vmatprep.subr.bf16.mxu0 0
    %8688 = vmatpush2.bf16.msra.mxu0 0
    %8689 = vmatprep.subr.bf16.mxu0 0
    %8690 = vmatpush2.bf16.msra.mxu0 0
    %8691 = vmatprep.mubr.bf16.mxu0 0
    %8692 = vmatmul.mubr.bf16.gmra.mxu0 %v8654
    %v8693 = vpop.f32.mrf.mxu0
    %v8694 = vadd.f32 0.0, %v8693
    %v8695 = vpop.f32.mrf.mxu0
    %v8696 = vpop.f32.mrf.mxu0
    %v8697 = vpop.f32.mrf.mxu0
    %8698 = vdwg.mxu0
    %v8699 = vadd.f32 %v8618, %v8694
    %v8700 = vld [vmem:[#allocation3 + $0x1c] sm:$0x4]
    %s8701 = scalar_lea.vmem %s7, 336
    %v8702 = vld [vmem:[%s8701] sm:$0xf]
    %v8703 = vld [vmem:[%s8701 + $0x4] sm:$0xf]
    %v8704 = vld [vmem:[%s8701 + $0x8] sm:$0xf]
    %v8705 = vld [vmem:[%s8701 + $0xc] sm:$0xf]
    %v8706 = vld [vmem:[%s8701 + $0x10] sm:$0xf]
    %v8707 = vld [vmem:[%s8701 + $0x14] sm:$0xf]
    %v8708 = vld [vmem:[%s8701 + $0x18] sm:$0x1]
    %v8710 = vunpack.c.l.b16 %v8700
    %v8711 = vpack.c.b16 %v8710, %v8710
    %v8712 = vrot.slane %v8711, 2
    %v8720 = vunpack.c.l.b16 %v8702
    %v8721 = vunpack.c.l.b16 %v8703
    %v8722 = vunpack.c.l.b16 %v8704
    %v8723 = vunpack.c.l.b16 %v8705
    %v8724 = vunpack.c.l.b16 %v8706
    %v8725 = vunpack.c.l.b16 %v8707
    %v8726 = vunpack.c.l.b16 %v8708
    %v8727 = vpack.c.b16 %v8721, %v8720
    %v8728 = vpack.c.b16 %v8723, %v8722
    %v8729 = vpack.c.b16 %v8725, %v8724
    %v8730 = vpack.c.b16 %v8726, %v8726
    %v8735 = vsel %vm7779, %v8712, 0
    %v8738 = vsel %vm7783, %v8730, 0
    %8740 = vmatprep.subr.bf16.mxu0 0
    %8741 = vmatpush1.bf16.msra.mxu0 0
    %8742 = vmatprep.subr.bf16.mxu0 0
    %8743 = vmatpush1.bf16.msra.mxu0 0
    %8744 = vmatprep.subr.bf16.mxu0 0
    %8745 = vmatpush1.bf16.msra.mxu0 0
    %8746 = vmatprep.subr.bf16.mxu0 0
    %8747 = vmatpush1.bf16.msra.mxu0 0
    %8748 = vmatprep.subr.bf16.mxu0 0
    %8749 = vmatpush1.bf16.msra.mxu0 %v8738
    %8750 = vmatprep.subr.bf16.mxu0 0
    %8751 = vmatpush1.bf16.msra.mxu0 %v8729
    %8752 = vmatprep.subr.bf16.mxu0 0
    %8753 = vmatpush1.bf16.msra.mxu0 %v8728
    %8754 = vmatprep.subr.bf16.mxu0 0
    %8755 = vmatpush1.bf16.msra.mxu0 %v8727
    %8756 = vmatprep.subr.bf16.mxu0 0
    %8757 = vmatpush2.bf16.msra.mxu0 0
    %8758 = vmatprep.subr.bf16.mxu0 0
    %8759 = vmatpush2.bf16.msra.mxu0 0
    %8760 = vmatprep.subr.bf16.mxu0 0
    %8761 = vmatpush2.bf16.msra.mxu0 0
    %8762 = vmatprep.subr.bf16.mxu0 0
    %8763 = vmatpush2.bf16.msra.mxu0 0
    %8764 = vmatprep.subr.bf16.mxu0 0
    %8765 = vmatpush2.bf16.msra.mxu0 0
    %8766 = vmatprep.subr.bf16.mxu0 0
    %8767 = vmatpush2.bf16.msra.mxu0 0
    %8768 = vmatprep.subr.bf16.mxu0 0
    %8769 = vmatpush2.bf16.msra.mxu0 0
    %8770 = vmatprep.subr.bf16.mxu0 0
    %8771 = vmatpush2.bf16.msra.mxu0 0
    %8772 = vmatprep.mubr.bf16.mxu0 0
    %8773 = vmatmul.mubr.bf16.gmra.mxu0 %v8735
    %v8774 = vpop.f32.mrf.mxu0
    %v8775 = vadd.f32 0.0, %v8774
    %v8776 = vpop.f32.mrf.mxu0
    %v8777 = vpop.f32.mrf.mxu0
    %v8778 = vpop.f32.mrf.mxu0
    %8779 = vdwg.mxu0
    %v8780 = vadd.f32 %v8699, %v8775
    %v8781 = vld [vmem:[#allocation3 + $0x1c] sm:$0x8]
    %s8782 = scalar_lea.vmem %s7, 364
    %v8783 = vld [vmem:[%s8782] sm:$0xf]
    %v8784 = vld [vmem:[%s8782 + $0x4] sm:$0xf]
    %v8785 = vld [vmem:[%s8782 + $0x8] sm:$0xf]
    %v8786 = vld [vmem:[%s8782 + $0xc] sm:$0xf]
    %v8787 = vld [vmem:[%s8782 + $0x10] sm:$0xf]
    %v8788 = vld [vmem:[%s8782 + $0x14] sm:$0xf]
    %v8789 = vld [vmem:[%s8782 + $0x18] sm:$0x1]
    %v8791 = vunpack.c.l.b16 %v8781
    %v8792 = vpack.c.b16 %v8791, %v8791
    %v8793 = vrot.slane %v8792, 3
    %v8801 = vunpack.c.l.b16 %v8783
    %v8802 = vunpack.c.l.b16 %v8784
    %v8803 = vunpack.c.l.b16 %v8785
    %v8804 = vunpack.c.l.b16 %v8786
    %v8805 = vunpack.c.l.b16 %v8787
    %v8806 = vunpack.c.l.b16 %v8788
    %v8807 = vunpack.c.l.b16 %v8789
    %v8808 = vpack.c.b16 %v8802, %v8801
    %v8809 = vpack.c.b16 %v8804, %v8803
    %v8810 = vpack.c.b16 %v8806, %v8805
    %v8811 = vpack.c.b16 %v8807, %v8807
    %v8816 = vsel %vm7779, %v8793, 0
    %v8819 = vsel %vm7783, %v8811, 0
    %8821 = vmatprep.subr.bf16.mxu0 0
    %8822 = vmatpush1.bf16.msra.mxu0 0
    %8823 = vmatprep.subr.bf16.mxu0 0
    %8824 = vmatpush1.bf16.msra.mxu0 0
    %8825 = vmatprep.subr.bf16.mxu0 0
    %8826 = vmatpush1.bf16.msra.mxu0 0
    %8827 = vmatprep.subr.bf16.mxu0 0
    %8828 = vmatpush1.bf16.msra.mxu0 0
    %8829 = vmatprep.subr.bf16.mxu0 0
    %8830 = vmatpush1.bf16.msra.mxu0 %v8819
    %8831 = vmatprep.subr.bf16.mxu0 0
    %8832 = vmatpush1.bf16.msra.mxu0 %v8810
    %8833 = vmatprep.subr.bf16.mxu0 0
    %8834 = vmatpush1.bf16.msra.mxu0 %v8809
    %8835 = vmatprep.subr.bf16.mxu0 0
    %8836 = vmatpush1.bf16.msra.mxu0 %v8808
    %8837 = vmatprep.subr.bf16.mxu0 0
    %8838 = vmatpush2.bf16.msra.mxu0 0
    %8839 = vmatprep.subr.bf16.mxu0 0
    %8840 = vmatpush2.bf16.msra.mxu0 0
    %8841 = vmatprep.subr.bf16.mxu0 0
    %8842 = vmatpush2.bf16.msra.mxu0 0
    %8843 = vmatprep.subr.bf16.mxu0 0
    %8844 = vmatpush2.bf16.msra.mxu0 0
    %8845 = vmatprep.subr.bf16.mxu0 0
    %8846 = vmatpush2.bf16.msra.mxu0 0
    %8847 = vmatprep.subr.bf16.mxu0 0
    %8848 = vmatpush2.bf16.msra.mxu0 0
    %8849 = vmatprep.subr.bf16.mxu0 0
    %8850 = vmatpush2.bf16.msra.mxu0 0
    %8851 = vmatprep.subr.bf16.mxu0 0
    %8852 = vmatpush2.bf16.msra.mxu0 0
    %8853 = vmatprep.mubr.bf16.mxu0 0
    %8854 = vmatmul.mubr.bf16.gmra.mxu0 %v8816
    %v8855 = vpop.f32.mrf.mxu0
    %v8856 = vadd.f32 0.0, %v8855
    %v8857 = vpop.f32.mrf.mxu0
    %v8858 = vpop.f32.mrf.mxu0
    %v8859 = vpop.f32.mrf.mxu0
    %8860 = vdwg.mxu0
    %v8861 = vadd.f32 %v8780, %v8856
    %v8862 = vld [vmem:[#allocation3 + $0x20] sm:$0x1]
    %s8863 = scalar_lea.vmem %s7, 392
    %v8864 = vld [vmem:[%s8863] sm:$0xf]
    %v8865 = vld [vmem:[%s8863 + $0x4] sm:$0xf]
    %v8866 = vld [vmem:[%s8863 + $0x8] sm:$0xf]
    %v8867 = vld [vmem:[%s8863 + $0xc] sm:$0xf]
    %v8868 = vld [vmem:[%s8863 + $0x10] sm:$0xf]
    %v8869 = vld [vmem:[%s8863 + $0x14] sm:$0xf]
    %v8870 = vld [vmem:[%s8863 + $0x18] sm:$0x1]
    %v8878 = vunpack.c.l.b16 %v8864
    %v8879 = vunpack.c.l.b16 %v8865
    %v8880 = vunpack.c.l.b16 %v8866
    %v8881 = vunpack.c.l.b16 %v8867
    %v8882 = vunpack.c.l.b16 %v8868
    %v8883 = vunpack.c.l.b16 %v8869
    %v8884 = vunpack.c.l.b16 %v8870
    %v8885 = vpack.c.b16 %v8879, %v8878
    %v8886 = vpack.c.b16 %v8881, %v8880
    %v8887 = vpack.c.b16 %v8883, %v8882
    %v8888 = vpack.c.b16 %v8884, %v8884
    %v8893 = vsel %vm7779, %v8862, 0
    %v8896 = vsel %vm7783, %v8888, 0
    %8898 = vmatprep.subr.bf16.mxu0 0
    %8899 = vmatpush1.bf16.msra.mxu0 0
    %8900 = vmatprep.subr.bf16.mxu0 0
    %8901 = vmatpush1.bf16.msra.mxu0 0
    %8902 = vmatprep.subr.bf16.mxu0 0
    %8903 = vmatpush1.bf16.msra.mxu0 0
    %8904 = vmatprep.subr.bf16.mxu0 0
    %8905 = vmatpush1.bf16.msra.mxu0 0
    %8906 = vmatprep.subr.bf16.mxu0 0
    %8907 = vmatpush1.bf16.msra.mxu0 %v8896
    %8908 = vmatprep.subr.bf16.mxu0 0
    %8909 = vmatpush1.bf16.msra.mxu0 %v8887
    %8910 = vmatprep.subr.bf16.mxu0 0
    %8911 = vmatpush1.bf16.msra.mxu0 %v8886
    %8912 = vmatprep.subr.bf16.mxu0 0
    %8913 = vmatpush1.bf16.msra.mxu0 %v8885
    %8914 = vmatprep.subr.bf16.mxu0 0
    %8915 = vmatpush2.bf16.msra.mxu0 0
    %8916 = vmatprep.subr.bf16.mxu0 0
    %8917 = vmatpush2.bf16.msra.mxu0 0
    %8918 = vmatprep.subr.bf16.mxu0 0
    %8919 = vmatpush2.bf16.msra.mxu0 0
    %8920 = vmatprep.subr.bf16.mxu0 0
    %8921 = vmatpush2.bf16.msra.mxu0 0
    %8922 = vmatprep.subr.bf16.mxu0 0
    %8923 = vmatpush2.bf16.msra.mxu0 0
    %8924 = vmatprep.subr.bf16.mxu0 0
    %8925 = vmatpush2.bf16.msra.mxu0 0
    %8926 = vmatprep.subr.bf16.mxu0 0
    %8927 = vmatpush2.bf16.msra.mxu0 0
    %8928 = vmatprep.subr.bf16.mxu0 0
    %8929 = vmatpush2.bf16.msra.mxu0 0
    %8930 = vmatprep.mubr.bf16.mxu0 0
    %8931 = vmatmul.mubr.bf16.gmra.mxu0 %v8893
    %v8932 = vpop.f32.mrf.mxu0
    %v8933 = vadd.f32 0.0, %v8932
    %v8934 = vpop.f32.mrf.mxu0
    %v8935 = vpop.f32.mrf.mxu0
    %v8936 = vpop.f32.mrf.mxu0
    %8937 = vdwg.mxu0
    %v8938 = vadd.f32 %v8861, %v8933
    %v8939 = vld [vmem:[#allocation3 + $0x20] sm:$0x8]
    %s8940 = scalar_lea.vmem %s7, 420
    %v8941 = vld [vmem:[%s8940] sm:$0xf]
    %v8942 = vld [vmem:[%s8940 + $0x4] sm:$0xf]
    %v8943 = vld [vmem:[%s8940 + $0x8] sm:$0xf]
    %v8944 = vld [vmem:[%s8940 + $0xc] sm:$0xf]
    %v8945 = vld [vmem:[%s8940 + $0x10] sm:$0xf]
    %v8946 = vld [vmem:[%s8940 + $0x14] sm:$0xf]
    %v8947 = vld [vmem:[%s8940 + $0x18] sm:$0x1]
    %v8949 = vunpack.c.l.b16 %v8939
    %v8950 = vpack.c.b16 %v8949, %v8949
    %v8951 = vrot.slane %v8950, 3
    %v8959 = vunpack.c.l.b16 %v8941
    %v8960 = vunpack.c.l.b16 %v8942
    %v8961 = vunpack.c.l.b16 %v8943
    %v8962 = vunpack.c.l.b16 %v8944
    %v8963 = vunpack.c.l.b16 %v8945
    %v8964 = vunpack.c.l.b16 %v8946
    %v8965 = vunpack.c.l.b16 %v8947
    %v8966 = vpack.c.b16 %v8960, %v8959
    %v8967 = vpack.c.b16 %v8962, %v8961
    %v8968 = vpack.c.b16 %v8964, %v8963
    %v8969 = vpack.c.b16 %v8965, %v8965
    %v8974 = vsel %vm7779, %v8951, 0
    %v8977 = vsel %vm7783, %v8969, 0
    %8979 = vmatprep.subr.bf16.mxu0 0
    %8980 = vmatpush1.bf16.msra.mxu0 0
    %8981 = vmatprep.subr.bf16.mxu0 0
    %8982 = vmatpush1.bf16.msra.mxu0 0
    %8983 = vmatprep.subr.bf16.mxu0 0
    %8984 = vmatpush1.bf16.msra.mxu0 0
    %8985 = vmatprep.subr.bf16.mxu0 0
    %8986 = vmatpush1.bf16.msra.mxu0 0
    %8987 = vmatprep.subr.bf16.mxu0 0
    %8988 = vmatpush1.bf16.msra.mxu0 %v8977
    %8989 = vmatprep.subr.bf16.mxu0 0
    %8990 = vmatpush1.bf16.msra.mxu0 %v8968
    %8991 = vmatprep.subr.bf16.mxu0 0
    %8992 = vmatpush1.bf16.msra.mxu0 %v8967
    %8993 = vmatprep.subr.bf16.mxu0 0
    %8994 = vmatpush1.bf16.msra.mxu0 %v8966
    %8995 = vmatprep.subr.bf16.mxu0 0
    %8996 = vmatpush2.bf16.msra.mxu0 0
    %8997 = vmatprep.subr.bf16.mxu0 0
    %8998 = vmatpush2.bf16.msra.mxu0 0
    %8999 = vmatprep.subr.bf16.mxu0 0
    %9000 = vmatpush2.bf16.msra.mxu0 0
    %9001 = vmatprep.subr.bf16.mxu0 0
    %9002 = vmatpush2.bf16.msra.mxu0 0
    %9003 = vmatprep.subr.bf16.mxu0 0
    %9004 = vmatpush2.bf16.msra.mxu0 0
    %9005 = vmatprep.subr.bf16.mxu0 0
    %9006 = vmatpush2.bf16.msra.mxu0 0
    %9007 = vmatprep.subr.bf16.mxu0 0
    %9008 = vmatpush2.bf16.msra.mxu0 0
    %9009 = vmatprep.subr.bf16.mxu0 0
    %9010 = vmatpush2.bf16.msra.mxu0 0
    %9011 = vmatprep.mubr.bf16.mxu0 0
    %9012 = vmatmul.mubr.bf16.gmra.mxu0 %v8974
    %v9013 = vpop.f32.mrf.mxu0
    %v9014 = vadd.f32 0.0, %v9013
    %v9015 = vpop.f32.mrf.mxu0
    %v9016 = vpop.f32.mrf.mxu0
    %v9017 = vpop.f32.mrf.mxu0
    %9018 = vdwg.mxu0
    %v9019 = vadd.f32 %v8938, %v9014
    %v9020 = vld [vmem:[#allocation3 + $0x24] sm:$0x1]
    %s9021 = scalar_lea.vmem %s7, 448
    %v9022 = vld [vmem:[%s9021] sm:$0xf]
    %v9023 = vld [vmem:[%s9021 + $0x4] sm:$0xf]
    %v9024 = vld [vmem:[%s9021 + $0x8] sm:$0xf]
    %v9025 = vld [vmem:[%s9021 + $0xc] sm:$0xf]
    %v9026 = vld [vmem:[%s9021 + $0x10] sm:$0xf]
    %v9027 = vld [vmem:[%s9021 + $0x14] sm:$0xf]
    %v9028 = vld [vmem:[%s9021 + $0x18] sm:$0x1]
    %v9036 = vunpack.c.l.b16 %v9022
    %v9037 = vunpack.c.l.b16 %v9023
    %v9038 = vunpack.c.l.b16 %v9024
    %v9039 = vunpack.c.l.b16 %v9025
    %v9040 = vunpack.c.l.b16 %v9026
    %v9041 = vunpack.c.l.b16 %v9027
    %v9042 = vunpack.c.l.b16 %v9028
    %v9043 = vpack.c.b16 %v9037, %v9036
    %v9044 = vpack.c.b16 %v9039, %v9038
    %v9045 = vpack.c.b16 %v9041, %v9040
    %v9046 = vpack.c.b16 %v9042, %v9042
    %v9051 = vsel %vm7779, %v9020, 0
    %v9054 = vsel %vm7783, %v9046, 0
    %9056 = vmatprep.subr.bf16.mxu0 0
    %9057 = vmatpush1.bf16.msra.mxu0 0
    %9058 = vmatprep.subr.bf16.mxu0 0
    %9059 = vmatpush1.bf16.msra.mxu0 0
    %9060 = vmatprep.subr.bf16.mxu0 0
    %9061 = vmatpush1.bf16.msra.mxu0 0
    %9062 = vmatprep.subr.bf16.mxu0 0
    %9063 = vmatpush1.bf16.msra.mxu0 0
    %9064 = vmatprep.subr.bf16.mxu0 0
    %9065 = vmatpush1.bf16.msra.mxu0 %v9054
    %9066 = vmatprep.subr.bf16.mxu0 0
    %9067 = vmatpush1.bf16.msra.mxu0 %v9045
    %9068 = vmatprep.subr.bf16.mxu0 0
    %9069 = vmatpush1.bf16.msra.mxu0 %v9044
    %9070 = vmatprep.subr.bf16.mxu0 0
    %9071 = vmatpush1.bf16.msra.mxu0 %v9043
    %9072 = vmatprep.subr.bf16.mxu0 0
    %9073 = vmatpush2.bf16.msra.mxu0 0
    %9074 = vmatprep.subr.bf16.mxu0 0
    %9075 = vmatpush2.bf16.msra.mxu0 0
    %9076 = vmatprep.subr.bf16.mxu0 0
    %9077 = vmatpush2.bf16.msra.mxu0 0
    %9078 = vmatprep.subr.bf16.mxu0 0
    %9079 = vmatpush2.bf16.msra.mxu0 0
    %9080 = vmatprep.subr.bf16.mxu0 0
    %9081 = vmatpush2.bf16.msra.mxu0 0
    %9082 = vmatprep.subr.bf16.mxu0 0
    %9083 = vmatpush2.bf16.msra.mxu0 0
    %9084 = vmatprep.subr.bf16.mxu0 0
    %9085 = vmatpush2.bf16.msra.mxu0 0
    %9086 = vmatprep.subr.bf16.mxu0 0
    %9087 = vmatpush2.bf16.msra.mxu0 0
    %9088 = vmatprep.mubr.bf16.mxu0 0
    %9089 = vmatmul.mubr.bf16.gmra.mxu0 %v9051
    %v9090 = vpop.f32.mrf.mxu0
    %v9091 = vadd.f32 0.0, %v9090
    %v9092 = vpop.f32.mrf.mxu0
    %v9093 = vpop.f32.mrf.mxu0
    %v9094 = vpop.f32.mrf.mxu0
    %9095 = vdwg.mxu0
    %v9096 = vadd.f32 %v9019, %v9091
    %v9097 = vld [vmem:[#allocation3 + $0x24] sm:$0x2]
    %s9098 = scalar_lea.vmem %s7, 476
    %v9099 = vld [vmem:[%s9098] sm:$0xf]
    %v9100 = vld [vmem:[%s9098 + $0x4] sm:$0xf]
    %v9101 = vld [vmem:[%s9098 + $0x8] sm:$0xf]
    %v9102 = vld [vmem:[%s9098 + $0xc] sm:$0xf]
    %v9103 = vld [vmem:[%s9098 + $0x10] sm:$0xf]
    %v9104 = vld [vmem:[%s9098 + $0x14] sm:$0xf]
    %v9105 = vld [vmem:[%s9098 + $0x18] sm:$0x1]
    %v9107 = vunpack.c.l.b16 %v9097
    %v9108 = vpack.c.b16 %v9107, %v9107
    %v9109 = vrot.slane %v9108, 1
    %v9117 = vunpack.c.l.b16 %v9099
    %v9118 = vunpack.c.l.b16 %v9100
    %v9119 = vunpack.c.l.b16 %v9101
    %v9120 = vunpack.c.l.b16 %v9102
    %v9121 = vunpack.c.l.b16 %v9103
    %v9122 = vunpack.c.l.b16 %v9104
    %v9123 = vunpack.c.l.b16 %v9105
    %v9124 = vpack.c.b16 %v9118, %v9117
    %v9125 = vpack.c.b16 %v9120, %v9119
    %v9126 = vpack.c.b16 %v9122, %v9121
    %v9127 = vpack.c.b16 %v9123, %v9123
    %v9132 = vsel %vm7779, %v9109, 0
    %v9135 = vsel %vm7783, %v9127, 0
    %9137 = vmatprep.subr.bf16.mxu0 0
    %9138 = vmatpush1.bf16.msra.mxu0 0
    %9139 = vmatprep.subr.bf16.mxu0 0
    %9140 = vmatpush1.bf16.msra.mxu0 0
    %9141 = vmatprep.subr.bf16.mxu0 0
    %9142 = vmatpush1.bf16.msra.mxu0 0
    %9143 = vmatprep.subr.bf16.mxu0 0
    %9144 = vmatpush1.bf16.msra.mxu0 0
    %9145 = vmatprep.subr.bf16.mxu0 0
    %9146 = vmatpush1.bf16.msra.mxu0 %v9135
    %9147 = vmatprep.subr.bf16.mxu0 0
    %9148 = vmatpush1.bf16.msra.mxu0 %v9126
    %9149 = vmatprep.subr.bf16.mxu0 0
    %9150 = vmatpush1.bf16.msra.mxu0 %v9125
    %9151 = vmatprep.subr.bf16.mxu0 0
    %9152 = vmatpush1.bf16.msra.mxu0 %v9124
    %9153 = vmatprep.subr.bf16.mxu0 0
    %9154 = vmatpush2.bf16.msra.mxu0 0
    %9155 = vmatprep.subr.bf16.mxu0 0
    %9156 = vmatpush2.bf16.msra.mxu0 0
    %9157 = vmatprep.subr.bf16.mxu0 0
    %9158 = vmatpush2.bf16.msra.mxu0 0
    %9159 = vmatprep.subr.bf16.mxu0 0
    %9160 = vmatpush2.bf16.msra.mxu0 0
    %9161 = vmatprep.subr.bf16.mxu0 0
    %9162 = vmatpush2.bf16.msra.mxu0 0
    %9163 = vmatprep.subr.bf16.mxu0 0
    %9164 = vmatpush2.bf16.msra.mxu0 0
    %9165 = vmatprep.subr.bf16.mxu0 0
    %9166 = vmatpush2.bf16.msra.mxu0 0
    %9167 = vmatprep.subr.bf16.mxu0 0
    %9168 = vmatpush2.bf16.msra.mxu0 0
    %9169 = vmatprep.mubr.bf16.mxu0 0
    %9170 = vmatmul.mubr.bf16.gmra.mxu0 %v9132
    %v9171 = vpop.f32.mrf.mxu0
    %v9172 = vadd.f32 0.0, %v9171
    %v9173 = vpop.f32.mrf.mxu0
    %v9174 = vpop.f32.mrf.mxu0
    %v9175 = vpop.f32.mrf.mxu0
    %9176 = vdwg.mxu0
    %v9177 = vadd.f32 %v9096, %v9172
    %v9178 = vld [vmem:[#allocation3 + $0x30] sm:$0x4]
    %s9179 = scalar_lea.vmem %s7, 504
    %v9180 = vld [vmem:[%s9179] sm:$0xf]
    %v9181 = vld [vmem:[%s9179 + $0x4] sm:$0xf]
    %v9182 = vld [vmem:[%s9179 + $0x8] sm:$0xf]
    %v9183 = vld [vmem:[%s9179 + $0xc] sm:$0xf]
    %v9184 = vld [vmem:[%s9179 + $0x10] sm:$0xf]
    %v9185 = vld [vmem:[%s9179 + $0x14] sm:$0xf]
    %v9186 = vld [vmem:[%s9179 + $0x18] sm:$0x1]
    %v9188 = vunpack.c.l.b16 %v9178
    %v9189 = vpack.c.b16 %v9188, %v9188
    %v9190 = vrot.slane %v9189, 2
    %v9198 = vunpack.c.l.b16 %v9180
    %v9199 = vunpack.c.l.b16 %v9181
    %v9200 = vunpack.c.l.b16 %v9182
    %v9201 = vunpack.c.l.b16 %v9183
    %v9202 = vunpack.c.l.b16 %v9184
    %v9203 = vunpack.c.l.b16 %v9185
    %v9204 = vunpack.c.l.b16 %v9186
    %v9205 = vpack.c.b16 %v9199, %v9198
    %v9206 = vpack.c.b16 %v9201, %v9200
    %v9207 = vpack.c.b16 %v9203, %v9202
    %v9208 = vpack.c.b16 %v9204, %v9204
    %v9213 = vsel %vm7779, %v9190, 0
    %v9216 = vsel %vm7783, %v9208, 0
    %9218 = vmatprep.subr.bf16.mxu0 0
    %9219 = vmatpush1.bf16.msra.mxu0 0
    %9220 = vmatprep.subr.bf16.mxu0 0
    %9221 = vmatpush1.bf16.msra.mxu0 0
    %9222 = vmatprep.subr.bf16.mxu0 0
    %9223 = vmatpush1.bf16.msra.mxu0 0
    %9224 = vmatprep.subr.bf16.mxu0 0
    %9225 = vmatpush1.bf16.msra.mxu0 0
    %9226 = vmatprep.subr.bf16.mxu0 0
    %9227 = vmatpush1.bf16.msra.mxu0 %v9216
    %9228 = vmatprep.subr.bf16.mxu0 0
    %9229 = vmatpush1.bf16.msra.mxu0 %v9207
    %9230 = vmatprep.subr.bf16.mxu0 0
    %9231 = vmatpush1.bf16.msra.mxu0 %v9206
    %9232 = vmatprep.subr.bf16.mxu0 0
    %9233 = vmatpush1.bf16.msra.mxu0 %v9205
    %9234 = vmatprep.subr.bf16.mxu0 0
    %9235 = vmatpush2.bf16.msra.mxu0 0
    %9236 = vmatprep.subr.bf16.mxu0 0
    %9237 = vmatpush2.bf16.msra.mxu0 0
    %9238 = vmatprep.subr.bf16.mxu0 0
    %9239 = vmatpush2.bf16.msra.mxu0 0
    %9240 = vmatprep.subr.bf16.mxu0 0
    %9241 = vmatpush2.bf16.msra.mxu0 0
    %9242 = vmatprep.subr.bf16.mxu0 0
    %9243 = vmatpush2.bf16.msra.mxu0 0
    %9244 = vmatprep.subr.bf16.mxu0 0
    %9245 = vmatpush2.bf16.msra.mxu0 0
    %9246 = vmatprep.subr.bf16.mxu0 0
    %9247 = vmatpush2.bf16.msra.mxu0 0
    %9248 = vmatprep.subr.bf16.mxu0 0
    %9249 = vmatpush2.bf16.msra.mxu0 0
    %9250 = vmatprep.mubr.bf16.mxu0 0
    %9251 = vmatmul.mubr.bf16.gmra.mxu0 %v9213
    %v9252 = vpop.f32.mrf.mxu0
    %v9253 = vadd.f32 0.0, %v9252
    %v9254 = vpop.f32.mrf.mxu0
    %v9255 = vpop.f32.mrf.mxu0
    %v9256 = vpop.f32.mrf.mxu0
    %9257 = vdwg.mxu0
    %v9258 = vadd.f32 %v9177, %v9253
    %v9259 = vld [vmem:[#allocation3 + $0x30] sm:$0x8]
    %s9260 = scalar_lea.vmem %s7, 532
    %v9261 = vld [vmem:[%s9260] sm:$0xf]
    %v9262 = vld [vmem:[%s9260 + $0x4] sm:$0xf]
    %v9263 = vld [vmem:[%s9260 + $0x8] sm:$0xf]
    %v9264 = vld [vmem:[%s9260 + $0xc] sm:$0xf]
    %v9265 = vld [vmem:[%s9260 + $0x10] sm:$0xf]
    %v9266 = vld [vmem:[%s9260 + $0x14] sm:$0xf]
    %v9267 = vld [vmem:[%s9260 + $0x18] sm:$0x1]
    %v9269 = vunpack.c.l.b16 %v9259
    %v9270 = vpack.c.b16 %v9269, %v9269
    %v9271 = vrot.slane %v9270, 3
    %v9279 = vunpack.c.l.b16 %v9261
    %v9280 = vunpack.c.l.b16 %v9262
    %v9281 = vunpack.c.l.b16 %v9263
    %v9282 = vunpack.c.l.b16 %v9264
    %v9283 = vunpack.c.l.b16 %v9265
    %v9284 = vunpack.c.l.b16 %v9266
    %v9285 = vunpack.c.l.b16 %v9267
    %v9286 = vpack.c.b16 %v9280, %v9279
    %v9287 = vpack.c.b16 %v9282, %v9281
    %v9288 = vpack.c.b16 %v9284, %v9283
    %v9289 = vpack.c.b16 %v9285, %v9285
    %v9294 = vsel %vm7779, %v9271, 0
    %v9297 = vsel %vm7783, %v9289, 0
    %9299 = vmatprep.subr.bf16.mxu0 0
    %9300 = vmatpush1.bf16.msra.mxu0 0
    %9301 = vmatprep.subr.bf16.mxu0 0
    %9302 = vmatpush1.bf16.msra.mxu0 0
    %9303 = vmatprep.subr.bf16.mxu0 0
    %9304 = vmatpush1.bf16.msra.mxu0 0
    %9305 = vmatprep.subr.bf16.mxu0 0
    %9306 = vmatpush1.bf16.msra.mxu0 0
    %9307 = vmatprep.subr.bf16.mxu0 0
    %9308 = vmatpush1.bf16.msra.mxu0 %v9297
    %9309 = vmatprep.subr.bf16.mxu0 0
    %9310 = vmatpush1.bf16.msra.mxu0 %v9288
    %9311 = vmatprep.subr.bf16.mxu0 0
    %9312 = vmatpush1.bf16.msra.mxu0 %v9287
    %9313 = vmatprep.subr.bf16.mxu0 0
    %9314 = vmatpush1.bf16.msra.mxu0 %v9286
    %9315 = vmatprep.subr.bf16.mxu0 0
    %9316 = vmatpush2.bf16.msra.mxu0 0
    %9317 = vmatprep.subr.bf16.mxu0 0
    %9318 = vmatpush2.bf16.msra.mxu0 0
    %9319 = vmatprep.subr.bf16.mxu0 0
    %9320 = vmatpush2.bf16.msra.mxu0 0
    %9321 = vmatprep.subr.bf16.mxu0 0
    %9322 = vmatpush2.bf16.msra.mxu0 0
    %9323 = vmatprep.subr.bf16.mxu0 0
    %9324 = vmatpush2.bf16.msra.mxu0 0
    %9325 = vmatprep.subr.bf16.mxu0 0
    %9326 = vmatpush2.bf16.msra.mxu0 0
    %9327 = vmatprep.subr.bf16.mxu0 0
    %9328 = vmatpush2.bf16.msra.mxu0 0
    %9329 = vmatprep.subr.bf16.mxu0 0
    %9330 = vmatpush2.bf16.msra.mxu0 0
    %9331 = vmatprep.mubr.bf16.mxu0 0
    %9332 = vmatmul.mubr.bf16.gmra.mxu0 %v9294
    %v9333 = vpop.f32.mrf.mxu0
    %v9334 = vadd.f32 0.0, %v9333
    %v9335 = vpop.f32.mrf.mxu0
    %v9336 = vpop.f32.mrf.mxu0
    %v9337 = vpop.f32.mrf.mxu0
    %9338 = vdwg.mxu0
    %v9339 = vadd.f32 %v9258, %v9334
    %v9340 = vld [vmem:[#allocation3 + $0x34] sm:$0x1]
    %s9341 = scalar_lea.vmem %s7, 560
    %v9342 = vld [vmem:[%s9341] sm:$0xf]
    %v9343 = vld [vmem:[%s9341 + $0x4] sm:$0xf]
    %v9344 = vld [vmem:[%s9341 + $0x8] sm:$0xf]
    %v9345 = vld [vmem:[%s9341 + $0xc] sm:$0xf]
    %v9346 = vld [vmem:[%s9341 + $0x10] sm:$0xf]
    %v9347 = vld [vmem:[%s9341 + $0x14] sm:$0xf]
    %v9348 = vld [vmem:[%s9341 + $0x18] sm:$0x1]
    %v9356 = vunpack.c.l.b16 %v9342
    %v9357 = vunpack.c.l.b16 %v9343
    %v9358 = vunpack.c.l.b16 %v9344
    %v9359 = vunpack.c.l.b16 %v9345
    %v9360 = vunpack.c.l.b16 %v9346
    %v9361 = vunpack.c.l.b16 %v9347
    %v9362 = vunpack.c.l.b16 %v9348
    %v9363 = vpack.c.b16 %v9357, %v9356
    %v9364 = vpack.c.b16 %v9359, %v9358
    %v9365 = vpack.c.b16 %v9361, %v9360
    %v9366 = vpack.c.b16 %v9362, %v9362
    %v9371 = vsel %vm7779, %v9340, 0
    %v9374 = vsel %vm7783, %v9366, 0
    %9376 = vmatprep.subr.bf16.mxu0 0
    %9377 = vmatpush1.bf16.msra.mxu0 0
    %9378 = vmatprep.subr.bf16.mxu0 0
    %9379 = vmatpush1.bf16.msra.mxu0 0
    %9380 = vmatprep.subr.bf16.mxu0 0
    %9381 = vmatpush1.bf16.msra.mxu0 0
    %9382 = vmatprep.subr.bf16.mxu0 0
    %9383 = vmatpush1.bf16.msra.mxu0 0
    %9384 = vmatprep.subr.bf16.mxu0 0
    %9385 = vmatpush1.bf16.msra.mxu0 %v9374
    %9386 = vmatprep.subr.bf16.mxu0 0
    %9387 = vmatpush1.bf16.msra.mxu0 %v9365
    %9388 = vmatprep.subr.bf16.mxu0 0
    %9389 = vmatpush1.bf16.msra.mxu0 %v9364
    %9390 = vmatprep.subr.bf16.mxu0 0
    %9391 = vmatpush1.bf16.msra.mxu0 %v9363
    %9392 = vmatprep.subr.bf16.mxu0 0
    %9393 = vmatpush2.bf16.msra.mxu0 0
    %9394 = vmatprep.subr.bf16.mxu0 0
    %9395 = vmatpush2.bf16.msra.mxu0 0
    %9396 = vmatprep.subr.bf16.mxu0 0
    %9397 = vmatpush2.bf16.msra.mxu0 0
    %9398 = vmatprep.subr.bf16.mxu0 0
    %9399 = vmatpush2.bf16.msra.mxu0 0
    %9400 = vmatprep.subr.bf16.mxu0 0
    %9401 = vmatpush2.bf16.msra.mxu0 0
    %9402 = vmatprep.subr.bf16.mxu0 0
    %9403 = vmatpush2.bf16.msra.mxu0 0
    %9404 = vmatprep.subr.bf16.mxu0 0
    %9405 = vmatpush2.bf16.msra.mxu0 0
    %9406 = vmatprep.subr.bf16.mxu0 0
    %9407 = vmatpush2.bf16.msra.mxu0 0
    %9408 = vmatprep.mubr.bf16.mxu0 0
    %9409 = vmatmul.mubr.bf16.gmra.mxu0 %v9371
    %v9410 = vpop.f32.mrf.mxu0
    %v9411 = vadd.f32 0.0, %v9410
    %v9412 = vpop.f32.mrf.mxu0
    %v9413 = vpop.f32.mrf.mxu0
    %v9414 = vpop.f32.mrf.mxu0
    %9415 = vdwg.mxu0
    %v9416 = vadd.f32 %v9339, %v9411
    %v9417 = vld [vmem:[#allocation3 + $0x34] sm:$0x8]
    %s9418 = scalar_lea.vmem %s7, 588
    %v9419 = vld [vmem:[%s9418] sm:$0xf]
    %v9420 = vld [vmem:[%s9418 + $0x4] sm:$0xf]
    %v9421 = vld [vmem:[%s9418 + $0x8] sm:$0xf]
    %v9422 = vld [vmem:[%s9418 + $0xc] sm:$0xf]
    %v9423 = vld [vmem:[%s9418 + $0x10] sm:$0xf]
    %v9424 = vld [vmem:[%s9418 + $0x14] sm:$0xf]
    %v9425 = vld [vmem:[%s9418 + $0x18] sm:$0x1]
    %v9427 = vunpack.c.l.b16 %v9417
    %v9428 = vpack.c.b16 %v9427, %v9427
    %v9429 = vrot.slane %v9428, 3
    %v9437 = vunpack.c.l.b16 %v9419
    %v9438 = vunpack.c.l.b16 %v9420
    %v9439 = vunpack.c.l.b16 %v9421
    %v9440 = vunpack.c.l.b16 %v9422
    %v9441 = vunpack.c.l.b16 %v9423
    %v9442 = vunpack.c.l.b16 %v9424
    %v9443 = vunpack.c.l.b16 %v9425
    %v9444 = vpack.c.b16 %v9438, %v9437
    %v9445 = vpack.c.b16 %v9440, %v9439
    %v9446 = vpack.c.b16 %v9442, %v9441
    %v9447 = vpack.c.b16 %v9443, %v9443
    %v9452 = vsel %vm7779, %v9429, 0
    %v9455 = vsel %vm7783, %v9447, 0
    %9457 = vmatprep.subr.bf16.mxu0 0
    %9458 = vmatpush1.bf16.msra.mxu0 0
    %9459 = vmatprep.subr.bf16.mxu0 0
    %9460 = vmatpush1.bf16.msra.mxu0 0
    %9461 = vmatprep.subr.bf16.mxu0 0
    %9462 = vmatpush1.bf16.msra.mxu0 0
    %9463 = vmatprep.subr.bf16.mxu0 0
    %9464 = vmatpush1.bf16.msra.mxu0 0
    %9465 = vmatprep.subr.bf16.mxu0 0
    %9466 = vmatpush1.bf16.msra.mxu0 %v9455
    %9467 = vmatprep.subr.bf16.mxu0 0
    %9468 = vmatpush1.bf16.msra.mxu0 %v9446
    %9469 = vmatprep.subr.bf16.mxu0 0
    %9470 = vmatpush1.bf16.msra.mxu0 %v9445
    %9471 = vmatprep.subr.bf16.mxu0 0
    %9472 = vmatpush1.bf16.msra.mxu0 %v9444
    %9473 = vmatprep.subr.bf16.mxu0 0
    %9474 = vmatpush2.bf16.msra.mxu0 0
    %9475 = vmatprep.subr.bf16.mxu0 0
    %9476 = vmatpush2.bf16.msra.mxu0 0
    %9477 = vmatprep.subr.bf16.mxu0 0
    %9478 = vmatpush2.bf16.msra.mxu0 0
    %9479 = vmatprep.subr.bf16.mxu0 0
    %9480 = vmatpush2.bf16.msra.mxu0 0
    %9481 = vmatprep.subr.bf16.mxu0 0
    %9482 = vmatpush2.bf16.msra.mxu0 0
    %9483 = vmatprep.subr.bf16.mxu0 0
    %9484 = vmatpush2.bf16.msra.mxu0 0
    %9485 = vmatprep.subr.bf16.mxu0 0
    %9486 = vmatpush2.bf16.msra.mxu0 0
    %9487 = vmatprep.subr.bf16.mxu0 0
    %9488 = vmatpush2.bf16.msra.mxu0 0
    %9489 = vmatprep.mubr.bf16.mxu0 0
    %9490 = vmatmul.mubr.bf16.gmra.mxu0 %v9452
    %v9491 = vpop.f32.mrf.mxu0
    %v9492 = vadd.f32 0.0, %v9491
    %v9493 = vpop.f32.mrf.mxu0
    %v9494 = vpop.f32.mrf.mxu0
    %v9495 = vpop.f32.mrf.mxu0
    %9496 = vdwg.mxu0
    %v9497 = vadd.f32 %v9416, %v9492
    %v9498 = vld [vmem:[#allocation3 + $0x38] sm:$0x1]
    %s9499 = scalar_lea.vmem %s7, 616
    %v9500 = vld [vmem:[%s9499] sm:$0xf]
    %v9501 = vld [vmem:[%s9499 + $0x4] sm:$0xf]
    %v9502 = vld [vmem:[%s9499 + $0x8] sm:$0xf]
    %v9503 = vld [vmem:[%s9499 + $0xc] sm:$0xf]
    %v9504 = vld [vmem:[%s9499 + $0x10] sm:$0xf]
    %v9505 = vld [vmem:[%s9499 + $0x14] sm:$0xf]
    %v9506 = vld [vmem:[%s9499 + $0x18] sm:$0x1]
    %v9514 = vunpack.c.l.b16 %v9500
    %v9515 = vunpack.c.l.b16 %v9501
    %v9516 = vunpack.c.l.b16 %v9502
    %v9517 = vunpack.c.l.b16 %v9503
    %v9518 = vunpack.c.l.b16 %v9504
    %v9519 = vunpack.c.l.b16 %v9505
    %v9520 = vunpack.c.l.b16 %v9506
    %v9521 = vpack.c.b16 %v9515, %v9514
    %v9522 = vpack.c.b16 %v9517, %v9516
    %v9523 = vpack.c.b16 %v9519, %v9518
    %v9524 = vpack.c.b16 %v9520, %v9520
    %v9529 = vsel %vm7779, %v9498, 0
    %v9532 = vsel %vm7783, %v9524, 0
    %9534 = vmatprep.subr.bf16.mxu0 0
    %9535 = vmatpush1.bf16.msra.mxu0 0
    %9536 = vmatprep.subr.bf16.mxu0 0
    %9537 = vmatpush1.bf16.msra.mxu0 0
    %9538 = vmatprep.subr.bf16.mxu0 0
    %9539 = vmatpush1.bf16.msra.mxu0 0
    %9540 = vmatprep.subr.bf16.mxu0 0
    %9541 = vmatpush1.bf16.msra.mxu0 0
    %9542 = vmatprep.subr.bf16.mxu0 0
    %9543 = vmatpush1.bf16.msra.mxu0 %v9532
    %9544 = vmatprep.subr.bf16.mxu0 0
    %9545 = vmatpush1.bf16.msra.mxu0 %v9523
    %9546 = vmatprep.subr.bf16.mxu0 0
    %9547 = vmatpush1.bf16.msra.mxu0 %v9522
    %9548 = vmatprep.subr.bf16.mxu0 0
    %9549 = vmatpush1.bf16.msra.mxu0 %v9521
    %9550 = vmatprep.subr.bf16.mxu0 0
    %9551 = vmatpush2.bf16.msra.mxu0 0
    %9552 = vmatprep.subr.bf16.mxu0 0
    %9553 = vmatpush2.bf16.msra.mxu0 0
    %9554 = vmatprep.subr.bf16.mxu0 0
    %9555 = vmatpush2.bf16.msra.mxu0 0
    %9556 = vmatprep.subr.bf16.mxu0 0
    %9557 = vmatpush2.bf16.msra.mxu0 0
    %9558 = vmatprep.subr.bf16.mxu0 0
    %9559 = vmatpush2.bf16.msra.mxu0 0
    %9560 = vmatprep.subr.bf16.mxu0 0
    %9561 = vmatpush2.bf16.msra.mxu0 0
    %9562 = vmatprep.subr.bf16.mxu0 0
    %9563 = vmatpush2.bf16.msra.mxu0 0
    %9564 = vmatprep.subr.bf16.mxu0 0
    %9565 = vmatpush2.bf16.msra.mxu0 0
    %9566 = vmatprep.mubr.bf16.mxu0 0
    %9567 = vmatmul.mubr.bf16.gmra.mxu0 %v9529
    %v9568 = vpop.f32.mrf.mxu0
    %v9569 = vadd.f32 0.0, %v9568
    %v9570 = vpop.f32.mrf.mxu0
    %v9571 = vpop.f32.mrf.mxu0
    %v9572 = vpop.f32.mrf.mxu0
    %9573 = vdwg.mxu0
    %v9574 = vadd.f32 %v9497, %v9569
    %v9575 = vld [vmem:[#allocation3 + $0x38] sm:$0x2]
    %s9576 = scalar_lea.vmem %s7, 644
    %v9577 = vld [vmem:[%s9576] sm:$0xf]
    %v9578 = vld [vmem:[%s9576 + $0x4] sm:$0xf]
    %v9579 = vld [vmem:[%s9576 + $0x8] sm:$0xf]
    %v9580 = vld [vmem:[%s9576 + $0xc] sm:$0xf]
    %v9581 = vld [vmem:[%s9576 + $0x10] sm:$0xf]
    %v9582 = vld [vmem:[%s9576 + $0x14] sm:$0xf]
    %v9583 = vld [vmem:[%s9576 + $0x18] sm:$0x1]
    %v9585 = vunpack.c.l.b16 %v9575
    %v9586 = vpack.c.b16 %v9585, %v9585
    %v9587 = vrot.slane %v9586, 1
    %v9595 = vunpack.c.l.b16 %v9577
    %v9596 = vunpack.c.l.b16 %v9578
    %v9597 = vunpack.c.l.b16 %v9579
    %v9598 = vunpack.c.l.b16 %v9580
    %v9599 = vunpack.c.l.b16 %v9581
    %v9600 = vunpack.c.l.b16 %v9582
    %v9601 = vunpack.c.l.b16 %v9583
    %v9602 = vpack.c.b16 %v9596, %v9595
    %v9603 = vpack.c.b16 %v9598, %v9597
    %v9604 = vpack.c.b16 %v9600, %v9599
    %v9605 = vpack.c.b16 %v9601, %v9601
    %v9610 = vsel %vm7779, %v9587, 0
    %v9613 = vsel %vm7783, %v9605, 0
    %9615 = vmatprep.subr.bf16.mxu0 0
    %9616 = vmatpush1.bf16.msra.mxu0 0
    %9617 = vmatprep.subr.bf16.mxu0 0
    %9618 = vmatpush1.bf16.msra.mxu0 0
    %9619 = vmatprep.subr.bf16.mxu0 0
    %9620 = vmatpush1.bf16.msra.mxu0 0
    %9621 = vmatprep.subr.bf16.mxu0 0
    %9622 = vmatpush1.bf16.msra.mxu0 0
    %9623 = vmatprep.subr.bf16.mxu0 0
    %9624 = vmatpush1.bf16.msra.mxu0 %v9613
    %9625 = vmatprep.subr.bf16.mxu0 0
    %9626 = vmatpush1.bf16.msra.mxu0 %v9604
    %9627 = vmatprep.subr.bf16.mxu0 0
    %9628 = vmatpush1.bf16.msra.mxu0 %v9603
    %9629 = vmatprep.subr.bf16.mxu0 0
    %9630 = vmatpush1.bf16.msra.mxu0 %v9602
    %9631 = vmatprep.subr.bf16.mxu0 0
    %9632 = vmatpush2.bf16.msra.mxu0 0
    %9633 = vmatprep.subr.bf16.mxu0 0
    %9634 = vmatpush2.bf16.msra.mxu0 0
    %9635 = vmatprep.subr.bf16.mxu0 0
    %9636 = vmatpush2.bf16.msra.mxu0 0
    %9637 = vmatprep.subr.bf16.mxu0 0
    %9638 = vmatpush2.bf16.msra.mxu0 0
    %9639 = vmatprep.subr.bf16.mxu0 0
    %9640 = vmatpush2.bf16.msra.mxu0 0
    %9641 = vmatprep.subr.bf16.mxu0 0
    %9642 = vmatpush2.bf16.msra.mxu0 0
    %9643 = vmatprep.subr.bf16.mxu0 0
    %9644 = vmatpush2.bf16.msra.mxu0 0
    %9645 = vmatprep.subr.bf16.mxu0 0
    %9646 = vmatpush2.bf16.msra.mxu0 0
    %9647 = vmatprep.mubr.bf16.mxu0 0
    %9648 = vmatmul.mubr.bf16.gmra.mxu0 %v9610
    %v9649 = vpop.f32.mrf.mxu0
    %v9650 = vadd.f32 0.0, %v9649
    %v9651 = vpop.f32.mrf.mxu0
    %v9652 = vpop.f32.mrf.mxu0
    %v9653 = vpop.f32.mrf.mxu0
    %9654 = vdwg.mxu0
    %v9655 = vadd.f32 %v9574, %v9650
    %v9656 = vld [vmem:[#allocation3 + $0x3c] sm:$0x1]
    %s9657 = scalar_lea.vmem %s7, 672
    %v9658 = vld [vmem:[%s9657] sm:$0xf]
    %v9659 = vld [vmem:[%s9657 + $0x4] sm:$0xf]
    %v9660 = vld [vmem:[%s9657 + $0x8] sm:$0xf]
    %v9661 = vld [vmem:[%s9657 + $0xc] sm:$0xf]
    %v9662 = vld [vmem:[%s9657 + $0x10] sm:$0xf]
    %v9663 = vld [vmem:[%s9657 + $0x14] sm:$0xf]
    %v9664 = vld [vmem:[%s9657 + $0x18] sm:$0x1]
    %v9672 = vunpack.c.l.b16 %v9658
    %v9673 = vunpack.c.l.b16 %v9659
    %v9674 = vunpack.c.l.b16 %v9660
    %v9675 = vunpack.c.l.b16 %v9661
    %v9676 = vunpack.c.l.b16 %v9662
    %v9677 = vunpack.c.l.b16 %v9663
    %v9678 = vunpack.c.l.b16 %v9664
    %v9679 = vpack.c.b16 %v9673, %v9672
    %v9680 = vpack.c.b16 %v9675, %v9674
    %v9681 = vpack.c.b16 %v9677, %v9676
    %v9682 = vpack.c.b16 %v9678, %v9678
    %v9687 = vsel %vm7779, %v9656, 0
    %v9690 = vsel %vm7783, %v9682, 0
    %9692 = vmatprep.subr.bf16.mxu0 0
    %9693 = vmatpush1.bf16.msra.mxu0 0
    %9694 = vmatprep.subr.bf16.mxu0 0
    %9695 = vmatpush1.bf16.msra.mxu0 0
    %9696 = vmatprep.subr.bf16.mxu0 0
    %9697 = vmatpush1.bf16.msra.mxu0 0
    %9698 = vmatprep.subr.bf16.mxu0 0
    %9699 = vmatpush1.bf16.msra.mxu0 0
    %9700 = vmatprep.subr.bf16.mxu0 0
    %9701 = vmatpush1.bf16.msra.mxu0 %v9690
    %9702 = vmatprep.subr.bf16.mxu0 0
    %9703 = vmatpush1.bf16.msra.mxu0 %v9681
    %9704 = vmatprep.subr.bf16.mxu0 0
    %9705 = vmatpush1.bf16.msra.mxu0 %v9680
    %9706 = vmatprep.subr.bf16.mxu0 0
    %9707 = vmatpush1.bf16.msra.mxu0 %v9679
    %9708 = vmatprep.subr.bf16.mxu0 0
    %9709 = vmatpush2.bf16.msra.mxu0 0
    %9710 = vmatprep.subr.bf16.mxu0 0
    %9711 = vmatpush2.bf16.msra.mxu0 0
    %9712 = vmatprep.subr.bf16.mxu0 0
    %9713 = vmatpush2.bf16.msra.mxu0 0
    %9714 = vmatprep.subr.bf16.mxu0 0
    %9715 = vmatpush2.bf16.msra.mxu0 0
    %9716 = vmatprep.subr.bf16.mxu0 0
    %9717 = vmatpush2.bf16.msra.mxu0 0
    %9718 = vmatprep.subr.bf16.mxu0 0
    %9719 = vmatpush2.bf16.msra.mxu0 0
    %9720 = vmatprep.subr.bf16.mxu0 0
    %9721 = vmatpush2.bf16.msra.mxu0 0
    %9722 = vmatprep.subr.bf16.mxu0 0
    %9723 = vmatpush2.bf16.msra.mxu0 0
    %9724 = vmatprep.mubr.bf16.mxu0 0
    %9725 = vmatmul.mubr.bf16.gmra.mxu0 %v9687
    %v9726 = vpop.f32.mrf.mxu0
    %v9727 = vadd.f32 0.0, %v9726
    %v9728 = vpop.f32.mrf.mxu0
    %v9729 = vpop.f32.mrf.mxu0
    %v9730 = vpop.f32.mrf.mxu0
    %9731 = vdwg.mxu0
    %v9732 = vadd.f32 %v9655, %v9727
    %v9733 = vld [vmem:[#allocation3 + $0x3c] sm:$0x2]
    %s9734 = scalar_lea.vmem %s7, 700
    %v9735 = vld [vmem:[%s9734] sm:$0xf]
    %v9736 = vld [vmem:[%s9734 + $0x4] sm:$0xf]
    %v9737 = vld [vmem:[%s9734 + $0x8] sm:$0xf]
    %v9738 = vld [vmem:[%s9734 + $0xc] sm:$0xf]
    %v9739 = vld [vmem:[%s9734 + $0x10] sm:$0xf]
    %v9740 = vld [vmem:[%s9734 + $0x14] sm:$0xf]
    %v9741 = vld [vmem:[%s9734 + $0x18] sm:$0x1]
    %v9743 = vunpack.c.l.b16 %v9733
    %v9744 = vpack.c.b16 %v9743, %v9743
    %v9745 = vrot.slane %v9744, 1
    %v9753 = vunpack.c.l.b16 %v9735
    %v9754 = vunpack.c.l.b16 %v9736
    %v9755 = vunpack.c.l.b16 %v9737
    %v9756 = vunpack.c.l.b16 %v9738
    %v9757 = vunpack.c.l.b16 %v9739
    %v9758 = vunpack.c.l.b16 %v9740
    %v9759 = vunpack.c.l.b16 %v9741
    %v9760 = vpack.c.b16 %v9754, %v9753
    %v9761 = vpack.c.b16 %v9756, %v9755
    %v9762 = vpack.c.b16 %v9758, %v9757
    %v9763 = vpack.c.b16 %v9759, %v9759
    %v9768 = vsel %vm7779, %v9745, 0
    %v9771 = vsel %vm7783, %v9763, 0
    %9773 = vmatprep.subr.bf16.mxu0 0
    %9774 = vmatpush1.bf16.msra.mxu0 0
    %9775 = vmatprep.subr.bf16.mxu0 0
    %9776 = vmatpush1.bf16.msra.mxu0 0
    %9777 = vmatprep.subr.bf16.mxu0 0
    %9778 = vmatpush1.bf16.msra.mxu0 0
    %9779 = vmatprep.subr.bf16.mxu0 0
    %9780 = vmatpush1.bf16.msra.mxu0 0
    %9781 = vmatprep.subr.bf16.mxu0 0
    %9782 = vmatpush1.bf16.msra.mxu0 %v9771
    %9783 = vmatprep.subr.bf16.mxu0 0
    %9784 = vmatpush1.bf16.msra.mxu0 %v9762
    %9785 = vmatprep.subr.bf16.mxu0 0
    %9786 = vmatpush1.bf16.msra.mxu0 %v9761
    %9787 = vmatprep.subr.bf16.mxu0 0
    %9788 = vmatpush1.bf16.msra.mxu0 %v9760
    %9789 = vmatprep.subr.bf16.mxu0 0
    %9790 = vmatpush2.bf16.msra.mxu0 0
    %9791 = vmatprep.subr.bf16.mxu0 0
    %9792 = vmatpush2.bf16.msra.mxu0 0
    %9793 = vmatprep.subr.bf16.mxu0 0
    %9794 = vmatpush2.bf16.msra.mxu0 0
    %9795 = vmatprep.subr.bf16.mxu0 0
    %9796 = vmatpush2.bf16.msra.mxu0 0
    %9797 = vmatprep.subr.bf16.mxu0 0
    %9798 = vmatpush2.bf16.msra.mxu0 0
    %9799 = vmatprep.subr.bf16.mxu0 0
    %9800 = vmatpush2.bf16.msra.mxu0 0
    %9801 = vmatprep.subr.bf16.mxu0 0
    %9802 = vmatpush2.bf16.msra.mxu0 0
    %9803 = vmatprep.subr.bf16.mxu0 0
    %9804 = vmatpush2.bf16.msra.mxu0 0
    %9805 = vmatprep.mubr.bf16.mxu0 0
    %9806 = vmatmul.mubr.bf16.gmra.mxu0 %v9768
    %v9807 = vpop.f32.mrf.mxu0
    %v9808 = vadd.f32 0.0, %v9807
    %v9809 = vpop.f32.mrf.mxu0
    %v9810 = vpop.f32.mrf.mxu0
    %v9811 = vpop.f32.mrf.mxu0
    %9812 = vdwg.mxu0
    %v9813 = vadd.f32 %v9732, %v9808
    %v9814 = vld [vmem:[#allocation3 + $0x3c] sm:$0x4]
    %s9815 = scalar_lea.vmem %s7, 728
    %v9816 = vld [vmem:[%s9815] sm:$0xf]
    %v9817 = vld [vmem:[%s9815 + $0x4] sm:$0xf]
    %v9818 = vld [vmem:[%s9815 + $0x8] sm:$0xf]
    %v9819 = vld [vmem:[%s9815 + $0xc] sm:$0xf]
    %v9820 = vld [vmem:[%s9815 + $0x10] sm:$0xf]
    %v9821 = vld [vmem:[%s9815 + $0x14] sm:$0xf]
    %v9822 = vld [vmem:[%s9815 + $0x18] sm:$0x1]
    %v9824 = vunpack.c.l.b16 %v9814
    %v9825 = vpack.c.b16 %v9824, %v9824
    %v9826 = vrot.slane %v9825, 2
    %v9834 = vunpack.c.l.b16 %v9816
    %v9835 = vunpack.c.l.b16 %v9817
    %v9836 = vunpack.c.l.b16 %v9818
    %v9837 = vunpack.c.l.b16 %v9819
    %v9838 = vunpack.c.l.b16 %v9820
    %v9839 = vunpack.c.l.b16 %v9821
    %v9840 = vunpack.c.l.b16 %v9822
    %v9841 = vpack.c.b16 %v9835, %v9834
    %v9842 = vpack.c.b16 %v9837, %v9836
    %v9843 = vpack.c.b16 %v9839, %v9838
    %v9844 = vpack.c.b16 %v9840, %v9840
    %v9849 = vsel %vm7779, %v9826, 0
    %v9852 = vsel %vm7783, %v9844, 0
    %9854 = vmatprep.subr.bf16.mxu0 0
    %9855 = vmatpush1.bf16.msra.mxu0 0
    %9856 = vmatprep.subr.bf16.mxu0 0
    %9857 = vmatpush1.bf16.msra.mxu0 0
    %9858 = vmatprep.subr.bf16.mxu0 0
    %9859 = vmatpush1.bf16.msra.mxu0 0
    %9860 = vmatprep.subr.bf16.mxu0 0
    %9861 = vmatpush1.bf16.msra.mxu0 0
    %9862 = vmatprep.subr.bf16.mxu0 0
    %9863 = vmatpush1.bf16.msra.mxu0 %v9852
    %9864 = vmatprep.subr.bf16.mxu0 0
    %9865 = vmatpush1.bf16.msra.mxu0 %v9843
    %9866 = vmatprep.subr.bf16.mxu0 0
    %9867 = vmatpush1.bf16.msra.mxu0 %v9842
    %9868 = vmatprep.subr.bf16.mxu0 0
    %9869 = vmatpush1.bf16.msra.mxu0 %v9841
    %9870 = vmatprep.subr.bf16.mxu0 0
    %9871 = vmatpush2.bf16.msra.mxu0 0
    %9872 = vmatprep.subr.bf16.mxu0 0
    %9873 = vmatpush2.bf16.msra.mxu0 0
    %9874 = vmatprep.subr.bf16.mxu0 0
    %9875 = vmatpush2.bf16.msra.mxu0 0
    %9876 = vmatprep.subr.bf16.mxu0 0
    %9877 = vmatpush2.bf16.msra.mxu0 0
    %9878 = vmatprep.subr.bf16.mxu0 0
    %9879 = vmatpush2.bf16.msra.mxu0 0
    %9880 = vmatprep.subr.bf16.mxu0 0
    %9881 = vmatpush2.bf16.msra.mxu0 0
    %9882 = vmatprep.subr.bf16.mxu0 0
    %9883 = vmatpush2.bf16.msra.mxu0 0
    %9884 = vmatprep.subr.bf16.mxu0 0
    %9885 = vmatpush2.bf16.msra.mxu0 0
    %9886 = vmatprep.mubr.bf16.mxu0 0
    %9887 = vmatmul.mubr.bf16.gmra.mxu0 %v9849
    %v9888 = vpop.f32.mrf.mxu0
    %v9889 = vadd.f32 0.0, %v9888
    %v9890 = vpop.f32.mrf.mxu0
    %v9891 = vpop.f32.mrf.mxu0
    %v9892 = vpop.f32.mrf.mxu0
    %9893 = vdwg.mxu0
    %v9894 = vadd.f32 %v9813, %v9889
    %v9895 = vld [vmem:[%s8] sm:$0x1]
    %v9897 = vlaneseq
    %v9898 = vshrl.u32 %v9897, 7
    %v9899 = vsub.s32 0, %v9898
    %v9900 = vrot.slane %v9895, %v9899
    %v9902 = vadd.f32 %v9894, %v9900
    %vm9903 = vcmp.gt.f32.partialorder %v9902, 0.0
    %v9904 = vmin.f32 %v9902, 0.0
    %v9905 = vmul.f32 %v9904, 1.442695
    %v9906 = vpow.pop %v9905
    %v9907 = vsub.f32 %v9906, 1.0
    %v9908 = vsel %vm9903, %v9902, %v9907
    %v9909 = vpack.c.bf16 %v9908, %v9908
    %v9910 = vld [vmem:[%s9] sm:$0xf]
    %v9911 = vld [vmem:[%s9 + $0x4] sm:$0xf]
    %v9912 = vld [vmem:[%s9 + $0x8] sm:$0xf]
    %v9913 = vld [vmem:[%s9 + $0xc] sm:$0xf]
    %v9914 = vld [vmem:[%s9 + $0x10] sm:$0xf]
    %v9915 = vld [vmem:[%s9 + $0x14] sm:$0xf]
    %v9916 = vld [vmem:[%s9 + $0x18] sm:$0x1]
    %v9917 = vld [vmem:[%s10] sm:$0x1]
    %v9919 = vlaneseq
    %v9920 = vshrl.u32 %v9919, 7
    %v9921 = vsub.s32 0, %v9920
    %v9922 = vrot.slane %v9917, %v9921
    %v9931 = vunpack.c.l.b16 %v9910
    %v9932 = vunpack.c.l.b16 %v9911
    %v9933 = vunpack.c.l.b16 %v9912
    %v9934 = vunpack.c.l.b16 %v9913
    %v9935 = vunpack.c.l.b16 %v9914
    %v9936 = vunpack.c.l.b16 %v9915
    %v9937 = vunpack.c.l.b16 %v9916
    %v9938 = vpack.c.b16 %v9932, %v9931
    %v9939 = vpack.c.b16 %v9934, %v9933
    %v9940 = vpack.c.b16 %v9936, %v9935
    %v9941 = vpack.c.b16 %v9937, %v9937
    %v9946 = vsel %vm7779, %v9909, 0
    %v9949 = vsel %vm7783, %v9941, 0
    %9951 = vmatprep.subr.bf16.mxu0 0
    %9952 = vmatpush1.bf16.msra.mxu0 0
    %9953 = vmatprep.subr.bf16.mxu0 0
    %9954 = vmatpush1.bf16.msra.mxu0 0
    %9955 = vmatprep.subr.bf16.mxu0 0
    %9956 = vmatpush1.bf16.msra.mxu0 0
    %9957 = vmatprep.subr.bf16.mxu0 0
    %9958 = vmatpush1.bf16.msra.mxu0 0
    %9959 = vmatprep.subr.bf16.mxu0 0
    %9960 = vmatpush1.bf16.msra.mxu0 %v9949
    %9961 = vmatprep.subr.bf16.mxu0 0
    %9962 = vmatpush1.bf16.msra.mxu0 %v9940
    %9963 = vmatprep.subr.bf16.mxu0 0
    %9964 = vmatpush1.bf16.msra.mxu0 %v9939
    %9965 = vmatprep.subr.bf16.mxu0 0
    %9966 = vmatpush1.bf16.msra.mxu0 %v9938
    %9967 = vmatprep.subr.bf16.mxu0 0
    %9968 = vmatpush2.bf16.msra.mxu0 0
    %9969 = vmatprep.subr.bf16.mxu0 0
    %9970 = vmatpush2.bf16.msra.mxu0 0
    %9971 = vmatprep.subr.bf16.mxu0 0
    %9972 = vmatpush2.bf16.msra.mxu0 0
    %9973 = vmatprep.subr.bf16.mxu0 0
    %9974 = vmatpush2.bf16.msra.mxu0 0
    %9975 = vmatprep.subr.bf16.mxu0 0
    %9976 = vmatpush2.bf16.msra.mxu0 0
    %9977 = vmatprep.subr.bf16.mxu0 0
    %9978 = vmatpush2.bf16.msra.mxu0 0
    %9979 = vmatprep.subr.bf16.mxu0 0
    %9980 = vmatpush2.bf16.msra.mxu0 0
    %9981 = vmatprep.subr.bf16.mxu0 0
    %9982 = vmatpush2.bf16.msra.mxu0 0
    %9983 = vmatprep.mubr.bf16.mxu0 0
    %9984 = vmatmul.mubr.bf16.gmra.mxu0 %v9946
    %v9985 = vpop.f32.mrf.mxu0
    %v9986 = vadd.f32 %v9922, %v9985
    %v9987 = vpop.f32.mrf.mxu0
    %v9988 = vpop.f32.mrf.mxu0
    %v9989 = vpop.f32.mrf.mxu0
    %9990 = vdwg.mxu0
    %vm9991 = vcmp.gt.f32.partialorder %v9986, 0.0
    %v9992 = vmin.f32 %v9986, 0.0
    %v9993 = vmul.f32 %v9992, 1.442695
    %v9994 = vpow.pop %v9993
    %v9995 = vsub.f32 %v9994, 1.0
    %v9996 = vsel %vm9991, %v9986, %v9995
    %v9997 = vpack.c.bf16 %v9996, %v9996
    %v9998 = vld [vmem:[%s11] sm:$0xf]
    %v9999 = vld [vmem:[%s11 + $0x4] sm:$0xf]
    %v10000 = vld [vmem:[%s11 + $0x8] sm:$0xf]
    %v10001 = vld [vmem:[%s11 + $0xc] sm:$0xf]
    %v10002 = vld [vmem:[%s11 + $0x10] sm:$0xf]
    %v10003 = vld [vmem:[%s11 + $0x14] sm:$0xf]
    %v10004 = vld [vmem:[%s11 + $0x18] sm:$0x1]
    %v10005 = vld [vmem:[%s12] sm:$0x1]
    %v10007 = vlaneseq
    %v10008 = vshrl.u32 %v10007, 7
    %v10009 = vsub.s32 0, %v10008
    %v10010 = vrot.slane %v10005, %v10009
    %v10019 = vunpack.c.l.b16 %v9998
    %v10020 = vunpack.c.l.b16 %v9999
    %v10021 = vunpack.c.l.b16 %v10000
    %v10022 = vunpack.c.l.b16 %v10001
    %v10023 = vunpack.c.l.b16 %v10002
    %v10024 = vunpack.c.l.b16 %v10003
    %v10025 = vunpack.c.l.b16 %v10004
    %v10026 = vpack.c.b16 %v10020, %v10019
    %v10027 = vpack.c.b16 %v10022, %v10021
    %v10028 = vpack.c.b16 %v10024, %v10023
    %v10029 = vpack.c.b16 %v10025, %v10025
    %v10034 = vsel %vm7779, %v9997, 0
    %v10037 = vsel %vm7783, %v10029, 0
    %10039 = vmatprep.subr.bf16.mxu0 0
    %10040 = vmatpush1.bf16.msra.mxu0 0
    %10041 = vmatprep.subr.bf16.mxu0 0
    %10042 = vmatpush1.bf16.msra.mxu0 0
    %10043 = vmatprep.subr.bf16.mxu0 0
    %10044 = vmatpush1.bf16.msra.mxu0 0
    %10045 = vmatprep.subr.bf16.mxu0 0
    %10046 = vmatpush1.bf16.msra.mxu0 0
    %10047 = vmatprep.subr.bf16.mxu0 0
    %10048 = vmatpush1.bf16.msra.mxu0 %v10037
    %10049 = vmatprep.subr.bf16.mxu0 0
    %10050 = vmatpush1.bf16.msra.mxu0 %v10028
    %10051 = vmatprep.subr.bf16.mxu0 0
    %10052 = vmatpush1.bf16.msra.mxu0 %v10027
    %10053 = vmatprep.subr.bf16.mxu0 0
    %10054 = vmatpush1.bf16.msra.mxu0 %v10026
    %10055 = vmatprep.subr.bf16.mxu0 0
    %10056 = vmatpush2.bf16.msra.mxu0 0
    %10057 = vmatprep.subr.bf16.mxu0 0
    %10058 = vmatpush2.bf16.msra.mxu0 0
    %10059 = vmatprep.subr.bf16.mxu0 0
    %10060 = vmatpush2.bf16.msra.mxu0 0
    %10061 = vmatprep.subr.bf16.mxu0 0
    %10062 = vmatpush2.bf16.msra.mxu0 0
    %10063 = vmatprep.subr.bf16.mxu0 0
    %10064 = vmatpush2.bf16.msra.mxu0 0
    %10065 = vmatprep.subr.bf16.mxu0 0
    %10066 = vmatpush2.bf16.msra.mxu0 0
    %10067 = vmatprep.subr.bf16.mxu0 0
    %10068 = vmatpush2.bf16.msra.mxu0 0
    %10069 = vmatprep.subr.bf16.mxu0 0
    %10070 = vmatpush2.bf16.msra.mxu0 0
    %10071 = vmatprep.mubr.bf16.mxu0 0
    %10072 = vmatmul.mubr.bf16.gmra.mxu0 %v10034
    %v10073 = vpop.f32.mrf.mxu0
    %v10074 = vadd.f32 %v10010, %v10073
    %v10075 = vpop.f32.mrf.mxu0
    %v10076 = vpop.f32.mrf.mxu0
    %v10077 = vpop.f32.mrf.mxu0
    %10078 = vdwg.mxu0
    %10079 = vst [vmem:[#allocation4] sm:$0x3] %v10074
    // Predicated region
    $region54: #{dqn_forward.1} parent=1 // pred_check
      _
    $region55: #{dqn_forward.1} parent=1 // pred_check_branch
      %10081 = sbr.rel (0) target = $region57
    $region56: #{dqn_forward.1} parent=1 // pred_region
      %s10083 = ssub.s32 32, 32
      %10084 = vsyncadd [#allocation5], %s10083
      %s10086 = sshll.u32 [#allocation4], 4
      %s10087 = int_to_ptr.vmem [resolvable:$true] %s10086
      %10089 = dma.vmem_to_hbm [thread:$0]  %s10087, 32, %s13, [#allocation5]
    $region57: #{dqn_forward.1} parent=1 // pred_fallthru
      _
    // Predicated region
    $region58: #{dqn_forward.1} parent=1 // pred_check
      _
    $region59: #{dqn_forward.1} parent=1 // pred_check_branch
      %10091 = sbr.rel (0) target = $region61
    $region60: #{dqn_forward.1} parent=1 // pred_region
      %10092 = dma.done [#allocation5], 32
    $region61: #{dqn_forward.1} parent=1 // pred_fallthru
      _
    %10093 = vsyncpa [#allocation5], 1

</llo_original>
